<compile_context>
chip_gen: v6e
topology: v6e:2x2x1
jax: 0.10.0
libtpu: 0.0.40
codegen_flags: <defaults>
</compile_context>

<pallas_src>
import jax
import jax.numpy as jnp
from jax.experimental import pallas as pl
from jax.experimental.pallas import tpu as pltpu

# ---- small, module-consistent sizes ------------------------------------------
INPUT_DIM = 5          # nn.Linear(input_dim=5, hidden_dim)
INPUT_DIM_PAD = 8      # zero-padded contraction dim (sublane aligned)
SEQ_LEN = 8            # small seq (module default was 60)
HIDDEN = 32            # small hidden (module default was 128)
NHEAD = 4
HEAD_DIM = HIDDEN // NHEAD
FF = 2048              # CustomEncoderLayer default dim_feedforward
FF_CHUNK = 512         # FFN chunk size (4 chunks)
NUM_LAYERS = 2
LN_EPS = 1e-5
BATCH = 2


def _layer_norm(x, w, b):
    # x: [M, H], w/b: [1, H]; PyTorch LayerNorm uses biased variance.
    mean = jnp.mean(x, axis=-1, keepdims=True)
    var = jnp.mean((x - mean) ** 2, axis=-1, keepdims=True)
    return (x - mean) * jax.lax.rsqrt(var + LN_EPS) * w + b


# ---- single fused kernel: proj + pos + 2x encoder layer + mean-pool ----------
def fused_branch_kernel(x_ref, proj_w_ref, proj_b_ref, pos_ref,
                        in_w_ref, in_b_ref, out_w_ref, out_b_ref,
                        ln1_w_ref, ln1_b_ref,
                        lin1_w_ref, lin1_b_ref, lin2_w_ref, lin2_b_ref,
                        ln2_w_ref, ln2_b_ref,
                        pooled_ref, attn_ref):
    B = x_ref.shape[0]
    M = B * SEQ_LEN

    # --- input projection (+ bias) + positional embedding ---
    x = x_ref[...].reshape(M, INPUT_DIM_PAD)                               # [M, 8]
    h = jnp.dot(x, proj_w_ref[...],
                preferred_element_type=jnp.float32) + proj_b_ref[...]      # [M, H]
    h = (h.reshape(B, SEQ_LEN, HIDDEN) + pos_ref[...]).reshape(M, HIDDEN)

    scale = 1.0 / (HEAD_DIM ** 0.5)

    for l in range(NUM_LAYERS):                       # static unroll over layers
        # --- packed QKV projection on flattened batch [M, 3H] ---
        qkv = jnp.dot(h, in_w_ref[l],
                      preferred_element_type=jnp.float32) + in_b_ref[l]
        q = (qkv[:, 0:HIDDEN] * scale).reshape(B, SEQ_LEN, HIDDEN)
        k = qkv[:, HIDDEN:2 * HIDDEN].reshape(B, SEQ_LEN, HIDDEN)
        v = qkv[:, 2 * HIDDEN:3 * HIDDEN].reshape(B, SEQ_LEN, HIDDEN)

        # --- multi-head attention: static loop over heads, batched over B ---
        # TODO(synk): a single 'bqhd,bkhd->bhqk' head-batched einsum would cut
        # lane slices further but needs multi-batch-dim dot_general in Mosaic.
        attn_avg = jnp.zeros((B, SEQ_LEN, SEQ_LEN), jnp.float32)
        head_outs = []
        for hd in range(NHEAD):
            lo = hd * HEAD_DIM
            qh = q[:, :, lo:lo + HEAD_DIM]
            kh = k[:, :, lo:lo + HEAD_DIM]
            vh = v[:, :, lo:lo + HEAD_DIM]
            s = jnp.einsum('bqd,bkd->bqk', qh, kh,
                           preferred_element_type=jnp.float32)             # [B,S,S]
            s = s - jnp.max(s, axis=-1, keepdims=True)
            e = jnp.exp(s)
            p = e * pl.reciprocal(jnp.sum(e, axis=-1, keepdims=True), approx=True)
            attn_avg = attn_avg + p
            head_outs.append(jnp.einsum('bqk,bkd->bqd', p, vh,
                                        preferred_element_type=jnp.float32))
        attn_ref[l] = attn_avg * (1.0 / NHEAD)        # averaged over heads

        concat = jnp.concatenate(head_outs, axis=-1).reshape(M, HIDDEN)
        attn_out = jnp.dot(concat, out_w_ref[l],
                           preferred_element_type=jnp.float32) + out_b_ref[l]

        # --- residual + norm1 (dropout2 = identity) ---
        src = _layer_norm(h + attn_out, ln1_w_ref[l], ln1_b_ref[l])

        # --- FFN: chunked over FF; both matmuls MXU-native (bf16 in, f32 acc) ---
        src_bf16 = src.astype(jnp.bfloat16)
        ff = jnp.zeros((M, HIDDEN), jnp.float32)
        for c in range(FF // FF_CHUNK):               # 4 static chunks of 512
            f0 = c * FF_CHUNK
            h1 = jnp.dot(src_bf16, lin1_w_ref[l, :, f0:f0 + FF_CHUNK],
                         preferred_element_type=jnp.float32)               # [M, 512]
            h1 = jnp.maximum(h1 + lin1_b_ref[l, :, f0:f0 + FF_CHUNK], 0.0)  # f32 relu
            ff = ff + jnp.dot(h1.astype(jnp.bfloat16),
                              lin2_w_ref[l, f0:f0 + FF_CHUNK, :],          # [512, H]
                              preferred_element_type=jnp.float32)
        ff = ff + lin2_b_ref[l]

        # --- residual + norm2 (dropout1/dropout3 = identity) ---
        h = _layer_norm(src + ff, ln2_w_ref[l], ln2_b_ref[l])

    # --- permute(0,2,1) -> AdaptiveAvgPool1d(1) -> squeeze == mean over seq ---
    pooled_ref[...] = jnp.mean(h.reshape(B, SEQ_LEN, HIDDEN), axis=1)


# ---- parameters (deterministic, synthetic; PyTorch-native layout) ------------
def init_params(key):
    keys = jax.random.split(key, 3 + NUM_LAYERS)

    def nrm(k, shape, scale=0.05):
        return (scale * jax.random.normal(k, shape)).astype(jnp.float32)

    params = {
        "proj_w": nrm(keys[0], (HIDDEN, INPUT_DIM), 0.1),     # [H, Din] (PyTorch)
        "proj_b": nrm(keys[1], (1, HIDDEN), 0.1),
        "pos": jax.random.normal(keys[2], (1, SEQ_LEN, HIDDEN)).astype(jnp.float32),
        "layers": [],
    }
    for l in range(NUM_LAYERS):
        lk = jax.random.split(keys[3 + l], 8)
        params["layers"].append(dict(
            attn_in_w=nrm(lk[0], (3 * HIDDEN, HIDDEN)),       # [3H, H] (PyTorch)
            attn_in_b=nrm(lk[1], (1, 3 * HIDDEN)),
            attn_out_w=nrm(lk[2], (HIDDEN, HIDDEN)),
            attn_out_b=nrm(lk[3], (1, HIDDEN)),
            ln1_w=jnp.ones((1, HIDDEN), jnp.float32),
            ln1_b=jnp.zeros((1, HIDDEN), jnp.float32),
            lin1_w=nrm(lk[4], (FF, HIDDEN)),                  # [FF, H] (PyTorch)
            lin1_b=nrm(lk[5], (1, FF)),
            lin2_w=nrm(lk[6], (HIDDEN, FF)),                  # [H, FF] (PyTorch)
            lin2_b=nrm(lk[7], (1, HIDDEN)),
            ln2_w=jnp.ones((1, HIDDEN), jnp.float32),
            ln2_b=jnp.zeros((1, HIDDEN), jnp.float32),
        ))
    return params


# ---- pack to kernel layout: pre-transposed, stacked over layers, bf16 FF -----
def pack_params(params):
    def stack(name):
        return jnp.stack([lp[name] for lp in params["layers"]])

    # zero-pad proj_w contraction dim 5 -> 8 (sublane aligned, exact semantics)
    proj_w_t = params["proj_w"].T                                          # [Din, H]
    proj_w_pad = jnp.zeros((INPUT_DIM_PAD, HIDDEN), jnp.float32)
    proj_w_pad = proj_w_pad.at[:INPUT_DIM, :].set(proj_w_t)

    return {
        "proj_w": proj_w_pad,                                           # [8, H]
        "proj_b": params["proj_b"],                                     # [1, H]
        "pos": params["pos"],                                           # [1, S, H]
        "in_w": jnp.stack([lp["attn_in_w"].T for lp in params["layers"]]),   # [L, H, 3H]
        "in_b": stack("attn_in_b"),                                     # [L, 1, 3H]
        "out_w": jnp.stack([lp["attn_out_w"].T for lp in params["layers"]]), # [L, H, H]
        "out_b": stack("attn_out_b"),                                   # [L, 1, H]
        "ln1_w": stack("ln1_w"), "ln1_b": stack("ln1_b"),               # [L, 1, H]
        "lin1_w": jnp.stack([lp["lin1_w"].T for lp in params["layers"]]
                            ).astype(jnp.bfloat16),                     # [L, H, FF] bf16
        "lin1_b": stack("lin1_b"),                                      # [L, 1, FF]
        "lin2_w": jnp.stack([lp["lin2_w"].T for lp in params["layers"]]
                            ).astype(jnp.bfloat16),                     # [L, FF, H] bf16
        "lin2_b": stack("lin2_b"),                                      # [L, 1, H]
        "ln2_w": stack("ln2_w"), "ln2_b": stack("ln2_b"),               # [L, 1, H]
    }


# ---- wrapper ------------------------------------------------------------------
@jax.jit
def transformer_branch_forward(x, packed):
    B, S, Din = x.shape
    # zero-pad input feature dim 5 -> 8 to match the padded proj_w
    x_pad = jnp.pad(x, ((0, 0), (0, 0), (0, INPUT_DIM_PAD - Din)))

    def full(shape):
        return pl.BlockSpec(shape, lambda i, _s=shape: (0,) * len(_s))

    pooled, attn = pl.pallas_call(
        fused_branch_kernel,
        grid=(1,),
        in_specs=[
            full((B, S, INPUT_DIM_PAD)),
            full((INPUT_DIM_PAD, HIDDEN)), full((1, HIDDEN)), full((1, S, HIDDEN)),
            full((NUM_LAYERS, HIDDEN, 3 * HIDDEN)), full((NUM_LAYERS, 1, 3 * HIDDEN)),
            full((NUM_LAYERS, HIDDEN, HIDDEN)), full((NUM_LAYERS, 1, HIDDEN)),
            full((NUM_LAYERS, 1, HIDDEN)), full((NUM_LAYERS, 1, HIDDEN)),
            full((NUM_LAYERS, HIDDEN, FF)), full((NUM_LAYERS, 1, FF)),
            full((NUM_LAYERS, FF, HIDDEN)), full((NUM_LAYERS, 1, HIDDEN)),
            full((NUM_LAYERS, 1, HIDDEN)), full((NUM_LAYERS, 1, HIDDEN)),
        ],
        out_specs=(full((B, HIDDEN)), full((NUM_LAYERS, B, S, S))),
        out_shape=(jax.ShapeDtypeStruct((B, HIDDEN), jnp.float32),
                   jax.ShapeDtypeStruct((NUM_LAYERS, B, S, S), jnp.float32)),
        compiler_params=pltpu.CompilerParams(
            dimension_semantics=("arbitrary",)),
    )(x_pad, packed["proj_w"], packed["proj_b"], packed["pos"],
      packed["in_w"], packed["in_b"], packed["out_w"], packed["out_b"],
      packed["ln1_w"], packed["ln1_b"],
      packed["lin1_w"], packed["lin1_b"], packed["lin2_w"], packed["lin2_b"],
      packed["ln2_w"], packed["ln2_b"])

    attn_maps = [attn[l] for l in range(NUM_LAYERS)]   # mirror module.attn_maps
    return pooled, attn_maps


if __name__ == "__main__":
    key = jax.random.PRNGKey(0)
    kx, kp = jax.random.split(key)
    x = jax.random.normal(kx, (BATCH, SEQ_LEN, INPUT_DIM), dtype=jnp.float32)
    params = init_params(kp)
    packed = pack_params(params)

    out, attn_maps = transformer_branch_forward(x, packed)
    out = jax.block_until_ready(out)

    assert out.shape == (BATCH, HIDDEN)
    assert len(attn_maps) == NUM_LAYERS
    assert attn_maps[0].shape == (BATCH, SEQ_LEN, SEQ_LEN)
    assert bool(jnp.all(jnp.isfinite(out)))
    assert bool(jnp.all(jnp.isfinite(attn_maps[0])))
    print("KERNEL_OK")
</pallas_src>

<mosaic_0001>
module attributes {stable_mosaic.version = 11 : i64} {
  func.func @fused_branch_kernel(%arg0: i32, %arg1: memref<2x8x8xf32, #tpu.memory_space<vmem>>, %arg2: memref<8x32xf32, #tpu.memory_space<vmem>>, %arg3: memref<1x32xf32, #tpu.memory_space<vmem>>, %arg4: memref<1x8x32xf32, #tpu.memory_space<vmem>>, %arg5: memref<2x32x96xf32, #tpu.memory_space<vmem>>, %arg6: memref<2x1x96xf32, #tpu.memory_space<vmem>>, %arg7: memref<2x32x32xf32, #tpu.memory_space<vmem>>, %arg8: memref<2x1x32xf32, #tpu.memory_space<vmem>>, %arg9: memref<2x1x32xf32, #tpu.memory_space<vmem>>, %arg10: memref<2x1x32xf32, #tpu.memory_space<vmem>>, %arg11: memref<2x32x2048xbf16, #tpu.memory_space<vmem>>, %arg12: memref<2x1x2048xf32, #tpu.memory_space<vmem>>, %arg13: memref<2x2048x32xbf16, #tpu.memory_space<vmem>>, %arg14: memref<2x1x32xf32, #tpu.memory_space<vmem>>, %arg15: memref<2x1x32xf32, #tpu.memory_space<vmem>>, %arg16: memref<2x1x32xf32, #tpu.memory_space<vmem>>, %arg17: memref<2x32xf32, #tpu.memory_space<vmem>>, %arg18: memref<2x2x8x8xf32, #tpu.memory_space<vmem>>) attributes {dimension_semantics = [#tpu.dimension_semantics<arbitrary>], iteration_bounds = array<i64: 1>, scalar_prefetch = 0 : i64, scratch_operands = 0 : i64, tpu.core_type = #tpu.core_type<tc>, window_params = [{pipeline_mode = #tpu.pipeline_mode<synchronous>, transform_indices = @transform_0, window_bounds = array<i64: 2, 8, 8>}, {pipeline_mode = #tpu.pipeline_mode<synchronous>, transform_indices = @transform_1, window_bounds = array<i64: 8, 32>}, {pipeline_mode = #tpu.pipeline_mode<synchronous>, transform_indices = @transform_2, window_bounds = array<i64: 1, 32>}, {pipeline_mode = #tpu.pipeline_mode<synchronous>, transform_indices = @transform_3, window_bounds = array<i64: 1, 8, 32>}, {pipeline_mode = #tpu.pipeline_mode<synchronous>, transform_indices = @transform_4, window_bounds = array<i64: 2, 32, 96>}, {pipeline_mode = #tpu.pipeline_mode<synchronous>, transform_indices = @transform_5, window_bounds = array<i64: 2, 1, 96>}, {pipeline_mode = #tpu.pipeline_mode<synchronous>, transform_indices = @transform_6, window_bounds = array<i64: 2, 32, 32>}, {pipeline_mode = #tpu.pipeline_mode<synchronous>, transform_indices = @transform_7, window_bounds = array<i64: 2, 1, 32>}, {pipeline_mode = #tpu.pipeline_mode<synchronous>, transform_indices = @transform_8, window_bounds = array<i64: 2, 1, 32>}, {pipeline_mode = #tpu.pipeline_mode<synchronous>, transform_indices = @transform_9, window_bounds = array<i64: 2, 1, 32>}, {pipeline_mode = #tpu.pipeline_mode<synchronous>, transform_indices = @transform_10, window_bounds = array<i64: 2, 32, 2048>}, {pipeline_mode = #tpu.pipeline_mode<synchronous>, transform_indices = @transform_11, window_bounds = array<i64: 2, 1, 2048>}, {pipeline_mode = #tpu.pipeline_mode<synchronous>, transform_indices = @transform_12, window_bounds = array<i64: 2, 2048, 32>}, {pipeline_mode = #tpu.pipeline_mode<synchronous>, transform_indices = @transform_13, window_bounds = array<i64: 2, 1, 32>}, {pipeline_mode = #tpu.pipeline_mode<synchronous>, transform_indices = @transform_14, window_bounds = array<i64: 2, 1, 32>}, {pipeline_mode = #tpu.pipeline_mode<synchronous>, transform_indices = @transform_15, window_bounds = array<i64: 2, 1, 32>}, {pipeline_mode = #tpu.pipeline_mode<synchronous>, transform_indices = @transform_16, window_bounds = array<i64: 2, 32>}, {pipeline_mode = #tpu.pipeline_mode<synchronous>, transform_indices = @transform_17, window_bounds = array<i64: 2, 2, 8, 8>}]} {
    %c0 = arith.constant 0 : index
    %c0_0 = arith.constant 0 : index
    %c0_1 = arith.constant 0 : index
    %0 = vector.load %arg1[%c0, %c0_0, %c0_1] : memref<2x8x8xf32, #tpu.memory_space<vmem>>, vector<2x8x8xf32>
    %1 = vector.shape_cast %0 : vector<2x8x8xf32> to vector<16x8xf32>
    %c0_2 = arith.constant 0 : index
    %c0_3 = arith.constant 0 : index
    %2 = vector.load %arg2[%c0_2, %c0_3] : memref<8x32xf32, #tpu.memory_space<vmem>>, vector<8x32xf32>
    %cst = arith.constant dense<0.000000e+00> : vector<16x32xf32>
    %3 = tpu.matmul %1, %2, %cst {dimension_numbers = #tpu.dot_dimension_numbers<[1], [0], [0], [1], [0, 0, 1, 1], [], []>} : vector<16x8xf32>, vector<8x32xf32>, vector<16x32xf32> -> vector<16x32xf32>
    %c0_4 = arith.constant 0 : index
    %c0_5 = arith.constant 0 : index
    %4 = vector.load %arg3[%c0_4, %c0_5] : memref<1x32xf32, #tpu.memory_space<vmem>>, vector<1x32xf32>
    %5 = vector.broadcast %4 : vector<1x32xf32> to vector<16x32xf32>
    %6 = arith.addf %3, %5 : vector<16x32xf32>
    %7 = vector.shape_cast %6 : vector<16x32xf32> to vector<2x8x32xf32>
    %c0_6 = arith.constant 0 : index
    %c0_7 = arith.constant 0 : index
    %c0_8 = arith.constant 0 : index
    %8 = vector.load %arg4[%c0_6, %c0_7, %c0_8] : memref<1x8x32xf32, #tpu.memory_space<vmem>>, vector<1x8x32xf32>
    %9 = vector.broadcast %8 : vector<1x8x32xf32> to vector<2x8x32xf32>
    %10 = arith.addf %7, %9 : vector<2x8x32xf32>
    %11 = vector.shape_cast %10 : vector<2x8x32xf32> to vector<16x32xf32>
    %c0_9 = arith.constant 0 : index
    %c0_10 = arith.constant 0 : index
    %c0_11 = arith.constant 0 : index
    %12 = vector.load %arg5[%c0_9, %c0_10, %c0_11] : memref<2x32x96xf32, #tpu.memory_space<vmem>>, vector<1x32x96xf32>
    %13 = vector.shape_cast %12 : vector<1x32x96xf32> to vector<32x96xf32>
    %cst_12 = arith.constant dense<0.000000e+00> : vector<16x96xf32>
    %14 = tpu.matmul %11, %13, %cst_12 {dimension_numbers = #tpu.dot_dimension_numbers<[1], [0], [0], [1], [0, 0, 1, 1], [], []>} : vector<16x32xf32>, vector<32x96xf32>, vector<16x96xf32> -> vector<16x96xf32>
    %c0_13 = arith.constant 0 : index
    %c0_14 = arith.constant 0 : index
    %c0_15 = arith.constant 0 : index
    %15 = vector.load %arg6[%c0_13, %c0_14, %c0_15] : memref<2x1x96xf32, #tpu.memory_space<vmem>>, vector<1x1x96xf32>
    %16 = vector.shape_cast %15 : vector<1x1x96xf32> to vector<1x96xf32>
    %17 = vector.broadcast %16 : vector<1x96xf32> to vector<16x96xf32>
    %18 = arith.addf %14, %17 : vector<16x96xf32>
    %19 = vector.extract_strided_slice %18 {offsets = [0, 0], sizes = [16, 32], strides = [1, 1]} : vector<16x96xf32> to vector<16x32xf32>
    %cst_16 = arith.constant 0.353553385 : f32
    %20 = vector.broadcast %cst_16 : f32 to vector<16x32xf32>
    %21 = arith.mulf %19, %20 : vector<16x32xf32>
    %22 = vector.shape_cast %21 : vector<16x32xf32> to vector<2x8x32xf32>
    %23 = vector.extract_strided_slice %18 {offsets = [0, 32], sizes = [16, 32], strides = [1, 1]} : vector<16x96xf32> to vector<16x32xf32>
    %24 = vector.shape_cast %23 : vector<16x32xf32> to vector<2x8x32xf32>
    %25 = vector.extract_strided_slice %18 {offsets = [0, 64], sizes = [16, 32], strides = [1, 1]} : vector<16x96xf32> to vector<16x32xf32>
    %26 = vector.shape_cast %25 : vector<16x32xf32> to vector<2x8x32xf32>
    %cst_17 = arith.constant 0.000000e+00 : f32
    %27 = vector.broadcast %cst_17 : f32 to vector<2x8x8xf32>
    %28 = vector.extract_strided_slice %22 {offsets = [0, 0, 0], sizes = [2, 8, 8], strides = [1, 1, 1]} : vector<2x8x32xf32> to vector<2x8x8xf32>
    %29 = vector.extract_strided_slice %24 {offsets = [0, 0, 0], sizes = [2, 8, 8], strides = [1, 1, 1]} : vector<2x8x32xf32> to vector<2x8x8xf32>
    %30 = vector.extract_strided_slice %26 {offsets = [0, 0, 0], sizes = [2, 8, 8], strides = [1, 1, 1]} : vector<2x8x32xf32> to vector<2x8x8xf32>
    "tpu.trace_start"() <{level = 10 : i32, message = "bqd,bkd->bqk"}> : () -> ()
    %cst_18 = arith.constant dense<0.000000e+00> : vector<2x8x8xf32>
    %31 = tpu.matmul %28, %29, %cst_18 {dimension_numbers = #tpu.dot_dimension_numbers<[2], [2], [1], [1], [0, 0, 0, 1, 1, 1], [0], [0]>} : vector<2x8x8xf32>, vector<2x8x8xf32>, vector<2x8x8xf32> -> vector<2x8x8xf32>
    "tpu.trace_stop"() : () -> ()
    %cst_19 = arith.constant dense<0xFF800000> : vector<2x8xf32>
    %32 = vector.multi_reduction <maximumf>, %31, %cst_19 [2] : vector<2x8x8xf32> to vector<2x8xf32>
    %33 = vector.shape_cast %32 : vector<2x8xf32> to vector<2x8x1xf32>
    %34 = vector.broadcast %33 : vector<2x8x1xf32> to vector<2x8x8xf32>
    %35 = arith.subf %31, %34 : vector<2x8x8xf32>
    %36 = math.exp %35 : vector<2x8x8xf32>
    %cst_20 = arith.constant dense<0.000000e+00> : vector<2x8xf32>
    %37 = vector.multi_reduction <add>, %36, %cst_20 [2] : vector<2x8x8xf32> to vector<2x8xf32>
    %38 = vector.shape_cast %37 : vector<2x8xf32> to vector<2x8x1xf32>
    %39 = tpu.reciprocal %38 {approx = true} : vector<2x8x1xf32> -> vector<2x8x1xf32>
    %40 = vector.broadcast %39 : vector<2x8x1xf32> to vector<2x8x8xf32>
    %41 = arith.mulf %36, %40 : vector<2x8x8xf32>
    %42 = arith.addf %27, %41 : vector<2x8x8xf32>
    "tpu.trace_start"() <{level = 10 : i32, message = "bqk,bkd->bqd"}> : () -> ()
    %cst_21 = arith.constant dense<0.000000e+00> : vector<2x8x8xf32>
    %43 = tpu.matmul %41, %30, %cst_21 {dimension_numbers = #tpu.dot_dimension_numbers<[2], [1], [1], [2], [0, 0, 0, 1, 1, 2], [0], [0]>} : vector<2x8x8xf32>, vector<2x8x8xf32>, vector<2x8x8xf32> -> vector<2x8x8xf32>
    "tpu.trace_stop"() : () -> ()
    %44 = vector.extract_strided_slice %22 {offsets = [0, 0, 8], sizes = [2, 8, 8], strides = [1, 1, 1]} : vector<2x8x32xf32> to vector<2x8x8xf32>
    %45 = vector.extract_strided_slice %24 {offsets = [0, 0, 8], sizes = [2, 8, 8], strides = [1, 1, 1]} : vector<2x8x32xf32> to vector<2x8x8xf32>
    %46 = vector.extract_strided_slice %26 {offsets = [0, 0, 8], sizes = [2, 8, 8], strides = [1, 1, 1]} : vector<2x8x32xf32> to vector<2x8x8xf32>
    "tpu.trace_start"() <{level = 10 : i32, message = "bqd,bkd->bqk"}> : () -> ()
    %cst_22 = arith.constant dense<0.000000e+00> : vector<2x8x8xf32>
    %47 = tpu.matmul %44, %45, %cst_22 {dimension_numbers = #tpu.dot_dimension_numbers<[2], [2], [1], [1], [0, 0, 0, 1, 1, 1], [0], [0]>} : vector<2x8x8xf32>, vector<2x8x8xf32>, vector<2x8x8xf32> -> vector<2x8x8xf32>
    "tpu.trace_stop"() : () -> ()
    %cst_23 = arith.constant dense<0xFF800000> : vector<2x8xf32>
    %48 = vector.multi_reduction <maximumf>, %47, %cst_23 [2] : vector<2x8x8xf32> to vector<2x8xf32>
    %49 = vector.shape_cast %48 : vector<2x8xf32> to vector<2x8x1xf32>
    %50 = vector.broadcast %49 : vector<2x8x1xf32> to vector<2x8x8xf32>
    %51 = arith.subf %47, %50 : vector<2x8x8xf32>
    %52 = math.exp %51 : vector<2x8x8xf32>
    %cst_24 = arith.constant dense<0.000000e+00> : vector<2x8xf32>
    %53 = vector.multi_reduction <add>, %52, %cst_24 [2] : vector<2x8x8xf32> to vector<2x8xf32>
    %54 = vector.shape_cast %53 : vector<2x8xf32> to vector<2x8x1xf32>
    %55 = tpu.reciprocal %54 {approx = true} : vector<2x8x1xf32> -> vector<2x8x1xf32>
    %56 = vector.broadcast %55 : vector<2x8x1xf32> to vector<2x8x8xf32>
    %57 = arith.mulf %52, %56 : vector<2x8x8xf32>
    %58 = arith.addf %42, %57 : vector<2x8x8xf32>
    "tpu.trace_start"() <{level = 10 : i32, message = "bqk,bkd->bqd"}> : () -> ()
    %cst_25 = arith.constant dense<0.000000e+00> : vector<2x8x8xf32>
    %59 = tpu.matmul %57, %46, %cst_25 {dimension_numbers = #tpu.dot_dimension_numbers<[2], [1], [1], [2], [0, 0, 0, 1, 1, 2], [0], [0]>} : vector<2x8x8xf32>, vector<2x8x8xf32>, vector<2x8x8xf32> -> vector<2x8x8xf32>
    "tpu.trace_stop"() : () -> ()
    %60 = vector.extract_strided_slice %22 {offsets = [0, 0, 16], sizes = [2, 8, 8], strides = [1, 1, 1]} : vector<2x8x32xf32> to vector<2x8x8xf32>
    %61 = vector.extract_strided_slice %24 {offsets = [0, 0, 16], sizes = [2, 8, 8], strides = [1, 1, 1]} : vector<2x8x32xf32> to vector<2x8x8xf32>
    %62 = vector.extract_strided_slice %26 {offsets = [0, 0, 16], sizes = [2, 8, 8], strides = [1, 1, 1]} : vector<2x8x32xf32> to vector<2x8x8xf32>
    "tpu.trace_start"() <{level = 10 : i32, message = "bqd,bkd->bqk"}> : () -> ()
    %cst_26 = arith.constant dense<0.000000e+00> : vector<2x8x8xf32>
    %63 = tpu.matmul %60, %61, %cst_26 {dimension_numbers = #tpu.dot_dimension_numbers<[2], [2], [1], [1], [0, 0, 0, 1, 1, 1], [0], [0]>} : vector<2x8x8xf32>, vector<2x8x8xf32>, vector<2x8x8xf32> -> vector<2x8x8xf32>
    "tpu.trace_stop"() : () -> ()
    %cst_27 = arith.constant dense<0xFF800000> : vector<2x8xf32>
    %64 = vector.multi_reduction <maximumf>, %63, %cst_27 [2] : vector<2x8x8xf32> to vector<2x8xf32>
    %65 = vector.shape_cast %64 : vector<2x8xf32> to vector<2x8x1xf32>
    %66 = vector.broadcast %65 : vector<2x8x1xf32> to vector<2x8x8xf32>
    %67 = arith.subf %63, %66 : vector<2x8x8xf32>
    %68 = math.exp %67 : vector<2x8x8xf32>
    %cst_28 = arith.constant dense<0.000000e+00> : vector<2x8xf32>
    %69 = vector.multi_reduction <add>, %68, %cst_28 [2] : vector<2x8x8xf32> to vector<2x8xf32>
    %70 = vector.shape_cast %69 : vector<2x8xf32> to vector<2x8x1xf32>
    %71 = tpu.reciprocal %70 {approx = true} : vector<2x8x1xf32> -> vector<2x8x1xf32>
    %72 = vector.broadcast %71 : vector<2x8x1xf32> to vector<2x8x8xf32>
    %73 = arith.mulf %68, %72 : vector<2x8x8xf32>
    %74 = arith.addf %58, %73 : vector<2x8x8xf32>
    "tpu.trace_start"() <{level = 10 : i32, message = "bqk,bkd->bqd"}> : () -> ()
    %cst_29 = arith.constant dense<0.000000e+00> : vector<2x8x8xf32>
    %75 = tpu.matmul %73, %62, %cst_29 {dimension_numbers = #tpu.dot_dimension_numbers<[2], [1], [1], [2], [0, 0, 0, 1, 1, 2], [0], [0]>} : vector<2x8x8xf32>, vector<2x8x8xf32>, vector<2x8x8xf32> -> vector<2x8x8xf32>
    "tpu.trace_stop"() : () -> ()
    %76 = vector.extract_strided_slice %22 {offsets = [0, 0, 24], sizes = [2, 8, 8], strides = [1, 1, 1]} : vector<2x8x32xf32> to vector<2x8x8xf32>
    %77 = vector.extract_strided_slice %24 {offsets = [0, 0, 24], sizes = [2, 8, 8], strides = [1, 1, 1]} : vector<2x8x32xf32> to vector<2x8x8xf32>
    %78 = vector.extract_strided_slice %26 {offsets = [0, 0, 24], sizes = [2, 8, 8], strides = [1, 1, 1]} : vector<2x8x32xf32> to vector<2x8x8xf32>
    "tpu.trace_start"() <{level = 10 : i32, message = "bqd,bkd->bqk"}> : () -> ()
    %cst_30 = arith.constant dense<0.000000e+00> : vector<2x8x8xf32>
    %79 = tpu.matmul %76, %77, %cst_30 {dimension_numbers = #tpu.dot_dimension_numbers<[2], [2], [1], [1], [0, 0, 0, 1, 1, 1], [0], [0]>} : vector<2x8x8xf32>, vector<2x8x8xf32>, vector<2x8x8xf32> -> vector<2x8x8xf32>
    "tpu.trace_stop"() : () -> ()
    %cst_31 = arith.constant dense<0xFF800000> : vector<2x8xf32>
    %80 = vector.multi_reduction <maximumf>, %79, %cst_31 [2] : vector<2x8x8xf32> to vector<2x8xf32>
    %81 = vector.shape_cast %80 : vector<2x8xf32> to vector<2x8x1xf32>
    %82 = vector.broadcast %81 : vector<2x8x1xf32> to vector<2x8x8xf32>
    %83 = arith.subf %79, %82 : vector<2x8x8xf32>
    %84 = math.exp %83 : vector<2x8x8xf32>
    %cst_32 = arith.constant dense<0.000000e+00> : vector<2x8xf32>
    %85 = vector.multi_reduction <add>, %84, %cst_32 [2] : vector<2x8x8xf32> to vector<2x8xf32>
    %86 = vector.shape_cast %85 : vector<2x8xf32> to vector<2x8x1xf32>
    %87 = tpu.reciprocal %86 {approx = true} : vector<2x8x1xf32> -> vector<2x8x1xf32>
    %88 = vector.broadcast %87 : vector<2x8x1xf32> to vector<2x8x8xf32>
    %89 = arith.mulf %84, %88 : vector<2x8x8xf32>
    %90 = arith.addf %74, %89 : vector<2x8x8xf32>
    "tpu.trace_start"() <{level = 10 : i32, message = "bqk,bkd->bqd"}> : () -> ()
    %cst_33 = arith.constant dense<0.000000e+00> : vector<2x8x8xf32>
    %91 = tpu.matmul %89, %78, %cst_33 {dimension_numbers = #tpu.dot_dimension_numbers<[2], [1], [1], [2], [0, 0, 0, 1, 1, 2], [0], [0]>} : vector<2x8x8xf32>, vector<2x8x8xf32>, vector<2x8x8xf32> -> vector<2x8x8xf32>
    "tpu.trace_stop"() : () -> ()
    %cst_34 = arith.constant 2.500000e-01 : f32
    %92 = vector.broadcast %cst_34 : f32 to vector<2x8x8xf32>
    %93 = arith.mulf %90, %92 : vector<2x8x8xf32>
    %c0_35 = arith.constant 0 : index
    %c0_36 = arith.constant 0 : index
    %c0_37 = arith.constant 0 : index
    %c0_38 = arith.constant 0 : index
    %94 = vector.load %arg18[%c0_35, %c0_36, %c0_37, %c0_38] : memref<2x2x8x8xf32, #tpu.memory_space<vmem>>, vector<1x2x8x8xf32>
    %95 = vector.shape_cast %94 : vector<1x2x8x8xf32> to vector<2x8x8xf32>
    %96 = vector.shape_cast %93 : vector<2x8x8xf32> to vector<1x2x8x8xf32>
    tpu.vector_store %arg18[%c0_35, %c0_36, %c0_37, %c0_38], %96 {strides = array<i32>} : memref<2x2x8x8xf32, #tpu.memory_space<vmem>>, vector<1x2x8x8xf32>,
    %97 = tpu.concatenate %43, %59, %75, %91 in 2 : vector<2x8x8xf32>, vector<2x8x8xf32>, vector<2x8x8xf32>, vector<2x8x8xf32> -> vector<2x8x32xf32>
    %98 = vector.shape_cast %97 : vector<2x8x32xf32> to vector<16x32xf32>
    %c0_39 = arith.constant 0 : index
    %c0_40 = arith.constant 0 : index
    %c0_41 = arith.constant 0 : index
    %99 = vector.load %arg7[%c0_39, %c0_40, %c0_41] : memref<2x32x32xf32, #tpu.memory_space<vmem>>, vector<1x32x32xf32>
    %100 = vector.shape_cast %99 : vector<1x32x32xf32> to vector<32x32xf32>
    %cst_42 = arith.constant dense<0.000000e+00> : vector<16x32xf32>
    %101 = tpu.matmul %98, %100, %cst_42 {dimension_numbers = #tpu.dot_dimension_numbers<[1], [0], [0], [1], [0, 0, 1, 1], [], []>} : vector<16x32xf32>, vector<32x32xf32>, vector<16x32xf32> -> vector<16x32xf32>
    %c0_43 = arith.constant 0 : index
    %c0_44 = arith.constant 0 : index
    %c0_45 = arith.constant 0 : index
    %102 = vector.load %arg8[%c0_43, %c0_44, %c0_45] : memref<2x1x32xf32, #tpu.memory_space<vmem>>, vector<1x1x32xf32>
    %103 = vector.shape_cast %102 : vector<1x1x32xf32> to vector<1x32xf32>
    %104 = vector.broadcast %103 : vector<1x32xf32> to vector<16x32xf32>
    %105 = arith.addf %101, %104 : vector<16x32xf32>
    %106 = arith.addf %11, %105 : vector<16x32xf32>
    %c0_46 = arith.constant 0 : index
    %c0_47 = arith.constant 0 : index
    %c0_48 = arith.constant 0 : index
    %107 = vector.load %arg9[%c0_46, %c0_47, %c0_48] : memref<2x1x32xf32, #tpu.memory_space<vmem>>, vector<1x1x32xf32>
    %108 = vector.shape_cast %107 : vector<1x1x32xf32> to vector<1x32xf32>
    %c0_49 = arith.constant 0 : index
    %c0_50 = arith.constant 0 : index
    %c0_51 = arith.constant 0 : index
    %109 = vector.load %arg10[%c0_49, %c0_50, %c0_51] : memref<2x1x32xf32, #tpu.memory_space<vmem>>, vector<1x1x32xf32>
    %110 = vector.shape_cast %109 : vector<1x1x32xf32> to vector<1x32xf32>
    %cst_52 = arith.constant dense<0.000000e+00> : vector<16xf32>
    %111 = vector.multi_reduction <add>, %106, %cst_52 [1] : vector<16x32xf32> to vector<16xf32>
    %112 = vector.shape_cast %111 : vector<16xf32> to vector<16x1xf32>
    %cst_53 = arith.constant 3.200000e+01 : f32
    %113 = vector.broadcast %cst_53 : f32 to vector<16x1xf32>
    %114 = arith.divf %112, %113 : vector<16x1xf32>
    %115 = vector.broadcast %114 : vector<16x1xf32> to vector<16x32xf32>
    %116 = arith.subf %106, %115 : vector<16x32xf32>
    %117 = arith.mulf %116, %116 : vector<16x32xf32>
    %cst_54 = arith.constant dense<0.000000e+00> : vector<16xf32>
    %118 = vector.multi_reduction <add>, %117, %cst_54 [1] : vector<16x32xf32> to vector<16xf32>
    %119 = vector.shape_cast %118 : vector<16xf32> to vector<16x1xf32>
    %cst_55 = arith.constant 3.200000e+01 : f32
    %120 = vector.broadcast %cst_55 : f32 to vector<16x1xf32>
    %121 = arith.divf %119, %120 : vector<16x1xf32>
    %122 = vector.broadcast %114 : vector<16x1xf32> to vector<16x32xf32>
    %123 = arith.subf %106, %122 : vector<16x32xf32>
    %cst_56 = arith.constant 9.99999974E-6 : f32
    %124 = vector.broadcast %cst_56 : f32 to vector<16x1xf32>
    %125 = arith.addf %121, %124 : vector<16x1xf32>
    %126 = math.rsqrt %125 : vector<16x1xf32>
    %127 = vector.broadcast %126 : vector<16x1xf32> to vector<16x32xf32>
    %128 = arith.mulf %123, %127 : vector<16x32xf32>
    %129 = vector.broadcast %108 : vector<1x32xf32> to vector<16x32xf32>
    %130 = arith.mulf %128, %129 : vector<16x32xf32>
    %131 = vector.broadcast %110 : vector<1x32xf32> to vector<16x32xf32>
    %132 = arith.addf %130, %131 : vector<16x32xf32>
    %133 = arith.truncf %132 : vector<16x32xf32> to vector<16x32xbf16>
    %cst_57 = arith.constant 0.000000e+00 : f32
    %134 = vector.broadcast %cst_57 : f32 to vector<16x32xf32>
    %c0_58 = arith.constant 0 : index
    %c0_59 = arith.constant 0 : index
    %c0_60 = arith.constant 0 : index
    %135 = vector.load %arg11[%c0_58, %c0_59, %c0_60] : memref<2x32x2048xbf16, #tpu.memory_space<vmem>>, vector<1x32x512xbf16>
    %136 = vector.shape_cast %135 : vector<1x32x512xbf16> to vector<32x512xbf16>
    %cst_61 = arith.constant dense<0.000000e+00> : vector<16x512xf32>
    %137 = tpu.matmul %133, %136, %cst_61 {dimension_numbers = #tpu.dot_dimension_numbers<[1], [0], [0], [1], [0, 0, 1, 1], [], []>} : vector<16x32xbf16>, vector<32x512xbf16>, vector<16x512xf32> -> vector<16x512xf32>
    %c0_62 = arith.constant 0 : index
    %c0_63 = arith.constant 0 : index
    %c0_64 = arith.constant 0 : index
    %138 = vector.load %arg12[%c0_62, %c0_63, %c0_64] : memref<2x1x2048xf32, #tpu.memory_space<vmem>>, vector<1x1x512xf32>
    %139 = vector.shape_cast %138 : vector<1x1x512xf32> to vector<1x512xf32>
    %140 = vector.broadcast %139 : vector<1x512xf32> to vector<16x512xf32>
    %141 = arith.addf %137, %140 : vector<16x512xf32>
    %cst_65 = arith.constant 0.000000e+00 : f32
    %142 = vector.broadcast %cst_65 : f32 to vector<16x512xf32>
    %143 = arith.maximumf %141, %142 : vector<16x512xf32>
    %144 = arith.truncf %143 : vector<16x512xf32> to vector<16x512xbf16>
    %c0_66 = arith.constant 0 : index
    %c0_67 = arith.constant 0 : index
    %c0_68 = arith.constant 0 : index
    %145 = vector.load %arg13[%c0_66, %c0_67, %c0_68] : memref<2x2048x32xbf16, #tpu.memory_space<vmem>>, vector<1x512x32xbf16>
    %146 = vector.shape_cast %145 : vector<1x512x32xbf16> to vector<512x32xbf16>
    %cst_69 = arith.constant dense<0.000000e+00> : vector<16x32xf32>
    %147 = tpu.matmul %144, %146, %cst_69 {dimension_numbers = #tpu.dot_dimension_numbers<[1], [0], [0], [1], [0, 0, 1, 1], [], []>} : vector<16x512xbf16>, vector<512x32xbf16>, vector<16x32xf32> -> vector<16x32xf32>
    %148 = arith.addf %134, %147 : vector<16x32xf32>
    %c0_70 = arith.constant 0 : index
    %c0_71 = arith.constant 0 : index
    %c512 = arith.constant 512 : index
    %149 = vector.load %arg11[%c0_70, %c0_71, %c512] : memref<2x32x2048xbf16, #tpu.memory_space<vmem>>, vector<1x32x512xbf16>
    %150 = vector.shape_cast %149 : vector<1x32x512xbf16> to vector<32x512xbf16>
    %cst_72 = arith.constant dense<0.000000e+00> : vector<16x512xf32>
    %151 = tpu.matmul %133, %150, %cst_72 {dimension_numbers = #tpu.dot_dimension_numbers<[1], [0], [0], [1], [0, 0, 1, 1], [], []>} : vector<16x32xbf16>, vector<32x512xbf16>, vector<16x512xf32> -> vector<16x512xf32>
    %c0_73 = arith.constant 0 : index
    %c0_74 = arith.constant 0 : index
    %c512_75 = arith.constant 512 : index
    %152 = vector.load %arg12[%c0_73, %c0_74, %c512_75] : memref<2x1x2048xf32, #tpu.memory_space<vmem>>, vector<1x1x512xf32>
    %153 = vector.shape_cast %152 : vector<1x1x512xf32> to vector<1x512xf32>
    %154 = vector.broadcast %153 : vector<1x512xf32> to vector<16x512xf32>
    %155 = arith.addf %151, %154 : vector<16x512xf32>
    %cst_76 = arith.constant 0.000000e+00 : f32
    %156 = vector.broadcast %cst_76 : f32 to vector<16x512xf32>
    %157 = arith.maximumf %155, %156 : vector<16x512xf32>
    %158 = arith.truncf %157 : vector<16x512xf32> to vector<16x512xbf16>
    %c0_77 = arith.constant 0 : index
    %c512_78 = arith.constant 512 : index
    %c0_79 = arith.constant 0 : index
    %159 = vector.load %arg13[%c0_77, %c512_78, %c0_79] : memref<2x2048x32xbf16, #tpu.memory_space<vmem>>, vector<1x512x32xbf16>
    %160 = vector.shape_cast %159 : vector<1x512x32xbf16> to vector<512x32xbf16>
    %cst_80 = arith.constant dense<0.000000e+00> : vector<16x32xf32>
    %161 = tpu.matmul %158, %160, %cst_80 {dimension_numbers = #tpu.dot_dimension_numbers<[1], [0], [0], [1], [0, 0, 1, 1], [], []>} : vector<16x512xbf16>, vector<512x32xbf16>, vector<16x32xf32> -> vector<16x32xf32>
    %162 = arith.addf %148, %161 : vector<16x32xf32>
    %c0_81 = arith.constant 0 : index
    %c0_82 = arith.constant 0 : index
    %c1024 = arith.constant 1024 : index
    %163 = vector.load %arg11[%c0_81, %c0_82, %c1024] : memref<2x32x2048xbf16, #tpu.memory_space<vmem>>, vector<1x32x512xbf16>
    %164 = vector.shape_cast %163 : vector<1x32x512xbf16> to vector<32x512xbf16>
    %cst_83 = arith.constant dense<0.000000e+00> : vector<16x512xf32>
    %165 = tpu.matmul %133, %164, %cst_83 {dimension_numbers = #tpu.dot_dimension_numbers<[1], [0], [0], [1], [0, 0, 1, 1], [], []>} : vector<16x32xbf16>, vector<32x512xbf16>, vector<16x512xf32> -> vector<16x512xf32>
    %c0_84 = arith.constant 0 : index
    %c0_85 = arith.constant 0 : index
    %c1024_86 = arith.constant 1024 : index
    %166 = vector.load %arg12[%c0_84, %c0_85, %c1024_86] : memref<2x1x2048xf32, #tpu.memory_space<vmem>>, vector<1x1x512xf32>
    %167 = vector.shape_cast %166 : vector<1x1x512xf32> to vector<1x512xf32>
    %168 = vector.broadcast %167 : vector<1x512xf32> to vector<16x512xf32>
    %169 = arith.addf %165, %168 : vector<16x512xf32>
    %cst_87 = arith.constant 0.000000e+00 : f32
    %170 = vector.broadcast %cst_87 : f32 to vector<16x512xf32>
    %171 = arith.maximumf %169, %170 : vector<16x512xf32>
    %172 = arith.truncf %171 : vector<16x512xf32> to vector<16x512xbf16>
    %c0_88 = arith.constant 0 : index
    %c1024_89 = arith.constant 1024 : index
    %c0_90 = arith.constant 0 : index
    %173 = vector.load %arg13[%c0_88, %c1024_89, %c0_90] : memref<2x2048x32xbf16, #tpu.memory_space<vmem>>, vector<1x512x32xbf16>
    %174 = vector.shape_cast %173 : vector<1x512x32xbf16> to vector<512x32xbf16>
    %cst_91 = arith.constant dense<0.000000e+00> : vector<16x32xf32>
    %175 = tpu.matmul %172, %174, %cst_91 {dimension_numbers = #tpu.dot_dimension_numbers<[1], [0], [0], [1], [0, 0, 1, 1], [], []>} : vector<16x512xbf16>, vector<512x32xbf16>, vector<16x32xf32> -> vector<16x32xf32>
    %176 = arith.addf %162, %175 : vector<16x32xf32>
    %c0_92 = arith.constant 0 : index
    %c0_93 = arith.constant 0 : index
    %c1536 = arith.constant 1536 : index
    %177 = vector.load %arg11[%c0_92, %c0_93, %c1536] : memref<2x32x2048xbf16, #tpu.memory_space<vmem>>, vector<1x32x512xbf16>
    %178 = vector.shape_cast %177 : vector<1x32x512xbf16> to vector<32x512xbf16>
    %cst_94 = arith.constant dense<0.000000e+00> : vector<16x512xf32>
    %179 = tpu.matmul %133, %178, %cst_94 {dimension_numbers = #tpu.dot_dimension_numbers<[1], [0], [0], [1], [0, 0, 1, 1], [], []>} : vector<16x32xbf16>, vector<32x512xbf16>, vector<16x512xf32> -> vector<16x512xf32>
    %c0_95 = arith.constant 0 : index
    %c0_96 = arith.constant 0 : index
    %c1536_97 = arith.constant 1536 : index
    %180 = vector.load %arg12[%c0_95, %c0_96, %c1536_97] : memref<2x1x2048xf32, #tpu.memory_space<vmem>>, vector<1x1x512xf32>
    %181 = vector.shape_cast %180 : vector<1x1x512xf32> to vector<1x512xf32>
    %182 = vector.broadcast %181 : vector<1x512xf32> to vector<16x512xf32>
    %183 = arith.addf %179, %182 : vector<16x512xf32>
    %cst_98 = arith.constant 0.000000e+00 : f32
    %184 = vector.broadcast %cst_98 : f32 to vector<16x512xf32>
    %185 = arith.maximumf %183, %184 : vector<16x512xf32>
    %186 = arith.truncf %185 : vector<16x512xf32> to vector<16x512xbf16>
    %c0_99 = arith.constant 0 : index
    %c1536_100 = arith.constant 1536 : index
    %c0_101 = arith.constant 0 : index
    %187 = vector.load %arg13[%c0_99, %c1536_100, %c0_101] : memref<2x2048x32xbf16, #tpu.memory_space<vmem>>, vector<1x512x32xbf16>
    %188 = vector.shape_cast %187 : vector<1x512x32xbf16> to vector<512x32xbf16>
    %cst_102 = arith.constant dense<0.000000e+00> : vector<16x32xf32>
    %189 = tpu.matmul %186, %188, %cst_102 {dimension_numbers = #tpu.dot_dimension_numbers<[1], [0], [0], [1], [0, 0, 1, 1], [], []>} : vector<16x512xbf16>, vector<512x32xbf16>, vector<16x32xf32> -> vector<16x32xf32>
    %190 = arith.addf %176, %189 : vector<16x32xf32>
    %c0_103 = arith.constant 0 : index
    %c0_104 = arith.constant 0 : index
    %c0_105 = arith.constant 0 : index
    %191 = vector.load %arg14[%c0_103, %c0_104, %c0_105] : memref<2x1x32xf32, #tpu.memory_space<vmem>>, vector<1x1x32xf32>
    %192 = vector.shape_cast %191 : vector<1x1x32xf32> to vector<1x32xf32>
    %193 = vector.broadcast %192 : vector<1x32xf32> to vector<16x32xf32>
    %194 = arith.addf %190, %193 : vector<16x32xf32>
    %195 = arith.addf %132, %194 : vector<16x32xf32>
    %c0_106 = arith.constant 0 : index
    %c0_107 = arith.constant 0 : index
    %c0_108 = arith.constant 0 : index
    %196 = vector.load %arg15[%c0_106, %c0_107, %c0_108] : memref<2x1x32xf32, #tpu.memory_space<vmem>>, vector<1x1x32xf32>
    %197 = vector.shape_cast %196 : vector<1x1x32xf32> to vector<1x32xf32>
    %c0_109 = arith.constant 0 : index
    %c0_110 = arith.constant 0 : index
    %c0_111 = arith.constant 0 : index
    %198 = vector.load %arg16[%c0_109, %c0_110, %c0_111] : memref<2x1x32xf32, #tpu.memory_space<vmem>>, vector<1x1x32xf32>
    %199 = vector.shape_cast %198 : vector<1x1x32xf32> to vector<1x32xf32>
    %cst_112 = arith.constant dense<0.000000e+00> : vector<16xf32>
    %200 = vector.multi_reduction <add>, %195, %cst_112 [1] : vector<16x32xf32> to vector<16xf32>
    %201 = vector.shape_cast %200 : vector<16xf32> to vector<16x1xf32>
    %cst_113 = arith.constant 3.200000e+01 : f32
    %202 = vector.broadcast %cst_113 : f32 to vector<16x1xf32>
    %203 = arith.divf %201, %202 : vector<16x1xf32>
    %204 = vector.broadcast %203 : vector<16x1xf32> to vector<16x32xf32>
    %205 = arith.subf %195, %204 : vector<16x32xf32>
    %206 = arith.mulf %205, %205 : vector<16x32xf32>
    %cst_114 = arith.constant dense<0.000000e+00> : vector<16xf32>
    %207 = vector.multi_reduction <add>, %206, %cst_114 [1] : vector<16x32xf32> to vector<16xf32>
    %208 = vector.shape_cast %207 : vector<16xf32> to vector<16x1xf32>
    %cst_115 = arith.constant 3.200000e+01 : f32
    %209 = vector.broadcast %cst_115 : f32 to vector<16x1xf32>
    %210 = arith.divf %208, %209 : vector<16x1xf32>
    %211 = vector.broadcast %203 : vector<16x1xf32> to vector<16x32xf32>
    %212 = arith.subf %195, %211 : vector<16x32xf32>
    %cst_116 = arith.constant 9.99999974E-6 : f32
    %213 = vector.broadcast %cst_116 : f32 to vector<16x1xf32>
    %214 = arith.addf %210, %213 : vector<16x1xf32>
    %215 = math.rsqrt %214 : vector<16x1xf32>
    %216 = vector.broadcast %215 : vector<16x1xf32> to vector<16x32xf32>
    %217 = arith.mulf %212, %216 : vector<16x32xf32>
    %218 = vector.broadcast %197 : vector<1x32xf32> to vector<16x32xf32>
    %219 = arith.mulf %217, %218 : vector<16x32xf32>
    %220 = vector.broadcast %199 : vector<1x32xf32> to vector<16x32xf32>
    %221 = arith.addf %219, %220 : vector<16x32xf32>
    %c1 = arith.constant 1 : index
    %c0_117 = arith.constant 0 : index
    %c0_118 = arith.constant 0 : index
    %222 = vector.load %arg5[%c1, %c0_117, %c0_118] : memref<2x32x96xf32, #tpu.memory_space<vmem>>, vector<1x32x96xf32>
    %223 = vector.shape_cast %222 : vector<1x32x96xf32> to vector<32x96xf32>
    %cst_119 = arith.constant dense<0.000000e+00> : vector<16x96xf32>
    %224 = tpu.matmul %221, %223, %cst_119 {dimension_numbers = #tpu.dot_dimension_numbers<[1], [0], [0], [1], [0, 0, 1, 1], [], []>} : vector<16x32xf32>, vector<32x96xf32>, vector<16x96xf32> -> vector<16x96xf32>
    %c1_120 = arith.constant 1 : index
    %c0_121 = arith.constant 0 : index
    %c0_122 = arith.constant 0 : index
    %225 = vector.load %arg6[%c1_120, %c0_121, %c0_122] : memref<2x1x96xf32, #tpu.memory_space<vmem>>, vector<1x1x96xf32>
    %226 = vector.shape_cast %225 : vector<1x1x96xf32> to vector<1x96xf32>
    %227 = vector.broadcast %226 : vector<1x96xf32> to vector<16x96xf32>
    %228 = arith.addf %224, %227 : vector<16x96xf32>
    %229 = vector.extract_strided_slice %228 {offsets = [0, 0], sizes = [16, 32], strides = [1, 1]} : vector<16x96xf32> to vector<16x32xf32>
    %cst_123 = arith.constant 0.353553385 : f32
    %230 = vector.broadcast %cst_123 : f32 to vector<16x32xf32>
    %231 = arith.mulf %229, %230 : vector<16x32xf32>
    %232 = vector.shape_cast %231 : vector<16x32xf32> to vector<2x8x32xf32>
    %233 = vector.extract_strided_slice %228 {offsets = [0, 32], sizes = [16, 32], strides = [1, 1]} : vector<16x96xf32> to vector<16x32xf32>
    %234 = vector.shape_cast %233 : vector<16x32xf32> to vector<2x8x32xf32>
    %235 = vector.extract_strided_slice %228 {offsets = [0, 64], sizes = [16, 32], strides = [1, 1]} : vector<16x96xf32> to vector<16x32xf32>
    %236 = vector.shape_cast %235 : vector<16x32xf32> to vector<2x8x32xf32>
    %cst_124 = arith.constant 0.000000e+00 : f32
    %237 = vector.broadcast %cst_124 : f32 to vector<2x8x8xf32>
    %238 = vector.extract_strided_slice %232 {offsets = [0, 0, 0], sizes = [2, 8, 8], strides = [1, 1, 1]} : vector<2x8x32xf32> to vector<2x8x8xf32>
    %239 = vector.extract_strided_slice %234 {offsets = [0, 0, 0], sizes = [2, 8, 8], strides = [1, 1, 1]} : vector<2x8x32xf32> to vector<2x8x8xf32>
    %240 = vector.extract_strided_slice %236 {offsets = [0, 0, 0], sizes = [2, 8, 8], strides = [1, 1, 1]} : vector<2x8x32xf32> to vector<2x8x8xf32>
    "tpu.trace_start"() <{level = 10 : i32, message = "bqd,bkd->bqk"}> : () -> ()
    %cst_125 = arith.constant dense<0.000000e+00> : vector<2x8x8xf32>
    %241 = tpu.matmul %238, %239, %cst_125 {dimension_numbers = #tpu.dot_dimension_numbers<[2], [2], [1], [1], [0, 0, 0, 1, 1, 1], [0], [0]>} : vector<2x8x8xf32>, vector<2x8x8xf32>, vector<2x8x8xf32> -> vector<2x8x8xf32>
    "tpu.trace_stop"() : () -> ()
    %cst_126 = arith.constant dense<0xFF800000> : vector<2x8xf32>
    %242 = vector.multi_reduction <maximumf>, %241, %cst_126 [2] : vector<2x8x8xf32> to vector<2x8xf32>
    %243 = vector.shape_cast %242 : vector<2x8xf32> to vector<2x8x1xf32>
    %244 = vector.broadcast %243 : vector<2x8x1xf32> to vector<2x8x8xf32>
    %245 = arith.subf %241, %244 : vector<2x8x8xf32>
    %246 = math.exp %245 : vector<2x8x8xf32>
    %cst_127 = arith.constant dense<0.000000e+00> : vector<2x8xf32>
    %247 = vector.multi_reduction <add>, %246, %cst_127 [2] : vector<2x8x8xf32> to vector<2x8xf32>
    %248 = vector.shape_cast %247 : vector<2x8xf32> to vector<2x8x1xf32>
    %249 = tpu.reciprocal %248 {approx = true} : vector<2x8x1xf32> -> vector<2x8x1xf32>
    %250 = vector.broadcast %249 : vector<2x8x1xf32> to vector<2x8x8xf32>
    %251 = arith.mulf %246, %250 : vector<2x8x8xf32>
    %252 = arith.addf %237, %251 : vector<2x8x8xf32>
    "tpu.trace_start"() <{level = 10 : i32, message = "bqk,bkd->bqd"}> : () -> ()
    %cst_128 = arith.constant dense<0.000000e+00> : vector<2x8x8xf32>
    %253 = tpu.matmul %251, %240, %cst_128 {dimension_numbers = #tpu.dot_dimension_numbers<[2], [1], [1], [2], [0, 0, 0, 1, 1, 2], [0], [0]>} : vector<2x8x8xf32>, vector<2x8x8xf32>, vector<2x8x8xf32> -> vector<2x8x8xf32>
    "tpu.trace_stop"() : () -> ()
    %254 = vector.extract_strided_slice %232 {offsets = [0, 0, 8], sizes = [2, 8, 8], strides = [1, 1, 1]} : vector<2x8x32xf32> to vector<2x8x8xf32>
    %255 = vector.extract_strided_slice %234 {offsets = [0, 0, 8], sizes = [2, 8, 8], strides = [1, 1, 1]} : vector<2x8x32xf32> to vector<2x8x8xf32>
    %256 = vector.extract_strided_slice %236 {offsets = [0, 0, 8], sizes = [2, 8, 8], strides = [1, 1, 1]} : vector<2x8x32xf32> to vector<2x8x8xf32>
    "tpu.trace_start"() <{level = 10 : i32, message = "bqd,bkd->bqk"}> : () -> ()
    %cst_129 = arith.constant dense<0.000000e+00> : vector<2x8x8xf32>
    %257 = tpu.matmul %254, %255, %cst_129 {dimension_numbers = #tpu.dot_dimension_numbers<[2], [2], [1], [1], [0, 0, 0, 1, 1, 1], [0], [0]>} : vector<2x8x8xf32>, vector<2x8x8xf32>, vector<2x8x8xf32> -> vector<2x8x8xf32>
    "tpu.trace_stop"() : () -> ()
    %cst_130 = arith.constant dense<0xFF800000> : vector<2x8xf32>
    %258 = vector.multi_reduction <maximumf>, %257, %cst_130 [2] : vector<2x8x8xf32> to vector<2x8xf32>
    %259 = vector.shape_cast %258 : vector<2x8xf32> to vector<2x8x1xf32>
    %260 = vector.broadcast %259 : vector<2x8x1xf32> to vector<2x8x8xf32>
    %261 = arith.subf %257, %260 : vector<2x8x8xf32>
    %262 = math.exp %261 : vector<2x8x8xf32>
    %cst_131 = arith.constant dense<0.000000e+00> : vector<2x8xf32>
    %263 = vector.multi_reduction <add>, %262, %cst_131 [2] : vector<2x8x8xf32> to vector<2x8xf32>
    %264 = vector.shape_cast %263 : vector<2x8xf32> to vector<2x8x1xf32>
    %265 = tpu.reciprocal %264 {approx = true} : vector<2x8x1xf32> -> vector<2x8x1xf32>
    %266 = vector.broadcast %265 : vector<2x8x1xf32> to vector<2x8x8xf32>
    %267 = arith.mulf %262, %266 : vector<2x8x8xf32>
    %268 = arith.addf %252, %267 : vector<2x8x8xf32>
    "tpu.trace_start"() <{level = 10 : i32, message = "bqk,bkd->bqd"}> : () -> ()
    %cst_132 = arith.constant dense<0.000000e+00> : vector<2x8x8xf32>
    %269 = tpu.matmul %267, %256, %cst_132 {dimension_numbers = #tpu.dot_dimension_numbers<[2], [1], [1], [2], [0, 0, 0, 1, 1, 2], [0], [0]>} : vector<2x8x8xf32>, vector<2x8x8xf32>, vector<2x8x8xf32> -> vector<2x8x8xf32>
    "tpu.trace_stop"() : () -> ()
    %270 = vector.extract_strided_slice %232 {offsets = [0, 0, 16], sizes = [2, 8, 8], strides = [1, 1, 1]} : vector<2x8x32xf32> to vector<2x8x8xf32>
    %271 = vector.extract_strided_slice %234 {offsets = [0, 0, 16], sizes = [2, 8, 8], strides = [1, 1, 1]} : vector<2x8x32xf32> to vector<2x8x8xf32>
    %272 = vector.extract_strided_slice %236 {offsets = [0, 0, 16], sizes = [2, 8, 8], strides = [1, 1, 1]} : vector<2x8x32xf32> to vector<2x8x8xf32>
    "tpu.trace_start"() <{level = 10 : i32, message = "bqd,bkd->bqk"}> : () -> ()
    %cst_133 = arith.constant dense<0.000000e+00> : vector<2x8x8xf32>
    %273 = tpu.matmul %270, %271, %cst_133 {dimension_numbers = #tpu.dot_dimension_numbers<[2], [2], [1], [1], [0, 0, 0, 1, 1, 1], [0], [0]>} : vector<2x8x8xf32>, vector<2x8x8xf32>, vector<2x8x8xf32> -> vector<2x8x8xf32>
    "tpu.trace_stop"() : () -> ()
    %cst_134 = arith.constant dense<0xFF800000> : vector<2x8xf32>
    %274 = vector.multi_reduction <maximumf>, %273, %cst_134 [2] : vector<2x8x8xf32> to vector<2x8xf32>
    %275 = vector.shape_cast %274 : vector<2x8xf32> to vector<2x8x1xf32>
    %276 = vector.broadcast %275 : vector<2x8x1xf32> to vector<2x8x8xf32>
    %277 = arith.subf %273, %276 : vector<2x8x8xf32>
    %278 = math.exp %277 : vector<2x8x8xf32>
    %cst_135 = arith.constant dense<0.000000e+00> : vector<2x8xf32>
    %279 = vector.multi_reduction <add>, %278, %cst_135 [2] : vector<2x8x8xf32> to vector<2x8xf32>
    %280 = vector.shape_cast %279 : vector<2x8xf32> to vector<2x8x1xf32>
    %281 = tpu.reciprocal %280 {approx = true} : vector<2x8x1xf32> -> vector<2x8x1xf32>
    %282 = vector.broadcast %281 : vector<2x8x1xf32> to vector<2x8x8xf32>
    %283 = arith.mulf %278, %282 : vector<2x8x8xf32>
    %284 = arith.addf %268, %283 : vector<2x8x8xf32>
    "tpu.trace_start"() <{level = 10 : i32, message = "bqk,bkd->bqd"}> : () -> ()
    %cst_136 = arith.constant dense<0.000000e+00> : vector<2x8x8xf32>
    %285 = tpu.matmul %283, %272, %cst_136 {dimension_numbers = #tpu.dot_dimension_numbers<[2], [1], [1], [2], [0, 0, 0, 1, 1, 2], [0], [0]>} : vector<2x8x8xf32>, vector<2x8x8xf32>, vector<2x8x8xf32> -> vector<2x8x8xf32>
    "tpu.trace_stop"() : () -> ()
    %286 = vector.extract_strided_slice %232 {offsets = [0, 0, 24], sizes = [2, 8, 8], strides = [1, 1, 1]} : vector<2x8x32xf32> to vector<2x8x8xf32>
    %287 = vector.extract_strided_slice %234 {offsets = [0, 0, 24], sizes = [2, 8, 8], strides = [1, 1, 1]} : vector<2x8x32xf32> to vector<2x8x8xf32>
    %288 = vector.extract_strided_slice %236 {offsets = [0, 0, 24], sizes = [2, 8, 8], strides = [1, 1, 1]} : vector<2x8x32xf32> to vector<2x8x8xf32>
    "tpu.trace_start"() <{level = 10 : i32, message = "bqd,bkd->bqk"}> : () -> ()
    %cst_137 = arith.constant dense<0.000000e+00> : vector<2x8x8xf32>
    %289 = tpu.matmul %286, %287, %cst_137 {dimension_numbers = #tpu.dot_dimension_numbers<[2], [2], [1], [1], [0, 0, 0, 1, 1, 1], [0], [0]>} : vector<2x8x8xf32>, vector<2x8x8xf32>, vector<2x8x8xf32> -> vector<2x8x8xf32>
    "tpu.trace_stop"() : () -> ()
    %cst_138 = arith.constant dense<0xFF800000> : vector<2x8xf32>
    %290 = vector.multi_reduction <maximumf>, %289, %cst_138 [2] : vector<2x8x8xf32> to vector<2x8xf32>
    %291 = vector.shape_cast %290 : vector<2x8xf32> to vector<2x8x1xf32>
    %292 = vector.broadcast %291 : vector<2x8x1xf32> to vector<2x8x8xf32>
    %293 = arith.subf %289, %292 : vector<2x8x8xf32>
    %294 = math.exp %293 : vector<2x8x8xf32>
    %cst_139 = arith.constant dense<0.000000e+00> : vector<2x8xf32>
    %295 = vector.multi_reduction <add>, %294, %cst_139 [2] : vector<2x8x8xf32> to vector<2x8xf32>
    %296 = vector.shape_cast %295 : vector<2x8xf32> to vector<2x8x1xf32>
    %297 = tpu.reciprocal %296 {approx = true} : vector<2x8x1xf32> -> vector<2x8x1xf32>
    %298 = vector.broadcast %297 : vector<2x8x1xf32> to vector<2x8x8xf32>
    %299 = arith.mulf %294, %298 : vector<2x8x8xf32>
    %300 = arith.addf %284, %299 : vector<2x8x8xf32>
    "tpu.trace_start"() <{level = 10 : i32, message = "bqk,bkd->bqd"}> : () -> ()
    %cst_140 = arith.constant dense<0.000000e+00> : vector<2x8x8xf32>
    %301 = tpu.matmul %299, %288, %cst_140 {dimension_numbers = #tpu.dot_dimension_numbers<[2], [1], [1], [2], [0, 0, 0, 1, 1, 2], [0], [0]>} : vector<2x8x8xf32>, vector<2x8x8xf32>, vector<2x8x8xf32> -> vector<2x8x8xf32>
    "tpu.trace_stop"() : () -> ()
    %cst_141 = arith.constant 2.500000e-01 : f32
    %302 = vector.broadcast %cst_141 : f32 to vector<2x8x8xf32>
    %303 = arith.mulf %300, %302 : vector<2x8x8xf32>
    %c1_142 = arith.constant 1 : index
    %c0_143 = arith.constant 0 : index
    %c0_144 = arith.constant 0 : index
    %c0_145 = arith.constant 0 : index
    %304 = vector.load %arg18[%c1_142, %c0_143, %c0_144, %c0_145] : memref<2x2x8x8xf32, #tpu.memory_space<vmem>>, vector<1x2x8x8xf32>
    %305 = vector.shape_cast %304 : vector<1x2x8x8xf32> to vector<2x8x8xf32>
    %306 = vector.shape_cast %303 : vector<2x8x8xf32> to vector<1x2x8x8xf32>
    tpu.vector_store %arg18[%c1_142, %c0_143, %c0_144, %c0_145], %306 {strides = array<i32>} : memref<2x2x8x8xf32, #tpu.memory_space<vmem>>, vector<1x2x8x8xf32>,
    %307 = tpu.concatenate %253, %269, %285, %301 in 2 : vector<2x8x8xf32>, vector<2x8x8xf32>, vector<2x8x8xf32>, vector<2x8x8xf32> -> vector<2x8x32xf32>
    %308 = vector.shape_cast %307 : vector<2x8x32xf32> to vector<16x32xf32>
    %c1_146 = arith.constant 1 : index
    %c0_147 = arith.constant 0 : index
    %c0_148 = arith.constant 0 : index
    %309 = vector.load %arg7[%c1_146, %c0_147, %c0_148] : memref<2x32x32xf32, #tpu.memory_space<vmem>>, vector<1x32x32xf32>
    %310 = vector.shape_cast %309 : vector<1x32x32xf32> to vector<32x32xf32>
    %cst_149 = arith.constant dense<0.000000e+00> : vector<16x32xf32>
    %311 = tpu.matmul %308, %310, %cst_149 {dimension_numbers = #tpu.dot_dimension_numbers<[1], [0], [0], [1], [0, 0, 1, 1], [], []>} : vector<16x32xf32>, vector<32x32xf32>, vector<16x32xf32> -> vector<16x32xf32>
    %c1_150 = arith.constant 1 : index
    %c0_151 = arith.constant 0 : index
    %c0_152 = arith.constant 0 : index
    %312 = vector.load %arg8[%c1_150, %c0_151, %c0_152] : memref<2x1x32xf32, #tpu.memory_space<vmem>>, vector<1x1x32xf32>
    %313 = vector.shape_cast %312 : vector<1x1x32xf32> to vector<1x32xf32>
    %314 = vector.broadcast %313 : vector<1x32xf32> to vector<16x32xf32>
    %315 = arith.addf %311, %314 : vector<16x32xf32>
    %316 = arith.addf %221, %315 : vector<16x32xf32>
    %c1_153 = arith.constant 1 : index
    %c0_154 = arith.constant 0 : index
    %c0_155 = arith.constant 0 : index
    %317 = vector.load %arg9[%c1_153, %c0_154, %c0_155] : memref<2x1x32xf32, #tpu.memory_space<vmem>>, vector<1x1x32xf32>
    %318 = vector.shape_cast %317 : vector<1x1x32xf32> to vector<1x32xf32>
    %c1_156 = arith.constant 1 : index
    %c0_157 = arith.constant 0 : index
    %c0_158 = arith.constant 0 : index
    %319 = vector.load %arg10[%c1_156, %c0_157, %c0_158] : memref<2x1x32xf32, #tpu.memory_space<vmem>>, vector<1x1x32xf32>
    %320 = vector.shape_cast %319 : vector<1x1x32xf32> to vector<1x32xf32>
    %cst_159 = arith.constant dense<0.000000e+00> : vector<16xf32>
    %321 = vector.multi_reduction <add>, %316, %cst_159 [1] : vector<16x32xf32> to vector<16xf32>
    %322 = vector.shape_cast %321 : vector<16xf32> to vector<16x1xf32>
    %cst_160 = arith.constant 3.200000e+01 : f32
    %323 = vector.broadcast %cst_160 : f32 to vector<16x1xf32>
    %324 = arith.divf %322, %323 : vector<16x1xf32>
    %325 = vector.broadcast %324 : vector<16x1xf32> to vector<16x32xf32>
    %326 = arith.subf %316, %325 : vector<16x32xf32>
    %327 = arith.mulf %326, %326 : vector<16x32xf32>
    %cst_161 = arith.constant dense<0.000000e+00> : vector<16xf32>
    %328 = vector.multi_reduction <add>, %327, %cst_161 [1] : vector<16x32xf32> to vector<16xf32>
    %329 = vector.shape_cast %328 : vector<16xf32> to vector<16x1xf32>
    %cst_162 = arith.constant 3.200000e+01 : f32
    %330 = vector.broadcast %cst_162 : f32 to vector<16x1xf32>
    %331 = arith.divf %329, %330 : vector<16x1xf32>
    %332 = vector.broadcast %324 : vector<16x1xf32> to vector<16x32xf32>
    %333 = arith.subf %316, %332 : vector<16x32xf32>
    %cst_163 = arith.constant 9.99999974E-6 : f32
    %334 = vector.broadcast %cst_163 : f32 to vector<16x1xf32>
    %335 = arith.addf %331, %334 : vector<16x1xf32>
    %336 = math.rsqrt %335 : vector<16x1xf32>
    %337 = vector.broadcast %336 : vector<16x1xf32> to vector<16x32xf32>
    %338 = arith.mulf %333, %337 : vector<16x32xf32>
    %339 = vector.broadcast %318 : vector<1x32xf32> to vector<16x32xf32>
    %340 = arith.mulf %338, %339 : vector<16x32xf32>
    %341 = vector.broadcast %320 : vector<1x32xf32> to vector<16x32xf32>
    %342 = arith.addf %340, %341 : vector<16x32xf32>
    %343 = arith.truncf %342 : vector<16x32xf32> to vector<16x32xbf16>
    %cst_164 = arith.constant 0.000000e+00 : f32
    %344 = vector.broadcast %cst_164 : f32 to vector<16x32xf32>
    %c1_165 = arith.constant 1 : index
    %c0_166 = arith.constant 0 : index
    %c0_167 = arith.constant 0 : index
    %345 = vector.load %arg11[%c1_165, %c0_166, %c0_167] : memref<2x32x2048xbf16, #tpu.memory_space<vmem>>, vector<1x32x512xbf16>
    %346 = vector.shape_cast %345 : vector<1x32x512xbf16> to vector<32x512xbf16>
    %cst_168 = arith.constant dense<0.000000e+00> : vector<16x512xf32>
    %347 = tpu.matmul %343, %346, %cst_168 {dimension_numbers = #tpu.dot_dimension_numbers<[1], [0], [0], [1], [0, 0, 1, 1], [], []>} : vector<16x32xbf16>, vector<32x512xbf16>, vector<16x512xf32> -> vector<16x512xf32>
    %c1_169 = arith.constant 1 : index
    %c0_170 = arith.constant 0 : index
    %c0_171 = arith.constant 0 : index
    %348 = vector.load %arg12[%c1_169, %c0_170, %c0_171] : memref<2x1x2048xf32, #tpu.memory_space<vmem>>, vector<1x1x512xf32>
    %349 = vector.shape_cast %348 : vector<1x1x512xf32> to vector<1x512xf32>
    %350 = vector.broadcast %349 : vector<1x512xf32> to vector<16x512xf32>
    %351 = arith.addf %347, %350 : vector<16x512xf32>
    %cst_172 = arith.constant 0.000000e+00 : f32
    %352 = vector.broadcast %cst_172 : f32 to vector<16x512xf32>
    %353 = arith.maximumf %351, %352 : vector<16x512xf32>
    %354 = arith.truncf %353 : vector<16x512xf32> to vector<16x512xbf16>
    %c1_173 = arith.constant 1 : index
    %c0_174 = arith.constant 0 : index
    %c0_175 = arith.constant 0 : index
    %355 = vector.load %arg13[%c1_173, %c0_174, %c0_175] : memref<2x2048x32xbf16, #tpu.memory_space<vmem>>, vector<1x512x32xbf16>
    %356 = vector.shape_cast %355 : vector<1x512x32xbf16> to vector<512x32xbf16>
    %cst_176 = arith.constant dense<0.000000e+00> : vector<16x32xf32>
    %357 = tpu.matmul %354, %356, %cst_176 {dimension_numbers = #tpu.dot_dimension_numbers<[1], [0], [0], [1], [0, 0, 1, 1], [], []>} : vector<16x512xbf16>, vector<512x32xbf16>, vector<16x32xf32> -> vector<16x32xf32>
    %358 = arith.addf %344, %357 : vector<16x32xf32>
    %c1_177 = arith.constant 1 : index
    %c0_178 = arith.constant 0 : index
    %c512_179 = arith.constant 512 : index
    %359 = vector.load %arg11[%c1_177, %c0_178, %c512_179] : memref<2x32x2048xbf16, #tpu.memory_space<vmem>>, vector<1x32x512xbf16>
    %360 = vector.shape_cast %359 : vector<1x32x512xbf16> to vector<32x512xbf16>
    %cst_180 = arith.constant dense<0.000000e+00> : vector<16x512xf32>
    %361 = tpu.matmul %343, %360, %cst_180 {dimension_numbers = #tpu.dot_dimension_numbers<[1], [0], [0], [1], [0, 0, 1, 1], [], []>} : vector<16x32xbf16>, vector<32x512xbf16>, vector<16x512xf32> -> vector<16x512xf32>
    %c1_181 = arith.constant 1 : index
    %c0_182 = arith.constant 0 : index
    %c512_183 = arith.constant 512 : index
    %362 = vector.load %arg12[%c1_181, %c0_182, %c512_183] : memref<2x1x2048xf32, #tpu.memory_space<vmem>>, vector<1x1x512xf32>
    %363 = vector.shape_cast %362 : vector<1x1x512xf32> to vector<1x512xf32>
    %364 = vector.broadcast %363 : vector<1x512xf32> to vector<16x512xf32>
    %365 = arith.addf %361, %364 : vector<16x512xf32>
    %cst_184 = arith.constant 0.000000e+00 : f32
    %366 = vector.broadcast %cst_184 : f32 to vector<16x512xf32>
    %367 = arith.maximumf %365, %366 : vector<16x512xf32>
    %368 = arith.truncf %367 : vector<16x512xf32> to vector<16x512xbf16>
    %c1_185 = arith.constant 1 : index
    %c512_186 = arith.constant 512 : index
    %c0_187 = arith.constant 0 : index
    %369 = vector.load %arg13[%c1_185, %c512_186, %c0_187] : memref<2x2048x32xbf16, #tpu.memory_space<vmem>>, vector<1x512x32xbf16>
    %370 = vector.shape_cast %369 : vector<1x512x32xbf16> to vector<512x32xbf16>
    %cst_188 = arith.constant dense<0.000000e+00> : vector<16x32xf32>
    %371 = tpu.matmul %368, %370, %cst_188 {dimension_numbers = #tpu.dot_dimension_numbers<[1], [0], [0], [1], [0, 0, 1, 1], [], []>} : vector<16x512xbf16>, vector<512x32xbf16>, vector<16x32xf32> -> vector<16x32xf32>
    %372 = arith.addf %358, %371 : vector<16x32xf32>
    %c1_189 = arith.constant 1 : index
    %c0_190 = arith.constant 0 : index
    %c1024_191 = arith.constant 1024 : index
    %373 = vector.load %arg11[%c1_189, %c0_190, %c1024_191] : memref<2x32x2048xbf16, #tpu.memory_space<vmem>>, vector<1x32x512xbf16>
    %374 = vector.shape_cast %373 : vector<1x32x512xbf16> to vector<32x512xbf16>
    %cst_192 = arith.constant dense<0.000000e+00> : vector<16x512xf32>
    %375 = tpu.matmul %343, %374, %cst_192 {dimension_numbers = #tpu.dot_dimension_numbers<[1], [0], [0], [1], [0, 0, 1, 1], [], []>} : vector<16x32xbf16>, vector<32x512xbf16>, vector<16x512xf32> -> vector<16x512xf32>
    %c1_193 = arith.constant 1 : index
    %c0_194 = arith.constant 0 : index
    %c1024_195 = arith.constant 1024 : index
    %376 = vector.load %arg12[%c1_193, %c0_194, %c1024_195] : memref<2x1x2048xf32, #tpu.memory_space<vmem>>, vector<1x1x512xf32>
    %377 = vector.shape_cast %376 : vector<1x1x512xf32> to vector<1x512xf32>
    %378 = vector.broadcast %377 : vector<1x512xf32> to vector<16x512xf32>
    %379 = arith.addf %375, %378 : vector<16x512xf32>
    %cst_196 = arith.constant 0.000000e+00 : f32
    %380 = vector.broadcast %cst_196 : f32 to vector<16x512xf32>
    %381 = arith.maximumf %379, %380 : vector<16x512xf32>
    %382 = arith.truncf %381 : vector<16x512xf32> to vector<16x512xbf16>
    %c1_197 = arith.constant 1 : index
    %c1024_198 = arith.constant 1024 : index
    %c0_199 = arith.constant 0 : index
    %383 = vector.load %arg13[%c1_197, %c1024_198, %c0_199] : memref<2x2048x32xbf16, #tpu.memory_space<vmem>>, vector<1x512x32xbf16>
    %384 = vector.shape_cast %383 : vector<1x512x32xbf16> to vector<512x32xbf16>
    %cst_200 = arith.constant dense<0.000000e+00> : vector<16x32xf32>
    %385 = tpu.matmul %382, %384, %cst_200 {dimension_numbers = #tpu.dot_dimension_numbers<[1], [0], [0], [1], [0, 0, 1, 1], [], []>} : vector<16x512xbf16>, vector<512x32xbf16>, vector<16x32xf32> -> vector<16x32xf32>
    %386 = arith.addf %372, %385 : vector<16x32xf32>
    %c1_201 = arith.constant 1 : index
    %c0_202 = arith.constant 0 : index
    %c1536_203 = arith.constant 1536 : index
    %387 = vector.load %arg11[%c1_201, %c0_202, %c1536_203] : memref<2x32x2048xbf16, #tpu.memory_space<vmem>>, vector<1x32x512xbf16>
    %388 = vector.shape_cast %387 : vector<1x32x512xbf16> to vector<32x512xbf16>
    %cst_204 = arith.constant dense<0.000000e+00> : vector<16x512xf32>
    %389 = tpu.matmul %343, %388, %cst_204 {dimension_numbers = #tpu.dot_dimension_numbers<[1], [0], [0], [1], [0, 0, 1, 1], [], []>} : vector<16x32xbf16>, vector<32x512xbf16>, vector<16x512xf32> -> vector<16x512xf32>
    %c1_205 = arith.constant 1 : index
    %c0_206 = arith.constant 0 : index
    %c1536_207 = arith.constant 1536 : index
    %390 = vector.load %arg12[%c1_205, %c0_206, %c1536_207] : memref<2x1x2048xf32, #tpu.memory_space<vmem>>, vector<1x1x512xf32>
    %391 = vector.shape_cast %390 : vector<1x1x512xf32> to vector<1x512xf32>
    %392 = vector.broadcast %391 : vector<1x512xf32> to vector<16x512xf32>
    %393 = arith.addf %389, %392 : vector<16x512xf32>
    %cst_208 = arith.constant 0.000000e+00 : f32
    %394 = vector.broadcast %cst_208 : f32 to vector<16x512xf32>
    %395 = arith.maximumf %393, %394 : vector<16x512xf32>
    %396 = arith.truncf %395 : vector<16x512xf32> to vector<16x512xbf16>
    %c1_209 = arith.constant 1 : index
    %c1536_210 = arith.constant 1536 : index
    %c0_211 = arith.constant 0 : index
    %397 = vector.load %arg13[%c1_209, %c1536_210, %c0_211] : memref<2x2048x32xbf16, #tpu.memory_space<vmem>>, vector<1x512x32xbf16>
    %398 = vector.shape_cast %397 : vector<1x512x32xbf16> to vector<512x32xbf16>
    %cst_212 = arith.constant dense<0.000000e+00> : vector<16x32xf32>
    %399 = tpu.matmul %396, %398, %cst_212 {dimension_numbers = #tpu.dot_dimension_numbers<[1], [0], [0], [1], [0, 0, 1, 1], [], []>} : vector<16x512xbf16>, vector<512x32xbf16>, vector<16x32xf32> -> vector<16x32xf32>
    %400 = arith.addf %386, %399 : vector<16x32xf32>
    %c1_213 = arith.constant 1 : index
    %c0_214 = arith.constant 0 : index
    %c0_215 = arith.constant 0 : index
    %401 = vector.load %arg14[%c1_213, %c0_214, %c0_215] : memref<2x1x32xf32, #tpu.memory_space<vmem>>, vector<1x1x32xf32>
    %402 = vector.shape_cast %401 : vector<1x1x32xf32> to vector<1x32xf32>
    %403 = vector.broadcast %402 : vector<1x32xf32> to vector<16x32xf32>
    %404 = arith.addf %400, %403 : vector<16x32xf32>
    %405 = arith.addf %342, %404 : vector<16x32xf32>
    %c1_216 = arith.constant 1 : index
    %c0_217 = arith.constant 0 : index
    %c0_218 = arith.constant 0 : index
    %406 = vector.load %arg15[%c1_216, %c0_217, %c0_218] : memref<2x1x32xf32, #tpu.memory_space<vmem>>, vector<1x1x32xf32>
    %407 = vector.shape_cast %406 : vector<1x1x32xf32> to vector<1x32xf32>
    %c1_219 = arith.constant 1 : index
    %c0_220 = arith.constant 0 : index
    %c0_221 = arith.constant 0 : index
    %408 = vector.load %arg16[%c1_219, %c0_220, %c0_221] : memref<2x1x32xf32, #tpu.memory_space<vmem>>, vector<1x1x32xf32>
    %409 = vector.shape_cast %408 : vector<1x1x32xf32> to vector<1x32xf32>
    %cst_222 = arith.constant dense<0.000000e+00> : vector<16xf32>
    %410 = vector.multi_reduction <add>, %405, %cst_222 [1] : vector<16x32xf32> to vector<16xf32>
    %411 = vector.shape_cast %410 : vector<16xf32> to vector<16x1xf32>
    %cst_223 = arith.constant 3.200000e+01 : f32
    %412 = vector.broadcast %cst_223 : f32 to vector<16x1xf32>
    %413 = arith.divf %411, %412 : vector<16x1xf32>
    %414 = vector.broadcast %413 : vector<16x1xf32> to vector<16x32xf32>
    %415 = arith.subf %405, %414 : vector<16x32xf32>
    %416 = arith.mulf %415, %415 : vector<16x32xf32>
    %cst_224 = arith.constant dense<0.000000e+00> : vector<16xf32>
    %417 = vector.multi_reduction <add>, %416, %cst_224 [1] : vector<16x32xf32> to vector<16xf32>
    %418 = vector.shape_cast %417 : vector<16xf32> to vector<16x1xf32>
    %cst_225 = arith.constant 3.200000e+01 : f32
    %419 = vector.broadcast %cst_225 : f32 to vector<16x1xf32>
    %420 = arith.divf %418, %419 : vector<16x1xf32>
    %421 = vector.broadcast %413 : vector<16x1xf32> to vector<16x32xf32>
    %422 = arith.subf %405, %421 : vector<16x32xf32>
    %cst_226 = arith.constant 9.99999974E-6 : f32
    %423 = vector.broadcast %cst_226 : f32 to vector<16x1xf32>
    %424 = arith.addf %420, %423 : vector<16x1xf32>
    %425 = math.rsqrt %424 : vector<16x1xf32>
    %426 = vector.broadcast %425 : vector<16x1xf32> to vector<16x32xf32>
    %427 = arith.mulf %422, %426 : vector<16x32xf32>
    %428 = vector.broadcast %407 : vector<1x32xf32> to vector<16x32xf32>
    %429 = arith.mulf %427, %428 : vector<16x32xf32>
    %430 = vector.broadcast %409 : vector<1x32xf32> to vector<16x32xf32>
    %431 = arith.addf %429, %430 : vector<16x32xf32>
    %432 = vector.shape_cast %431 : vector<16x32xf32> to vector<2x8x32xf32>
    %cst_227 = arith.constant dense<0.000000e+00> : vector<2x32xf32>
    %433 = vector.multi_reduction <add>, %432, %cst_227 [1] : vector<2x8x32xf32> to vector<2x32xf32>
    %cst_228 = arith.constant 8.000000e+00 : f32
    %434 = vector.broadcast %cst_228 : f32 to vector<2x32xf32>
    %435 = arith.divf %433, %434 : vector<2x32xf32>
    %c0_229 = arith.constant 0 : index
    %c0_230 = arith.constant 0 : index
    %436 = vector.load %arg17[%c0_229, %c0_230] : memref<2x32xf32, #tpu.memory_space<vmem>>, vector<2x32xf32>
    tpu.vector_store %arg17[%c0_229, %c0_230], %435 {strides = array<i32>} : memref<2x32xf32, #tpu.memory_space<vmem>>, vector<2x32xf32>,
    return
  }
  func.func @transform_0(%arg0: i32) -> (i32, i32, i32) {
    %c0_i32 = arith.constant 0 : i32
    %c0_i32_0 = arith.constant 0 : i32
    %c0_i32_1 = arith.constant 0 : i32
    %c0_i32_2 = arith.constant 0 : i32
    return %c0_i32, %c0_i32_0, %c0_i32_1 : i32, i32, i32
  }
  func.func @transform_1(%arg0: i32) -> (i32, i32) {
    %c0_i32 = arith.constant 0 : i32
    %c0_i32_0 = arith.constant 0 : i32
    %c0_i32_1 = arith.constant 0 : i32
    return %c0_i32, %c0_i32_0 : i32, i32
  }
  func.func @transform_2(%arg0: i32) -> (i32, i32) {
    %c0_i32 = arith.constant 0 : i32
    %c0_i32_0 = arith.constant 0 : i32
    %c0_i32_1 = arith.constant 0 : i32
    return %c0_i32, %c0_i32_0 : i32, i32
  }
  func.func @transform_3(%arg0: i32) -> (i32, i32, i32) {
    %c0_i32 = arith.constant 0 : i32
    %c0_i32_0 = arith.constant 0 : i32
    %c0_i32_1 = arith.constant 0 : i32
    %c0_i32_2 = arith.constant 0 : i32
    return %c0_i32, %c0_i32_0, %c0_i32_1 : i32, i32, i32
  }
  func.func @transform_4(%arg0: i32) -> (i32, i32, i32) {
    %c0_i32 = arith.constant 0 : i32
    %c0_i32_0 = arith.constant 0 : i32
    %c0_i32_1 = arith.constant 0 : i32
    %c0_i32_2 = arith.constant 0 : i32
    return %c0_i32, %c0_i32_0, %c0_i32_1 : i32, i32, i32
  }
  func.func @transform_5(%arg0: i32) -> (i32, i32, i32) {
    %c0_i32 = arith.constant 0 : i32
    %c0_i32_0 = arith.constant 0 : i32
    %c0_i32_1 = arith.constant 0 : i32
    %c0_i32_2 = arith.constant 0 : i32
    return %c0_i32, %c0_i32_0, %c0_i32_1 : i32, i32, i32
  }
  func.func @transform_6(%arg0: i32) -> (i32, i32, i32) {
    %c0_i32 = arith.constant 0 : i32
    %c0_i32_0 = arith.constant 0 : i32
    %c0_i32_1 = arith.constant 0 : i32
    %c0_i32_2 = arith.constant 0 : i32
    return %c0_i32, %c0_i32_0, %c0_i32_1 : i32, i32, i32
  }
  func.func @transform_7(%arg0: i32) -> (i32, i32, i32) {
    %c0_i32 = arith.constant 0 : i32
    %c0_i32_0 = arith.constant 0 : i32
    %c0_i32_1 = arith.constant 0 : i32
    %c0_i32_2 = arith.constant 0 : i32
    return %c0_i32, %c0_i32_0, %c0_i32_1 : i32, i32, i32
  }
  func.func @transform_8(%arg0: i32) -> (i32, i32, i32) {
    %c0_i32 = arith.constant 0 : i32
    %c0_i32_0 = arith.constant 0 : i32
    %c0_i32_1 = arith.constant 0 : i32
    %c0_i32_2 = arith.constant 0 : i32
    return %c0_i32, %c0_i32_0, %c0_i32_1 : i32, i32, i32
  }
  func.func @transform_9(%arg0: i32) -> (i32, i32, i32) {
    %c0_i32 = arith.constant 0 : i32
    %c0_i32_0 = arith.constant 0 : i32
    %c0_i32_1 = arith.constant 0 : i32
    %c0_i32_2 = arith.constant 0 : i32
    return %c0_i32, %c0_i32_0, %c0_i32_1 : i32, i32, i32
  }
  func.func @transform_10(%arg0: i32) -> (i32, i32, i32) {
    %c0_i32 = arith.constant 0 : i32
    %c0_i32_0 = arith.constant 0 : i32
    %c0_i32_1 = arith.constant 0 : i32
    %c0_i32_2 = arith.constant 0 : i32
    return %c0_i32, %c0_i32_0, %c0_i32_1 : i32, i32, i32
  }
  func.func @transform_11(%arg0: i32) -> (i32, i32, i32) {
    %c0_i32 = arith.constant 0 : i32
    %c0_i32_0 = arith.constant 0 : i32
    %c0_i32_1 = arith.constant 0 : i32
    %c0_i32_2 = arith.constant 0 : i32
    return %c0_i32, %c0_i32_0, %c0_i32_1 : i32, i32, i32
  }
  func.func @transform_12(%arg0: i32) -> (i32, i32, i32) {
    %c0_i32 = arith.constant 0 : i32
    %c0_i32_0 = arith.constant 0 : i32
    %c0_i32_1 = arith.constant 0 : i32
    %c0_i32_2 = arith.constant 0 : i32
    return %c0_i32, %c0_i32_0, %c0_i32_1 : i32, i32, i32
  }
  func.func @transform_13(%arg0: i32) -> (i32, i32, i32) {
    %c0_i32 = arith.constant 0 : i32
    %c0_i32_0 = arith.constant 0 : i32
    %c0_i32_1 = arith.constant 0 : i32
    %c0_i32_2 = arith.constant 0 : i32
    return %c0_i32, %c0_i32_0, %c0_i32_1 : i32, i32, i32
  }
  func.func @transform_14(%arg0: i32) -> (i32, i32, i32) {
    %c0_i32 = arith.constant 0 : i32
    %c0_i32_0 = arith.constant 0 : i32
    %c0_i32_1 = arith.constant 0 : i32
    %c0_i32_2 = arith.constant 0 : i32
    return %c0_i32, %c0_i32_0, %c0_i32_1 : i32, i32, i32
  }
  func.func @transform_15(%arg0: i32) -> (i32, i32, i32) {
    %c0_i32 = arith.constant 0 : i32
    %c0_i32_0 = arith.constant 0 : i32
    %c0_i32_1 = arith.constant 0 : i32
    %c0_i32_2 = arith.constant 0 : i32
    return %c0_i32, %c0_i32_0, %c0_i32_1 : i32, i32, i32
  }
  func.func @transform_16(%arg0: i32) -> (i32, i32) {
    %c0_i32 = arith.constant 0 : i32
    %c0_i32_0 = arith.constant 0 : i32
    %c0_i32_1 = arith.constant 0 : i32
    return %c0_i32, %c0_i32_0 : i32, i32
  }
  func.func @transform_17(%arg0: i32) -> (i32, i32, i32, i32) {
    %c0_i32 = arith.constant 0 : i32
    %c0_i32_0 = arith.constant 0 : i32
    %c0_i32_1 = arith.constant 0 : i32
    %c0_i32_2 = arith.constant 0 : i32
    %c0_i32_3 = arith.constant 0 : i32
    return %c0_i32, %c0_i32_0, %c0_i32_1, %c0_i32_2 : i32, i32, i32, i32
  }
}

</mosaic_0001>

<llo_original>
// kernel: transformer_branch_forward.1
$region0: #{transformer_branch_forward.1}
  #allocation0 [shape = 'u32[]', space=smem, size = 0x4, offset = 0x4, fixed_abs, tag = 'smem constant byte address 0x4 - core index']
  #allocation1 [shape = 'u32[144,128]{1,0:T(1,128)}', space=vmem, size = 0x12000, scoped, tag = 'internal scratch']
  %s0 = inlined_call_operand.vmem [shape: f32[2,8,8], index: 0, kind: input, shape index: {}]
  %s1 = inlined_call_operand.vmem [shape: f32[8,32], index: 1, kind: input, shape index: {}]
  %s2 = inlined_call_operand.vmem [shape: f32[1,32], index: 2, kind: input, shape index: {}]
  %s3 = inlined_call_operand.vmem [shape: f32[1,8,32], index: 3, kind: input, shape index: {}]
  %s4 = inlined_call_operand.vmem [shape: f32[2,32,96], index: 4, kind: input, shape index: {}]
  %s5 = inlined_call_operand.vmem [shape: f32[2,1,96], index: 5, kind: input, shape index: {}]
  %s6 = inlined_call_operand.vmem [shape: f32[2,32,32], index: 6, kind: input, shape index: {}]
  %s7 = inlined_call_operand.vmem [shape: f32[2,1,32], index: 7, kind: input, shape index: {}]
  %s8 = inlined_call_operand.vmem [shape: f32[2,1,32], index: 8, kind: input, shape index: {}]
  %s9 = inlined_call_operand.vmem [shape: f32[2,1,32], index: 9, kind: input, shape index: {}]
  %s10 = inlined_call_operand.vmem [shape: bf16[2,32,2048], index: 10, kind: input, shape index: {}]
  %s11 = inlined_call_operand.vmem [shape: f32[2,1,2048], index: 11, kind: input, shape index: {}]
  %s12 = inlined_call_operand.vmem [shape: bf16[2,2048,32], index: 12, kind: input, shape index: {}]
  %s13 = inlined_call_operand.vmem [shape: f32[2,1,32], index: 13, kind: input, shape index: {}]
  %s14 = inlined_call_operand.vmem [shape: f32[2,1,32], index: 14, kind: input, shape index: {}]
  %s15 = inlined_call_operand.vmem [shape: f32[2,1,32], index: 15, kind: input, shape index: {}]
  %s16 = inlined_call_operand.hbm [shape: f32[2,32], index: 16, kind: output, shape index: {0}]
  %s17 = inlined_call_operand.vmem [shape: f32[2,2,8,8], index: 17, kind: output, shape index: {1}]
  %18 = xla_tuple %s16, %s17
  %s19 = sld [smem:[#allocation0]]
  $region82: #{transformer_branch_forward.1} parent=0
    _
  %s21 = ssub.s32 1, %s19
  %s22 = scalar_select 0, %s21, %s19
  $region1: #{transformer_branch_forward.1} parent=0
    #allocation2 [shape = 'u8[1024]{0}', space=vmem, size = 0x400, scoped, tag = 'output window, operand 0, single buffered']
    #allocation3 [shape = 's32[1]{0}', space=sflag, size = 0x4, scoped, tag = 'scoped memory for transformer_branch_forward.1']
    %23 = vsyncpa [#allocation3], 0
    // Predicated region
    $region2: #{transformer_branch_forward.1} parent=1 // pred_check
      _
    $region3: #{transformer_branch_forward.1} parent=1 // pred_check_branch
      %25 = sbr.rel (0) target = $region5
    $region4: #{transformer_branch_forward.1} parent=1 // pred_region
      _
    $region5: #{transformer_branch_forward.1} parent=1 // pred_fallthru
      _
    // Predicated region
    $region6: #{transformer_branch_forward.1} parent=1 // pred_check
      _
    $region7: #{transformer_branch_forward.1} parent=1 // pred_check_branch
      %27 = sbr.rel (0) target = $region9
    $region8: #{transformer_branch_forward.1} parent=1 // pred_region
      _
    $region9: #{transformer_branch_forward.1} parent=1 // pred_fallthru
      _
    // Predicated region
    $region10: #{transformer_branch_forward.1} parent=1 // pred_check
      _
    $region11: #{transformer_branch_forward.1} parent=1 // pred_check_branch
      %29 = sbr.rel (0) target = $region13
    $region12: #{transformer_branch_forward.1} parent=1 // pred_region
      _
    $region13: #{transformer_branch_forward.1} parent=1 // pred_fallthru
      _
    // Predicated region
    $region14: #{transformer_branch_forward.1} parent=1 // pred_check
      _
    $region15: #{transformer_branch_forward.1} parent=1 // pred_check_branch
      %31 = sbr.rel (0) target = $region17
    $region16: #{transformer_branch_forward.1} parent=1 // pred_region
      _
    $region17: #{transformer_branch_forward.1} parent=1 // pred_fallthru
      _
    // Predicated region
    $region18: #{transformer_branch_forward.1} parent=1 // pred_check
      _
    $region19: #{transformer_branch_forward.1} parent=1 // pred_check_branch
      %33 = sbr.rel (0) target = $region21
    $region20: #{transformer_branch_forward.1} parent=1 // pred_region
      _
    $region21: #{transformer_branch_forward.1} parent=1 // pred_fallthru
      _
    // Predicated region
    $region22: #{transformer_branch_forward.1} parent=1 // pred_check
      _
    $region23: #{transformer_branch_forward.1} parent=1 // pred_check_branch
      %35 = sbr.rel (0) target = $region25
    $region24: #{transformer_branch_forward.1} parent=1 // pred_region
      _
    $region25: #{transformer_branch_forward.1} parent=1 // pred_fallthru
      _
    // Predicated region
    $region26: #{transformer_branch_forward.1} parent=1 // pred_check
      _
    $region27: #{transformer_branch_forward.1} parent=1 // pred_check_branch
      %37 = sbr.rel (0) target = $region29
    $region28: #{transformer_branch_forward.1} parent=1 // pred_region
      _
    $region29: #{transformer_branch_forward.1} parent=1 // pred_fallthru
      _
    // Predicated region
    $region30: #{transformer_branch_forward.1} parent=1 // pred_check
      _
    $region31: #{transformer_branch_forward.1} parent=1 // pred_check_branch
      %39 = sbr.rel (0) target = $region33
    $region32: #{transformer_branch_forward.1} parent=1 // pred_region
      _
    $region33: #{transformer_branch_forward.1} parent=1 // pred_fallthru
      _
    // Predicated region
    $region34: #{transformer_branch_forward.1} parent=1 // pred_check
      _
    $region35: #{transformer_branch_forward.1} parent=1 // pred_check_branch
      %41 = sbr.rel (0) target = $region37
    $region36: #{transformer_branch_forward.1} parent=1 // pred_region
      _
    $region37: #{transformer_branch_forward.1} parent=1 // pred_fallthru
      _
    // Predicated region
    $region38: #{transformer_branch_forward.1} parent=1 // pred_check
      _
    $region39: #{transformer_branch_forward.1} parent=1 // pred_check_branch
      %43 = sbr.rel (0) target = $region41
    $region40: #{transformer_branch_forward.1} parent=1 // pred_region
      _
    $region41: #{transformer_branch_forward.1} parent=1 // pred_fallthru
      _
    // Predicated region
    $region42: #{transformer_branch_forward.1} parent=1 // pred_check
      _
    $region43: #{transformer_branch_forward.1} parent=1 // pred_check_branch
      %45 = sbr.rel (0) target = $region45
    $region44: #{transformer_branch_forward.1} parent=1 // pred_region
      _
    $region45: #{transformer_branch_forward.1} parent=1 // pred_fallthru
      _
    // Predicated region
    $region46: #{transformer_branch_forward.1} parent=1 // pred_check
      _
    $region47: #{transformer_branch_forward.1} parent=1 // pred_check_branch
      %47 = sbr.rel (0) target = $region49
    $region48: #{transformer_branch_forward.1} parent=1 // pred_region
      _
    $region49: #{transformer_branch_forward.1} parent=1 // pred_fallthru
      _
    // Predicated region
    $region50: #{transformer_branch_forward.1} parent=1 // pred_check
      _
    $region51: #{transformer_branch_forward.1} parent=1 // pred_check_branch
      %49 = sbr.rel (0) target = $region53
    $region52: #{transformer_branch_forward.1} parent=1 // pred_region
      _
    $region53: #{transformer_branch_forward.1} parent=1 // pred_fallthru
      _
    // Predicated region
    $region54: #{transformer_branch_forward.1} parent=1 // pred_check
      _
    $region55: #{transformer_branch_forward.1} parent=1 // pred_check_branch
      %51 = sbr.rel (0) target = $region57
    $region56: #{transformer_branch_forward.1} parent=1 // pred_region
      _
    $region57: #{transformer_branch_forward.1} parent=1 // pred_fallthru
      _
    // Predicated region
    $region58: #{transformer_branch_forward.1} parent=1 // pred_check
      _
    $region59: #{transformer_branch_forward.1} parent=1 // pred_check_branch
      %53 = sbr.rel (0) target = $region61
    $region60: #{transformer_branch_forward.1} parent=1 // pred_region
      _
    $region61: #{transformer_branch_forward.1} parent=1 // pred_fallthru
      _
    // Predicated region
    $region62: #{transformer_branch_forward.1} parent=1 // pred_check
      _
    $region63: #{transformer_branch_forward.1} parent=1 // pred_check_branch
      %55 = sbr.rel (0) target = $region65
    $region64: #{transformer_branch_forward.1} parent=1 // pred_region
      _
    $region65: #{transformer_branch_forward.1} parent=1 // pred_fallthru
      _
    %v57 = vld [vmem:[%s0] sm:$0xff]
    %v58 = vld [vmem:[%s0 + $0x8] sm:$0xff]
    %v59 = vld [vmem:[%s1] sm:$0xff]
    %v60 = vld [vmem:[%s2] sm:$0x1]
    %v62 = vlaneseq
    %v63 = vshrl.u32 %v62, 7
    %v64 = vsub.s32 0, %v63
    %v65 = vrot.slane %v60, %v64
    %vm67 = vcmask 64512
    %v69 = vsel %vm67, %v57, 0
    %v72 = vsel %vm67, %v58, 0
    %74 = vmatprep.subr.mxu0 0.0
    %75 = vmatpush1.msra.mxu0 0.0
    %76 = vmatprep.subr.mxu0 0.0
    %77 = vmatpush1.msra.mxu0 0.0
    %78 = vmatprep.subr.mxu0 0.0
    %79 = vmatpush1.msra.mxu0 0.0
    %80 = vmatprep.subr.mxu0 0.0
    %81 = vmatpush1.msra.mxu0 0.0
    %82 = vmatprep.subr.mxu0 0.0
    %83 = vmatpush1.msra.mxu0 0.0
    %84 = vmatprep.subr.mxu0 0.0
    %85 = vmatpush1.msra.mxu0 0.0
    %86 = vmatprep.subr.mxu0 0.0
    %87 = vmatpush1.msra.mxu0 0.0
    %88 = vmatprep.subr.mxu0 0.0
    %89 = vmatpush1.msra.mxu0 0.0
    %90 = vmatprep.subr.mxu0 0.0
    %91 = vmatpush1.msra.mxu0 0.0
    %92 = vmatprep.subr.mxu0 0.0
    %93 = vmatpush1.msra.mxu0 0.0
    %94 = vmatprep.subr.mxu0 0.0
    %95 = vmatpush1.msra.mxu0 0.0
    %96 = vmatprep.subr.mxu0 0.0
    %97 = vmatpush1.msra.mxu0 0.0
    %98 = vmatprep.subr.mxu0 0.0
    %99 = vmatpush1.msra.mxu0 0.0
    %100 = vmatprep.subr.mxu0 0.0
    %101 = vmatpush1.msra.mxu0 0.0
    %102 = vmatprep.subr.mxu0 0.0
    %103 = vmatpush1.msra.mxu0 0.0
    %104 = vmatprep.subr.mxu0 0.0
    %105 = vmatpush1.msra.mxu0 %v59
    %106 = vmatprep.subr.mxu0 0.0
    %107 = vmatpush2.msra.mxu0 0.0
    %108 = vmatprep.subr.mxu0 0.0
    %109 = vmatpush2.msra.mxu0 0.0
    %110 = vmatprep.subr.mxu0 0.0
    %111 = vmatpush2.msra.mxu0 0.0
    %112 = vmatprep.subr.mxu0 0.0
    %113 = vmatpush2.msra.mxu0 0.0
    %114 = vmatprep.subr.mxu0 0.0
    %115 = vmatpush2.msra.mxu0 0.0
    %116 = vmatprep.subr.mxu0 0.0
    %117 = vmatpush2.msra.mxu0 0.0
    %118 = vmatprep.subr.mxu0 0.0
    %119 = vmatpush2.msra.mxu0 0.0
    %120 = vmatprep.subr.mxu0 0.0
    %121 = vmatpush2.msra.mxu0 0.0
    %122 = vmatprep.subr.mxu0 0.0
    %123 = vmatpush2.msra.mxu0 0.0
    %124 = vmatprep.subr.mxu0 0.0
    %125 = vmatpush2.msra.mxu0 0.0
    %126 = vmatprep.subr.mxu0 0.0
    %127 = vmatpush2.msra.mxu0 0.0
    %128 = vmatprep.subr.mxu0 0.0
    %129 = vmatpush2.msra.mxu0 0.0
    %130 = vmatprep.subr.mxu0 0.0
    %131 = vmatpush2.msra.mxu0 0.0
    %132 = vmatprep.subr.mxu0 0.0
    %133 = vmatpush2.msra.mxu0 0.0
    %134 = vmatprep.subr.mxu0 0.0
    %135 = vmatpush2.msra.mxu0 0.0
    %136 = vmatprep.subr.mxu0 0.0
    %137 = vmatpush2.msra.mxu0 0.0
    %138 = vmatprep.mubr.f32.mxu0 0.0
    %139 = vmatmul.mubr.f32.gmra.mxu0 %v69
    %v140 = vpop.f32.mrf.mxu0
    %v141 = vadd.f32 %v65, %v140
    %v142 = vpop.f32.mrf.mxu0
    %143 = vmatprep.mubr.f32.mxu0 0.0
    %144 = vmatmul.mubr.f32.gmra.mxu0 %v72
    %v145 = vpop.f32.mrf.mxu0
    %v146 = vadd.f32 %v65, %v145
    %v147 = vpop.f32.mrf.mxu0
    %148 = vdwg.mxu0
    %v149 = vld [vmem:[%s3] sm:$0xff]
    %v150 = vadd.f32 %v141, %v149
    %v151 = vadd.f32 %v146, %v149
    %v152 = vld [vmem:[%s4] sm:$0xff]
    %v153 = vld [vmem:[%s4 + $0x8] sm:$0xff]
    %v154 = vld [vmem:[%s4 + $0x10] sm:$0xff]
    %v155 = vld [vmem:[%s4 + $0x18] sm:$0xff]
    %v156 = vld [vmem:[%s5] sm:$0x1]
    %v158 = vlaneseq
    %v159 = vshrl.u32 %v158, 7
    %v160 = vsub.s32 0, %v159
    %v161 = vrot.slane %v156, %v160
    %vm163 = vcmask 261120
    %v165 = vsel %vm163, %v150, 0
    %v168 = vsel %vm163, %v151, 0
    %170 = vmatprep.subr.mxu0 0.0
    %171 = vmatpush1.msra.mxu0 0.0
    %172 = vmatprep.subr.mxu0 0.0
    %173 = vmatpush1.msra.mxu0 0.0
    %174 = vmatprep.subr.mxu0 0.0
    %175 = vmatpush1.msra.mxu0 0.0
    %176 = vmatprep.subr.mxu0 0.0
    %177 = vmatpush1.msra.mxu0 0.0
    %178 = vmatprep.subr.mxu0 0.0
    %179 = vmatpush1.msra.mxu0 0.0
    %180 = vmatprep.subr.mxu0 0.0
    %181 = vmatpush1.msra.mxu0 0.0
    %182 = vmatprep.subr.mxu0 0.0
    %183 = vmatpush1.msra.mxu0 0.0
    %184 = vmatprep.subr.mxu0 0.0
    %185 = vmatpush1.msra.mxu0 0.0
    %186 = vmatprep.subr.mxu0 0.0
    %187 = vmatpush1.msra.mxu0 0.0
    %188 = vmatprep.subr.mxu0 0.0
    %189 = vmatpush1.msra.mxu0 0.0
    %190 = vmatprep.subr.mxu0 0.0
    %191 = vmatpush1.msra.mxu0 0.0
    %192 = vmatprep.subr.mxu0 0.0
    %193 = vmatpush1.msra.mxu0 0.0
    %194 = vmatprep.subr.mxu0 0.0
    %195 = vmatpush1.msra.mxu0 %v155
    %196 = vmatprep.subr.mxu0 0.0
    %197 = vmatpush1.msra.mxu0 %v154
    %198 = vmatprep.subr.mxu0 0.0
    %199 = vmatpush1.msra.mxu0 %v153
    %200 = vmatprep.subr.mxu0 0.0
    %201 = vmatpush1.msra.mxu0 %v152
    %202 = vmatprep.subr.mxu0 0.0
    %203 = vmatpush2.msra.mxu0 0.0
    %204 = vmatprep.subr.mxu0 0.0
    %205 = vmatpush2.msra.mxu0 0.0
    %206 = vmatprep.subr.mxu0 0.0
    %207 = vmatpush2.msra.mxu0 0.0
    %208 = vmatprep.subr.mxu0 0.0
    %209 = vmatpush2.msra.mxu0 0.0
    %210 = vmatprep.subr.mxu0 0.0
    %211 = vmatpush2.msra.mxu0 0.0
    %212 = vmatprep.subr.mxu0 0.0
    %213 = vmatpush2.msra.mxu0 0.0
    %214 = vmatprep.subr.mxu0 0.0
    %215 = vmatpush2.msra.mxu0 0.0
    %216 = vmatprep.subr.mxu0 0.0
    %217 = vmatpush2.msra.mxu0 0.0
    %218 = vmatprep.subr.mxu0 0.0
    %219 = vmatpush2.msra.mxu0 0.0
    %220 = vmatprep.subr.mxu0 0.0
    %221 = vmatpush2.msra.mxu0 0.0
    %222 = vmatprep.subr.mxu0 0.0
    %223 = vmatpush2.msra.mxu0 0.0
    %224 = vmatprep.subr.mxu0 0.0
    %225 = vmatpush2.msra.mxu0 0.0
    %226 = vmatprep.subr.mxu0 0.0
    %227 = vmatpush2.msra.mxu0 0.0
    %228 = vmatprep.subr.mxu0 0.0
    %229 = vmatpush2.msra.mxu0 0.0
    %230 = vmatprep.subr.mxu0 0.0
    %231 = vmatpush2.msra.mxu0 0.0
    %232 = vmatprep.subr.mxu0 0.0
    %233 = vmatpush2.msra.mxu0 0.0
    %234 = vmatprep.mubr.f32.mxu0 0.0
    %235 = vmatmul.mubr.f32.gmra.mxu0 %v165
    %v236 = vpop.f32.mrf.mxu0
    %v237 = vadd.f32 %v161, %v236
    %v238 = vpop.f32.mrf.mxu0
    %239 = vmatprep.mubr.f32.mxu0 0.0
    %240 = vmatmul.mubr.f32.gmra.mxu0 %v168
    %v241 = vpop.f32.mrf.mxu0
    %v242 = vadd.f32 %v161, %v241
    %v243 = vpop.f32.mrf.mxu0
    %244 = vdwg.mxu0
    %v245 = vmul.f32 %v237, 0.35355338
    %v246 = vmul.f32 %v242, 0.35355338
    %248 = vrot.lane.b32.xlu0 %v237, 96
    %v249 = vpop.permute.xlu0 %248
    %v251 = vsel %vm67, %v245, 0
    %v253 = vsel %vm67, %v249, 0
    %255 = vmatprep.subr.mxu0 0.0
    %256 = vmatpush1.xpose.msra.mxu0 0.0
    %257 = vmatprep.subr.mxu0 0.0
    %258 = vmatpush1.xpose.msra.mxu0 0.0
    %259 = vmatprep.subr.mxu0 0.0
    %260 = vmatpush1.xpose.msra.mxu0 0.0
    %261 = vmatprep.subr.mxu0 0.0
    %262 = vmatpush1.xpose.msra.mxu0 0.0
    %263 = vmatprep.subr.mxu0 0.0
    %264 = vmatpush1.xpose.msra.mxu0 0.0
    %265 = vmatprep.subr.mxu0 0.0
    %266 = vmatpush1.xpose.msra.mxu0 0.0
    %267 = vmatprep.subr.mxu0 0.0
    %268 = vmatpush1.xpose.msra.mxu0 0.0
    %269 = vmatprep.subr.mxu0 0.0
    %270 = vmatpush1.xpose.msra.mxu0 0.0
    %271 = vmatprep.subr.mxu0 0.0
    %272 = vmatpush1.xpose.msra.mxu0 0.0
    %273 = vmatprep.subr.mxu0 0.0
    %274 = vmatpush1.xpose.msra.mxu0 0.0
    %275 = vmatprep.subr.mxu0 0.0
    %276 = vmatpush1.xpose.msra.mxu0 0.0
    %277 = vmatprep.subr.mxu0 0.0
    %278 = vmatpush1.xpose.msra.mxu0 0.0
    %279 = vmatprep.subr.mxu0 0.0
    %280 = vmatpush1.xpose.msra.mxu0 0.0
    %281 = vmatprep.subr.mxu0 0.0
    %282 = vmatpush1.xpose.msra.mxu0 0.0
    %283 = vmatprep.subr.mxu0 0.0
    %284 = vmatpush1.xpose.msra.mxu0 0.0
    %285 = vmatprep.subr.mxu0 0.0
    %286 = vmatpush1.xpose.msra.mxu0 %v253
    %287 = vmatprep.subr.mxu0 0.0
    %288 = vmatpush2.xpose.msra.mxu0 0.0
    %289 = vmatprep.subr.mxu0 0.0
    %290 = vmatpush2.xpose.msra.mxu0 0.0
    %291 = vmatprep.subr.mxu0 0.0
    %292 = vmatpush2.xpose.msra.mxu0 0.0
    %293 = vmatprep.subr.mxu0 0.0
    %294 = vmatpush2.xpose.msra.mxu0 0.0
    %295 = vmatprep.subr.mxu0 0.0
    %296 = vmatpush2.xpose.msra.mxu0 0.0
    %297 = vmatprep.subr.mxu0 0.0
    %298 = vmatpush2.xpose.msra.mxu0 0.0
    %299 = vmatprep.subr.mxu0 0.0
    %300 = vmatpush2.xpose.msra.mxu0 0.0
    %301 = vmatprep.subr.mxu0 0.0
    %302 = vmatpush2.xpose.msra.mxu0 0.0
    %303 = vmatprep.subr.mxu0 0.0
    %304 = vmatpush2.xpose.msra.mxu0 0.0
    %305 = vmatprep.subr.mxu0 0.0
    %306 = vmatpush2.xpose.msra.mxu0 0.0
    %307 = vmatprep.subr.mxu0 0.0
    %308 = vmatpush2.xpose.msra.mxu0 0.0
    %309 = vmatprep.subr.mxu0 0.0
    %310 = vmatpush2.xpose.msra.mxu0 0.0
    %311 = vmatprep.subr.mxu0 0.0
    %312 = vmatpush2.xpose.msra.mxu0 0.0
    %313 = vmatprep.subr.mxu0 0.0
    %314 = vmatpush2.xpose.msra.mxu0 0.0
    %315 = vmatprep.subr.mxu0 0.0
    %316 = vmatpush2.xpose.msra.mxu0 0.0
    %317 = vmatprep.subr.mxu0 0.0
    %318 = vmatpush2.xpose.msra.mxu0 0.0
    %319 = vmatprep.mubr.f32.mxu0 0.0
    %320 = vmatmul.mubr.f32.gmra.mxu0 %v251
    %v321 = vpop.f32.mrf.mxu0
    %v322 = vadd.f32 0.0, %v321
    %v323 = vpop.f32.mrf.mxu0
    %324 = vdwg.mxu0
    %326 = vrot.lane.b32.xlu0 %v242, 96
    %v327 = vpop.permute.xlu0 %326
    %v329 = vsel %vm67, %v246, 0
    %v331 = vsel %vm67, %v327, 0
    %333 = vmatprep.subr.mxu0 0.0
    %334 = vmatpush1.xpose.msra.mxu0 0.0
    %335 = vmatprep.subr.mxu0 0.0
    %336 = vmatpush1.xpose.msra.mxu0 0.0
    %337 = vmatprep.subr.mxu0 0.0
    %338 = vmatpush1.xpose.msra.mxu0 0.0
    %339 = vmatprep.subr.mxu0 0.0
    %340 = vmatpush1.xpose.msra.mxu0 0.0
    %341 = vmatprep.subr.mxu0 0.0
    %342 = vmatpush1.xpose.msra.mxu0 0.0
    %343 = vmatprep.subr.mxu0 0.0
    %344 = vmatpush1.xpose.msra.mxu0 0.0
    %345 = vmatprep.subr.mxu0 0.0
    %346 = vmatpush1.xpose.msra.mxu0 0.0
    %347 = vmatprep.subr.mxu0 0.0
    %348 = vmatpush1.xpose.msra.mxu0 0.0
    %349 = vmatprep.subr.mxu0 0.0
    %350 = vmatpush1.xpose.msra.mxu0 0.0
    %351 = vmatprep.subr.mxu0 0.0
    %352 = vmatpush1.xpose.msra.mxu0 0.0
    %353 = vmatprep.subr.mxu0 0.0
    %354 = vmatpush1.xpose.msra.mxu0 0.0
    %355 = vmatprep.subr.mxu0 0.0
    %356 = vmatpush1.xpose.msra.mxu0 0.0
    %357 = vmatprep.subr.mxu0 0.0
    %358 = vmatpush1.xpose.msra.mxu0 0.0
    %359 = vmatprep.subr.mxu0 0.0
    %360 = vmatpush1.xpose.msra.mxu0 0.0
    %361 = vmatprep.subr.mxu0 0.0
    %362 = vmatpush1.xpose.msra.mxu0 0.0
    %363 = vmatprep.subr.mxu0 0.0
    %364 = vmatpush1.xpose.msra.mxu0 %v331
    %365 = vmatprep.subr.mxu0 0.0
    %366 = vmatpush2.xpose.msra.mxu0 0.0
    %367 = vmatprep.subr.mxu0 0.0
    %368 = vmatpush2.xpose.msra.mxu0 0.0
    %369 = vmatprep.subr.mxu0 0.0
    %370 = vmatpush2.xpose.msra.mxu0 0.0
    %371 = vmatprep.subr.mxu0 0.0
    %372 = vmatpush2.xpose.msra.mxu0 0.0
    %373 = vmatprep.subr.mxu0 0.0
    %374 = vmatpush2.xpose.msra.mxu0 0.0
    %375 = vmatprep.subr.mxu0 0.0
    %376 = vmatpush2.xpose.msra.mxu0 0.0
    %377 = vmatprep.subr.mxu0 0.0
    %378 = vmatpush2.xpose.msra.mxu0 0.0
    %379 = vmatprep.subr.mxu0 0.0
    %380 = vmatpush2.xpose.msra.mxu0 0.0
    %381 = vmatprep.subr.mxu0 0.0
    %382 = vmatpush2.xpose.msra.mxu0 0.0
    %383 = vmatprep.subr.mxu0 0.0
    %384 = vmatpush2.xpose.msra.mxu0 0.0
    %385 = vmatprep.subr.mxu0 0.0
    %386 = vmatpush2.xpose.msra.mxu0 0.0
    %387 = vmatprep.subr.mxu0 0.0
    %388 = vmatpush2.xpose.msra.mxu0 0.0
    %389 = vmatprep.subr.mxu0 0.0
    %390 = vmatpush2.xpose.msra.mxu0 0.0
    %391 = vmatprep.subr.mxu0 0.0
    %392 = vmatpush2.xpose.msra.mxu0 0.0
    %393 = vmatprep.subr.mxu0 0.0
    %394 = vmatpush2.xpose.msra.mxu0 0.0
    %395 = vmatprep.subr.mxu0 0.0
    %396 = vmatpush2.xpose.msra.mxu0 0.0
    %397 = vmatprep.mubr.f32.mxu0 0.0
    %398 = vmatmul.mubr.f32.gmra.mxu0 %v329
    %v399 = vpop.f32.mrf.mxu0
    %v400 = vadd.f32 0.0, %v399
    %v401 = vpop.f32.mrf.mxu0
    %402 = vdwg.mxu0
    %v403 = vsel %vm67, %v322, -inf
    %404 = vmax.xlane.f32.xlu0 %v403
    %v405 = vpop.xlane.xlu0 %404
    %v406 = vsel %vm67, %v400, -inf
    %407 = vmax.xlane.f32.xlu0 %v406
    %v408 = vpop.xlane.xlu0 %407
    %v409 = vsub.f32 %v322, %v405
    %v410 = vsub.f32 %v400, %v408
    %v411 = vmul.f32 %v409, 1.442695
    %v412 = vpow.pop %v411
    %v413 = vmul.f32 %v410, 1.442695
    %v414 = vpow.pop %v413
    %v415 = vsel %vm67, %v412, 0.0
    %416 = vadd.xlane.f32.xlu0 %v415
    %v417 = vpop.xlane.xlu0 %416
    %v418 = vsel %vm67, %v414, 0.0
    %419 = vadd.xlane.f32.xlu0 %v418
    %v420 = vpop.xlane.xlu0 %419
    %v421 = vrcp.pop %v417
    %v422 = vrcp.pop %v420
    %v423 = vmul.f32 %v412, %v421
    %v424 = vmul.f32 %v414, %v422
    %v425 = vadd.f32 %v423, 0.0
    %v426 = vadd.f32 %v424, 0.0
    %427 = vrot.lane.b32.xlu0 %v237, 64
    %v428 = vpop.permute.xlu0 %427
    %v431 = vsel %vm67, %v423, 0
    %433 = vmatprep.subr.mxu0 0.0
    %434 = vmatpush1.msra.mxu0 0.0
    %435 = vmatprep.subr.mxu0 0.0
    %436 = vmatpush1.msra.mxu0 0.0
    %437 = vmatprep.subr.mxu0 0.0
    %438 = vmatpush1.msra.mxu0 0.0
    %439 = vmatprep.subr.mxu0 0.0
    %440 = vmatpush1.msra.mxu0 0.0
    %441 = vmatprep.subr.mxu0 0.0
    %442 = vmatpush1.msra.mxu0 0.0
    %443 = vmatprep.subr.mxu0 0.0
    %444 = vmatpush1.msra.mxu0 0.0
    %445 = vmatprep.subr.mxu0 0.0
    %446 = vmatpush1.msra.mxu0 0.0
    %447 = vmatprep.subr.mxu0 0.0
    %448 = vmatpush1.msra.mxu0 0.0
    %449 = vmatprep.subr.mxu0 0.0
    %450 = vmatpush1.msra.mxu0 0.0
    %451 = vmatprep.subr.mxu0 0.0
    %452 = vmatpush1.msra.mxu0 0.0
    %453 = vmatprep.subr.mxu0 0.0
    %454 = vmatpush1.msra.mxu0 0.0
    %455 = vmatprep.subr.mxu0 0.0
    %456 = vmatpush1.msra.mxu0 0.0
    %457 = vmatprep.subr.mxu0 0.0
    %458 = vmatpush1.msra.mxu0 0.0
    %459 = vmatprep.subr.mxu0 0.0
    %460 = vmatpush1.msra.mxu0 0.0
    %461 = vmatprep.subr.mxu0 0.0
    %462 = vmatpush1.msra.mxu0 0.0
    %463 = vmatprep.subr.mxu0 0.0
    %464 = vmatpush1.msra.mxu0 %v428
    %465 = vmatprep.subr.mxu0 0.0
    %466 = vmatpush2.msra.mxu0 0.0
    %467 = vmatprep.subr.mxu0 0.0
    %468 = vmatpush2.msra.mxu0 0.0
    %469 = vmatprep.subr.mxu0 0.0
    %470 = vmatpush2.msra.mxu0 0.0
    %471 = vmatprep.subr.mxu0 0.0
    %472 = vmatpush2.msra.mxu0 0.0
    %473 = vmatprep.subr.mxu0 0.0
    %474 = vmatpush2.msra.mxu0 0.0
    %475 = vmatprep.subr.mxu0 0.0
    %476 = vmatpush2.msra.mxu0 0.0
    %477 = vmatprep.subr.mxu0 0.0
    %478 = vmatpush2.msra.mxu0 0.0
    %479 = vmatprep.subr.mxu0 0.0
    %480 = vmatpush2.msra.mxu0 0.0
    %481 = vmatprep.subr.mxu0 0.0
    %482 = vmatpush2.msra.mxu0 0.0
    %483 = vmatprep.subr.mxu0 0.0
    %484 = vmatpush2.msra.mxu0 0.0
    %485 = vmatprep.subr.mxu0 0.0
    %486 = vmatpush2.msra.mxu0 0.0
    %487 = vmatprep.subr.mxu0 0.0
    %488 = vmatpush2.msra.mxu0 0.0
    %489 = vmatprep.subr.mxu0 0.0
    %490 = vmatpush2.msra.mxu0 0.0
    %491 = vmatprep.subr.mxu0 0.0
    %492 = vmatpush2.msra.mxu0 0.0
    %493 = vmatprep.subr.mxu0 0.0
    %494 = vmatpush2.msra.mxu0 0.0
    %495 = vmatprep.subr.mxu0 0.0
    %496 = vmatpush2.msra.mxu0 0.0
    %497 = vmatprep.mubr.f32.mxu0 0.0
    %498 = vmatmul.mubr.f32.gmra.mxu0 %v431
    %v499 = vpop.f32.mrf.mxu0
    %v500 = vadd.f32 0.0, %v499
    %v501 = vpop.f32.mrf.mxu0
    %502 = vdwg.mxu0
    %503 = vrot.lane.b32.xlu0 %v242, 64
    %v504 = vpop.permute.xlu0 %503
    %v507 = vsel %vm67, %v424, 0
    %509 = vmatprep.subr.mxu0 0.0
    %510 = vmatpush1.msra.mxu0 0.0
    %511 = vmatprep.subr.mxu0 0.0
    %512 = vmatpush1.msra.mxu0 0.0
    %513 = vmatprep.subr.mxu0 0.0
    %514 = vmatpush1.msra.mxu0 0.0
    %515 = vmatprep.subr.mxu0 0.0
    %516 = vmatpush1.msra.mxu0 0.0
    %517 = vmatprep.subr.mxu0 0.0
    %518 = vmatpush1.msra.mxu0 0.0
    %519 = vmatprep.subr.mxu0 0.0
    %520 = vmatpush1.msra.mxu0 0.0
    %521 = vmatprep.subr.mxu0 0.0
    %522 = vmatpush1.msra.mxu0 0.0
    %523 = vmatprep.subr.mxu0 0.0
    %524 = vmatpush1.msra.mxu0 0.0
    %525 = vmatprep.subr.mxu0 0.0
    %526 = vmatpush1.msra.mxu0 0.0
    %527 = vmatprep.subr.mxu0 0.0
    %528 = vmatpush1.msra.mxu0 0.0
    %529 = vmatprep.subr.mxu0 0.0
    %530 = vmatpush1.msra.mxu0 0.0
    %531 = vmatprep.subr.mxu0 0.0
    %532 = vmatpush1.msra.mxu0 0.0
    %533 = vmatprep.subr.mxu0 0.0
    %534 = vmatpush1.msra.mxu0 0.0
    %535 = vmatprep.subr.mxu0 0.0
    %536 = vmatpush1.msra.mxu0 0.0
    %537 = vmatprep.subr.mxu0 0.0
    %538 = vmatpush1.msra.mxu0 0.0
    %539 = vmatprep.subr.mxu0 0.0
    %540 = vmatpush1.msra.mxu0 %v504
    %541 = vmatprep.subr.mxu0 0.0
    %542 = vmatpush2.msra.mxu0 0.0
    %543 = vmatprep.subr.mxu0 0.0
    %544 = vmatpush2.msra.mxu0 0.0
    %545 = vmatprep.subr.mxu0 0.0
    %546 = vmatpush2.msra.mxu0 0.0
    %547 = vmatprep.subr.mxu0 0.0
    %548 = vmatpush2.msra.mxu0 0.0
    %549 = vmatprep.subr.mxu0 0.0
    %550 = vmatpush2.msra.mxu0 0.0
    %551 = vmatprep.subr.mxu0 0.0
    %552 = vmatpush2.msra.mxu0 0.0
    %553 = vmatprep.subr.mxu0 0.0
    %554 = vmatpush2.msra.mxu0 0.0
    %555 = vmatprep.subr.mxu0 0.0
    %556 = vmatpush2.msra.mxu0 0.0
    %557 = vmatprep.subr.mxu0 0.0
    %558 = vmatpush2.msra.mxu0 0.0
    %559 = vmatprep.subr.mxu0 0.0
    %560 = vmatpush2.msra.mxu0 0.0
    %561 = vmatprep.subr.mxu0 0.0
    %562 = vmatpush2.msra.mxu0 0.0
    %563 = vmatprep.subr.mxu0 0.0
    %564 = vmatpush2.msra.mxu0 0.0
    %565 = vmatprep.subr.mxu0 0.0
    %566 = vmatpush2.msra.mxu0 0.0
    %567 = vmatprep.subr.mxu0 0.0
    %568 = vmatpush2.msra.mxu0 0.0
    %569 = vmatprep.subr.mxu0 0.0
    %570 = vmatpush2.msra.mxu0 0.0
    %571 = vmatprep.subr.mxu0 0.0
    %572 = vmatpush2.msra.mxu0 0.0
    %573 = vmatprep.mubr.f32.mxu0 0.0
    %574 = vmatmul.mubr.f32.gmra.mxu0 %v507
    %v575 = vpop.f32.mrf.mxu0
    %v576 = vadd.f32 0.0, %v575
    %v577 = vpop.f32.mrf.mxu0
    %578 = vdwg.mxu0
    %579 = vrot.lane.b32.xlu0 %v245, 120
    %v580 = vpop.permute.xlu0 %579
    %581 = vrot.lane.b32.xlu0 %v237, 88
    %v582 = vpop.permute.xlu0 %581
    %v583 = vsel %vm67, %v580, 0
    %v585 = vsel %vm67, %v582, 0
    %587 = vmatprep.subr.mxu0 0.0
    %588 = vmatpush1.xpose.msra.mxu0 0.0
    %589 = vmatprep.subr.mxu0 0.0
    %590 = vmatpush1.xpose.msra.mxu0 0.0
    %591 = vmatprep.subr.mxu0 0.0
    %592 = vmatpush1.xpose.msra.mxu0 0.0
    %593 = vmatprep.subr.mxu0 0.0
    %594 = vmatpush1.xpose.msra.mxu0 0.0
    %595 = vmatprep.subr.mxu0 0.0
    %596 = vmatpush1.xpose.msra.mxu0 0.0
    %597 = vmatprep.subr.mxu0 0.0
    %598 = vmatpush1.xpose.msra.mxu0 0.0
    %599 = vmatprep.subr.mxu0 0.0
    %600 = vmatpush1.xpose.msra.mxu0 0.0
    %601 = vmatprep.subr.mxu0 0.0
    %602 = vmatpush1.xpose.msra.mxu0 0.0
    %603 = vmatprep.subr.mxu0 0.0
    %604 = vmatpush1.xpose.msra.mxu0 0.0
    %605 = vmatprep.subr.mxu0 0.0
    %606 = vmatpush1.xpose.msra.mxu0 0.0
    %607 = vmatprep.subr.mxu0 0.0
    %608 = vmatpush1.xpose.msra.mxu0 0.0
    %609 = vmatprep.subr.mxu0 0.0
    %610 = vmatpush1.xpose.msra.mxu0 0.0
    %611 = vmatprep.subr.mxu0 0.0
    %612 = vmatpush1.xpose.msra.mxu0 0.0
    %613 = vmatprep.subr.mxu0 0.0
    %614 = vmatpush1.xpose.msra.mxu0 0.0
    %615 = vmatprep.subr.mxu0 0.0
    %616 = vmatpush1.xpose.msra.mxu0 0.0
    %617 = vmatprep.subr.mxu0 0.0
    %618 = vmatpush1.xpose.msra.mxu0 %v585
    %619 = vmatprep.subr.mxu0 0.0
    %620 = vmatpush2.xpose.msra.mxu0 0.0
    %621 = vmatprep.subr.mxu0 0.0
    %622 = vmatpush2.xpose.msra.mxu0 0.0
    %623 = vmatprep.subr.mxu0 0.0
    %624 = vmatpush2.xpose.msra.mxu0 0.0
    %625 = vmatprep.subr.mxu0 0.0
    %626 = vmatpush2.xpose.msra.mxu0 0.0
    %627 = vmatprep.subr.mxu0 0.0
    %628 = vmatpush2.xpose.msra.mxu0 0.0
    %629 = vmatprep.subr.mxu0 0.0
    %630 = vmatpush2.xpose.msra.mxu0 0.0
    %631 = vmatprep.subr.mxu0 0.0
    %632 = vmatpush2.xpose.msra.mxu0 0.0
    %633 = vmatprep.subr.mxu0 0.0
    %634 = vmatpush2.xpose.msra.mxu0 0.0
    %635 = vmatprep.subr.mxu0 0.0
    %636 = vmatpush2.xpose.msra.mxu0 0.0
    %637 = vmatprep.subr.mxu0 0.0
    %638 = vmatpush2.xpose.msra.mxu0 0.0
    %639 = vmatprep.subr.mxu0 0.0
    %640 = vmatpush2.xpose.msra.mxu0 0.0
    %641 = vmatprep.subr.mxu0 0.0
    %642 = vmatpush2.xpose.msra.mxu0 0.0
    %643 = vmatprep.subr.mxu0 0.0
    %644 = vmatpush2.xpose.msra.mxu0 0.0
    %645 = vmatprep.subr.mxu0 0.0
    %646 = vmatpush2.xpose.msra.mxu0 0.0
    %647 = vmatprep.subr.mxu0 0.0
    %648 = vmatpush2.xpose.msra.mxu0 0.0
    %649 = vmatprep.subr.mxu0 0.0
    %650 = vmatpush2.xpose.msra.mxu0 0.0
    %651 = vmatprep.mubr.f32.mxu0 0.0
    %652 = vmatmul.mubr.f32.gmra.mxu0 %v583
    %v653 = vpop.f32.mrf.mxu0
    %v654 = vadd.f32 0.0, %v653
    %v655 = vpop.f32.mrf.mxu0
    %656 = vdwg.mxu0
    %657 = vrot.lane.b32.xlu0 %v246, 120
    %v658 = vpop.permute.xlu0 %657
    %659 = vrot.lane.b32.xlu0 %v242, 88
    %v660 = vpop.permute.xlu0 %659
    %v661 = vsel %vm67, %v658, 0
    %v663 = vsel %vm67, %v660, 0
    %665 = vmatprep.subr.mxu0 0.0
    %666 = vmatpush1.xpose.msra.mxu0 0.0
    %667 = vmatprep.subr.mxu0 0.0
    %668 = vmatpush1.xpose.msra.mxu0 0.0
    %669 = vmatprep.subr.mxu0 0.0
    %670 = vmatpush1.xpose.msra.mxu0 0.0
    %671 = vmatprep.subr.mxu0 0.0
    %672 = vmatpush1.xpose.msra.mxu0 0.0
    %673 = vmatprep.subr.mxu0 0.0
    %674 = vmatpush1.xpose.msra.mxu0 0.0
    %675 = vmatprep.subr.mxu0 0.0
    %676 = vmatpush1.xpose.msra.mxu0 0.0
    %677 = vmatprep.subr.mxu0 0.0
    %678 = vmatpush1.xpose.msra.mxu0 0.0
    %679 = vmatprep.subr.mxu0 0.0
    %680 = vmatpush1.xpose.msra.mxu0 0.0
    %681 = vmatprep.subr.mxu0 0.0
    %682 = vmatpush1.xpose.msra.mxu0 0.0
    %683 = vmatprep.subr.mxu0 0.0
    %684 = vmatpush1.xpose.msra.mxu0 0.0
    %685 = vmatprep.subr.mxu0 0.0
    %686 = vmatpush1.xpose.msra.mxu0 0.0
    %687 = vmatprep.subr.mxu0 0.0
    %688 = vmatpush1.xpose.msra.mxu0 0.0
    %689 = vmatprep.subr.mxu0 0.0
    %690 = vmatpush1.xpose.msra.mxu0 0.0
    %691 = vmatprep.subr.mxu0 0.0
    %692 = vmatpush1.xpose.msra.mxu0 0.0
    %693 = vmatprep.subr.mxu0 0.0
    %694 = vmatpush1.xpose.msra.mxu0 0.0
    %695 = vmatprep.subr.mxu0 0.0
    %696 = vmatpush1.xpose.msra.mxu0 %v663
    %697 = vmatprep.subr.mxu0 0.0
    %698 = vmatpush2.xpose.msra.mxu0 0.0
    %699 = vmatprep.subr.mxu0 0.0
    %700 = vmatpush2.xpose.msra.mxu0 0.0
    %701 = vmatprep.subr.mxu0 0.0
    %702 = vmatpush2.xpose.msra.mxu0 0.0
    %703 = vmatprep.subr.mxu0 0.0
    %704 = vmatpush2.xpose.msra.mxu0 0.0
    %705 = vmatprep.subr.mxu0 0.0
    %706 = vmatpush2.xpose.msra.mxu0 0.0
    %707 = vmatprep.subr.mxu0 0.0
    %708 = vmatpush2.xpose.msra.mxu0 0.0
    %709 = vmatprep.subr.mxu0 0.0
    %710 = vmatpush2.xpose.msra.mxu0 0.0
    %711 = vmatprep.subr.mxu0 0.0
    %712 = vmatpush2.xpose.msra.mxu0 0.0
    %713 = vmatprep.subr.mxu0 0.0
    %714 = vmatpush2.xpose.msra.mxu0 0.0
    %715 = vmatprep.subr.mxu0 0.0
    %716 = vmatpush2.xpose.msra.mxu0 0.0
    %717 = vmatprep.subr.mxu0 0.0
    %718 = vmatpush2.xpose.msra.mxu0 0.0
    %719 = vmatprep.subr.mxu0 0.0
    %720 = vmatpush2.xpose.msra.mxu0 0.0
    %721 = vmatprep.subr.mxu0 0.0
    %722 = vmatpush2.xpose.msra.mxu0 0.0
    %723 = vmatprep.subr.mxu0 0.0
    %724 = vmatpush2.xpose.msra.mxu0 0.0
    %725 = vmatprep.subr.mxu0 0.0
    %726 = vmatpush2.xpose.msra.mxu0 0.0
    %727 = vmatprep.subr.mxu0 0.0
    %728 = vmatpush2.xpose.msra.mxu0 0.0
    %729 = vmatprep.mubr.f32.mxu0 0.0
    %730 = vmatmul.mubr.f32.gmra.mxu0 %v661
    %v731 = vpop.f32.mrf.mxu0
    %v732 = vadd.f32 0.0, %v731
    %v733 = vpop.f32.mrf.mxu0
    %734 = vdwg.mxu0
    %v735 = vsel %vm67, %v654, -inf
    %736 = vmax.xlane.f32.xlu0 %v735
    %v737 = vpop.xlane.xlu0 %736
    %v738 = vsel %vm67, %v732, -inf
    %739 = vmax.xlane.f32.xlu0 %v738
    %v740 = vpop.xlane.xlu0 %739
    %v741 = vsub.f32 %v654, %v737
    %v742 = vsub.f32 %v732, %v740
    %v743 = vmul.f32 %v741, 1.442695
    %v744 = vpow.pop %v743
    %v745 = vmul.f32 %v742, 1.442695
    %v746 = vpow.pop %v745
    %v747 = vsel %vm67, %v744, 0.0
    %748 = vadd.xlane.f32.xlu0 %v747
    %v749 = vpop.xlane.xlu0 %748
    %v750 = vsel %vm67, %v746, 0.0
    %751 = vadd.xlane.f32.xlu0 %v750
    %v752 = vpop.xlane.xlu0 %751
    %v753 = vrcp.pop %v749
    %v754 = vrcp.pop %v752
    %v755 = vmul.f32 %v744, %v753
    %v756 = vmul.f32 %v746, %v754
    %v757 = vadd.f32 %v425, %v755
    %v758 = vadd.f32 %v426, %v756
    %759 = vrot.lane.b32.xlu0 %v237, 56
    %v760 = vpop.permute.xlu0 %759
    %v763 = vsel %vm67, %v755, 0
    %765 = vmatprep.subr.mxu0 0.0
    %766 = vmatpush1.msra.mxu0 0.0
    %767 = vmatprep.subr.mxu0 0.0
    %768 = vmatpush1.msra.mxu0 0.0
    %769 = vmatprep.subr.mxu0 0.0
    %770 = vmatpush1.msra.mxu0 0.0
    %771 = vmatprep.subr.mxu0 0.0
    %772 = vmatpush1.msra.mxu0 0.0
    %773 = vmatprep.subr.mxu0 0.0
    %774 = vmatpush1.msra.mxu0 0.0
    %775 = vmatprep.subr.mxu0 0.0
    %776 = vmatpush1.msra.mxu0 0.0
    %777 = vmatprep.subr.mxu0 0.0
    %778 = vmatpush1.msra.mxu0 0.0
    %779 = vmatprep.subr.mxu0 0.0
    %780 = vmatpush1.msra.mxu0 0.0
    %781 = vmatprep.subr.mxu0 0.0
    %782 = vmatpush1.msra.mxu0 0.0
    %783 = vmatprep.subr.mxu0 0.0
    %784 = vmatpush1.msra.mxu0 0.0
    %785 = vmatprep.subr.mxu0 0.0
    %786 = vmatpush1.msra.mxu0 0.0
    %787 = vmatprep.subr.mxu0 0.0
    %788 = vmatpush1.msra.mxu0 0.0
    %789 = vmatprep.subr.mxu0 0.0
    %790 = vmatpush1.msra.mxu0 0.0
    %791 = vmatprep.subr.mxu0 0.0
    %792 = vmatpush1.msra.mxu0 0.0
    %793 = vmatprep.subr.mxu0 0.0
    %794 = vmatpush1.msra.mxu0 0.0
    %795 = vmatprep.subr.mxu0 0.0
    %796 = vmatpush1.msra.mxu0 %v760
    %797 = vmatprep.subr.mxu0 0.0
    %798 = vmatpush2.msra.mxu0 0.0
    %799 = vmatprep.subr.mxu0 0.0
    %800 = vmatpush2.msra.mxu0 0.0
    %801 = vmatprep.subr.mxu0 0.0
    %802 = vmatpush2.msra.mxu0 0.0
    %803 = vmatprep.subr.mxu0 0.0
    %804 = vmatpush2.msra.mxu0 0.0
    %805 = vmatprep.subr.mxu0 0.0
    %806 = vmatpush2.msra.mxu0 0.0
    %807 = vmatprep.subr.mxu0 0.0
    %808 = vmatpush2.msra.mxu0 0.0
    %809 = vmatprep.subr.mxu0 0.0
    %810 = vmatpush2.msra.mxu0 0.0
    %811 = vmatprep.subr.mxu0 0.0
    %812 = vmatpush2.msra.mxu0 0.0
    %813 = vmatprep.subr.mxu0 0.0
    %814 = vmatpush2.msra.mxu0 0.0
    %815 = vmatprep.subr.mxu0 0.0
    %816 = vmatpush2.msra.mxu0 0.0
    %817 = vmatprep.subr.mxu0 0.0
    %818 = vmatpush2.msra.mxu0 0.0
    %819 = vmatprep.subr.mxu0 0.0
    %820 = vmatpush2.msra.mxu0 0.0
    %821 = vmatprep.subr.mxu0 0.0
    %822 = vmatpush2.msra.mxu0 0.0
    %823 = vmatprep.subr.mxu0 0.0
    %824 = vmatpush2.msra.mxu0 0.0
    %825 = vmatprep.subr.mxu0 0.0
    %826 = vmatpush2.msra.mxu0 0.0
    %827 = vmatprep.subr.mxu0 0.0
    %828 = vmatpush2.msra.mxu0 0.0
    %829 = vmatprep.mubr.f32.mxu0 0.0
    %830 = vmatmul.mubr.f32.gmra.mxu0 %v763
    %v831 = vpop.f32.mrf.mxu0
    %v832 = vadd.f32 0.0, %v831
    %v833 = vpop.f32.mrf.mxu0
    %834 = vdwg.mxu0
    %835 = vrot.lane.b32.xlu0 %v242, 56
    %v836 = vpop.permute.xlu0 %835
    %v839 = vsel %vm67, %v756, 0
    %841 = vmatprep.subr.mxu0 0.0
    %842 = vmatpush1.msra.mxu0 0.0
    %843 = vmatprep.subr.mxu0 0.0
    %844 = vmatpush1.msra.mxu0 0.0
    %845 = vmatprep.subr.mxu0 0.0
    %846 = vmatpush1.msra.mxu0 0.0
    %847 = vmatprep.subr.mxu0 0.0
    %848 = vmatpush1.msra.mxu0 0.0
    %849 = vmatprep.subr.mxu0 0.0
    %850 = vmatpush1.msra.mxu0 0.0
    %851 = vmatprep.subr.mxu0 0.0
    %852 = vmatpush1.msra.mxu0 0.0
    %853 = vmatprep.subr.mxu0 0.0
    %854 = vmatpush1.msra.mxu0 0.0
    %855 = vmatprep.subr.mxu0 0.0
    %856 = vmatpush1.msra.mxu0 0.0
    %857 = vmatprep.subr.mxu0 0.0
    %858 = vmatpush1.msra.mxu0 0.0
    %859 = vmatprep.subr.mxu0 0.0
    %860 = vmatpush1.msra.mxu0 0.0
    %861 = vmatprep.subr.mxu0 0.0
    %862 = vmatpush1.msra.mxu0 0.0
    %863 = vmatprep.subr.mxu0 0.0
    %864 = vmatpush1.msra.mxu0 0.0
    %865 = vmatprep.subr.mxu0 0.0
    %866 = vmatpush1.msra.mxu0 0.0
    %867 = vmatprep.subr.mxu0 0.0
    %868 = vmatpush1.msra.mxu0 0.0
    %869 = vmatprep.subr.mxu0 0.0
    %870 = vmatpush1.msra.mxu0 0.0
    %871 = vmatprep.subr.mxu0 0.0
    %872 = vmatpush1.msra.mxu0 %v836
    %873 = vmatprep.subr.mxu0 0.0
    %874 = vmatpush2.msra.mxu0 0.0
    %875 = vmatprep.subr.mxu0 0.0
    %876 = vmatpush2.msra.mxu0 0.0
    %877 = vmatprep.subr.mxu0 0.0
    %878 = vmatpush2.msra.mxu0 0.0
    %879 = vmatprep.subr.mxu0 0.0
    %880 = vmatpush2.msra.mxu0 0.0
    %881 = vmatprep.subr.mxu0 0.0
    %882 = vmatpush2.msra.mxu0 0.0
    %883 = vmatprep.subr.mxu0 0.0
    %884 = vmatpush2.msra.mxu0 0.0
    %885 = vmatprep.subr.mxu0 0.0
    %886 = vmatpush2.msra.mxu0 0.0
    %887 = vmatprep.subr.mxu0 0.0
    %888 = vmatpush2.msra.mxu0 0.0
    %889 = vmatprep.subr.mxu0 0.0
    %890 = vmatpush2.msra.mxu0 0.0
    %891 = vmatprep.subr.mxu0 0.0
    %892 = vmatpush2.msra.mxu0 0.0
    %893 = vmatprep.subr.mxu0 0.0
    %894 = vmatpush2.msra.mxu0 0.0
    %895 = vmatprep.subr.mxu0 0.0
    %896 = vmatpush2.msra.mxu0 0.0
    %897 = vmatprep.subr.mxu0 0.0
    %898 = vmatpush2.msra.mxu0 0.0
    %899 = vmatprep.subr.mxu0 0.0
    %900 = vmatpush2.msra.mxu0 0.0
    %901 = vmatprep.subr.mxu0 0.0
    %902 = vmatpush2.msra.mxu0 0.0
    %903 = vmatprep.subr.mxu0 0.0
    %904 = vmatpush2.msra.mxu0 0.0
    %905 = vmatprep.mubr.f32.mxu0 0.0
    %906 = vmatmul.mubr.f32.gmra.mxu0 %v839
    %v907 = vpop.f32.mrf.mxu0
    %v908 = vadd.f32 0.0, %v907
    %v909 = vpop.f32.mrf.mxu0
    %910 = vdwg.mxu0
    %911 = vrot.lane.b32.xlu0 %v245, 112
    %v912 = vpop.permute.xlu0 %911
    %913 = vrot.lane.b32.xlu0 %v237, 80
    %v914 = vpop.permute.xlu0 %913
    %v915 = vsel %vm67, %v912, 0
    %v917 = vsel %vm67, %v914, 0
    %919 = vmatprep.subr.mxu0 0.0
    %920 = vmatpush1.xpose.msra.mxu0 0.0
    %921 = vmatprep.subr.mxu0 0.0
    %922 = vmatpush1.xpose.msra.mxu0 0.0
    %923 = vmatprep.subr.mxu0 0.0
    %924 = vmatpush1.xpose.msra.mxu0 0.0
    %925 = vmatprep.subr.mxu0 0.0
    %926 = vmatpush1.xpose.msra.mxu0 0.0
    %927 = vmatprep.subr.mxu0 0.0
    %928 = vmatpush1.xpose.msra.mxu0 0.0
    %929 = vmatprep.subr.mxu0 0.0
    %930 = vmatpush1.xpose.msra.mxu0 0.0
    %931 = vmatprep.subr.mxu0 0.0
    %932 = vmatpush1.xpose.msra.mxu0 0.0
    %933 = vmatprep.subr.mxu0 0.0
    %934 = vmatpush1.xpose.msra.mxu0 0.0
    %935 = vmatprep.subr.mxu0 0.0
    %936 = vmatpush1.xpose.msra.mxu0 0.0
    %937 = vmatprep.subr.mxu0 0.0
    %938 = vmatpush1.xpose.msra.mxu0 0.0
    %939 = vmatprep.subr.mxu0 0.0
    %940 = vmatpush1.xpose.msra.mxu0 0.0
    %941 = vmatprep.subr.mxu0 0.0
    %942 = vmatpush1.xpose.msra.mxu0 0.0
    %943 = vmatprep.subr.mxu0 0.0
    %944 = vmatpush1.xpose.msra.mxu0 0.0
    %945 = vmatprep.subr.mxu0 0.0
    %946 = vmatpush1.xpose.msra.mxu0 0.0
    %947 = vmatprep.subr.mxu0 0.0
    %948 = vmatpush1.xpose.msra.mxu0 0.0
    %949 = vmatprep.subr.mxu0 0.0
    %950 = vmatpush1.xpose.msra.mxu0 %v917
    %951 = vmatprep.subr.mxu0 0.0
    %952 = vmatpush2.xpose.msra.mxu0 0.0
    %953 = vmatprep.subr.mxu0 0.0
    %954 = vmatpush2.xpose.msra.mxu0 0.0
    %955 = vmatprep.subr.mxu0 0.0
    %956 = vmatpush2.xpose.msra.mxu0 0.0
    %957 = vmatprep.subr.mxu0 0.0
    %958 = vmatpush2.xpose.msra.mxu0 0.0
    %959 = vmatprep.subr.mxu0 0.0
    %960 = vmatpush2.xpose.msra.mxu0 0.0
    %961 = vmatprep.subr.mxu0 0.0
    %962 = vmatpush2.xpose.msra.mxu0 0.0
    %963 = vmatprep.subr.mxu0 0.0
    %964 = vmatpush2.xpose.msra.mxu0 0.0
    %965 = vmatprep.subr.mxu0 0.0
    %966 = vmatpush2.xpose.msra.mxu0 0.0
    %967 = vmatprep.subr.mxu0 0.0
    %968 = vmatpush2.xpose.msra.mxu0 0.0
    %969 = vmatprep.subr.mxu0 0.0
    %970 = vmatpush2.xpose.msra.mxu0 0.0
    %971 = vmatprep.subr.mxu0 0.0
    %972 = vmatpush2.xpose.msra.mxu0 0.0
    %973 = vmatprep.subr.mxu0 0.0
    %974 = vmatpush2.xpose.msra.mxu0 0.0
    %975 = vmatprep.subr.mxu0 0.0
    %976 = vmatpush2.xpose.msra.mxu0 0.0
    %977 = vmatprep.subr.mxu0 0.0
    %978 = vmatpush2.xpose.msra.mxu0 0.0
    %979 = vmatprep.subr.mxu0 0.0
    %980 = vmatpush2.xpose.msra.mxu0 0.0
    %981 = vmatprep.subr.mxu0 0.0
    %982 = vmatpush2.xpose.msra.mxu0 0.0
    %983 = vmatprep.mubr.f32.mxu0 0.0
    %984 = vmatmul.mubr.f32.gmra.mxu0 %v915
    %v985 = vpop.f32.mrf.mxu0
    %v986 = vadd.f32 0.0, %v985
    %v987 = vpop.f32.mrf.mxu0
    %988 = vdwg.mxu0
    %989 = vrot.lane.b32.xlu0 %v246, 112
    %v990 = vpop.permute.xlu0 %989
    %991 = vrot.lane.b32.xlu0 %v242, 80
    %v992 = vpop.permute.xlu0 %991
    %v993 = vsel %vm67, %v990, 0
    %v995 = vsel %vm67, %v992, 0
    %997 = vmatprep.subr.mxu0 0.0
    %998 = vmatpush1.xpose.msra.mxu0 0.0
    %999 = vmatprep.subr.mxu0 0.0
    %1000 = vmatpush1.xpose.msra.mxu0 0.0
    %1001 = vmatprep.subr.mxu0 0.0
    %1002 = vmatpush1.xpose.msra.mxu0 0.0
    %1003 = vmatprep.subr.mxu0 0.0
    %1004 = vmatpush1.xpose.msra.mxu0 0.0
    %1005 = vmatprep.subr.mxu0 0.0
    %1006 = vmatpush1.xpose.msra.mxu0 0.0
    %1007 = vmatprep.subr.mxu0 0.0
    %1008 = vmatpush1.xpose.msra.mxu0 0.0
    %1009 = vmatprep.subr.mxu0 0.0
    %1010 = vmatpush1.xpose.msra.mxu0 0.0
    %1011 = vmatprep.subr.mxu0 0.0
    %1012 = vmatpush1.xpose.msra.mxu0 0.0
    %1013 = vmatprep.subr.mxu0 0.0
    %1014 = vmatpush1.xpose.msra.mxu0 0.0
    %1015 = vmatprep.subr.mxu0 0.0
    %1016 = vmatpush1.xpose.msra.mxu0 0.0
    %1017 = vmatprep.subr.mxu0 0.0
    %1018 = vmatpush1.xpose.msra.mxu0 0.0
    %1019 = vmatprep.subr.mxu0 0.0
    %1020 = vmatpush1.xpose.msra.mxu0 0.0
    %1021 = vmatprep.subr.mxu0 0.0
    %1022 = vmatpush1.xpose.msra.mxu0 0.0
    %1023 = vmatprep.subr.mxu0 0.0
    %1024 = vmatpush1.xpose.msra.mxu0 0.0
    %1025 = vmatprep.subr.mxu0 0.0
    %1026 = vmatpush1.xpose.msra.mxu0 0.0
    %1027 = vmatprep.subr.mxu0 0.0
    %1028 = vmatpush1.xpose.msra.mxu0 %v995
    %1029 = vmatprep.subr.mxu0 0.0
    %1030 = vmatpush2.xpose.msra.mxu0 0.0
    %1031 = vmatprep.subr.mxu0 0.0
    %1032 = vmatpush2.xpose.msra.mxu0 0.0
    %1033 = vmatprep.subr.mxu0 0.0
    %1034 = vmatpush2.xpose.msra.mxu0 0.0
    %1035 = vmatprep.subr.mxu0 0.0
    %1036 = vmatpush2.xpose.msra.mxu0 0.0
    %1037 = vmatprep.subr.mxu0 0.0
    %1038 = vmatpush2.xpose.msra.mxu0 0.0
    %1039 = vmatprep.subr.mxu0 0.0
    %1040 = vmatpush2.xpose.msra.mxu0 0.0
    %1041 = vmatprep.subr.mxu0 0.0
    %1042 = vmatpush2.xpose.msra.mxu0 0.0
    %1043 = vmatprep.subr.mxu0 0.0
    %1044 = vmatpush2.xpose.msra.mxu0 0.0
    %1045 = vmatprep.subr.mxu0 0.0
    %1046 = vmatpush2.xpose.msra.mxu0 0.0
    %1047 = vmatprep.subr.mxu0 0.0
    %1048 = vmatpush2.xpose.msra.mxu0 0.0
    %1049 = vmatprep.subr.mxu0 0.0
    %1050 = vmatpush2.xpose.msra.mxu0 0.0
    %1051 = vmatprep.subr.mxu0 0.0
    %1052 = vmatpush2.xpose.msra.mxu0 0.0
    %1053 = vmatprep.subr.mxu0 0.0
    %1054 = vmatpush2.xpose.msra.mxu0 0.0
    %1055 = vmatprep.subr.mxu0 0.0
    %1056 = vmatpush2.xpose.msra.mxu0 0.0
    %1057 = vmatprep.subr.mxu0 0.0
    %1058 = vmatpush2.xpose.msra.mxu0 0.0
    %1059 = vmatprep.subr.mxu0 0.0
    %1060 = vmatpush2.xpose.msra.mxu0 0.0
    %1061 = vmatprep.mubr.f32.mxu0 0.0
    %1062 = vmatmul.mubr.f32.gmra.mxu0 %v993
    %v1063 = vpop.f32.mrf.mxu0
    %v1064 = vadd.f32 0.0, %v1063
    %v1065 = vpop.f32.mrf.mxu0
    %1066 = vdwg.mxu0
    %v1067 = vsel %vm67, %v986, -inf
    %1068 = vmax.xlane.f32.xlu0 %v1067
    %v1069 = vpop.xlane.xlu0 %1068
    %v1070 = vsel %vm67, %v1064, -inf
    %1071 = vmax.xlane.f32.xlu0 %v1070
    %v1072 = vpop.xlane.xlu0 %1071
    %v1073 = vsub.f32 %v986, %v1069
    %v1074 = vsub.f32 %v1064, %v1072
    %v1075 = vmul.f32 %v1073, 1.442695
    %v1076 = vpow.pop %v1075
    %v1077 = vmul.f32 %v1074, 1.442695
    %v1078 = vpow.pop %v1077
    %v1079 = vsel %vm67, %v1076, 0.0
    %1080 = vadd.xlane.f32.xlu0 %v1079
    %v1081 = vpop.xlane.xlu0 %1080
    %v1082 = vsel %vm67, %v1078, 0.0
    %1083 = vadd.xlane.f32.xlu0 %v1082
    %v1084 = vpop.xlane.xlu0 %1083
    %v1085 = vrcp.pop %v1081
    %v1086 = vrcp.pop %v1084
    %v1087 = vmul.f32 %v1076, %v1085
    %v1088 = vmul.f32 %v1078, %v1086
    %v1089 = vadd.f32 %v757, %v1087
    %v1090 = vadd.f32 %v758, %v1088
    %1091 = vrot.lane.b32.xlu0 %v237, 48
    %v1092 = vpop.permute.xlu0 %1091
    %v1095 = vsel %vm67, %v1087, 0
    %1097 = vmatprep.subr.mxu0 0.0
    %1098 = vmatpush1.msra.mxu0 0.0
    %1099 = vmatprep.subr.mxu0 0.0
    %1100 = vmatpush1.msra.mxu0 0.0
    %1101 = vmatprep.subr.mxu0 0.0
    %1102 = vmatpush1.msra.mxu0 0.0
    %1103 = vmatprep.subr.mxu0 0.0
    %1104 = vmatpush1.msra.mxu0 0.0
    %1105 = vmatprep.subr.mxu0 0.0
    %1106 = vmatpush1.msra.mxu0 0.0
    %1107 = vmatprep.subr.mxu0 0.0
    %1108 = vmatpush1.msra.mxu0 0.0
    %1109 = vmatprep.subr.mxu0 0.0
    %1110 = vmatpush1.msra.mxu0 0.0
    %1111 = vmatprep.subr.mxu0 0.0
    %1112 = vmatpush1.msra.mxu0 0.0
    %1113 = vmatprep.subr.mxu0 0.0
    %1114 = vmatpush1.msra.mxu0 0.0
    %1115 = vmatprep.subr.mxu0 0.0
    %1116 = vmatpush1.msra.mxu0 0.0
    %1117 = vmatprep.subr.mxu0 0.0
    %1118 = vmatpush1.msra.mxu0 0.0
    %1119 = vmatprep.subr.mxu0 0.0
    %1120 = vmatpush1.msra.mxu0 0.0
    %1121 = vmatprep.subr.mxu0 0.0
    %1122 = vmatpush1.msra.mxu0 0.0
    %1123 = vmatprep.subr.mxu0 0.0
    %1124 = vmatpush1.msra.mxu0 0.0
    %1125 = vmatprep.subr.mxu0 0.0
    %1126 = vmatpush1.msra.mxu0 0.0
    %1127 = vmatprep.subr.mxu0 0.0
    %1128 = vmatpush1.msra.mxu0 %v1092
    %1129 = vmatprep.subr.mxu0 0.0
    %1130 = vmatpush2.msra.mxu0 0.0
    %1131 = vmatprep.subr.mxu0 0.0
    %1132 = vmatpush2.msra.mxu0 0.0
    %1133 = vmatprep.subr.mxu0 0.0
    %1134 = vmatpush2.msra.mxu0 0.0
    %1135 = vmatprep.subr.mxu0 0.0
    %1136 = vmatpush2.msra.mxu0 0.0
    %1137 = vmatprep.subr.mxu0 0.0
    %1138 = vmatpush2.msra.mxu0 0.0
    %1139 = vmatprep.subr.mxu0 0.0
    %1140 = vmatpush2.msra.mxu0 0.0
    %1141 = vmatprep.subr.mxu0 0.0
    %1142 = vmatpush2.msra.mxu0 0.0
    %1143 = vmatprep.subr.mxu0 0.0
    %1144 = vmatpush2.msra.mxu0 0.0
    %1145 = vmatprep.subr.mxu0 0.0
    %1146 = vmatpush2.msra.mxu0 0.0
    %1147 = vmatprep.subr.mxu0 0.0
    %1148 = vmatpush2.msra.mxu0 0.0
    %1149 = vmatprep.subr.mxu0 0.0
    %1150 = vmatpush2.msra.mxu0 0.0
    %1151 = vmatprep.subr.mxu0 0.0
    %1152 = vmatpush2.msra.mxu0 0.0
    %1153 = vmatprep.subr.mxu0 0.0
    %1154 = vmatpush2.msra.mxu0 0.0
    %1155 = vmatprep.subr.mxu0 0.0
    %1156 = vmatpush2.msra.mxu0 0.0
    %1157 = vmatprep.subr.mxu0 0.0
    %1158 = vmatpush2.msra.mxu0 0.0
    %1159 = vmatprep.subr.mxu0 0.0
    %1160 = vmatpush2.msra.mxu0 0.0
    %1161 = vmatprep.mubr.f32.mxu0 0.0
    %1162 = vmatmul.mubr.f32.gmra.mxu0 %v1095
    %v1163 = vpop.f32.mrf.mxu0
    %v1164 = vadd.f32 0.0, %v1163
    %v1165 = vpop.f32.mrf.mxu0
    %1166 = vdwg.mxu0
    %1167 = vrot.lane.b32.xlu0 %v242, 48
    %v1168 = vpop.permute.xlu0 %1167
    %v1171 = vsel %vm67, %v1088, 0
    %1173 = vmatprep.subr.mxu0 0.0
    %1174 = vmatpush1.msra.mxu0 0.0
    %1175 = vmatprep.subr.mxu0 0.0
    %1176 = vmatpush1.msra.mxu0 0.0
    %1177 = vmatprep.subr.mxu0 0.0
    %1178 = vmatpush1.msra.mxu0 0.0
    %1179 = vmatprep.subr.mxu0 0.0
    %1180 = vmatpush1.msra.mxu0 0.0
    %1181 = vmatprep.subr.mxu0 0.0
    %1182 = vmatpush1.msra.mxu0 0.0
    %1183 = vmatprep.subr.mxu0 0.0
    %1184 = vmatpush1.msra.mxu0 0.0
    %1185 = vmatprep.subr.mxu0 0.0
    %1186 = vmatpush1.msra.mxu0 0.0
    %1187 = vmatprep.subr.mxu0 0.0
    %1188 = vmatpush1.msra.mxu0 0.0
    %1189 = vmatprep.subr.mxu0 0.0
    %1190 = vmatpush1.msra.mxu0 0.0
    %1191 = vmatprep.subr.mxu0 0.0
    %1192 = vmatpush1.msra.mxu0 0.0
    %1193 = vmatprep.subr.mxu0 0.0
    %1194 = vmatpush1.msra.mxu0 0.0
    %1195 = vmatprep.subr.mxu0 0.0
    %1196 = vmatpush1.msra.mxu0 0.0
    %1197 = vmatprep.subr.mxu0 0.0
    %1198 = vmatpush1.msra.mxu0 0.0
    %1199 = vmatprep.subr.mxu0 0.0
    %1200 = vmatpush1.msra.mxu0 0.0
    %1201 = vmatprep.subr.mxu0 0.0
    %1202 = vmatpush1.msra.mxu0 0.0
    %1203 = vmatprep.subr.mxu0 0.0
    %1204 = vmatpush1.msra.mxu0 %v1168
    %1205 = vmatprep.subr.mxu0 0.0
    %1206 = vmatpush2.msra.mxu0 0.0
    %1207 = vmatprep.subr.mxu0 0.0
    %1208 = vmatpush2.msra.mxu0 0.0
    %1209 = vmatprep.subr.mxu0 0.0
    %1210 = vmatpush2.msra.mxu0 0.0
    %1211 = vmatprep.subr.mxu0 0.0
    %1212 = vmatpush2.msra.mxu0 0.0
    %1213 = vmatprep.subr.mxu0 0.0
    %1214 = vmatpush2.msra.mxu0 0.0
    %1215 = vmatprep.subr.mxu0 0.0
    %1216 = vmatpush2.msra.mxu0 0.0
    %1217 = vmatprep.subr.mxu0 0.0
    %1218 = vmatpush2.msra.mxu0 0.0
    %1219 = vmatprep.subr.mxu0 0.0
    %1220 = vmatpush2.msra.mxu0 0.0
    %1221 = vmatprep.subr.mxu0 0.0
    %1222 = vmatpush2.msra.mxu0 0.0
    %1223 = vmatprep.subr.mxu0 0.0
    %1224 = vmatpush2.msra.mxu0 0.0
    %1225 = vmatprep.subr.mxu0 0.0
    %1226 = vmatpush2.msra.mxu0 0.0
    %1227 = vmatprep.subr.mxu0 0.0
    %1228 = vmatpush2.msra.mxu0 0.0
    %1229 = vmatprep.subr.mxu0 0.0
    %1230 = vmatpush2.msra.mxu0 0.0
    %1231 = vmatprep.subr.mxu0 0.0
    %1232 = vmatpush2.msra.mxu0 0.0
    %1233 = vmatprep.subr.mxu0 0.0
    %1234 = vmatpush2.msra.mxu0 0.0
    %1235 = vmatprep.subr.mxu0 0.0
    %1236 = vmatpush2.msra.mxu0 0.0
    %1237 = vmatprep.mubr.f32.mxu0 0.0
    %1238 = vmatmul.mubr.f32.gmra.mxu0 %v1171
    %v1239 = vpop.f32.mrf.mxu0
    %v1240 = vadd.f32 0.0, %v1239
    %v1241 = vpop.f32.mrf.mxu0
    %1242 = vdwg.mxu0
    %1243 = vrot.lane.b32.xlu0 %v245, 104
    %v1244 = vpop.permute.xlu0 %1243
    %1245 = vrot.lane.b32.xlu0 %v237, 72
    %v1246 = vpop.permute.xlu0 %1245
    %v1247 = vsel %vm67, %v1244, 0
    %v1249 = vsel %vm67, %v1246, 0
    %1251 = vmatprep.subr.mxu0 0.0
    %1252 = vmatpush1.xpose.msra.mxu0 0.0
    %1253 = vmatprep.subr.mxu0 0.0
    %1254 = vmatpush1.xpose.msra.mxu0 0.0
    %1255 = vmatprep.subr.mxu0 0.0
    %1256 = vmatpush1.xpose.msra.mxu0 0.0
    %1257 = vmatprep.subr.mxu0 0.0
    %1258 = vmatpush1.xpose.msra.mxu0 0.0
    %1259 = vmatprep.subr.mxu0 0.0
    %1260 = vmatpush1.xpose.msra.mxu0 0.0
    %1261 = vmatprep.subr.mxu0 0.0
    %1262 = vmatpush1.xpose.msra.mxu0 0.0
    %1263 = vmatprep.subr.mxu0 0.0
    %1264 = vmatpush1.xpose.msra.mxu0 0.0
    %1265 = vmatprep.subr.mxu0 0.0
    %1266 = vmatpush1.xpose.msra.mxu0 0.0
    %1267 = vmatprep.subr.mxu0 0.0
    %1268 = vmatpush1.xpose.msra.mxu0 0.0
    %1269 = vmatprep.subr.mxu0 0.0
    %1270 = vmatpush1.xpose.msra.mxu0 0.0
    %1271 = vmatprep.subr.mxu0 0.0
    %1272 = vmatpush1.xpose.msra.mxu0 0.0
    %1273 = vmatprep.subr.mxu0 0.0
    %1274 = vmatpush1.xpose.msra.mxu0 0.0
    %1275 = vmatprep.subr.mxu0 0.0
    %1276 = vmatpush1.xpose.msra.mxu0 0.0
    %1277 = vmatprep.subr.mxu0 0.0
    %1278 = vmatpush1.xpose.msra.mxu0 0.0
    %1279 = vmatprep.subr.mxu0 0.0
    %1280 = vmatpush1.xpose.msra.mxu0 0.0
    %1281 = vmatprep.subr.mxu0 0.0
    %1282 = vmatpush1.xpose.msra.mxu0 %v1249
    %1283 = vmatprep.subr.mxu0 0.0
    %1284 = vmatpush2.xpose.msra.mxu0 0.0
    %1285 = vmatprep.subr.mxu0 0.0
    %1286 = vmatpush2.xpose.msra.mxu0 0.0
    %1287 = vmatprep.subr.mxu0 0.0
    %1288 = vmatpush2.xpose.msra.mxu0 0.0
    %1289 = vmatprep.subr.mxu0 0.0
    %1290 = vmatpush2.xpose.msra.mxu0 0.0
    %1291 = vmatprep.subr.mxu0 0.0
    %1292 = vmatpush2.xpose.msra.mxu0 0.0
    %1293 = vmatprep.subr.mxu0 0.0
    %1294 = vmatpush2.xpose.msra.mxu0 0.0
    %1295 = vmatprep.subr.mxu0 0.0
    %1296 = vmatpush2.xpose.msra.mxu0 0.0
    %1297 = vmatprep.subr.mxu0 0.0
    %1298 = vmatpush2.xpose.msra.mxu0 0.0
    %1299 = vmatprep.subr.mxu0 0.0
    %1300 = vmatpush2.xpose.msra.mxu0 0.0
    %1301 = vmatprep.subr.mxu0 0.0
    %1302 = vmatpush2.xpose.msra.mxu0 0.0
    %1303 = vmatprep.subr.mxu0 0.0
    %1304 = vmatpush2.xpose.msra.mxu0 0.0
    %1305 = vmatprep.subr.mxu0 0.0
    %1306 = vmatpush2.xpose.msra.mxu0 0.0
    %1307 = vmatprep.subr.mxu0 0.0
    %1308 = vmatpush2.xpose.msra.mxu0 0.0
    %1309 = vmatprep.subr.mxu0 0.0
    %1310 = vmatpush2.xpose.msra.mxu0 0.0
    %1311 = vmatprep.subr.mxu0 0.0
    %1312 = vmatpush2.xpose.msra.mxu0 0.0
    %1313 = vmatprep.subr.mxu0 0.0
    %1314 = vmatpush2.xpose.msra.mxu0 0.0
    %1315 = vmatprep.mubr.f32.mxu0 0.0
    %1316 = vmatmul.mubr.f32.gmra.mxu0 %v1247
    %v1317 = vpop.f32.mrf.mxu0
    %v1318 = vadd.f32 0.0, %v1317
    %v1319 = vpop.f32.mrf.mxu0
    %1320 = vdwg.mxu0
    %1321 = vrot.lane.b32.xlu0 %v246, 104
    %v1322 = vpop.permute.xlu0 %1321
    %1323 = vrot.lane.b32.xlu0 %v242, 72
    %v1324 = vpop.permute.xlu0 %1323
    %v1325 = vsel %vm67, %v1322, 0
    %v1327 = vsel %vm67, %v1324, 0
    %1329 = vmatprep.subr.mxu0 0.0
    %1330 = vmatpush1.xpose.msra.mxu0 0.0
    %1331 = vmatprep.subr.mxu0 0.0
    %1332 = vmatpush1.xpose.msra.mxu0 0.0
    %1333 = vmatprep.subr.mxu0 0.0
    %1334 = vmatpush1.xpose.msra.mxu0 0.0
    %1335 = vmatprep.subr.mxu0 0.0
    %1336 = vmatpush1.xpose.msra.mxu0 0.0
    %1337 = vmatprep.subr.mxu0 0.0
    %1338 = vmatpush1.xpose.msra.mxu0 0.0
    %1339 = vmatprep.subr.mxu0 0.0
    %1340 = vmatpush1.xpose.msra.mxu0 0.0
    %1341 = vmatprep.subr.mxu0 0.0
    %1342 = vmatpush1.xpose.msra.mxu0 0.0
    %1343 = vmatprep.subr.mxu0 0.0
    %1344 = vmatpush1.xpose.msra.mxu0 0.0
    %1345 = vmatprep.subr.mxu0 0.0
    %1346 = vmatpush1.xpose.msra.mxu0 0.0
    %1347 = vmatprep.subr.mxu0 0.0
    %1348 = vmatpush1.xpose.msra.mxu0 0.0
    %1349 = vmatprep.subr.mxu0 0.0
    %1350 = vmatpush1.xpose.msra.mxu0 0.0
    %1351 = vmatprep.subr.mxu0 0.0
    %1352 = vmatpush1.xpose.msra.mxu0 0.0
    %1353 = vmatprep.subr.mxu0 0.0
    %1354 = vmatpush1.xpose.msra.mxu0 0.0
    %1355 = vmatprep.subr.mxu0 0.0
    %1356 = vmatpush1.xpose.msra.mxu0 0.0
    %1357 = vmatprep.subr.mxu0 0.0
    %1358 = vmatpush1.xpose.msra.mxu0 0.0
    %1359 = vmatprep.subr.mxu0 0.0
    %1360 = vmatpush1.xpose.msra.mxu0 %v1327
    %1361 = vmatprep.subr.mxu0 0.0
    %1362 = vmatpush2.xpose.msra.mxu0 0.0
    %1363 = vmatprep.subr.mxu0 0.0
    %1364 = vmatpush2.xpose.msra.mxu0 0.0
    %1365 = vmatprep.subr.mxu0 0.0
    %1366 = vmatpush2.xpose.msra.mxu0 0.0
    %1367 = vmatprep.subr.mxu0 0.0
    %1368 = vmatpush2.xpose.msra.mxu0 0.0
    %1369 = vmatprep.subr.mxu0 0.0
    %1370 = vmatpush2.xpose.msra.mxu0 0.0
    %1371 = vmatprep.subr.mxu0 0.0
    %1372 = vmatpush2.xpose.msra.mxu0 0.0
    %1373 = vmatprep.subr.mxu0 0.0
    %1374 = vmatpush2.xpose.msra.mxu0 0.0
    %1375 = vmatprep.subr.mxu0 0.0
    %1376 = vmatpush2.xpose.msra.mxu0 0.0
    %1377 = vmatprep.subr.mxu0 0.0
    %1378 = vmatpush2.xpose.msra.mxu0 0.0
    %1379 = vmatprep.subr.mxu0 0.0
    %1380 = vmatpush2.xpose.msra.mxu0 0.0
    %1381 = vmatprep.subr.mxu0 0.0
    %1382 = vmatpush2.xpose.msra.mxu0 0.0
    %1383 = vmatprep.subr.mxu0 0.0
    %1384 = vmatpush2.xpose.msra.mxu0 0.0
    %1385 = vmatprep.subr.mxu0 0.0
    %1386 = vmatpush2.xpose.msra.mxu0 0.0
    %1387 = vmatprep.subr.mxu0 0.0
    %1388 = vmatpush2.xpose.msra.mxu0 0.0
    %1389 = vmatprep.subr.mxu0 0.0
    %1390 = vmatpush2.xpose.msra.mxu0 0.0
    %1391 = vmatprep.subr.mxu0 0.0
    %1392 = vmatpush2.xpose.msra.mxu0 0.0
    %1393 = vmatprep.mubr.f32.mxu0 0.0
    %1394 = vmatmul.mubr.f32.gmra.mxu0 %v1325
    %v1395 = vpop.f32.mrf.mxu0
    %v1396 = vadd.f32 0.0, %v1395
    %v1397 = vpop.f32.mrf.mxu0
    %1398 = vdwg.mxu0
    %v1399 = vsel %vm67, %v1318, -inf
    %1400 = vmax.xlane.f32.xlu0 %v1399
    %v1401 = vpop.xlane.xlu0 %1400
    %v1402 = vsel %vm67, %v1396, -inf
    %1403 = vmax.xlane.f32.xlu0 %v1402
    %v1404 = vpop.xlane.xlu0 %1403
    %v1405 = vsub.f32 %v1318, %v1401
    %v1406 = vsub.f32 %v1396, %v1404
    %v1407 = vmul.f32 %v1405, 1.442695
    %v1408 = vpow.pop %v1407
    %v1409 = vmul.f32 %v1406, 1.442695
    %v1410 = vpow.pop %v1409
    %v1411 = vsel %vm67, %v1408, 0.0
    %1412 = vadd.xlane.f32.xlu0 %v1411
    %v1413 = vpop.xlane.xlu0 %1412
    %v1414 = vsel %vm67, %v1410, 0.0
    %1415 = vadd.xlane.f32.xlu0 %v1414
    %v1416 = vpop.xlane.xlu0 %1415
    %v1417 = vrcp.pop %v1413
    %v1418 = vrcp.pop %v1416
    %v1419 = vmul.f32 %v1408, %v1417
    %v1420 = vmul.f32 %v1410, %v1418
    %v1421 = vadd.f32 %v1089, %v1419
    %v1422 = vadd.f32 %v1090, %v1420
    %1423 = vrot.lane.b32.xlu0 %v237, 40
    %v1424 = vpop.permute.xlu0 %1423
    %v1427 = vsel %vm67, %v1419, 0
    %1429 = vmatprep.subr.mxu0 0.0
    %1430 = vmatpush1.msra.mxu0 0.0
    %1431 = vmatprep.subr.mxu0 0.0
    %1432 = vmatpush1.msra.mxu0 0.0
    %1433 = vmatprep.subr.mxu0 0.0
    %1434 = vmatpush1.msra.mxu0 0.0
    %1435 = vmatprep.subr.mxu0 0.0
    %1436 = vmatpush1.msra.mxu0 0.0
    %1437 = vmatprep.subr.mxu0 0.0
    %1438 = vmatpush1.msra.mxu0 0.0
    %1439 = vmatprep.subr.mxu0 0.0
    %1440 = vmatpush1.msra.mxu0 0.0
    %1441 = vmatprep.subr.mxu0 0.0
    %1442 = vmatpush1.msra.mxu0 0.0
    %1443 = vmatprep.subr.mxu0 0.0
    %1444 = vmatpush1.msra.mxu0 0.0
    %1445 = vmatprep.subr.mxu0 0.0
    %1446 = vmatpush1.msra.mxu0 0.0
    %1447 = vmatprep.subr.mxu0 0.0
    %1448 = vmatpush1.msra.mxu0 0.0
    %1449 = vmatprep.subr.mxu0 0.0
    %1450 = vmatpush1.msra.mxu0 0.0
    %1451 = vmatprep.subr.mxu0 0.0
    %1452 = vmatpush1.msra.mxu0 0.0
    %1453 = vmatprep.subr.mxu0 0.0
    %1454 = vmatpush1.msra.mxu0 0.0
    %1455 = vmatprep.subr.mxu0 0.0
    %1456 = vmatpush1.msra.mxu0 0.0
    %1457 = vmatprep.subr.mxu0 0.0
    %1458 = vmatpush1.msra.mxu0 0.0
    %1459 = vmatprep.subr.mxu0 0.0
    %1460 = vmatpush1.msra.mxu0 %v1424
    %1461 = vmatprep.subr.mxu0 0.0
    %1462 = vmatpush2.msra.mxu0 0.0
    %1463 = vmatprep.subr.mxu0 0.0
    %1464 = vmatpush2.msra.mxu0 0.0
    %1465 = vmatprep.subr.mxu0 0.0
    %1466 = vmatpush2.msra.mxu0 0.0
    %1467 = vmatprep.subr.mxu0 0.0
    %1468 = vmatpush2.msra.mxu0 0.0
    %1469 = vmatprep.subr.mxu0 0.0
    %1470 = vmatpush2.msra.mxu0 0.0
    %1471 = vmatprep.subr.mxu0 0.0
    %1472 = vmatpush2.msra.mxu0 0.0
    %1473 = vmatprep.subr.mxu0 0.0
    %1474 = vmatpush2.msra.mxu0 0.0
    %1475 = vmatprep.subr.mxu0 0.0
    %1476 = vmatpush2.msra.mxu0 0.0
    %1477 = vmatprep.subr.mxu0 0.0
    %1478 = vmatpush2.msra.mxu0 0.0
    %1479 = vmatprep.subr.mxu0 0.0
    %1480 = vmatpush2.msra.mxu0 0.0
    %1481 = vmatprep.subr.mxu0 0.0
    %1482 = vmatpush2.msra.mxu0 0.0
    %1483 = vmatprep.subr.mxu0 0.0
    %1484 = vmatpush2.msra.mxu0 0.0
    %1485 = vmatprep.subr.mxu0 0.0
    %1486 = vmatpush2.msra.mxu0 0.0
    %1487 = vmatprep.subr.mxu0 0.0
    %1488 = vmatpush2.msra.mxu0 0.0
    %1489 = vmatprep.subr.mxu0 0.0
    %1490 = vmatpush2.msra.mxu0 0.0
    %1491 = vmatprep.subr.mxu0 0.0
    %1492 = vmatpush2.msra.mxu0 0.0
    %1493 = vmatprep.mubr.f32.mxu0 0.0
    %1494 = vmatmul.mubr.f32.gmra.mxu0 %v1427
    %v1495 = vpop.f32.mrf.mxu0
    %v1496 = vadd.f32 0.0, %v1495
    %v1497 = vpop.f32.mrf.mxu0
    %1498 = vdwg.mxu0
    %1499 = vrot.lane.b32.xlu0 %v242, 40
    %v1500 = vpop.permute.xlu0 %1499
    %v1503 = vsel %vm67, %v1420, 0
    %1505 = vmatprep.subr.mxu0 0.0
    %1506 = vmatpush1.msra.mxu0 0.0
    %1507 = vmatprep.subr.mxu0 0.0
    %1508 = vmatpush1.msra.mxu0 0.0
    %1509 = vmatprep.subr.mxu0 0.0
    %1510 = vmatpush1.msra.mxu0 0.0
    %1511 = vmatprep.subr.mxu0 0.0
    %1512 = vmatpush1.msra.mxu0 0.0
    %1513 = vmatprep.subr.mxu0 0.0
    %1514 = vmatpush1.msra.mxu0 0.0
    %1515 = vmatprep.subr.mxu0 0.0
    %1516 = vmatpush1.msra.mxu0 0.0
    %1517 = vmatprep.subr.mxu0 0.0
    %1518 = vmatpush1.msra.mxu0 0.0
    %1519 = vmatprep.subr.mxu0 0.0
    %1520 = vmatpush1.msra.mxu0 0.0
    %1521 = vmatprep.subr.mxu0 0.0
    %1522 = vmatpush1.msra.mxu0 0.0
    %1523 = vmatprep.subr.mxu0 0.0
    %1524 = vmatpush1.msra.mxu0 0.0
    %1525 = vmatprep.subr.mxu0 0.0
    %1526 = vmatpush1.msra.mxu0 0.0
    %1527 = vmatprep.subr.mxu0 0.0
    %1528 = vmatpush1.msra.mxu0 0.0
    %1529 = vmatprep.subr.mxu0 0.0
    %1530 = vmatpush1.msra.mxu0 0.0
    %1531 = vmatprep.subr.mxu0 0.0
    %1532 = vmatpush1.msra.mxu0 0.0
    %1533 = vmatprep.subr.mxu0 0.0
    %1534 = vmatpush1.msra.mxu0 0.0
    %1535 = vmatprep.subr.mxu0 0.0
    %1536 = vmatpush1.msra.mxu0 %v1500
    %1537 = vmatprep.subr.mxu0 0.0
    %1538 = vmatpush2.msra.mxu0 0.0
    %1539 = vmatprep.subr.mxu0 0.0
    %1540 = vmatpush2.msra.mxu0 0.0
    %1541 = vmatprep.subr.mxu0 0.0
    %1542 = vmatpush2.msra.mxu0 0.0
    %1543 = vmatprep.subr.mxu0 0.0
    %1544 = vmatpush2.msra.mxu0 0.0
    %1545 = vmatprep.subr.mxu0 0.0
    %1546 = vmatpush2.msra.mxu0 0.0
    %1547 = vmatprep.subr.mxu0 0.0
    %1548 = vmatpush2.msra.mxu0 0.0
    %1549 = vmatprep.subr.mxu0 0.0
    %1550 = vmatpush2.msra.mxu0 0.0
    %1551 = vmatprep.subr.mxu0 0.0
    %1552 = vmatpush2.msra.mxu0 0.0
    %1553 = vmatprep.subr.mxu0 0.0
    %1554 = vmatpush2.msra.mxu0 0.0
    %1555 = vmatprep.subr.mxu0 0.0
    %1556 = vmatpush2.msra.mxu0 0.0
    %1557 = vmatprep.subr.mxu0 0.0
    %1558 = vmatpush2.msra.mxu0 0.0
    %1559 = vmatprep.subr.mxu0 0.0
    %1560 = vmatpush2.msra.mxu0 0.0
    %1561 = vmatprep.subr.mxu0 0.0
    %1562 = vmatpush2.msra.mxu0 0.0
    %1563 = vmatprep.subr.mxu0 0.0
    %1564 = vmatpush2.msra.mxu0 0.0
    %1565 = vmatprep.subr.mxu0 0.0
    %1566 = vmatpush2.msra.mxu0 0.0
    %1567 = vmatprep.subr.mxu0 0.0
    %1568 = vmatpush2.msra.mxu0 0.0
    %1569 = vmatprep.mubr.f32.mxu0 0.0
    %1570 = vmatmul.mubr.f32.gmra.mxu0 %v1503
    %v1571 = vpop.f32.mrf.mxu0
    %v1572 = vadd.f32 0.0, %v1571
    %v1573 = vpop.f32.mrf.mxu0
    %1574 = vdwg.mxu0
    %v1575 = vmul.f32 %v1421, 0.25
    %v1576 = vmul.f32 %v1422, 0.25
    %1577 = vst.msk [vmem:[%s17] sm:$0xff] %vm67, %v1575
    %1578 = vst.msk [vmem:[%s17 + $0x8] sm:$0xff] %vm67, %v1576
    %1581 = vrot.lane.b32.xlu0 %v832, 8
    %v1582 = vpop.permute.xlu0 %1581
    %1583 = vrot.lane.b32.xlu0 %v908, 8
    %v1584 = vpop.permute.xlu0 %1583
    %1589 = vrot.lane.b32.xlu0 %v1164, 16
    %v1590 = vpop.permute.xlu0 %1589
    %1591 = vrot.lane.b32.xlu0 %v1240, 16
    %v1592 = vpop.permute.xlu0 %1591
    %1597 = vrot.lane.b32.xlu0 %v1496, 24
    %v1598 = vpop.permute.xlu0 %1597
    %1599 = vrot.lane.b32.xlu0 %v1572, 24
    %v1600 = vpop.permute.xlu0 %1599
    %v1603 = vsel %vm67, %v500, %v1582
    %v1604 = vsel %vm67, %v576, %v1584
    %vm1605 = vcmask 130048
    %v1606 = vsel %vm1605, %v1603, %v1590
    %v1607 = vsel %vm1605, %v1604, %v1592
    %vm1608 = vcmask 195584
    %v1609 = vsel %vm1608, %v1606, %v1598
    %v1610 = vsel %vm1608, %v1607, %v1600
    %v1611 = vld [vmem:[%s6] sm:$0xff]
    %v1612 = vld [vmem:[%s6 + $0x8] sm:$0xff]
    %v1613 = vld [vmem:[%s6 + $0x10] sm:$0xff]
    %v1614 = vld [vmem:[%s6 + $0x18] sm:$0xff]
    %v1615 = vld [vmem:[%s7] sm:$0x1]
    %v1617 = vlaneseq
    %v1618 = vshrl.u32 %v1617, 7
    %v1619 = vsub.s32 0, %v1618
    %v1620 = vrot.slane %v1615, %v1619
    %v1623 = vsel %vm163, %v1609, 0
    %v1626 = vsel %vm163, %v1610, 0
    %1628 = vmatprep.subr.mxu0 0.0
    %1629 = vmatpush1.msra.mxu0 0.0
    %1630 = vmatprep.subr.mxu0 0.0
    %1631 = vmatpush1.msra.mxu0 0.0
    %1632 = vmatprep.subr.mxu0 0.0
    %1633 = vmatpush1.msra.mxu0 0.0
    %1634 = vmatprep.subr.mxu0 0.0
    %1635 = vmatpush1.msra.mxu0 0.0
    %1636 = vmatprep.subr.mxu0 0.0
    %1637 = vmatpush1.msra.mxu0 0.0
    %1638 = vmatprep.subr.mxu0 0.0
    %1639 = vmatpush1.msra.mxu0 0.0
    %1640 = vmatprep.subr.mxu0 0.0
    %1641 = vmatpush1.msra.mxu0 0.0
    %1642 = vmatprep.subr.mxu0 0.0
    %1643 = vmatpush1.msra.mxu0 0.0
    %1644 = vmatprep.subr.mxu0 0.0
    %1645 = vmatpush1.msra.mxu0 0.0
    %1646 = vmatprep.subr.mxu0 0.0
    %1647 = vmatpush1.msra.mxu0 0.0
    %1648 = vmatprep.subr.mxu0 0.0
    %1649 = vmatpush1.msra.mxu0 0.0
    %1650 = vmatprep.subr.mxu0 0.0
    %1651 = vmatpush1.msra.mxu0 0.0
    %1652 = vmatprep.subr.mxu0 0.0
    %1653 = vmatpush1.msra.mxu0 %v1614
    %1654 = vmatprep.subr.mxu0 0.0
    %1655 = vmatpush1.msra.mxu0 %v1613
    %1656 = vmatprep.subr.mxu0 0.0
    %1657 = vmatpush1.msra.mxu0 %v1612
    %1658 = vmatprep.subr.mxu0 0.0
    %1659 = vmatpush1.msra.mxu0 %v1611
    %1660 = vmatprep.subr.mxu0 0.0
    %1661 = vmatpush2.msra.mxu0 0.0
    %1662 = vmatprep.subr.mxu0 0.0
    %1663 = vmatpush2.msra.mxu0 0.0
    %1664 = vmatprep.subr.mxu0 0.0
    %1665 = vmatpush2.msra.mxu0 0.0
    %1666 = vmatprep.subr.mxu0 0.0
    %1667 = vmatpush2.msra.mxu0 0.0
    %1668 = vmatprep.subr.mxu0 0.0
    %1669 = vmatpush2.msra.mxu0 0.0
    %1670 = vmatprep.subr.mxu0 0.0
    %1671 = vmatpush2.msra.mxu0 0.0
    %1672 = vmatprep.subr.mxu0 0.0
    %1673 = vmatpush2.msra.mxu0 0.0
    %1674 = vmatprep.subr.mxu0 0.0
    %1675 = vmatpush2.msra.mxu0 0.0
    %1676 = vmatprep.subr.mxu0 0.0
    %1677 = vmatpush2.msra.mxu0 0.0
    %1678 = vmatprep.subr.mxu0 0.0
    %1679 = vmatpush2.msra.mxu0 0.0
    %1680 = vmatprep.subr.mxu0 0.0
    %1681 = vmatpush2.msra.mxu0 0.0
    %1682 = vmatprep.subr.mxu0 0.0
    %1683 = vmatpush2.msra.mxu0 0.0
    %1684 = vmatprep.subr.mxu0 0.0
    %1685 = vmatpush2.msra.mxu0 0.0
    %1686 = vmatprep.subr.mxu0 0.0
    %1687 = vmatpush2.msra.mxu0 0.0
    %1688 = vmatprep.subr.mxu0 0.0
    %1689 = vmatpush2.msra.mxu0 0.0
    %1690 = vmatprep.subr.mxu0 0.0
    %1691 = vmatpush2.msra.mxu0 0.0
    %1692 = vmatprep.mubr.f32.mxu0 0.0
    %1693 = vmatmul.mubr.f32.gmra.mxu0 %v1623
    %v1694 = vpop.f32.mrf.mxu0
    %v1695 = vadd.f32 %v1620, %v1694
    %v1696 = vpop.f32.mrf.mxu0
    %1697 = vmatprep.mubr.f32.mxu0 0.0
    %1698 = vmatmul.mubr.f32.gmra.mxu0 %v1626
    %v1699 = vpop.f32.mrf.mxu0
    %v1700 = vadd.f32 %v1620, %v1699
    %v1701 = vpop.f32.mrf.mxu0
    %1702 = vdwg.mxu0
    %v1703 = vadd.f32 %v150, %v1695
    %v1704 = vadd.f32 %v151, %v1700
    %v1705 = vld [vmem:[%s8] sm:$0x1]
    %v1706 = vld [vmem:[%s9] sm:$0x1]
    %v1707 = vsel %vm163, %v1703, 0.0
    %1708 = vadd.xlane.f32.xlu0 %v1707
    %v1709 = vpop.xlane.xlu0 %1708
    %v1710 = vsel %vm163, %v1704, 0.0
    %1711 = vadd.xlane.f32.xlu0 %v1710
    %v1712 = vpop.xlane.xlu0 %1711
    %v1713 = vrcp.pop 32.0
    %v1714 = vmul.f32 %v1709, %v1713
    %v1715 = vmul.f32 %v1712, %v1713
    %v1716 = vsub.f32 %v1703, %v1714
    %v1717 = vsub.f32 %v1704, %v1715
    %v1718 = vmul.f32 %v1716, %v1716
    %v1719 = vmul.f32 %v1717, %v1717
    %v1720 = vsel %vm163, %v1718, 0.0
    %1721 = vadd.xlane.f32.xlu0 %v1720
    %v1722 = vpop.xlane.xlu0 %1721
    %v1723 = vsel %vm163, %v1719, 0.0
    %1724 = vadd.xlane.f32.xlu0 %v1723
    %v1725 = vpop.xlane.xlu0 %1724
    %v1726 = vmul.f32 %v1722, %v1713
    %v1727 = vmul.f32 %v1725, %v1713
    %v1728 = vadd.f32 %v1726, 1e-05
    %v1729 = vadd.f32 %v1727, 1e-05
    %v1730 = vrsqrt.pop %v1728
    %v1731 = vrsqrt.pop %v1729
    %v1732 = vmul.f32 %v1716, %v1730
    %v1733 = vmul.f32 %v1717, %v1731
    %v1735 = vlaneseq
    %v1736 = vshrl.u32 %v1735, 7
    %v1737 = vsub.s32 0, %v1736
    %v1738 = vrot.slane %v1705, %v1737
    %v1740 = vmul.f32 %v1732, %v1738
    %v1741 = vmul.f32 %v1733, %v1738
    %v1743 = vlaneseq
    %v1744 = vshrl.u32 %v1743, 7
    %v1745 = vsub.s32 0, %v1744
    %v1746 = vrot.slane %v1706, %v1745
    %v1748 = vadd.f32 %v1740, %v1746
    %v1749 = vadd.f32 %v1741, %v1746
    %v1750 = vpack.c.bf16 %v1749, %v1748
    %v1751 = vld [vmem:[%s10] sm:$0xff]
    %v1752 = vld [vmem:[%s10 + $0x8] sm:$0xff]
    %v1753 = vld [vmem:[%s10 + $0x40] sm:$0xff]
    %v1754 = vld [vmem:[%s10 + $0x48] sm:$0xff]
    %v1755 = vld [vmem:[%s10 + $0x80] sm:$0xff]
    %v1756 = vld [vmem:[%s10 + $0x88] sm:$0xff]
    %v1757 = vld [vmem:[%s10 + $0xc0] sm:$0xff]
    %v1758 = vld [vmem:[%s10 + $0xc8] sm:$0xff]
    %v1759 = vld [vmem:[%s11] sm:$0xf]
    %v1761 = vlaneseq
    %v1762 = vshrl.u32 %v1761, 7
    %v1763 = vsub.s32 0, %v1762
    %v1764 = vrot.slane %v1759, %v1763
    %v1765 = vlaneseq
    %v1766 = vshrl.u32 %v1765, 7
    %v1767 = vsub.s32 1, %v1766
    %v1768 = vrot.slane %v1759, %v1767
    %v1769 = vlaneseq
    %v1770 = vshrl.u32 %v1769, 7
    %v1771 = vsub.s32 2, %v1770
    %v1772 = vrot.slane %v1759, %v1771
    %v1773 = vlaneseq
    %v1774 = vshrl.u32 %v1773, 7
    %v1775 = vsub.s32 3, %v1774
    %v1776 = vrot.slane %v1759, %v1775
    %v1789 = vunpack.c.l.b16 %v1751
    %v1790 = vunpack.c.h.b16 %v1751
    %v1791 = vunpack.c.l.b16 %v1752
    %v1792 = vunpack.c.h.b16 %v1752
    %v1793 = vunpack.c.l.b16 %v1753
    %v1794 = vunpack.c.h.b16 %v1753
    %v1795 = vunpack.c.l.b16 %v1754
    %v1796 = vunpack.c.h.b16 %v1754
    %v1797 = vunpack.c.l.b16 %v1755
    %v1798 = vunpack.c.h.b16 %v1755
    %v1799 = vunpack.c.l.b16 %v1756
    %v1800 = vunpack.c.h.b16 %v1756
    %v1801 = vunpack.c.l.b16 %v1757
    %v1802 = vunpack.c.h.b16 %v1757
    %v1803 = vunpack.c.l.b16 %v1758
    %v1804 = vunpack.c.h.b16 %v1758
    %v1805 = vpack.c.b16 %v1793, %v1789
    %v1806 = vpack.c.b16 %v1794, %v1790
    %v1807 = vpack.c.b16 %v1795, %v1791
    %v1808 = vpack.c.b16 %v1796, %v1792
    %v1809 = vpack.c.b16 %v1801, %v1797
    %v1810 = vpack.c.b16 %v1802, %v1798
    %v1811 = vpack.c.b16 %v1803, %v1799
    %v1812 = vpack.c.b16 %v1804, %v1800
    %v1822 = vsel %vm163, %v1750, 0
    %1824 = vmatprep.subr.bf16.mxu0 0
    %1825 = vmatpush1.bf16.msra.mxu0 0
    %1826 = vmatprep.subr.bf16.mxu0 0
    %1827 = vmatpush1.bf16.msra.mxu0 0
    %1828 = vmatprep.subr.bf16.mxu0 0
    %1829 = vmatpush1.bf16.msra.mxu0 0
    %1830 = vmatprep.subr.bf16.mxu0 0
    %1831 = vmatpush1.bf16.msra.mxu0 0
    %1832 = vmatprep.subr.bf16.mxu0 0
    %1833 = vmatpush1.bf16.msra.mxu0 0
    %1834 = vmatprep.subr.bf16.mxu0 0
    %1835 = vmatpush1.bf16.msra.mxu0 0
    %1836 = vmatprep.subr.bf16.mxu0 %v1810
    %1837 = vmatpush1.bf16.msra.mxu0 %v1809
    %1838 = vmatprep.subr.bf16.mxu0 %v1806
    %1839 = vmatpush1.bf16.msra.mxu0 %v1805
    %1840 = vmatprep.subr.bf16.mxu0 0
    %1841 = vmatpush2.bf16.msra.mxu0 0
    %1842 = vmatprep.subr.bf16.mxu0 0
    %1843 = vmatpush2.bf16.msra.mxu0 0
    %1844 = vmatprep.subr.bf16.mxu0 0
    %1845 = vmatpush2.bf16.msra.mxu0 0
    %1846 = vmatprep.subr.bf16.mxu0 0
    %1847 = vmatpush2.bf16.msra.mxu0 0
    %1848 = vmatprep.subr.bf16.mxu0 0
    %1849 = vmatpush2.bf16.msra.mxu0 0
    %1850 = vmatprep.subr.bf16.mxu0 0
    %1851 = vmatpush2.bf16.msra.mxu0 0
    %1852 = vmatprep.subr.bf16.mxu0 0
    %1853 = vmatpush2.bf16.msra.mxu0 0
    %1854 = vmatprep.subr.bf16.mxu0 0
    %1855 = vmatpush2.bf16.msra.mxu0 0
    %1856 = vmatprep.mubr.bf16.mxu0 0
    %1857 = vmatmul.mubr.bf16.gmra.mxu0 %v1822
    %v1858 = vpop.f32.mrf.mxu0
    %v1859 = vadd.f32 %v1764, %v1858
    %v1860 = vpop.f32.mrf.mxu0
    %v1861 = vadd.f32 %v1768, %v1860
    %v1862 = vpop.f32.mrf.mxu0
    %v1863 = vadd.f32 %v1764, %v1862
    %v1864 = vpop.f32.mrf.mxu0
    %v1865 = vadd.f32 %v1768, %v1864
    %1866 = vdwg.mxu0
    %1867 = vmatprep.subr.bf16.mxu0 0
    %1868 = vmatpush1.bf16.msra.mxu0 0
    %1869 = vmatprep.subr.bf16.mxu0 0
    %1870 = vmatpush1.bf16.msra.mxu0 0
    %1871 = vmatprep.subr.bf16.mxu0 0
    %1872 = vmatpush1.bf16.msra.mxu0 0
    %1873 = vmatprep.subr.bf16.mxu0 0
    %1874 = vmatpush1.bf16.msra.mxu0 0
    %1875 = vmatprep.subr.bf16.mxu0 0
    %1876 = vmatpush1.bf16.msra.mxu0 0
    %1877 = vmatprep.subr.bf16.mxu0 0
    %1878 = vmatpush1.bf16.msra.mxu0 0
    %1879 = vmatprep.subr.bf16.mxu0 %v1812
    %1880 = vmatpush1.bf16.msra.mxu0 %v1811
    %1881 = vmatprep.subr.bf16.mxu0 %v1808
    %1882 = vmatpush1.bf16.msra.mxu0 %v1807
    %1883 = vmatprep.subr.bf16.mxu0 0
    %1884 = vmatpush2.bf16.msra.mxu0 0
    %1885 = vmatprep.subr.bf16.mxu0 0
    %1886 = vmatpush2.bf16.msra.mxu0 0
    %1887 = vmatprep.subr.bf16.mxu0 0
    %1888 = vmatpush2.bf16.msra.mxu0 0
    %1889 = vmatprep.subr.bf16.mxu0 0
    %1890 = vmatpush2.bf16.msra.mxu0 0
    %1891 = vmatprep.subr.bf16.mxu0 0
    %1892 = vmatpush2.bf16.msra.mxu0 0
    %1893 = vmatprep.subr.bf16.mxu0 0
    %1894 = vmatpush2.bf16.msra.mxu0 0
    %1895 = vmatprep.subr.bf16.mxu0 0
    %1896 = vmatpush2.bf16.msra.mxu0 0
    %1897 = vmatprep.subr.bf16.mxu0 0
    %1898 = vmatpush2.bf16.msra.mxu0 0
    %1899 = vmatprep.mubr.bf16.mxu0 0
    %1900 = vmatmul.mubr.bf16.gmra.mxu0 %v1822
    %v1901 = vpop.f32.mrf.mxu0
    %v1902 = vadd.f32 %v1772, %v1901
    %v1903 = vpop.f32.mrf.mxu0
    %v1904 = vadd.f32 %v1776, %v1903
    %v1905 = vpop.f32.mrf.mxu0
    %v1906 = vadd.f32 %v1772, %v1905
    %v1907 = vpop.f32.mrf.mxu0
    %v1908 = vadd.f32 %v1776, %v1907
    %1909 = vdwg.mxu0
    %v1910 = vmax.f32 %v1859, 0.0
    %v1911 = vmax.f32 %v1861, 0.0
    %v1912 = vmax.f32 %v1902, 0.0
    %v1913 = vmax.f32 %v1904, 0.0
    %v1914 = vmax.f32 %v1863, 0.0
    %v1915 = vmax.f32 %v1865, 0.0
    %v1916 = vmax.f32 %v1906, 0.0
    %v1917 = vmax.f32 %v1908, 0.0
    %v1918 = vpack.c.bf16 %v1914, %v1910
    %v1919 = vpack.c.bf16 %v1915, %v1911
    %v1920 = vpack.c.bf16 %v1916, %v1912
    %v1921 = vpack.c.bf16 %v1917, %v1913
    %v1922 = vld [vmem:[%s12] sm:$0xf]
    %v1923 = vld [vmem:[%s12 + $0x4] sm:$0xf]
    %v1924 = vld [vmem:[%s12 + $0x8] sm:$0xf]
    %v1925 = vld [vmem:[%s12 + $0xc] sm:$0xf]
    %v1926 = vld [vmem:[%s12 + $0x10] sm:$0xf]
    %v1927 = vld [vmem:[%s12 + $0x14] sm:$0xf]
    %v1928 = vld [vmem:[%s12 + $0x18] sm:$0xf]
    %v1929 = vld [vmem:[%s12 + $0x1c] sm:$0xf]
    %v1930 = vld [vmem:[%s12 + $0x20] sm:$0xf]
    %v1931 = vld [vmem:[%s12 + $0x24] sm:$0xf]
    %v1932 = vld [vmem:[%s12 + $0x28] sm:$0xf]
    %v1933 = vld [vmem:[%s12 + $0x2c] sm:$0xf]
    %v1934 = vld [vmem:[%s12 + $0x30] sm:$0xf]
    %v1935 = vld [vmem:[%s12 + $0x34] sm:$0xf]
    %v1936 = vld [vmem:[%s12 + $0x38] sm:$0xf]
    %v1937 = vld [vmem:[%s12 + $0x3c] sm:$0xf]
    %v1938 = vld [vmem:[%s12 + $0x40] sm:$0xf]
    %v1939 = vld [vmem:[%s12 + $0x44] sm:$0xf]
    %v1940 = vld [vmem:[%s12 + $0x48] sm:$0xf]
    %v1941 = vld [vmem:[%s12 + $0x4c] sm:$0xf]
    %v1942 = vld [vmem:[%s12 + $0x50] sm:$0xf]
    %v1943 = vld [vmem:[%s12 + $0x54] sm:$0xf]
    %v1944 = vld [vmem:[%s12 + $0x58] sm:$0xf]
    %v1945 = vld [vmem:[%s12 + $0x5c] sm:$0xf]
    %v1946 = vld [vmem:[%s12 + $0x60] sm:$0xf]
    %v1947 = vld [vmem:[%s12 + $0x64] sm:$0xf]
    %v1948 = vld [vmem:[%s12 + $0x68] sm:$0xf]
    %v1949 = vld [vmem:[%s12 + $0x6c] sm:$0xf]
    %v1950 = vld [vmem:[%s12 + $0x70] sm:$0xf]
    %v1951 = vld [vmem:[%s12 + $0x74] sm:$0xf]
    %v1952 = vld [vmem:[%s12 + $0x78] sm:$0xf]
    %v1953 = vld [vmem:[%s12 + $0x7c] sm:$0xf]
    %v1954 = vld [vmem:[%s12 + $0x80] sm:$0xf]
    %v1955 = vld [vmem:[%s12 + $0x84] sm:$0xf]
    %v1956 = vld [vmem:[%s12 + $0x88] sm:$0xf]
    %v1957 = vld [vmem:[%s12 + $0x8c] sm:$0xf]
    %v1958 = vld [vmem:[%s12 + $0x90] sm:$0xf]
    %v1959 = vld [vmem:[%s12 + $0x94] sm:$0xf]
    %v1960 = vld [vmem:[%s12 + $0x98] sm:$0xf]
    %v1961 = vld [vmem:[%s12 + $0x9c] sm:$0xf]
    %v1962 = vld [vmem:[%s12 + $0xa0] sm:$0xf]
    %v1963 = vld [vmem:[%s12 + $0xa4] sm:$0xf]
    %v1964 = vld [vmem:[%s12 + $0xa8] sm:$0xf]
    %v1965 = vld [vmem:[%s12 + $0xac] sm:$0xf]
    %v1966 = vld [vmem:[%s12 + $0xb0] sm:$0xf]
    %v1967 = vld [vmem:[%s12 + $0xb4] sm:$0xf]
    %v1968 = vld [vmem:[%s12 + $0xb8] sm:$0xf]
    %v1969 = vld [vmem:[%s12 + $0xbc] sm:$0xf]
    %v1970 = vld [vmem:[%s12 + $0xc0] sm:$0xf]
    %v1971 = vld [vmem:[%s12 + $0xc4] sm:$0xf]
    %v1972 = vld [vmem:[%s12 + $0xc8] sm:$0xf]
    %v1973 = vld [vmem:[%s12 + $0xcc] sm:$0xf]
    %v1974 = vld [vmem:[%s12 + $0xd0] sm:$0xf]
    %v1975 = vld [vmem:[%s12 + $0xd4] sm:$0xf]
    %v1976 = vld [vmem:[%s12 + $0xd8] sm:$0xf]
    %v1977 = vld [vmem:[%s12 + $0xdc] sm:$0xf]
    %v1978 = vld [vmem:[%s12 + $0xe0] sm:$0xf]
    %v1979 = vld [vmem:[%s12 + $0xe4] sm:$0xf]
    %v1980 = vld [vmem:[%s12 + $0xe8] sm:$0xf]
    %v1981 = vld [vmem:[%s12 + $0xec] sm:$0xf]
    %v1982 = vld [vmem:[%s12 + $0xf0] sm:$0xf]
    %v1983 = vld [vmem:[%s12 + $0xf4] sm:$0xf]
    %v1984 = vld [vmem:[%s12 + $0xf8] sm:$0xf]
    %v1985 = vld [vmem:[%s12 + $0xfc] sm:$0xf]
    %v1986 = vld [vmem:[%s10 + $0x10] sm:$0xff]
    %v1987 = vld [vmem:[%s10 + $0x18] sm:$0xff]
    %v1988 = vld [vmem:[%s10 + $0x50] sm:$0xff]
    %v1989 = vld [vmem:[%s10 + $0x58] sm:$0xff]
    %v1990 = vld [vmem:[%s10 + $0x90] sm:$0xff]
    %v1991 = vld [vmem:[%s10 + $0x98] sm:$0xff]
    %v1992 = vld [vmem:[%s10 + $0xd0] sm:$0xff]
    %v1993 = vld [vmem:[%s10 + $0xd8] sm:$0xff]
    %v1994 = vld [vmem:[%s11 + $0x4] sm:$0xf]
    %v1996 = vlaneseq
    %v1997 = vshrl.u32 %v1996, 7
    %v1998 = vsub.s32 0, %v1997
    %v1999 = vrot.slane %v1994, %v1998
    %v2000 = vlaneseq
    %v2001 = vshrl.u32 %v2000, 7
    %v2002 = vsub.s32 1, %v2001
    %v2003 = vrot.slane %v1994, %v2002
    %v2004 = vlaneseq
    %v2005 = vshrl.u32 %v2004, 7
    %v2006 = vsub.s32 2, %v2005
    %v2007 = vrot.slane %v1994, %v2006
    %v2008 = vlaneseq
    %v2009 = vshrl.u32 %v2008, 7
    %v2010 = vsub.s32 3, %v2009
    %v2011 = vrot.slane %v1994, %v2010
    %v2024 = vunpack.c.l.b16 %v1986
    %v2025 = vunpack.c.h.b16 %v1986
    %v2026 = vunpack.c.l.b16 %v1987
    %v2027 = vunpack.c.h.b16 %v1987
    %v2028 = vunpack.c.l.b16 %v1988
    %v2029 = vunpack.c.h.b16 %v1988
    %v2030 = vunpack.c.l.b16 %v1989
    %v2031 = vunpack.c.h.b16 %v1989
    %v2032 = vunpack.c.l.b16 %v1990
    %v2033 = vunpack.c.h.b16 %v1990
    %v2034 = vunpack.c.l.b16 %v1991
    %v2035 = vunpack.c.h.b16 %v1991
    %v2036 = vunpack.c.l.b16 %v1992
    %v2037 = vunpack.c.h.b16 %v1992
    %v2038 = vunpack.c.l.b16 %v1993
    %v2039 = vunpack.c.h.b16 %v1993
    %v2040 = vpack.c.b16 %v2028, %v2024
    %v2041 = vpack.c.b16 %v2029, %v2025
    %v2042 = vpack.c.b16 %v2030, %v2026
    %v2043 = vpack.c.b16 %v2031, %v2027
    %v2044 = vpack.c.b16 %v2036, %v2032
    %v2045 = vpack.c.b16 %v2037, %v2033
    %v2046 = vpack.c.b16 %v2038, %v2034
    %v2047 = vpack.c.b16 %v2039, %v2035
    %2056 = vmatprep.subr.bf16.mxu0 0
    %2057 = vmatpush1.bf16.msra.mxu0 0
    %2058 = vmatprep.subr.bf16.mxu0 0
    %2059 = vmatpush1.bf16.msra.mxu0 0
    %2060 = vmatprep.subr.bf16.mxu0 0
    %2061 = vmatpush1.bf16.msra.mxu0 0
    %2062 = vmatprep.subr.bf16.mxu0 0
    %2063 = vmatpush1.bf16.msra.mxu0 0
    %2064 = vmatprep.subr.bf16.mxu0 0
    %2065 = vmatpush1.bf16.msra.mxu0 0
    %2066 = vmatprep.subr.bf16.mxu0 0
    %2067 = vmatpush1.bf16.msra.mxu0 0
    %2068 = vmatprep.subr.bf16.mxu0 %v2045
    %2069 = vmatpush1.bf16.msra.mxu0 %v2044
    %2070 = vmatprep.subr.bf16.mxu0 %v2041
    %2071 = vmatpush1.bf16.msra.mxu0 %v2040
    %2072 = vmatprep.subr.bf16.mxu0 0
    %2073 = vmatpush2.bf16.msra.mxu0 0
    %2074 = vmatprep.subr.bf16.mxu0 0
    %2075 = vmatpush2.bf16.msra.mxu0 0
    %2076 = vmatprep.subr.bf16.mxu0 0
    %2077 = vmatpush2.bf16.msra.mxu0 0
    %2078 = vmatprep.subr.bf16.mxu0 0
    %2079 = vmatpush2.bf16.msra.mxu0 0
    %2080 = vmatprep.subr.bf16.mxu0 0
    %2081 = vmatpush2.bf16.msra.mxu0 0
    %2082 = vmatprep.subr.bf16.mxu0 0
    %2083 = vmatpush2.bf16.msra.mxu0 0
    %2084 = vmatprep.subr.bf16.mxu0 0
    %2085 = vmatpush2.bf16.msra.mxu0 0
    %2086 = vmatprep.subr.bf16.mxu0 0
    %2087 = vmatpush2.bf16.msra.mxu0 0
    %2088 = vmatprep.mubr.bf16.mxu0 0
    %2089 = vmatmul.mubr.bf16.gmra.mxu0 %v1822
    %v2090 = vpop.f32.mrf.mxu0
    %v2091 = vadd.f32 %v1999, %v2090
    %v2092 = vpop.f32.mrf.mxu0
    %v2093 = vadd.f32 %v2003, %v2092
    %v2094 = vpop.f32.mrf.mxu0
    %v2095 = vadd.f32 %v1999, %v2094
    %v2096 = vpop.f32.mrf.mxu0
    %v2097 = vadd.f32 %v2003, %v2096
    %2098 = vdwg.mxu0
    %2099 = vmatprep.subr.bf16.mxu0 0
    %2100 = vmatpush1.bf16.msra.mxu0 0
    %2101 = vmatprep.subr.bf16.mxu0 0
    %2102 = vmatpush1.bf16.msra.mxu0 0
    %2103 = vmatprep.subr.bf16.mxu0 0
    %2104 = vmatpush1.bf16.msra.mxu0 0
    %2105 = vmatprep.subr.bf16.mxu0 0
    %2106 = vmatpush1.bf16.msra.mxu0 0
    %2107 = vmatprep.subr.bf16.mxu0 0
    %2108 = vmatpush1.bf16.msra.mxu0 0
    %2109 = vmatprep.subr.bf16.mxu0 0
    %2110 = vmatpush1.bf16.msra.mxu0 0
    %2111 = vmatprep.subr.bf16.mxu0 %v2047
    %2112 = vmatpush1.bf16.msra.mxu0 %v2046
    %2113 = vmatprep.subr.bf16.mxu0 %v2043
    %2114 = vmatpush1.bf16.msra.mxu0 %v2042
    %2115 = vmatprep.subr.bf16.mxu0 0
    %2116 = vmatpush2.bf16.msra.mxu0 0
    %2117 = vmatprep.subr.bf16.mxu0 0
    %2118 = vmatpush2.bf16.msra.mxu0 0
    %2119 = vmatprep.subr.bf16.mxu0 0
    %2120 = vmatpush2.bf16.msra.mxu0 0
    %2121 = vmatprep.subr.bf16.mxu0 0
    %2122 = vmatpush2.bf16.msra.mxu0 0
    %2123 = vmatprep.subr.bf16.mxu0 0
    %2124 = vmatpush2.bf16.msra.mxu0 0
    %2125 = vmatprep.subr.bf16.mxu0 0
    %2126 = vmatpush2.bf16.msra.mxu0 0
    %2127 = vmatprep.subr.bf16.mxu0 0
    %2128 = vmatpush2.bf16.msra.mxu0 0
    %2129 = vmatprep.subr.bf16.mxu0 0
    %2130 = vmatpush2.bf16.msra.mxu0 0
    %2131 = vmatprep.mubr.bf16.mxu0 0
    %2132 = vmatmul.mubr.bf16.gmra.mxu0 %v1822
    %v2133 = vpop.f32.mrf.mxu0
    %v2134 = vadd.f32 %v2007, %v2133
    %v2135 = vpop.f32.mrf.mxu0
    %v2136 = vadd.f32 %v2011, %v2135
    %v2137 = vpop.f32.mrf.mxu0
    %v2138 = vadd.f32 %v2007, %v2137
    %v2139 = vpop.f32.mrf.mxu0
    %v2140 = vadd.f32 %v2011, %v2139
    %2141 = vdwg.mxu0
    %v2142 = vmax.f32 %v2091, 0.0
    %v2143 = vmax.f32 %v2093, 0.0
    %v2144 = vmax.f32 %v2134, 0.0
    %v2145 = vmax.f32 %v2136, 0.0
    %v2146 = vmax.f32 %v2095, 0.0
    %v2147 = vmax.f32 %v2097, 0.0
    %v2148 = vmax.f32 %v2138, 0.0
    %v2149 = vmax.f32 %v2140, 0.0
    %v2150 = vpack.c.bf16 %v2146, %v2142
    %v2151 = vpack.c.bf16 %v2147, %v2143
    %v2152 = vpack.c.bf16 %v2148, %v2144
    %v2153 = vpack.c.bf16 %v2149, %v2145
    %v2154 = vld [vmem:[%s12 + $0x100] sm:$0xf]
    %v2155 = vld [vmem:[%s12 + $0x104] sm:$0xf]
    %v2156 = vld [vmem:[%s12 + $0x108] sm:$0xf]
    %v2157 = vld [vmem:[%s12 + $0x10c] sm:$0xf]
    %v2158 = vld [vmem:[%s12 + $0x110] sm:$0xf]
    %v2159 = vld [vmem:[%s12 + $0x114] sm:$0xf]
    %v2160 = vld [vmem:[%s12 + $0x118] sm:$0xf]
    %v2161 = vld [vmem:[%s12 + $0x11c] sm:$0xf]
    %v2162 = vld [vmem:[%s12 + $0x120] sm:$0xf]
    %v2163 = vld [vmem:[%s12 + $0x124] sm:$0xf]
    %v2164 = vld [vmem:[%s12 + $0x128] sm:$0xf]
    %v2165 = vld [vmem:[%s12 + $0x12c] sm:$0xf]
    %v2166 = vld [vmem:[%s12 + $0x130] sm:$0xf]
    %v2167 = vld [vmem:[%s12 + $0x134] sm:$0xf]
    %v2168 = vld [vmem:[%s12 + $0x138] sm:$0xf]
    %v2169 = vld [vmem:[%s12 + $0x13c] sm:$0xf]
    %v2170 = vld [vmem:[%s12 + $0x140] sm:$0xf]
    %v2171 = vld [vmem:[%s12 + $0x144] sm:$0xf]
    %v2172 = vld [vmem:[%s12 + $0x148] sm:$0xf]
    %v2173 = vld [vmem:[%s12 + $0x14c] sm:$0xf]
    %v2174 = vld [vmem:[%s12 + $0x150] sm:$0xf]
    %v2175 = vld [vmem:[%s12 + $0x154] sm:$0xf]
    %v2176 = vld [vmem:[%s12 + $0x158] sm:$0xf]
    %v2177 = vld [vmem:[%s12 + $0x15c] sm:$0xf]
    %v2178 = vld [vmem:[%s12 + $0x160] sm:$0xf]
    %v2179 = vld [vmem:[%s12 + $0x164] sm:$0xf]
    %v2180 = vld [vmem:[%s12 + $0x168] sm:$0xf]
    %v2181 = vld [vmem:[%s12 + $0x16c] sm:$0xf]
    %v2182 = vld [vmem:[%s12 + $0x170] sm:$0xf]
    %v2183 = vld [vmem:[%s12 + $0x174] sm:$0xf]
    %v2184 = vld [vmem:[%s12 + $0x178] sm:$0xf]
    %v2185 = vld [vmem:[%s12 + $0x17c] sm:$0xf]
    %v2186 = vld [vmem:[%s12 + $0x180] sm:$0xf]
    %v2187 = vld [vmem:[%s12 + $0x184] sm:$0xf]
    %v2188 = vld [vmem:[%s12 + $0x188] sm:$0xf]
    %v2189 = vld [vmem:[%s12 + $0x18c] sm:$0xf]
    %v2190 = vld [vmem:[%s12 + $0x190] sm:$0xf]
    %v2191 = vld [vmem:[%s12 + $0x194] sm:$0xf]
    %v2192 = vld [vmem:[%s12 + $0x198] sm:$0xf]
    %v2193 = vld [vmem:[%s12 + $0x19c] sm:$0xf]
    %v2194 = vld [vmem:[%s12 + $0x1a0] sm:$0xf]
    %v2195 = vld [vmem:[%s12 + $0x1a4] sm:$0xf]
    %v2196 = vld [vmem:[%s12 + $0x1a8] sm:$0xf]
    %v2197 = vld [vmem:[%s12 + $0x1ac] sm:$0xf]
    %v2198 = vld [vmem:[%s12 + $0x1b0] sm:$0xf]
    %v2199 = vld [vmem:[%s12 + $0x1b4] sm:$0xf]
    %v2200 = vld [vmem:[%s12 + $0x1b8] sm:$0xf]
    %v2201 = vld [vmem:[%s12 + $0x1bc] sm:$0xf]
    %v2202 = vld [vmem:[%s12 + $0x1c0] sm:$0xf]
    %v2203 = vld [vmem:[%s12 + $0x1c4] sm:$0xf]
    %v2204 = vld [vmem:[%s12 + $0x1c8] sm:$0xf]
    %v2205 = vld [vmem:[%s12 + $0x1cc] sm:$0xf]
    %v2206 = vld [vmem:[%s12 + $0x1d0] sm:$0xf]
    %v2207 = vld [vmem:[%s12 + $0x1d4] sm:$0xf]
    %v2208 = vld [vmem:[%s12 + $0x1d8] sm:$0xf]
    %v2209 = vld [vmem:[%s12 + $0x1dc] sm:$0xf]
    %v2210 = vld [vmem:[%s12 + $0x1e0] sm:$0xf]
    %v2211 = vld [vmem:[%s12 + $0x1e4] sm:$0xf]
    %v2212 = vld [vmem:[%s12 + $0x1e8] sm:$0xf]
    %v2213 = vld [vmem:[%s12 + $0x1ec] sm:$0xf]
    %v2214 = vld [vmem:[%s12 + $0x1f0] sm:$0xf]
    %v2215 = vld [vmem:[%s12 + $0x1f4] sm:$0xf]
    %v2216 = vld [vmem:[%s12 + $0x1f8] sm:$0xf]
    %v2217 = vld [vmem:[%s12 + $0x1fc] sm:$0xf]
    %v2282 = vunpack.c.l.b16 %v2154
    %v2283 = vunpack.c.l.b16 %v2155
    %v2284 = vunpack.c.l.b16 %v2156
    %v2285 = vunpack.c.l.b16 %v2157
    %v2286 = vunpack.c.l.b16 %v2158
    %v2287 = vunpack.c.l.b16 %v2159
    %v2288 = vunpack.c.l.b16 %v2160
    %v2289 = vunpack.c.l.b16 %v2161
    %v2290 = vunpack.c.l.b16 %v2162
    %v2291 = vunpack.c.l.b16 %v2163
    %v2292 = vunpack.c.l.b16 %v2164
    %v2293 = vunpack.c.l.b16 %v2165
    %v2294 = vunpack.c.l.b16 %v2166
    %v2295 = vunpack.c.l.b16 %v2167
    %v2296 = vunpack.c.l.b16 %v2168
    %v2297 = vunpack.c.l.b16 %v2169
    %v2298 = vunpack.c.l.b16 %v2170
    %v2299 = vunpack.c.l.b16 %v2171
    %v2300 = vunpack.c.l.b16 %v2172
    %v2301 = vunpack.c.l.b16 %v2173
    %v2302 = vunpack.c.l.b16 %v2174
    %v2303 = vunpack.c.l.b16 %v2175
    %v2304 = vunpack.c.l.b16 %v2176
    %v2305 = vunpack.c.l.b16 %v2177
    %v2306 = vunpack.c.l.b16 %v2178
    %v2307 = vunpack.c.l.b16 %v2179
    %v2308 = vunpack.c.l.b16 %v2180
    %v2309 = vunpack.c.l.b16 %v2181
    %v2310 = vunpack.c.l.b16 %v2182
    %v2311 = vunpack.c.l.b16 %v2183
    %v2312 = vunpack.c.l.b16 %v2184
    %v2313 = vunpack.c.l.b16 %v2185
    %v2314 = vunpack.c.l.b16 %v2186
    %v2315 = vunpack.c.l.b16 %v2187
    %v2316 = vunpack.c.l.b16 %v2188
    %v2317 = vunpack.c.l.b16 %v2189
    %v2318 = vunpack.c.l.b16 %v2190
    %v2319 = vunpack.c.l.b16 %v2191
    %v2320 = vunpack.c.l.b16 %v2192
    %v2321 = vunpack.c.l.b16 %v2193
    %v2322 = vunpack.c.l.b16 %v2194
    %v2323 = vunpack.c.l.b16 %v2195
    %v2324 = vunpack.c.l.b16 %v2196
    %v2325 = vunpack.c.l.b16 %v2197
    %v2326 = vunpack.c.l.b16 %v2198
    %v2327 = vunpack.c.l.b16 %v2199
    %v2328 = vunpack.c.l.b16 %v2200
    %v2329 = vunpack.c.l.b16 %v2201
    %v2330 = vunpack.c.l.b16 %v2202
    %v2331 = vunpack.c.l.b16 %v2203
    %v2332 = vunpack.c.l.b16 %v2204
    %v2333 = vunpack.c.l.b16 %v2205
    %v2334 = vunpack.c.l.b16 %v2206
    %v2335 = vunpack.c.l.b16 %v2207
    %v2336 = vunpack.c.l.b16 %v2208
    %v2337 = vunpack.c.l.b16 %v2209
    %v2338 = vunpack.c.l.b16 %v2210
    %v2339 = vunpack.c.l.b16 %v2211
    %v2340 = vunpack.c.l.b16 %v2212
    %v2341 = vunpack.c.l.b16 %v2213
    %v2342 = vunpack.c.l.b16 %v2214
    %v2343 = vunpack.c.l.b16 %v2215
    %v2344 = vunpack.c.l.b16 %v2216
    %v2345 = vunpack.c.l.b16 %v2217
    %v2346 = vpack.c.b16 %v2283, %v2282
    %v2347 = vpack.c.b16 %v2285, %v2284
    %v2348 = vpack.c.b16 %v2287, %v2286
    %v2349 = vpack.c.b16 %v2289, %v2288
    %v2350 = vpack.c.b16 %v2291, %v2290
    %v2351 = vpack.c.b16 %v2293, %v2292
    %v2352 = vpack.c.b16 %v2295, %v2294
    %v2353 = vpack.c.b16 %v2297, %v2296
    %v2354 = vpack.c.b16 %v2299, %v2298
    %v2355 = vpack.c.b16 %v2301, %v2300
    %v2356 = vpack.c.b16 %v2303, %v2302
    %v2357 = vpack.c.b16 %v2305, %v2304
    %v2358 = vpack.c.b16 %v2307, %v2306
    %v2359 = vpack.c.b16 %v2309, %v2308
    %v2360 = vpack.c.b16 %v2311, %v2310
    %v2361 = vpack.c.b16 %v2313, %v2312
    %v2362 = vpack.c.b16 %v2315, %v2314
    %v2363 = vpack.c.b16 %v2317, %v2316
    %v2364 = vpack.c.b16 %v2319, %v2318
    %v2365 = vpack.c.b16 %v2321, %v2320
    %v2366 = vpack.c.b16 %v2323, %v2322
    %v2367 = vpack.c.b16 %v2325, %v2324
    %v2368 = vpack.c.b16 %v2327, %v2326
    %v2369 = vpack.c.b16 %v2329, %v2328
    %v2370 = vpack.c.b16 %v2331, %v2330
    %v2371 = vpack.c.b16 %v2333, %v2332
    %v2372 = vpack.c.b16 %v2335, %v2334
    %v2373 = vpack.c.b16 %v2337, %v2336
    %v2374 = vpack.c.b16 %v2339, %v2338
    %v2375 = vpack.c.b16 %v2341, %v2340
    %v2376 = vpack.c.b16 %v2343, %v2342
    %v2377 = vpack.c.b16 %v2345, %v2344
    %2410 = vmatprep.subr.bf16.mxu0 0
    %2411 = vmatpush1.bf16.msra.mxu0 %v2353
    %2412 = vmatprep.subr.bf16.mxu0 0
    %2413 = vmatpush1.bf16.msra.mxu0 %v2352
    %2414 = vmatprep.subr.bf16.mxu0 0
    %2415 = vmatpush1.bf16.msra.mxu0 %v2351
    %2416 = vmatprep.subr.bf16.mxu0 0
    %2417 = vmatpush1.bf16.msra.mxu0 %v2350
    %2418 = vmatprep.subr.bf16.mxu0 0
    %2419 = vmatpush1.bf16.msra.mxu0 %v2349
    %2420 = vmatprep.subr.bf16.mxu0 0
    %2421 = vmatpush1.bf16.msra.mxu0 %v2348
    %2422 = vmatprep.subr.bf16.mxu0 0
    %2423 = vmatpush1.bf16.msra.mxu0 %v2347
    %2424 = vmatprep.subr.bf16.mxu0 0
    %2425 = vmatpush1.bf16.msra.mxu0 %v2346
    %2426 = vmatprep.subr.bf16.mxu0 0
    %2427 = vmatpush2.bf16.msra.mxu0 %v2361
    %2428 = vmatprep.subr.bf16.mxu0 0
    %2429 = vmatpush2.bf16.msra.mxu0 %v2360
    %2430 = vmatprep.subr.bf16.mxu0 0
    %2431 = vmatpush2.bf16.msra.mxu0 %v2359
    %2432 = vmatprep.subr.bf16.mxu0 0
    %2433 = vmatpush2.bf16.msra.mxu0 %v2358
    %2434 = vmatprep.subr.bf16.mxu0 0
    %2435 = vmatpush2.bf16.msra.mxu0 %v2357
    %2436 = vmatprep.subr.bf16.mxu0 0
    %2437 = vmatpush2.bf16.msra.mxu0 %v2356
    %2438 = vmatprep.subr.bf16.mxu0 0
    %2439 = vmatpush2.bf16.msra.mxu0 %v2355
    %2440 = vmatprep.subr.bf16.mxu0 0
    %2441 = vmatpush2.bf16.msra.mxu0 %v2354
    %2442 = vmatprep.mubr.bf16.mxu0 %v2151
    %2443 = vmatmul.mubr.bf16.gmra.mxu0 %v2150
    %v2444 = vpop.f32.mrf.mxu0
    %v2445 = vadd.f32 0.0, %v2444
    %v2446 = vpop.f32.mrf.mxu0
    %v2447 = vpop.f32.mrf.mxu0
    %v2448 = vadd.f32 0.0, %v2447
    %v2449 = vpop.f32.mrf.mxu0
    %2450 = vdwg.mxu0
    %2451 = vmatprep.subr.bf16.mxu0 0
    %2452 = vmatpush1.bf16.msra.mxu0 %v2369
    %2453 = vmatprep.subr.bf16.mxu0 0
    %2454 = vmatpush1.bf16.msra.mxu0 %v2368
    %2455 = vmatprep.subr.bf16.mxu0 0
    %2456 = vmatpush1.bf16.msra.mxu0 %v2367
    %2457 = vmatprep.subr.bf16.mxu0 0
    %2458 = vmatpush1.bf16.msra.mxu0 %v2366
    %2459 = vmatprep.subr.bf16.mxu0 0
    %2460 = vmatpush1.bf16.msra.mxu0 %v2365
    %2461 = vmatprep.subr.bf16.mxu0 0
    %2462 = vmatpush1.bf16.msra.mxu0 %v2364
    %2463 = vmatprep.subr.bf16.mxu0 0
    %2464 = vmatpush1.bf16.msra.mxu0 %v2363
    %2465 = vmatprep.subr.bf16.mxu0 0
    %2466 = vmatpush1.bf16.msra.mxu0 %v2362
    %2467 = vmatprep.subr.bf16.mxu0 0
    %2468 = vmatpush2.bf16.msra.mxu0 %v2377
    %2469 = vmatprep.subr.bf16.mxu0 0
    %2470 = vmatpush2.bf16.msra.mxu0 %v2376
    %2471 = vmatprep.subr.bf16.mxu0 0
    %2472 = vmatpush2.bf16.msra.mxu0 %v2375
    %2473 = vmatprep.subr.bf16.mxu0 0
    %2474 = vmatpush2.bf16.msra.mxu0 %v2374
    %2475 = vmatprep.subr.bf16.mxu0 0
    %2476 = vmatpush2.bf16.msra.mxu0 %v2373
    %2477 = vmatprep.subr.bf16.mxu0 0
    %2478 = vmatpush2.bf16.msra.mxu0 %v2372
    %2479 = vmatprep.subr.bf16.mxu0 0
    %2480 = vmatpush2.bf16.msra.mxu0 %v2371
    %2481 = vmatprep.subr.bf16.mxu0 0
    %2482 = vmatpush2.bf16.msra.mxu0 %v2370
    %2483 = vmatprep.mubr.bf16.mxu0 %v2153
    %2484 = vmatmul.mubr.bf16.gmra.mxu0 %v2152
    %v2485 = vpop.f32.mrf.mxu0
    %v2486 = vadd.f32 %v2445, %v2485
    %v2487 = vpop.f32.mrf.mxu0
    %v2488 = vpop.f32.mrf.mxu0
    %v2489 = vadd.f32 %v2448, %v2488
    %v2490 = vpop.f32.mrf.mxu0
    %2491 = vdwg.mxu0
    %v2556 = vunpack.c.l.b16 %v1922
    %v2557 = vunpack.c.l.b16 %v1923
    %v2558 = vunpack.c.l.b16 %v1924
    %v2559 = vunpack.c.l.b16 %v1925
    %v2560 = vunpack.c.l.b16 %v1926
    %v2561 = vunpack.c.l.b16 %v1927
    %v2562 = vunpack.c.l.b16 %v1928
    %v2563 = vunpack.c.l.b16 %v1929
    %v2564 = vunpack.c.l.b16 %v1930
    %v2565 = vunpack.c.l.b16 %v1931
    %v2566 = vunpack.c.l.b16 %v1932
    %v2567 = vunpack.c.l.b16 %v1933
    %v2568 = vunpack.c.l.b16 %v1934
    %v2569 = vunpack.c.l.b16 %v1935
    %v2570 = vunpack.c.l.b16 %v1936
    %v2571 = vunpack.c.l.b16 %v1937
    %v2572 = vunpack.c.l.b16 %v1938
    %v2573 = vunpack.c.l.b16 %v1939
    %v2574 = vunpack.c.l.b16 %v1940
    %v2575 = vunpack.c.l.b16 %v1941
    %v2576 = vunpack.c.l.b16 %v1942
    %v2577 = vunpack.c.l.b16 %v1943
    %v2578 = vunpack.c.l.b16 %v1944
    %v2579 = vunpack.c.l.b16 %v1945
    %v2580 = vunpack.c.l.b16 %v1946
    %v2581 = vunpack.c.l.b16 %v1947
    %v2582 = vunpack.c.l.b16 %v1948
    %v2583 = vunpack.c.l.b16 %v1949
    %v2584 = vunpack.c.l.b16 %v1950
    %v2585 = vunpack.c.l.b16 %v1951
    %v2586 = vunpack.c.l.b16 %v1952
    %v2587 = vunpack.c.l.b16 %v1953
    %v2588 = vunpack.c.l.b16 %v1954
    %v2589 = vunpack.c.l.b16 %v1955
    %v2590 = vunpack.c.l.b16 %v1956
    %v2591 = vunpack.c.l.b16 %v1957
    %v2592 = vunpack.c.l.b16 %v1958
    %v2593 = vunpack.c.l.b16 %v1959
    %v2594 = vunpack.c.l.b16 %v1960
    %v2595 = vunpack.c.l.b16 %v1961
    %v2596 = vunpack.c.l.b16 %v1962
    %v2597 = vunpack.c.l.b16 %v1963
    %v2598 = vunpack.c.l.b16 %v1964
    %v2599 = vunpack.c.l.b16 %v1965
    %v2600 = vunpack.c.l.b16 %v1966
    %v2601 = vunpack.c.l.b16 %v1967
    %v2602 = vunpack.c.l.b16 %v1968
    %v2603 = vunpack.c.l.b16 %v1969
    %v2604 = vunpack.c.l.b16 %v1970
    %v2605 = vunpack.c.l.b16 %v1971
    %v2606 = vunpack.c.l.b16 %v1972
    %v2607 = vunpack.c.l.b16 %v1973
    %v2608 = vunpack.c.l.b16 %v1974
    %v2609 = vunpack.c.l.b16 %v1975
    %v2610 = vunpack.c.l.b16 %v1976
    %v2611 = vunpack.c.l.b16 %v1977
    %v2612 = vunpack.c.l.b16 %v1978
    %v2613 = vunpack.c.l.b16 %v1979
    %v2614 = vunpack.c.l.b16 %v1980
    %v2615 = vunpack.c.l.b16 %v1981
    %v2616 = vunpack.c.l.b16 %v1982
    %v2617 = vunpack.c.l.b16 %v1983
    %v2618 = vunpack.c.l.b16 %v1984
    %v2619 = vunpack.c.l.b16 %v1985
    %v2620 = vpack.c.b16 %v2557, %v2556
    %v2621 = vpack.c.b16 %v2559, %v2558
    %v2622 = vpack.c.b16 %v2561, %v2560
    %v2623 = vpack.c.b16 %v2563, %v2562
    %v2624 = vpack.c.b16 %v2565, %v2564
    %v2625 = vpack.c.b16 %v2567, %v2566
    %v2626 = vpack.c.b16 %v2569, %v2568
    %v2627 = vpack.c.b16 %v2571, %v2570
    %v2628 = vpack.c.b16 %v2573, %v2572
    %v2629 = vpack.c.b16 %v2575, %v2574
    %v2630 = vpack.c.b16 %v2577, %v2576
    %v2631 = vpack.c.b16 %v2579, %v2578
    %v2632 = vpack.c.b16 %v2581, %v2580
    %v2633 = vpack.c.b16 %v2583, %v2582
    %v2634 = vpack.c.b16 %v2585, %v2584
    %v2635 = vpack.c.b16 %v2587, %v2586
    %v2636 = vpack.c.b16 %v2589, %v2588
    %v2637 = vpack.c.b16 %v2591, %v2590
    %v2638 = vpack.c.b16 %v2593, %v2592
    %v2639 = vpack.c.b16 %v2595, %v2594
    %v2640 = vpack.c.b16 %v2597, %v2596
    %v2641 = vpack.c.b16 %v2599, %v2598
    %v2642 = vpack.c.b16 %v2601, %v2600
    %v2643 = vpack.c.b16 %v2603, %v2602
    %v2644 = vpack.c.b16 %v2605, %v2604
    %v2645 = vpack.c.b16 %v2607, %v2606
    %v2646 = vpack.c.b16 %v2609, %v2608
    %v2647 = vpack.c.b16 %v2611, %v2610
    %v2648 = vpack.c.b16 %v2613, %v2612
    %v2649 = vpack.c.b16 %v2615, %v2614
    %v2650 = vpack.c.b16 %v2617, %v2616
    %v2651 = vpack.c.b16 %v2619, %v2618
    %2684 = vmatprep.subr.bf16.mxu0 0
    %2685 = vmatpush1.bf16.msra.mxu0 %v2627
    %2686 = vmatprep.subr.bf16.mxu0 0
    %2687 = vmatpush1.bf16.msra.mxu0 %v2626
    %2688 = vmatprep.subr.bf16.mxu0 0
    %2689 = vmatpush1.bf16.msra.mxu0 %v2625
    %2690 = vmatprep.subr.bf16.mxu0 0
    %2691 = vmatpush1.bf16.msra.mxu0 %v2624
    %2692 = vmatprep.subr.bf16.mxu0 0
    %2693 = vmatpush1.bf16.msra.mxu0 %v2623
    %2694 = vmatprep.subr.bf16.mxu0 0
    %2695 = vmatpush1.bf16.msra.mxu0 %v2622
    %2696 = vmatprep.subr.bf16.mxu0 0
    %2697 = vmatpush1.bf16.msra.mxu0 %v2621
    %2698 = vmatprep.subr.bf16.mxu0 0
    %2699 = vmatpush1.bf16.msra.mxu0 %v2620
    %2700 = vmatprep.subr.bf16.mxu0 0
    %2701 = vmatpush2.bf16.msra.mxu0 %v2635
    %2702 = vmatprep.subr.bf16.mxu0 0
    %2703 = vmatpush2.bf16.msra.mxu0 %v2634
    %2704 = vmatprep.subr.bf16.mxu0 0
    %2705 = vmatpush2.bf16.msra.mxu0 %v2633
    %2706 = vmatprep.subr.bf16.mxu0 0
    %2707 = vmatpush2.bf16.msra.mxu0 %v2632
    %2708 = vmatprep.subr.bf16.mxu0 0
    %2709 = vmatpush2.bf16.msra.mxu0 %v2631
    %2710 = vmatprep.subr.bf16.mxu0 0
    %2711 = vmatpush2.bf16.msra.mxu0 %v2630
    %2712 = vmatprep.subr.bf16.mxu0 0
    %2713 = vmatpush2.bf16.msra.mxu0 %v2629
    %2714 = vmatprep.subr.bf16.mxu0 0
    %2715 = vmatpush2.bf16.msra.mxu0 %v2628
    %2716 = vmatprep.mubr.bf16.mxu0 %v1919
    %2717 = vmatmul.mubr.bf16.gmra.mxu0 %v1918
    %v2718 = vpop.f32.mrf.mxu0
    %v2719 = vadd.f32 %v2486, %v2718
    %v2720 = vpop.f32.mrf.mxu0
    %v2721 = vpop.f32.mrf.mxu0
    %v2722 = vadd.f32 %v2489, %v2721
    %v2723 = vpop.f32.mrf.mxu0
    %2724 = vdwg.mxu0
    %2725 = vmatprep.subr.bf16.mxu0 0
    %2726 = vmatpush1.bf16.msra.mxu0 %v2643
    %2727 = vmatprep.subr.bf16.mxu0 0
    %2728 = vmatpush1.bf16.msra.mxu0 %v2642
    %2729 = vmatprep.subr.bf16.mxu0 0
    %2730 = vmatpush1.bf16.msra.mxu0 %v2641
    %2731 = vmatprep.subr.bf16.mxu0 0
    %2732 = vmatpush1.bf16.msra.mxu0 %v2640
    %2733 = vmatprep.subr.bf16.mxu0 0
    %2734 = vmatpush1.bf16.msra.mxu0 %v2639
    %2735 = vmatprep.subr.bf16.mxu0 0
    %2736 = vmatpush1.bf16.msra.mxu0 %v2638
    %2737 = vmatprep.subr.bf16.mxu0 0
    %2738 = vmatpush1.bf16.msra.mxu0 %v2637
    %2739 = vmatprep.subr.bf16.mxu0 0
    %2740 = vmatpush1.bf16.msra.mxu0 %v2636
    %2741 = vmatprep.subr.bf16.mxu0 0
    %2742 = vmatpush2.bf16.msra.mxu0 %v2651
    %2743 = vmatprep.subr.bf16.mxu0 0
    %2744 = vmatpush2.bf16.msra.mxu0 %v2650
    %2745 = vmatprep.subr.bf16.mxu0 0
    %2746 = vmatpush2.bf16.msra.mxu0 %v2649
    %2747 = vmatprep.subr.bf16.mxu0 0
    %2748 = vmatpush2.bf16.msra.mxu0 %v2648
    %2749 = vmatprep.subr.bf16.mxu0 0
    %2750 = vmatpush2.bf16.msra.mxu0 %v2647
    %2751 = vmatprep.subr.bf16.mxu0 0
    %2752 = vmatpush2.bf16.msra.mxu0 %v2646
    %2753 = vmatprep.subr.bf16.mxu0 0
    %2754 = vmatpush2.bf16.msra.mxu0 %v2645
    %2755 = vmatprep.subr.bf16.mxu0 0
    %2756 = vmatpush2.bf16.msra.mxu0 %v2644
    %2757 = vmatprep.mubr.bf16.mxu0 %v1921
    %2758 = vmatmul.mubr.bf16.gmra.mxu0 %v1920
    %v2759 = vpop.f32.mrf.mxu0
    %v2760 = vadd.f32 %v2719, %v2759
    %v2761 = vpop.f32.mrf.mxu0
    %v2762 = vpop.f32.mrf.mxu0
    %v2763 = vadd.f32 %v2722, %v2762
    %v2764 = vpop.f32.mrf.mxu0
    %2765 = vdwg.mxu0
    %v2766 = vld [vmem:[%s10 + $0x20] sm:$0xff]
    %v2767 = vld [vmem:[%s10 + $0x28] sm:$0xff]
    %v2768 = vld [vmem:[%s10 + $0x60] sm:$0xff]
    %v2769 = vld [vmem:[%s10 + $0x68] sm:$0xff]
    %v2770 = vld [vmem:[%s10 + $0xa0] sm:$0xff]
    %v2771 = vld [vmem:[%s10 + $0xa8] sm:$0xff]
    %v2772 = vld [vmem:[%s10 + $0xe0] sm:$0xff]
    %v2773 = vld [vmem:[%s10 + $0xe8] sm:$0xff]
    %v2774 = vld [vmem:[%s11 + $0x8] sm:$0xf]
    %v2776 = vlaneseq
    %v2777 = vshrl.u32 %v2776, 7
    %v2778 = vsub.s32 0, %v2777
    %v2779 = vrot.slane %v2774, %v2778
    %v2780 = vlaneseq
    %v2781 = vshrl.u32 %v2780, 7
    %v2782 = vsub.s32 1, %v2781
    %v2783 = vrot.slane %v2774, %v2782
    %v2784 = vlaneseq
    %v2785 = vshrl.u32 %v2784, 7
    %v2786 = vsub.s32 2, %v2785
    %v2787 = vrot.slane %v2774, %v2786
    %v2788 = vlaneseq
    %v2789 = vshrl.u32 %v2788, 7
    %v2790 = vsub.s32 3, %v2789
    %v2791 = vrot.slane %v2774, %v2790
    %v2804 = vunpack.c.l.b16 %v2766
    %v2805 = vunpack.c.h.b16 %v2766
    %v2806 = vunpack.c.l.b16 %v2767
    %v2807 = vunpack.c.h.b16 %v2767
    %v2808 = vunpack.c.l.b16 %v2768
    %v2809 = vunpack.c.h.b16 %v2768
    %v2810 = vunpack.c.l.b16 %v2769
    %v2811 = vunpack.c.h.b16 %v2769
    %v2812 = vunpack.c.l.b16 %v2770
    %v2813 = vunpack.c.h.b16 %v2770
    %v2814 = vunpack.c.l.b16 %v2771
    %v2815 = vunpack.c.h.b16 %v2771
    %v2816 = vunpack.c.l.b16 %v2772
    %v2817 = vunpack.c.h.b16 %v2772
    %v2818 = vunpack.c.l.b16 %v2773
    %v2819 = vunpack.c.h.b16 %v2773
    %v2820 = vpack.c.b16 %v2808, %v2804
    %v2821 = vpack.c.b16 %v2809, %v2805
    %v2822 = vpack.c.b16 %v2810, %v2806
    %v2823 = vpack.c.b16 %v2811, %v2807
    %v2824 = vpack.c.b16 %v2816, %v2812
    %v2825 = vpack.c.b16 %v2817, %v2813
    %v2826 = vpack.c.b16 %v2818, %v2814
    %v2827 = vpack.c.b16 %v2819, %v2815
    %2836 = vmatprep.subr.bf16.mxu0 0
    %2837 = vmatpush1.bf16.msra.mxu0 0
    %2838 = vmatprep.subr.bf16.mxu0 0
    %2839 = vmatpush1.bf16.msra.mxu0 0
    %2840 = vmatprep.subr.bf16.mxu0 0
    %2841 = vmatpush1.bf16.msra.mxu0 0
    %2842 = vmatprep.subr.bf16.mxu0 0
    %2843 = vmatpush1.bf16.msra.mxu0 0
    %2844 = vmatprep.subr.bf16.mxu0 0
    %2845 = vmatpush1.bf16.msra.mxu0 0
    %2846 = vmatprep.subr.bf16.mxu0 0
    %2847 = vmatpush1.bf16.msra.mxu0 0
    %2848 = vmatprep.subr.bf16.mxu0 %v2825
    %2849 = vmatpush1.bf16.msra.mxu0 %v2824
    %2850 = vmatprep.subr.bf16.mxu0 %v2821
    %2851 = vmatpush1.bf16.msra.mxu0 %v2820
    %2852 = vmatprep.subr.bf16.mxu0 0
    %2853 = vmatpush2.bf16.msra.mxu0 0
    %2854 = vmatprep.subr.bf16.mxu0 0
    %2855 = vmatpush2.bf16.msra.mxu0 0
    %2856 = vmatprep.subr.bf16.mxu0 0
    %2857 = vmatpush2.bf16.msra.mxu0 0
    %2858 = vmatprep.subr.bf16.mxu0 0
    %2859 = vmatpush2.bf16.msra.mxu0 0
    %2860 = vmatprep.subr.bf16.mxu0 0
    %2861 = vmatpush2.bf16.msra.mxu0 0
    %2862 = vmatprep.subr.bf16.mxu0 0
    %2863 = vmatpush2.bf16.msra.mxu0 0
    %2864 = vmatprep.subr.bf16.mxu0 0
    %2865 = vmatpush2.bf16.msra.mxu0 0
    %2866 = vmatprep.subr.bf16.mxu0 0
    %2867 = vmatpush2.bf16.msra.mxu0 0
    %2868 = vmatprep.mubr.bf16.mxu0 0
    %2869 = vmatmul.mubr.bf16.gmra.mxu0 %v1822
    %v2870 = vpop.f32.mrf.mxu0
    %v2871 = vadd.f32 %v2779, %v2870
    %v2872 = vpop.f32.mrf.mxu0
    %v2873 = vadd.f32 %v2783, %v2872
    %v2874 = vpop.f32.mrf.mxu0
    %v2875 = vadd.f32 %v2779, %v2874
    %v2876 = vpop.f32.mrf.mxu0
    %v2877 = vadd.f32 %v2783, %v2876
    %2878 = vdwg.mxu0
    %2879 = vmatprep.subr.bf16.mxu0 0
    %2880 = vmatpush1.bf16.msra.mxu0 0
    %2881 = vmatprep.subr.bf16.mxu0 0
    %2882 = vmatpush1.bf16.msra.mxu0 0
    %2883 = vmatprep.subr.bf16.mxu0 0
    %2884 = vmatpush1.bf16.msra.mxu0 0
    %2885 = vmatprep.subr.bf16.mxu0 0
    %2886 = vmatpush1.bf16.msra.mxu0 0
    %2887 = vmatprep.subr.bf16.mxu0 0
    %2888 = vmatpush1.bf16.msra.mxu0 0
    %2889 = vmatprep.subr.bf16.mxu0 0
    %2890 = vmatpush1.bf16.msra.mxu0 0
    %2891 = vmatprep.subr.bf16.mxu0 %v2827
    %2892 = vmatpush1.bf16.msra.mxu0 %v2826
    %2893 = vmatprep.subr.bf16.mxu0 %v2823
    %2894 = vmatpush1.bf16.msra.mxu0 %v2822
    %2895 = vmatprep.subr.bf16.mxu0 0
    %2896 = vmatpush2.bf16.msra.mxu0 0
    %2897 = vmatprep.subr.bf16.mxu0 0
    %2898 = vmatpush2.bf16.msra.mxu0 0
    %2899 = vmatprep.subr.bf16.mxu0 0
    %2900 = vmatpush2.bf16.msra.mxu0 0
    %2901 = vmatprep.subr.bf16.mxu0 0
    %2902 = vmatpush2.bf16.msra.mxu0 0
    %2903 = vmatprep.subr.bf16.mxu0 0
    %2904 = vmatpush2.bf16.msra.mxu0 0
    %2905 = vmatprep.subr.bf16.mxu0 0
    %2906 = vmatpush2.bf16.msra.mxu0 0
    %2907 = vmatprep.subr.bf16.mxu0 0
    %2908 = vmatpush2.bf16.msra.mxu0 0
    %2909 = vmatprep.subr.bf16.mxu0 0
    %2910 = vmatpush2.bf16.msra.mxu0 0
    %2911 = vmatprep.mubr.bf16.mxu0 0
    %2912 = vmatmul.mubr.bf16.gmra.mxu0 %v1822
    %v2913 = vpop.f32.mrf.mxu0
    %v2914 = vadd.f32 %v2787, %v2913
    %v2915 = vpop.f32.mrf.mxu0
    %v2916 = vadd.f32 %v2791, %v2915
    %v2917 = vpop.f32.mrf.mxu0
    %v2918 = vadd.f32 %v2787, %v2917
    %v2919 = vpop.f32.mrf.mxu0
    %v2920 = vadd.f32 %v2791, %v2919
    %2921 = vdwg.mxu0
    %v2922 = vmax.f32 %v2871, 0.0
    %v2923 = vmax.f32 %v2873, 0.0
    %v2924 = vmax.f32 %v2914, 0.0
    %v2925 = vmax.f32 %v2916, 0.0
    %v2926 = vmax.f32 %v2875, 0.0
    %v2927 = vmax.f32 %v2877, 0.0
    %v2928 = vmax.f32 %v2918, 0.0
    %v2929 = vmax.f32 %v2920, 0.0
    %v2930 = vpack.c.bf16 %v2926, %v2922
    %v2931 = vpack.c.bf16 %v2927, %v2923
    %v2932 = vpack.c.bf16 %v2928, %v2924
    %v2933 = vpack.c.bf16 %v2929, %v2925
    %v2934 = vld [vmem:[%s12 + $0x200] sm:$0xf]
    %v2935 = vld [vmem:[%s12 + $0x204] sm:$0xf]
    %v2936 = vld [vmem:[%s12 + $0x208] sm:$0xf]
    %v2937 = vld [vmem:[%s12 + $0x20c] sm:$0xf]
    %v2938 = vld [vmem:[%s12 + $0x210] sm:$0xf]
    %v2939 = vld [vmem:[%s12 + $0x214] sm:$0xf]
    %v2940 = vld [vmem:[%s12 + $0x218] sm:$0xf]
    %v2941 = vld [vmem:[%s12 + $0x21c] sm:$0xf]
    %v2942 = vld [vmem:[%s12 + $0x220] sm:$0xf]
    %v2943 = vld [vmem:[%s12 + $0x224] sm:$0xf]
    %v2944 = vld [vmem:[%s12 + $0x228] sm:$0xf]
    %v2945 = vld [vmem:[%s12 + $0x22c] sm:$0xf]
    %v2946 = vld [vmem:[%s12 + $0x230] sm:$0xf]
    %v2947 = vld [vmem:[%s12 + $0x234] sm:$0xf]
    %v2948 = vld [vmem:[%s12 + $0x238] sm:$0xf]
    %v2949 = vld [vmem:[%s12 + $0x23c] sm:$0xf]
    %v2950 = vld [vmem:[%s12 + $0x240] sm:$0xf]
    %v2951 = vld [vmem:[%s12 + $0x244] sm:$0xf]
    %v2952 = vld [vmem:[%s12 + $0x248] sm:$0xf]
    %v2953 = vld [vmem:[%s12 + $0x24c] sm:$0xf]
    %v2954 = vld [vmem:[%s12 + $0x250] sm:$0xf]
    %v2955 = vld [vmem:[%s12 + $0x254] sm:$0xf]
    %v2956 = vld [vmem:[%s12 + $0x258] sm:$0xf]
    %v2957 = vld [vmem:[%s12 + $0x25c] sm:$0xf]
    %v2958 = vld [vmem:[%s12 + $0x260] sm:$0xf]
    %v2959 = vld [vmem:[%s12 + $0x264] sm:$0xf]
    %v2960 = vld [vmem:[%s12 + $0x268] sm:$0xf]
    %v2961 = vld [vmem:[%s12 + $0x26c] sm:$0xf]
    %v2962 = vld [vmem:[%s12 + $0x270] sm:$0xf]
    %v2963 = vld [vmem:[%s12 + $0x274] sm:$0xf]
    %v2964 = vld [vmem:[%s12 + $0x278] sm:$0xf]
    %v2965 = vld [vmem:[%s12 + $0x27c] sm:$0xf]
    %v2966 = vld [vmem:[%s12 + $0x280] sm:$0xf]
    %v2967 = vld [vmem:[%s12 + $0x284] sm:$0xf]
    %v2968 = vld [vmem:[%s12 + $0x288] sm:$0xf]
    %v2969 = vld [vmem:[%s12 + $0x28c] sm:$0xf]
    %v2970 = vld [vmem:[%s12 + $0x290] sm:$0xf]
    %v2971 = vld [vmem:[%s12 + $0x294] sm:$0xf]
    %v2972 = vld [vmem:[%s12 + $0x298] sm:$0xf]
    %v2973 = vld [vmem:[%s12 + $0x29c] sm:$0xf]
    %v2974 = vld [vmem:[%s12 + $0x2a0] sm:$0xf]
    %v2975 = vld [vmem:[%s12 + $0x2a4] sm:$0xf]
    %v2976 = vld [vmem:[%s12 + $0x2a8] sm:$0xf]
    %v2977 = vld [vmem:[%s12 + $0x2ac] sm:$0xf]
    %v2978 = vld [vmem:[%s12 + $0x2b0] sm:$0xf]
    %v2979 = vld [vmem:[%s12 + $0x2b4] sm:$0xf]
    %v2980 = vld [vmem:[%s12 + $0x2b8] sm:$0xf]
    %v2981 = vld [vmem:[%s12 + $0x2bc] sm:$0xf]
    %v2982 = vld [vmem:[%s12 + $0x2c0] sm:$0xf]
    %v2983 = vld [vmem:[%s12 + $0x2c4] sm:$0xf]
    %v2984 = vld [vmem:[%s12 + $0x2c8] sm:$0xf]
    %v2985 = vld [vmem:[%s12 + $0x2cc] sm:$0xf]
    %v2986 = vld [vmem:[%s12 + $0x2d0] sm:$0xf]
    %v2987 = vld [vmem:[%s12 + $0x2d4] sm:$0xf]
    %v2988 = vld [vmem:[%s12 + $0x2d8] sm:$0xf]
    %v2989 = vld [vmem:[%s12 + $0x2dc] sm:$0xf]
    %v2990 = vld [vmem:[%s12 + $0x2e0] sm:$0xf]
    %v2991 = vld [vmem:[%s12 + $0x2e4] sm:$0xf]
    %v2992 = vld [vmem:[%s12 + $0x2e8] sm:$0xf]
    %v2993 = vld [vmem:[%s12 + $0x2ec] sm:$0xf]
    %v2994 = vld [vmem:[%s12 + $0x2f0] sm:$0xf]
    %v2995 = vld [vmem:[%s12 + $0x2f4] sm:$0xf]
    %v2996 = vld [vmem:[%s12 + $0x2f8] sm:$0xf]
    %v2997 = vld [vmem:[%s12 + $0x2fc] sm:$0xf]
    %v3062 = vunpack.c.l.b16 %v2934
    %v3063 = vunpack.c.l.b16 %v2935
    %v3064 = vunpack.c.l.b16 %v2936
    %v3065 = vunpack.c.l.b16 %v2937
    %v3066 = vunpack.c.l.b16 %v2938
    %v3067 = vunpack.c.l.b16 %v2939
    %v3068 = vunpack.c.l.b16 %v2940
    %v3069 = vunpack.c.l.b16 %v2941
    %v3070 = vunpack.c.l.b16 %v2942
    %v3071 = vunpack.c.l.b16 %v2943
    %v3072 = vunpack.c.l.b16 %v2944
    %v3073 = vunpack.c.l.b16 %v2945
    %v3074 = vunpack.c.l.b16 %v2946
    %v3075 = vunpack.c.l.b16 %v2947
    %v3076 = vunpack.c.l.b16 %v2948
    %v3077 = vunpack.c.l.b16 %v2949
    %v3078 = vunpack.c.l.b16 %v2950
    %v3079 = vunpack.c.l.b16 %v2951
    %v3080 = vunpack.c.l.b16 %v2952
    %v3081 = vunpack.c.l.b16 %v2953
    %v3082 = vunpack.c.l.b16 %v2954
    %v3083 = vunpack.c.l.b16 %v2955
    %v3084 = vunpack.c.l.b16 %v2956
    %v3085 = vunpack.c.l.b16 %v2957
    %v3086 = vunpack.c.l.b16 %v2958
    %v3087 = vunpack.c.l.b16 %v2959
    %v3088 = vunpack.c.l.b16 %v2960
    %v3089 = vunpack.c.l.b16 %v2961
    %v3090 = vunpack.c.l.b16 %v2962
    %v3091 = vunpack.c.l.b16 %v2963
    %v3092 = vunpack.c.l.b16 %v2964
    %v3093 = vunpack.c.l.b16 %v2965
    %v3094 = vunpack.c.l.b16 %v2966
    %v3095 = vunpack.c.l.b16 %v2967
    %v3096 = vunpack.c.l.b16 %v2968
    %v3097 = vunpack.c.l.b16 %v2969
    %v3098 = vunpack.c.l.b16 %v2970
    %v3099 = vunpack.c.l.b16 %v2971
    %v3100 = vunpack.c.l.b16 %v2972
    %v3101 = vunpack.c.l.b16 %v2973
    %v3102 = vunpack.c.l.b16 %v2974
    %v3103 = vunpack.c.l.b16 %v2975
    %v3104 = vunpack.c.l.b16 %v2976
    %v3105 = vunpack.c.l.b16 %v2977
    %v3106 = vunpack.c.l.b16 %v2978
    %v3107 = vunpack.c.l.b16 %v2979
    %v3108 = vunpack.c.l.b16 %v2980
    %v3109 = vunpack.c.l.b16 %v2981
    %v3110 = vunpack.c.l.b16 %v2982
    %v3111 = vunpack.c.l.b16 %v2983
    %v3112 = vunpack.c.l.b16 %v2984
    %v3113 = vunpack.c.l.b16 %v2985
    %v3114 = vunpack.c.l.b16 %v2986
    %v3115 = vunpack.c.l.b16 %v2987
    %v3116 = vunpack.c.l.b16 %v2988
    %v3117 = vunpack.c.l.b16 %v2989
    %v3118 = vunpack.c.l.b16 %v2990
    %v3119 = vunpack.c.l.b16 %v2991
    %v3120 = vunpack.c.l.b16 %v2992
    %v3121 = vunpack.c.l.b16 %v2993
    %v3122 = vunpack.c.l.b16 %v2994
    %v3123 = vunpack.c.l.b16 %v2995
    %v3124 = vunpack.c.l.b16 %v2996
    %v3125 = vunpack.c.l.b16 %v2997
    %v3126 = vpack.c.b16 %v3063, %v3062
    %v3127 = vpack.c.b16 %v3065, %v3064
    %v3128 = vpack.c.b16 %v3067, %v3066
    %v3129 = vpack.c.b16 %v3069, %v3068
    %v3130 = vpack.c.b16 %v3071, %v3070
    %v3131 = vpack.c.b16 %v3073, %v3072
    %v3132 = vpack.c.b16 %v3075, %v3074
    %v3133 = vpack.c.b16 %v3077, %v3076
    %v3134 = vpack.c.b16 %v3079, %v3078
    %v3135 = vpack.c.b16 %v3081, %v3080
    %v3136 = vpack.c.b16 %v3083, %v3082
    %v3137 = vpack.c.b16 %v3085, %v3084
    %v3138 = vpack.c.b16 %v3087, %v3086
    %v3139 = vpack.c.b16 %v3089, %v3088
    %v3140 = vpack.c.b16 %v3091, %v3090
    %v3141 = vpack.c.b16 %v3093, %v3092
    %v3142 = vpack.c.b16 %v3095, %v3094
    %v3143 = vpack.c.b16 %v3097, %v3096
    %v3144 = vpack.c.b16 %v3099, %v3098
    %v3145 = vpack.c.b16 %v3101, %v3100
    %v3146 = vpack.c.b16 %v3103, %v3102
    %v3147 = vpack.c.b16 %v3105, %v3104
    %v3148 = vpack.c.b16 %v3107, %v3106
    %v3149 = vpack.c.b16 %v3109, %v3108
    %v3150 = vpack.c.b16 %v3111, %v3110
    %v3151 = vpack.c.b16 %v3113, %v3112
    %v3152 = vpack.c.b16 %v3115, %v3114
    %v3153 = vpack.c.b16 %v3117, %v3116
    %v3154 = vpack.c.b16 %v3119, %v3118
    %v3155 = vpack.c.b16 %v3121, %v3120
    %v3156 = vpack.c.b16 %v3123, %v3122
    %v3157 = vpack.c.b16 %v3125, %v3124
    %3190 = vmatprep.subr.bf16.mxu0 0
    %3191 = vmatpush1.bf16.msra.mxu0 %v3133
    %3192 = vmatprep.subr.bf16.mxu0 0
    %3193 = vmatpush1.bf16.msra.mxu0 %v3132
    %3194 = vmatprep.subr.bf16.mxu0 0
    %3195 = vmatpush1.bf16.msra.mxu0 %v3131
    %3196 = vmatprep.subr.bf16.mxu0 0
    %3197 = vmatpush1.bf16.msra.mxu0 %v3130
    %3198 = vmatprep.subr.bf16.mxu0 0
    %3199 = vmatpush1.bf16.msra.mxu0 %v3129
    %3200 = vmatprep.subr.bf16.mxu0 0
    %3201 = vmatpush1.bf16.msra.mxu0 %v3128
    %3202 = vmatprep.subr.bf16.mxu0 0
    %3203 = vmatpush1.bf16.msra.mxu0 %v3127
    %3204 = vmatprep.subr.bf16.mxu0 0
    %3205 = vmatpush1.bf16.msra.mxu0 %v3126
    %3206 = vmatprep.subr.bf16.mxu0 0
    %3207 = vmatpush2.bf16.msra.mxu0 %v3141
    %3208 = vmatprep.subr.bf16.mxu0 0
    %3209 = vmatpush2.bf16.msra.mxu0 %v3140
    %3210 = vmatprep.subr.bf16.mxu0 0
    %3211 = vmatpush2.bf16.msra.mxu0 %v3139
    %3212 = vmatprep.subr.bf16.mxu0 0
    %3213 = vmatpush2.bf16.msra.mxu0 %v3138
    %3214 = vmatprep.subr.bf16.mxu0 0
    %3215 = vmatpush2.bf16.msra.mxu0 %v3137
    %3216 = vmatprep.subr.bf16.mxu0 0
    %3217 = vmatpush2.bf16.msra.mxu0 %v3136
    %3218 = vmatprep.subr.bf16.mxu0 0
    %3219 = vmatpush2.bf16.msra.mxu0 %v3135
    %3220 = vmatprep.subr.bf16.mxu0 0
    %3221 = vmatpush2.bf16.msra.mxu0 %v3134
    %3222 = vmatprep.mubr.bf16.mxu0 %v2931
    %3223 = vmatmul.mubr.bf16.gmra.mxu0 %v2930
    %v3224 = vpop.f32.mrf.mxu0
    %v3225 = vadd.f32 0.0, %v3224
    %v3226 = vpop.f32.mrf.mxu0
    %v3227 = vpop.f32.mrf.mxu0
    %v3228 = vadd.f32 0.0, %v3227
    %v3229 = vpop.f32.mrf.mxu0
    %3230 = vdwg.mxu0
    %3231 = vmatprep.subr.bf16.mxu0 0
    %3232 = vmatpush1.bf16.msra.mxu0 %v3149
    %3233 = vmatprep.subr.bf16.mxu0 0
    %3234 = vmatpush1.bf16.msra.mxu0 %v3148
    %3235 = vmatprep.subr.bf16.mxu0 0
    %3236 = vmatpush1.bf16.msra.mxu0 %v3147
    %3237 = vmatprep.subr.bf16.mxu0 0
    %3238 = vmatpush1.bf16.msra.mxu0 %v3146
    %3239 = vmatprep.subr.bf16.mxu0 0
    %3240 = vmatpush1.bf16.msra.mxu0 %v3145
    %3241 = vmatprep.subr.bf16.mxu0 0
    %3242 = vmatpush1.bf16.msra.mxu0 %v3144
    %3243 = vmatprep.subr.bf16.mxu0 0
    %3244 = vmatpush1.bf16.msra.mxu0 %v3143
    %3245 = vmatprep.subr.bf16.mxu0 0
    %3246 = vmatpush1.bf16.msra.mxu0 %v3142
    %3247 = vmatprep.subr.bf16.mxu0 0
    %3248 = vmatpush2.bf16.msra.mxu0 %v3157
    %3249 = vmatprep.subr.bf16.mxu0 0
    %3250 = vmatpush2.bf16.msra.mxu0 %v3156
    %3251 = vmatprep.subr.bf16.mxu0 0
    %3252 = vmatpush2.bf16.msra.mxu0 %v3155
    %3253 = vmatprep.subr.bf16.mxu0 0
    %3254 = vmatpush2.bf16.msra.mxu0 %v3154
    %3255 = vmatprep.subr.bf16.mxu0 0
    %3256 = vmatpush2.bf16.msra.mxu0 %v3153
    %3257 = vmatprep.subr.bf16.mxu0 0
    %3258 = vmatpush2.bf16.msra.mxu0 %v3152
    %3259 = vmatprep.subr.bf16.mxu0 0
    %3260 = vmatpush2.bf16.msra.mxu0 %v3151
    %3261 = vmatprep.subr.bf16.mxu0 0
    %3262 = vmatpush2.bf16.msra.mxu0 %v3150
    %3263 = vmatprep.mubr.bf16.mxu0 %v2933
    %3264 = vmatmul.mubr.bf16.gmra.mxu0 %v2932
    %v3265 = vpop.f32.mrf.mxu0
    %v3266 = vadd.f32 %v3225, %v3265
    %v3267 = vpop.f32.mrf.mxu0
    %v3268 = vpop.f32.mrf.mxu0
    %v3269 = vadd.f32 %v3228, %v3268
    %v3270 = vpop.f32.mrf.mxu0
    %3271 = vdwg.mxu0
    %v3272 = vadd.f32 %v2760, %v3266
    %v3273 = vadd.f32 %v2763, %v3269
    %v3274 = vld [vmem:[%s10 + $0x30] sm:$0xff]
    %v3275 = vld [vmem:[%s10 + $0x38] sm:$0xff]
    %v3276 = vld [vmem:[%s10 + $0x70] sm:$0xff]
    %v3277 = vld [vmem:[%s10 + $0x78] sm:$0xff]
    %v3278 = vld [vmem:[%s10 + $0xb0] sm:$0xff]
    %v3279 = vld [vmem:[%s10 + $0xb8] sm:$0xff]
    %v3280 = vld [vmem:[%s10 + $0xf0] sm:$0xff]
    %v3281 = vld [vmem:[%s10 + $0xf8] sm:$0xff]
    %v3282 = vld [vmem:[%s11 + $0xc] sm:$0xf]
    %v3284 = vlaneseq
    %v3285 = vshrl.u32 %v3284, 7
    %v3286 = vsub.s32 0, %v3285
    %v3287 = vrot.slane %v3282, %v3286
    %v3288 = vlaneseq
    %v3289 = vshrl.u32 %v3288, 7
    %v3290 = vsub.s32 1, %v3289
    %v3291 = vrot.slane %v3282, %v3290
    %v3292 = vlaneseq
    %v3293 = vshrl.u32 %v3292, 7
    %v3294 = vsub.s32 2, %v3293
    %v3295 = vrot.slane %v3282, %v3294
    %v3296 = vlaneseq
    %v3297 = vshrl.u32 %v3296, 7
    %v3298 = vsub.s32 3, %v3297
    %v3299 = vrot.slane %v3282, %v3298
    %v3312 = vunpack.c.l.b16 %v3274
    %v3313 = vunpack.c.h.b16 %v3274
    %v3314 = vunpack.c.l.b16 %v3275
    %v3315 = vunpack.c.h.b16 %v3275
    %v3316 = vunpack.c.l.b16 %v3276
    %v3317 = vunpack.c.h.b16 %v3276
    %v3318 = vunpack.c.l.b16 %v3277
    %v3319 = vunpack.c.h.b16 %v3277
    %v3320 = vunpack.c.l.b16 %v3278
    %v3321 = vunpack.c.h.b16 %v3278
    %v3322 = vunpack.c.l.b16 %v3279
    %v3323 = vunpack.c.h.b16 %v3279
    %v3324 = vunpack.c.l.b16 %v3280
    %v3325 = vunpack.c.h.b16 %v3280
    %v3326 = vunpack.c.l.b16 %v3281
    %v3327 = vunpack.c.h.b16 %v3281
    %v3328 = vpack.c.b16 %v3316, %v3312
    %v3329 = vpack.c.b16 %v3317, %v3313
    %v3330 = vpack.c.b16 %v3318, %v3314
    %v3331 = vpack.c.b16 %v3319, %v3315
    %v3332 = vpack.c.b16 %v3324, %v3320
    %v3333 = vpack.c.b16 %v3325, %v3321
    %v3334 = vpack.c.b16 %v3326, %v3322
    %v3335 = vpack.c.b16 %v3327, %v3323
    %3344 = vmatprep.subr.bf16.mxu0 0
    %3345 = vmatpush1.bf16.msra.mxu0 0
    %3346 = vmatprep.subr.bf16.mxu0 0
    %3347 = vmatpush1.bf16.msra.mxu0 0
    %3348 = vmatprep.subr.bf16.mxu0 0
    %3349 = vmatpush1.bf16.msra.mxu0 0
    %3350 = vmatprep.subr.bf16.mxu0 0
    %3351 = vmatpush1.bf16.msra.mxu0 0
    %3352 = vmatprep.subr.bf16.mxu0 0
    %3353 = vmatpush1.bf16.msra.mxu0 0
    %3354 = vmatprep.subr.bf16.mxu0 0
    %3355 = vmatpush1.bf16.msra.mxu0 0
    %3356 = vmatprep.subr.bf16.mxu0 %v3333
    %3357 = vmatpush1.bf16.msra.mxu0 %v3332
    %3358 = vmatprep.subr.bf16.mxu0 %v3329
    %3359 = vmatpush1.bf16.msra.mxu0 %v3328
    %3360 = vmatprep.subr.bf16.mxu0 0
    %3361 = vmatpush2.bf16.msra.mxu0 0
    %3362 = vmatprep.subr.bf16.mxu0 0
    %3363 = vmatpush2.bf16.msra.mxu0 0
    %3364 = vmatprep.subr.bf16.mxu0 0
    %3365 = vmatpush2.bf16.msra.mxu0 0
    %3366 = vmatprep.subr.bf16.mxu0 0
    %3367 = vmatpush2.bf16.msra.mxu0 0
    %3368 = vmatprep.subr.bf16.mxu0 0
    %3369 = vmatpush2.bf16.msra.mxu0 0
    %3370 = vmatprep.subr.bf16.mxu0 0
    %3371 = vmatpush2.bf16.msra.mxu0 0
    %3372 = vmatprep.subr.bf16.mxu0 0
    %3373 = vmatpush2.bf16.msra.mxu0 0
    %3374 = vmatprep.subr.bf16.mxu0 0
    %3375 = vmatpush2.bf16.msra.mxu0 0
    %3376 = vmatprep.mubr.bf16.mxu0 0
    %3377 = vmatmul.mubr.bf16.gmra.mxu0 %v1822
    %v3378 = vpop.f32.mrf.mxu0
    %v3379 = vadd.f32 %v3287, %v3378
    %v3380 = vpop.f32.mrf.mxu0
    %v3381 = vadd.f32 %v3291, %v3380
    %v3382 = vpop.f32.mrf.mxu0
    %v3383 = vadd.f32 %v3287, %v3382
    %v3384 = vpop.f32.mrf.mxu0
    %v3385 = vadd.f32 %v3291, %v3384
    %3386 = vdwg.mxu0
    %3387 = vmatprep.subr.bf16.mxu0 0
    %3388 = vmatpush1.bf16.msra.mxu0 0
    %3389 = vmatprep.subr.bf16.mxu0 0
    %3390 = vmatpush1.bf16.msra.mxu0 0
    %3391 = vmatprep.subr.bf16.mxu0 0
    %3392 = vmatpush1.bf16.msra.mxu0 0
    %3393 = vmatprep.subr.bf16.mxu0 0
    %3394 = vmatpush1.bf16.msra.mxu0 0
    %3395 = vmatprep.subr.bf16.mxu0 0
    %3396 = vmatpush1.bf16.msra.mxu0 0
    %3397 = vmatprep.subr.bf16.mxu0 0
    %3398 = vmatpush1.bf16.msra.mxu0 0
    %3399 = vmatprep.subr.bf16.mxu0 %v3335
    %3400 = vmatpush1.bf16.msra.mxu0 %v3334
    %3401 = vmatprep.subr.bf16.mxu0 %v3331
    %3402 = vmatpush1.bf16.msra.mxu0 %v3330
    %3403 = vmatprep.subr.bf16.mxu0 0
    %3404 = vmatpush2.bf16.msra.mxu0 0
    %3405 = vmatprep.subr.bf16.mxu0 0
    %3406 = vmatpush2.bf16.msra.mxu0 0
    %3407 = vmatprep.subr.bf16.mxu0 0
    %3408 = vmatpush2.bf16.msra.mxu0 0
    %3409 = vmatprep.subr.bf16.mxu0 0
    %3410 = vmatpush2.bf16.msra.mxu0 0
    %3411 = vmatprep.subr.bf16.mxu0 0
    %3412 = vmatpush2.bf16.msra.mxu0 0
    %3413 = vmatprep.subr.bf16.mxu0 0
    %3414 = vmatpush2.bf16.msra.mxu0 0
    %3415 = vmatprep.subr.bf16.mxu0 0
    %3416 = vmatpush2.bf16.msra.mxu0 0
    %3417 = vmatprep.subr.bf16.mxu0 0
    %3418 = vmatpush2.bf16.msra.mxu0 0
    %3419 = vmatprep.mubr.bf16.mxu0 0
    %3420 = vmatmul.mubr.bf16.gmra.mxu0 %v1822
    %v3421 = vpop.f32.mrf.mxu0
    %v3422 = vadd.f32 %v3295, %v3421
    %v3423 = vpop.f32.mrf.mxu0
    %v3424 = vadd.f32 %v3299, %v3423
    %v3425 = vpop.f32.mrf.mxu0
    %v3426 = vadd.f32 %v3295, %v3425
    %v3427 = vpop.f32.mrf.mxu0
    %v3428 = vadd.f32 %v3299, %v3427
    %3429 = vdwg.mxu0
    %v3430 = vmax.f32 %v3379, 0.0
    %v3431 = vmax.f32 %v3381, 0.0
    %v3432 = vmax.f32 %v3422, 0.0
    %v3433 = vmax.f32 %v3424, 0.0
    %v3434 = vmax.f32 %v3383, 0.0
    %v3435 = vmax.f32 %v3385, 0.0
    %v3436 = vmax.f32 %v3426, 0.0
    %v3437 = vmax.f32 %v3428, 0.0
    %v3438 = vpack.c.bf16 %v3434, %v3430
    %v3439 = vpack.c.bf16 %v3435, %v3431
    %v3440 = vpack.c.bf16 %v3436, %v3432
    %v3441 = vpack.c.bf16 %v3437, %v3433
    %v3442 = vld [vmem:[%s12 + $0x300] sm:$0xf]
    %v3443 = vld [vmem:[%s12 + $0x304] sm:$0xf]
    %v3444 = vld [vmem:[%s12 + $0x308] sm:$0xf]
    %v3445 = vld [vmem:[%s12 + $0x30c] sm:$0xf]
    %v3446 = vld [vmem:[%s12 + $0x310] sm:$0xf]
    %v3447 = vld [vmem:[%s12 + $0x314] sm:$0xf]
    %v3448 = vld [vmem:[%s12 + $0x318] sm:$0xf]
    %v3449 = vld [vmem:[%s12 + $0x31c] sm:$0xf]
    %v3450 = vld [vmem:[%s12 + $0x320] sm:$0xf]
    %v3451 = vld [vmem:[%s12 + $0x324] sm:$0xf]
    %v3452 = vld [vmem:[%s12 + $0x328] sm:$0xf]
    %v3453 = vld [vmem:[%s12 + $0x32c] sm:$0xf]
    %v3454 = vld [vmem:[%s12 + $0x330] sm:$0xf]
    %v3455 = vld [vmem:[%s12 + $0x334] sm:$0xf]
    %v3456 = vld [vmem:[%s12 + $0x338] sm:$0xf]
    %v3457 = vld [vmem:[%s12 + $0x33c] sm:$0xf]
    %v3458 = vld [vmem:[%s12 + $0x340] sm:$0xf]
    %v3459 = vld [vmem:[%s12 + $0x344] sm:$0xf]
    %v3460 = vld [vmem:[%s12 + $0x348] sm:$0xf]
    %v3461 = vld [vmem:[%s12 + $0x34c] sm:$0xf]
    %v3462 = vld [vmem:[%s12 + $0x350] sm:$0xf]
    %v3463 = vld [vmem:[%s12 + $0x354] sm:$0xf]
    %v3464 = vld [vmem:[%s12 + $0x358] sm:$0xf]
    %v3465 = vld [vmem:[%s12 + $0x35c] sm:$0xf]
    %v3466 = vld [vmem:[%s12 + $0x360] sm:$0xf]
    %v3467 = vld [vmem:[%s12 + $0x364] sm:$0xf]
    %v3468 = vld [vmem:[%s12 + $0x368] sm:$0xf]
    %v3469 = vld [vmem:[%s12 + $0x36c] sm:$0xf]
    %v3470 = vld [vmem:[%s12 + $0x370] sm:$0xf]
    %v3471 = vld [vmem:[%s12 + $0x374] sm:$0xf]
    %v3472 = vld [vmem:[%s12 + $0x378] sm:$0xf]
    %v3473 = vld [vmem:[%s12 + $0x37c] sm:$0xf]
    %v3474 = vld [vmem:[%s12 + $0x380] sm:$0xf]
    %v3475 = vld [vmem:[%s12 + $0x384] sm:$0xf]
    %v3476 = vld [vmem:[%s12 + $0x388] sm:$0xf]
    %v3477 = vld [vmem:[%s12 + $0x38c] sm:$0xf]
    %v3478 = vld [vmem:[%s12 + $0x390] sm:$0xf]
    %v3479 = vld [vmem:[%s12 + $0x394] sm:$0xf]
    %v3480 = vld [vmem:[%s12 + $0x398] sm:$0xf]
    %v3481 = vld [vmem:[%s12 + $0x39c] sm:$0xf]
    %v3482 = vld [vmem:[%s12 + $0x3a0] sm:$0xf]
    %v3483 = vld [vmem:[%s12 + $0x3a4] sm:$0xf]
    %v3484 = vld [vmem:[%s12 + $0x3a8] sm:$0xf]
    %v3485 = vld [vmem:[%s12 + $0x3ac] sm:$0xf]
    %v3486 = vld [vmem:[%s12 + $0x3b0] sm:$0xf]
    %v3487 = vld [vmem:[%s12 + $0x3b4] sm:$0xf]
    %v3488 = vld [vmem:[%s12 + $0x3b8] sm:$0xf]
    %v3489 = vld [vmem:[%s12 + $0x3bc] sm:$0xf]
    %v3490 = vld [vmem:[%s12 + $0x3c0] sm:$0xf]
    %v3491 = vld [vmem:[%s12 + $0x3c4] sm:$0xf]
    %v3492 = vld [vmem:[%s12 + $0x3c8] sm:$0xf]
    %v3493 = vld [vmem:[%s12 + $0x3cc] sm:$0xf]
    %v3494 = vld [vmem:[%s12 + $0x3d0] sm:$0xf]
    %v3495 = vld [vmem:[%s12 + $0x3d4] sm:$0xf]
    %v3496 = vld [vmem:[%s12 + $0x3d8] sm:$0xf]
    %v3497 = vld [vmem:[%s12 + $0x3dc] sm:$0xf]
    %v3498 = vld [vmem:[%s12 + $0x3e0] sm:$0xf]
    %v3499 = vld [vmem:[%s12 + $0x3e4] sm:$0xf]
    %v3500 = vld [vmem:[%s12 + $0x3e8] sm:$0xf]
    %v3501 = vld [vmem:[%s12 + $0x3ec] sm:$0xf]
    %v3502 = vld [vmem:[%s12 + $0x3f0] sm:$0xf]
    %v3503 = vld [vmem:[%s12 + $0x3f4] sm:$0xf]
    %v3504 = vld [vmem:[%s12 + $0x3f8] sm:$0xf]
    %v3505 = vld [vmem:[%s12 + $0x3fc] sm:$0xf]
    %v3570 = vunpack.c.l.b16 %v3442
    %v3571 = vunpack.c.l.b16 %v3443
    %v3572 = vunpack.c.l.b16 %v3444
    %v3573 = vunpack.c.l.b16 %v3445
    %v3574 = vunpack.c.l.b16 %v3446
    %v3575 = vunpack.c.l.b16 %v3447
    %v3576 = vunpack.c.l.b16 %v3448
    %v3577 = vunpack.c.l.b16 %v3449
    %v3578 = vunpack.c.l.b16 %v3450
    %v3579 = vunpack.c.l.b16 %v3451
    %v3580 = vunpack.c.l.b16 %v3452
    %v3581 = vunpack.c.l.b16 %v3453
    %v3582 = vunpack.c.l.b16 %v3454
    %v3583 = vunpack.c.l.b16 %v3455
    %v3584 = vunpack.c.l.b16 %v3456
    %v3585 = vunpack.c.l.b16 %v3457
    %v3586 = vunpack.c.l.b16 %v3458
    %v3587 = vunpack.c.l.b16 %v3459
    %v3588 = vunpack.c.l.b16 %v3460
    %v3589 = vunpack.c.l.b16 %v3461
    %v3590 = vunpack.c.l.b16 %v3462
    %v3591 = vunpack.c.l.b16 %v3463
    %v3592 = vunpack.c.l.b16 %v3464
    %v3593 = vunpack.c.l.b16 %v3465
    %v3594 = vunpack.c.l.b16 %v3466
    %v3595 = vunpack.c.l.b16 %v3467
    %v3596 = vunpack.c.l.b16 %v3468
    %v3597 = vunpack.c.l.b16 %v3469
    %v3598 = vunpack.c.l.b16 %v3470
    %v3599 = vunpack.c.l.b16 %v3471
    %v3600 = vunpack.c.l.b16 %v3472
    %v3601 = vunpack.c.l.b16 %v3473
    %v3602 = vunpack.c.l.b16 %v3474
    %v3603 = vunpack.c.l.b16 %v3475
    %v3604 = vunpack.c.l.b16 %v3476
    %v3605 = vunpack.c.l.b16 %v3477
    %v3606 = vunpack.c.l.b16 %v3478
    %v3607 = vunpack.c.l.b16 %v3479
    %v3608 = vunpack.c.l.b16 %v3480
    %v3609 = vunpack.c.l.b16 %v3481
    %v3610 = vunpack.c.l.b16 %v3482
    %v3611 = vunpack.c.l.b16 %v3483
    %v3612 = vunpack.c.l.b16 %v3484
    %v3613 = vunpack.c.l.b16 %v3485
    %v3614 = vunpack.c.l.b16 %v3486
    %v3615 = vunpack.c.l.b16 %v3487
    %v3616 = vunpack.c.l.b16 %v3488
    %v3617 = vunpack.c.l.b16 %v3489
    %v3618 = vunpack.c.l.b16 %v3490
    %v3619 = vunpack.c.l.b16 %v3491
    %v3620 = vunpack.c.l.b16 %v3492
    %v3621 = vunpack.c.l.b16 %v3493
    %v3622 = vunpack.c.l.b16 %v3494
    %v3623 = vunpack.c.l.b16 %v3495
    %v3624 = vunpack.c.l.b16 %v3496
    %v3625 = vunpack.c.l.b16 %v3497
    %v3626 = vunpack.c.l.b16 %v3498
    %v3627 = vunpack.c.l.b16 %v3499
    %v3628 = vunpack.c.l.b16 %v3500
    %v3629 = vunpack.c.l.b16 %v3501
    %v3630 = vunpack.c.l.b16 %v3502
    %v3631 = vunpack.c.l.b16 %v3503
    %v3632 = vunpack.c.l.b16 %v3504
    %v3633 = vunpack.c.l.b16 %v3505
    %v3634 = vpack.c.b16 %v3571, %v3570
    %v3635 = vpack.c.b16 %v3573, %v3572
    %v3636 = vpack.c.b16 %v3575, %v3574
    %v3637 = vpack.c.b16 %v3577, %v3576
    %v3638 = vpack.c.b16 %v3579, %v3578
    %v3639 = vpack.c.b16 %v3581, %v3580
    %v3640 = vpack.c.b16 %v3583, %v3582
    %v3641 = vpack.c.b16 %v3585, %v3584
    %v3642 = vpack.c.b16 %v3587, %v3586
    %v3643 = vpack.c.b16 %v3589, %v3588
    %v3644 = vpack.c.b16 %v3591, %v3590
    %v3645 = vpack.c.b16 %v3593, %v3592
    %v3646 = vpack.c.b16 %v3595, %v3594
    %v3647 = vpack.c.b16 %v3597, %v3596
    %v3648 = vpack.c.b16 %v3599, %v3598
    %v3649 = vpack.c.b16 %v3601, %v3600
    %v3650 = vpack.c.b16 %v3603, %v3602
    %v3651 = vpack.c.b16 %v3605, %v3604
    %v3652 = vpack.c.b16 %v3607, %v3606
    %v3653 = vpack.c.b16 %v3609, %v3608
    %v3654 = vpack.c.b16 %v3611, %v3610
    %v3655 = vpack.c.b16 %v3613, %v3612
    %v3656 = vpack.c.b16 %v3615, %v3614
    %v3657 = vpack.c.b16 %v3617, %v3616
    %v3658 = vpack.c.b16 %v3619, %v3618
    %v3659 = vpack.c.b16 %v3621, %v3620
    %v3660 = vpack.c.b16 %v3623, %v3622
    %v3661 = vpack.c.b16 %v3625, %v3624
    %v3662 = vpack.c.b16 %v3627, %v3626
    %v3663 = vpack.c.b16 %v3629, %v3628
    %v3664 = vpack.c.b16 %v3631, %v3630
    %v3665 = vpack.c.b16 %v3633, %v3632
    %3698 = vmatprep.subr.bf16.mxu0 0
    %3699 = vmatpush1.bf16.msra.mxu0 %v3641
    %3700 = vmatprep.subr.bf16.mxu0 0
    %3701 = vmatpush1.bf16.msra.mxu0 %v3640
    %3702 = vmatprep.subr.bf16.mxu0 0
    %3703 = vmatpush1.bf16.msra.mxu0 %v3639
    %3704 = vmatprep.subr.bf16.mxu0 0
    %3705 = vmatpush1.bf16.msra.mxu0 %v3638
    %3706 = vmatprep.subr.bf16.mxu0 0
    %3707 = vmatpush1.bf16.msra.mxu0 %v3637
    %3708 = vmatprep.subr.bf16.mxu0 0
    %3709 = vmatpush1.bf16.msra.mxu0 %v3636
    %3710 = vmatprep.subr.bf16.mxu0 0
    %3711 = vmatpush1.bf16.msra.mxu0 %v3635
    %3712 = vmatprep.subr.bf16.mxu0 0
    %3713 = vmatpush1.bf16.msra.mxu0 %v3634
    %3714 = vmatprep.subr.bf16.mxu0 0
    %3715 = vmatpush2.bf16.msra.mxu0 %v3649
    %3716 = vmatprep.subr.bf16.mxu0 0
    %3717 = vmatpush2.bf16.msra.mxu0 %v3648
    %3718 = vmatprep.subr.bf16.mxu0 0
    %3719 = vmatpush2.bf16.msra.mxu0 %v3647
    %3720 = vmatprep.subr.bf16.mxu0 0
    %3721 = vmatpush2.bf16.msra.mxu0 %v3646
    %3722 = vmatprep.subr.bf16.mxu0 0
    %3723 = vmatpush2.bf16.msra.mxu0 %v3645
    %3724 = vmatprep.subr.bf16.mxu0 0
    %3725 = vmatpush2.bf16.msra.mxu0 %v3644
    %3726 = vmatprep.subr.bf16.mxu0 0
    %3727 = vmatpush2.bf16.msra.mxu0 %v3643
    %3728 = vmatprep.subr.bf16.mxu0 0
    %3729 = vmatpush2.bf16.msra.mxu0 %v3642
    %3730 = vmatprep.mubr.bf16.mxu0 %v3439
    %3731 = vmatmul.mubr.bf16.gmra.mxu0 %v3438
    %v3732 = vpop.f32.mrf.mxu0
    %v3733 = vadd.f32 0.0, %v3732
    %v3734 = vpop.f32.mrf.mxu0
    %v3735 = vpop.f32.mrf.mxu0
    %v3736 = vadd.f32 0.0, %v3735
    %v3737 = vpop.f32.mrf.mxu0
    %3738 = vdwg.mxu0
    %3739 = vmatprep.subr.bf16.mxu0 0
    %3740 = vmatpush1.bf16.msra.mxu0 %v3657
    %3741 = vmatprep.subr.bf16.mxu0 0
    %3742 = vmatpush1.bf16.msra.mxu0 %v3656
    %3743 = vmatprep.subr.bf16.mxu0 0
    %3744 = vmatpush1.bf16.msra.mxu0 %v3655
    %3745 = vmatprep.subr.bf16.mxu0 0
    %3746 = vmatpush1.bf16.msra.mxu0 %v3654
    %3747 = vmatprep.subr.bf16.mxu0 0
    %3748 = vmatpush1.bf16.msra.mxu0 %v3653
    %3749 = vmatprep.subr.bf16.mxu0 0
    %3750 = vmatpush1.bf16.msra.mxu0 %v3652
    %3751 = vmatprep.subr.bf16.mxu0 0
    %3752 = vmatpush1.bf16.msra.mxu0 %v3651
    %3753 = vmatprep.subr.bf16.mxu0 0
    %3754 = vmatpush1.bf16.msra.mxu0 %v3650
    %3755 = vmatprep.subr.bf16.mxu0 0
    %3756 = vmatpush2.bf16.msra.mxu0 %v3665
    %3757 = vmatprep.subr.bf16.mxu0 0
    %3758 = vmatpush2.bf16.msra.mxu0 %v3664
    %3759 = vmatprep.subr.bf16.mxu0 0
    %3760 = vmatpush2.bf16.msra.mxu0 %v3663
    %3761 = vmatprep.subr.bf16.mxu0 0
    %3762 = vmatpush2.bf16.msra.mxu0 %v3662
    %3763 = vmatprep.subr.bf16.mxu0 0
    %3764 = vmatpush2.bf16.msra.mxu0 %v3661
    %3765 = vmatprep.subr.bf16.mxu0 0
    %3766 = vmatpush2.bf16.msra.mxu0 %v3660
    %3767 = vmatprep.subr.bf16.mxu0 0
    %3768 = vmatpush2.bf16.msra.mxu0 %v3659
    %3769 = vmatprep.subr.bf16.mxu0 0
    %3770 = vmatpush2.bf16.msra.mxu0 %v3658
    %3771 = vmatprep.mubr.bf16.mxu0 %v3441
    %3772 = vmatmul.mubr.bf16.gmra.mxu0 %v3440
    %v3773 = vpop.f32.mrf.mxu0
    %v3774 = vadd.f32 %v3733, %v3773
    %v3775 = vpop.f32.mrf.mxu0
    %v3776 = vpop.f32.mrf.mxu0
    %v3777 = vadd.f32 %v3736, %v3776
    %v3778 = vpop.f32.mrf.mxu0
    %3779 = vdwg.mxu0
    %v3780 = vadd.f32 %v3272, %v3774
    %v3781 = vadd.f32 %v3273, %v3777
    %v3782 = vld [vmem:[%s13] sm:$0x1]
    %v3784 = vlaneseq
    %v3785 = vshrl.u32 %v3784, 7
    %v3786 = vsub.s32 0, %v3785
    %v3787 = vrot.slane %v3782, %v3786
    %v3789 = vadd.f32 %v3780, %v3787
    %v3790 = vadd.f32 %v3781, %v3787
    %v3791 = vadd.f32 %v1748, %v3789
    %v3792 = vadd.f32 %v1749, %v3790
    %v3793 = vld [vmem:[%s14] sm:$0x1]
    %v3794 = vld [vmem:[%s15] sm:$0x1]
    %v3795 = vsel %vm163, %v3791, 0.0
    %3796 = vadd.xlane.f32.xlu0 %v3795
    %v3797 = vpop.xlane.xlu0 %3796
    %v3798 = vsel %vm163, %v3792, 0.0
    %3799 = vadd.xlane.f32.xlu0 %v3798
    %v3800 = vpop.xlane.xlu0 %3799
    %v3801 = vmul.f32 %v3797, %v1713
    %v3802 = vmul.f32 %v3800, %v1713
    %v3803 = vsub.f32 %v3791, %v3801
    %v3804 = vsub.f32 %v3792, %v3802
    %v3805 = vmul.f32 %v3803, %v3803
    %v3806 = vmul.f32 %v3804, %v3804
    %v3807 = vsel %vm163, %v3805, 0.0
    %3808 = vadd.xlane.f32.xlu0 %v3807
    %v3809 = vpop.xlane.xlu0 %3808
    %v3810 = vsel %vm163, %v3806, 0.0
    %3811 = vadd.xlane.f32.xlu0 %v3810
    %v3812 = vpop.xlane.xlu0 %3811
    %v3813 = vmul.f32 %v3809, %v1713
    %v3814 = vmul.f32 %v3812, %v1713
    %v3815 = vadd.f32 %v3813, 1e-05
    %v3816 = vadd.f32 %v3814, 1e-05
    %v3817 = vrsqrt.pop %v3815
    %v3818 = vrsqrt.pop %v3816
    %v3819 = vmul.f32 %v3803, %v3817
    %v3820 = vmul.f32 %v3804, %v3818
    %v3822 = vlaneseq
    %v3823 = vshrl.u32 %v3822, 7
    %v3824 = vsub.s32 0, %v3823
    %v3825 = vrot.slane %v3793, %v3824
    %v3827 = vmul.f32 %v3819, %v3825
    %v3828 = vmul.f32 %v3820, %v3825
    %v3830 = vlaneseq
    %v3831 = vshrl.u32 %v3830, 7
    %v3832 = vsub.s32 0, %v3831
    %v3833 = vrot.slane %v3794, %v3832
    %v3835 = vadd.f32 %v3827, %v3833
    %v3836 = vadd.f32 %v3828, %v3833
    %s3837 = scalar_lea.vmem %s4, 32
    %v3838 = vld [vmem:[%s3837] sm:$0xff]
    %v3839 = vld [vmem:[%s3837 + $0x8] sm:$0xff]
    %v3840 = vld [vmem:[%s3837 + $0x10] sm:$0xff]
    %v3841 = vld [vmem:[%s3837 + $0x18] sm:$0xff]
    %s3842 = scalar_lea.vmem %s5, 1
    %v3843 = vld [vmem:[%s3842] sm:$0x1]
    %v3845 = vlaneseq
    %v3846 = vshrl.u32 %v3845, 7
    %v3847 = vsub.s32 0, %v3846
    %v3848 = vrot.slane %v3843, %v3847
    %v3851 = vsel %vm163, %v3835, 0
    %v3854 = vsel %vm163, %v3836, 0
    %3856 = vmatprep.subr.mxu0 0.0
    %3857 = vmatpush1.msra.mxu0 0.0
    %3858 = vmatprep.subr.mxu0 0.0
    %3859 = vmatpush1.msra.mxu0 0.0
    %3860 = vmatprep.subr.mxu0 0.0
    %3861 = vmatpush1.msra.mxu0 0.0
    %3862 = vmatprep.subr.mxu0 0.0
    %3863 = vmatpush1.msra.mxu0 0.0
    %3864 = vmatprep.subr.mxu0 0.0
    %3865 = vmatpush1.msra.mxu0 0.0
    %3866 = vmatprep.subr.mxu0 0.0
    %3867 = vmatpush1.msra.mxu0 0.0
    %3868 = vmatprep.subr.mxu0 0.0
    %3869 = vmatpush1.msra.mxu0 0.0
    %3870 = vmatprep.subr.mxu0 0.0
    %3871 = vmatpush1.msra.mxu0 0.0
    %3872 = vmatprep.subr.mxu0 0.0
    %3873 = vmatpush1.msra.mxu0 0.0
    %3874 = vmatprep.subr.mxu0 0.0
    %3875 = vmatpush1.msra.mxu0 0.0
    %3876 = vmatprep.subr.mxu0 0.0
    %3877 = vmatpush1.msra.mxu0 0.0
    %3878 = vmatprep.subr.mxu0 0.0
    %3879 = vmatpush1.msra.mxu0 0.0
    %3880 = vmatprep.subr.mxu0 0.0
    %3881 = vmatpush1.msra.mxu0 %v3841
    %3882 = vmatprep.subr.mxu0 0.0
    %3883 = vmatpush1.msra.mxu0 %v3840
    %3884 = vmatprep.subr.mxu0 0.0
    %3885 = vmatpush1.msra.mxu0 %v3839
    %3886 = vmatprep.subr.mxu0 0.0
    %3887 = vmatpush1.msra.mxu0 %v3838
    %3888 = vmatprep.subr.mxu0 0.0
    %3889 = vmatpush2.msra.mxu0 0.0
    %3890 = vmatprep.subr.mxu0 0.0
    %3891 = vmatpush2.msra.mxu0 0.0
    %3892 = vmatprep.subr.mxu0 0.0
    %3893 = vmatpush2.msra.mxu0 0.0
    %3894 = vmatprep.subr.mxu0 0.0
    %3895 = vmatpush2.msra.mxu0 0.0
    %3896 = vmatprep.subr.mxu0 0.0
    %3897 = vmatpush2.msra.mxu0 0.0
    %3898 = vmatprep.subr.mxu0 0.0
    %3899 = vmatpush2.msra.mxu0 0.0
    %3900 = vmatprep.subr.mxu0 0.0
    %3901 = vmatpush2.msra.mxu0 0.0
    %3902 = vmatprep.subr.mxu0 0.0
    %3903 = vmatpush2.msra.mxu0 0.0
    %3904 = vmatprep.subr.mxu0 0.0
    %3905 = vmatpush2.msra.mxu0 0.0
    %3906 = vmatprep.subr.mxu0 0.0
    %3907 = vmatpush2.msra.mxu0 0.0
    %3908 = vmatprep.subr.mxu0 0.0
    %3909 = vmatpush2.msra.mxu0 0.0
    %3910 = vmatprep.subr.mxu0 0.0
    %3911 = vmatpush2.msra.mxu0 0.0
    %3912 = vmatprep.subr.mxu0 0.0
    %3913 = vmatpush2.msra.mxu0 0.0
    %3914 = vmatprep.subr.mxu0 0.0
    %3915 = vmatpush2.msra.mxu0 0.0
    %3916 = vmatprep.subr.mxu0 0.0
    %3917 = vmatpush2.msra.mxu0 0.0
    %3918 = vmatprep.subr.mxu0 0.0
    %3919 = vmatpush2.msra.mxu0 0.0
    %3920 = vmatprep.mubr.f32.mxu0 0.0
    %3921 = vmatmul.mubr.f32.gmra.mxu0 %v3851
    %v3922 = vpop.f32.mrf.mxu0
    %v3923 = vadd.f32 %v3848, %v3922
    %v3924 = vpop.f32.mrf.mxu0
    %3925 = vmatprep.mubr.f32.mxu0 0.0
    %3926 = vmatmul.mubr.f32.gmra.mxu0 %v3854
    %v3927 = vpop.f32.mrf.mxu0
    %v3928 = vadd.f32 %v3848, %v3927
    %v3929 = vpop.f32.mrf.mxu0
    %3930 = vdwg.mxu0
    %v3931 = vmul.f32 %v3923, 0.35355338
    %v3932 = vmul.f32 %v3928, 0.35355338
    %3934 = vrot.lane.b32.xlu0 %v3923, 96
    %v3935 = vpop.permute.xlu0 %3934
    %v3937 = vsel %vm67, %v3931, 0
    %v3939 = vsel %vm67, %v3935, 0
    %3941 = vmatprep.subr.mxu0 0.0
    %3942 = vmatpush1.xpose.msra.mxu0 0.0
    %3943 = vmatprep.subr.mxu0 0.0
    %3944 = vmatpush1.xpose.msra.mxu0 0.0
    %3945 = vmatprep.subr.mxu0 0.0
    %3946 = vmatpush1.xpose.msra.mxu0 0.0
    %3947 = vmatprep.subr.mxu0 0.0
    %3948 = vmatpush1.xpose.msra.mxu0 0.0
    %3949 = vmatprep.subr.mxu0 0.0
    %3950 = vmatpush1.xpose.msra.mxu0 0.0
    %3951 = vmatprep.subr.mxu0 0.0
    %3952 = vmatpush1.xpose.msra.mxu0 0.0
    %3953 = vmatprep.subr.mxu0 0.0
    %3954 = vmatpush1.xpose.msra.mxu0 0.0
    %3955 = vmatprep.subr.mxu0 0.0
    %3956 = vmatpush1.xpose.msra.mxu0 0.0
    %3957 = vmatprep.subr.mxu0 0.0
    %3958 = vmatpush1.xpose.msra.mxu0 0.0
    %3959 = vmatprep.subr.mxu0 0.0
    %3960 = vmatpush1.xpose.msra.mxu0 0.0
    %3961 = vmatprep.subr.mxu0 0.0
    %3962 = vmatpush1.xpose.msra.mxu0 0.0
    %3963 = vmatprep.subr.mxu0 0.0
    %3964 = vmatpush1.xpose.msra.mxu0 0.0
    %3965 = vmatprep.subr.mxu0 0.0
    %3966 = vmatpush1.xpose.msra.mxu0 0.0
    %3967 = vmatprep.subr.mxu0 0.0
    %3968 = vmatpush1.xpose.msra.mxu0 0.0
    %3969 = vmatprep.subr.mxu0 0.0
    %3970 = vmatpush1.xpose.msra.mxu0 0.0
    %3971 = vmatprep.subr.mxu0 0.0
    %3972 = vmatpush1.xpose.msra.mxu0 %v3939
    %3973 = vmatprep.subr.mxu0 0.0
    %3974 = vmatpush2.xpose.msra.mxu0 0.0
    %3975 = vmatprep.subr.mxu0 0.0
    %3976 = vmatpush2.xpose.msra.mxu0 0.0
    %3977 = vmatprep.subr.mxu0 0.0
    %3978 = vmatpush2.xpose.msra.mxu0 0.0
    %3979 = vmatprep.subr.mxu0 0.0
    %3980 = vmatpush2.xpose.msra.mxu0 0.0
    %3981 = vmatprep.subr.mxu0 0.0
    %3982 = vmatpush2.xpose.msra.mxu0 0.0
    %3983 = vmatprep.subr.mxu0 0.0
    %3984 = vmatpush2.xpose.msra.mxu0 0.0
    %3985 = vmatprep.subr.mxu0 0.0
    %3986 = vmatpush2.xpose.msra.mxu0 0.0
    %3987 = vmatprep.subr.mxu0 0.0
    %3988 = vmatpush2.xpose.msra.mxu0 0.0
    %3989 = vmatprep.subr.mxu0 0.0
    %3990 = vmatpush2.xpose.msra.mxu0 0.0
    %3991 = vmatprep.subr.mxu0 0.0
    %3992 = vmatpush2.xpose.msra.mxu0 0.0
    %3993 = vmatprep.subr.mxu0 0.0
    %3994 = vmatpush2.xpose.msra.mxu0 0.0
    %3995 = vmatprep.subr.mxu0 0.0
    %3996 = vmatpush2.xpose.msra.mxu0 0.0
    %3997 = vmatprep.subr.mxu0 0.0
    %3998 = vmatpush2.xpose.msra.mxu0 0.0
    %3999 = vmatprep.subr.mxu0 0.0
    %4000 = vmatpush2.xpose.msra.mxu0 0.0
    %4001 = vmatprep.subr.mxu0 0.0
    %4002 = vmatpush2.xpose.msra.mxu0 0.0
    %4003 = vmatprep.subr.mxu0 0.0
    %4004 = vmatpush2.xpose.msra.mxu0 0.0
    %4005 = vmatprep.mubr.f32.mxu0 0.0
    %4006 = vmatmul.mubr.f32.gmra.mxu0 %v3937
    %v4007 = vpop.f32.mrf.mxu0
    %v4008 = vadd.f32 0.0, %v4007
    %v4009 = vpop.f32.mrf.mxu0
    %4010 = vdwg.mxu0
    %4012 = vrot.lane.b32.xlu0 %v3928, 96
    %v4013 = vpop.permute.xlu0 %4012
    %v4015 = vsel %vm67, %v3932, 0
    %v4017 = vsel %vm67, %v4013, 0
    %4019 = vmatprep.subr.mxu0 0.0
    %4020 = vmatpush1.xpose.msra.mxu0 0.0
    %4021 = vmatprep.subr.mxu0 0.0
    %4022 = vmatpush1.xpose.msra.mxu0 0.0
    %4023 = vmatprep.subr.mxu0 0.0
    %4024 = vmatpush1.xpose.msra.mxu0 0.0
    %4025 = vmatprep.subr.mxu0 0.0
    %4026 = vmatpush1.xpose.msra.mxu0 0.0
    %4027 = vmatprep.subr.mxu0 0.0
    %4028 = vmatpush1.xpose.msra.mxu0 0.0
    %4029 = vmatprep.subr.mxu0 0.0
    %4030 = vmatpush1.xpose.msra.mxu0 0.0
    %4031 = vmatprep.subr.mxu0 0.0
    %4032 = vmatpush1.xpose.msra.mxu0 0.0
    %4033 = vmatprep.subr.mxu0 0.0
    %4034 = vmatpush1.xpose.msra.mxu0 0.0
    %4035 = vmatprep.subr.mxu0 0.0
    %4036 = vmatpush1.xpose.msra.mxu0 0.0
    %4037 = vmatprep.subr.mxu0 0.0
    %4038 = vmatpush1.xpose.msra.mxu0 0.0
    %4039 = vmatprep.subr.mxu0 0.0
    %4040 = vmatpush1.xpose.msra.mxu0 0.0
    %4041 = vmatprep.subr.mxu0 0.0
    %4042 = vmatpush1.xpose.msra.mxu0 0.0
    %4043 = vmatprep.subr.mxu0 0.0
    %4044 = vmatpush1.xpose.msra.mxu0 0.0
    %4045 = vmatprep.subr.mxu0 0.0
    %4046 = vmatpush1.xpose.msra.mxu0 0.0
    %4047 = vmatprep.subr.mxu0 0.0
    %4048 = vmatpush1.xpose.msra.mxu0 0.0
    %4049 = vmatprep.subr.mxu0 0.0
    %4050 = vmatpush1.xpose.msra.mxu0 %v4017
    %4051 = vmatprep.subr.mxu0 0.0
    %4052 = vmatpush2.xpose.msra.mxu0 0.0
    %4053 = vmatprep.subr.mxu0 0.0
    %4054 = vmatpush2.xpose.msra.mxu0 0.0
    %4055 = vmatprep.subr.mxu0 0.0
    %4056 = vmatpush2.xpose.msra.mxu0 0.0
    %4057 = vmatprep.subr.mxu0 0.0
    %4058 = vmatpush2.xpose.msra.mxu0 0.0
    %4059 = vmatprep.subr.mxu0 0.0
    %4060 = vmatpush2.xpose.msra.mxu0 0.0
    %4061 = vmatprep.subr.mxu0 0.0
    %4062 = vmatpush2.xpose.msra.mxu0 0.0
    %4063 = vmatprep.subr.mxu0 0.0
    %4064 = vmatpush2.xpose.msra.mxu0 0.0
    %4065 = vmatprep.subr.mxu0 0.0
    %4066 = vmatpush2.xpose.msra.mxu0 0.0
    %4067 = vmatprep.subr.mxu0 0.0
    %4068 = vmatpush2.xpose.msra.mxu0 0.0
    %4069 = vmatprep.subr.mxu0 0.0
    %4070 = vmatpush2.xpose.msra.mxu0 0.0
    %4071 = vmatprep.subr.mxu0 0.0
    %4072 = vmatpush2.xpose.msra.mxu0 0.0
    %4073 = vmatprep.subr.mxu0 0.0
    %4074 = vmatpush2.xpose.msra.mxu0 0.0
    %4075 = vmatprep.subr.mxu0 0.0
    %4076 = vmatpush2.xpose.msra.mxu0 0.0
    %4077 = vmatprep.subr.mxu0 0.0
    %4078 = vmatpush2.xpose.msra.mxu0 0.0
    %4079 = vmatprep.subr.mxu0 0.0
    %4080 = vmatpush2.xpose.msra.mxu0 0.0
    %4081 = vmatprep.subr.mxu0 0.0
    %4082 = vmatpush2.xpose.msra.mxu0 0.0
    %4083 = vmatprep.mubr.f32.mxu0 0.0
    %4084 = vmatmul.mubr.f32.gmra.mxu0 %v4015
    %v4085 = vpop.f32.mrf.mxu0
    %v4086 = vadd.f32 0.0, %v4085
    %v4087 = vpop.f32.mrf.mxu0
    %4088 = vdwg.mxu0
    %v4089 = vsel %vm67, %v4008, -inf
    %4090 = vmax.xlane.f32.xlu0 %v4089
    %v4091 = vpop.xlane.xlu0 %4090
    %v4092 = vsel %vm67, %v4086, -inf
    %4093 = vmax.xlane.f32.xlu0 %v4092
    %v4094 = vpop.xlane.xlu0 %4093
    %v4095 = vsub.f32 %v4008, %v4091
    %v4096 = vsub.f32 %v4086, %v4094
    %v4097 = vmul.f32 %v4095, 1.442695
    %v4098 = vpow.pop %v4097
    %v4099 = vmul.f32 %v4096, 1.442695
    %v4100 = vpow.pop %v4099
    %v4101 = vsel %vm67, %v4098, 0.0
    %4102 = vadd.xlane.f32.xlu0 %v4101
    %v4103 = vpop.xlane.xlu0 %4102
    %v4104 = vsel %vm67, %v4100, 0.0
    %4105 = vadd.xlane.f32.xlu0 %v4104
    %v4106 = vpop.xlane.xlu0 %4105
    %v4107 = vrcp.pop %v4103
    %v4108 = vrcp.pop %v4106
    %v4109 = vmul.f32 %v4098, %v4107
    %v4110 = vmul.f32 %v4100, %v4108
    %v4111 = vadd.f32 %v4109, 0.0
    %v4112 = vadd.f32 %v4110, 0.0
    %4113 = vrot.lane.b32.xlu0 %v3923, 64
    %v4114 = vpop.permute.xlu0 %4113
    %v4117 = vsel %vm67, %v4109, 0
    %4119 = vmatprep.subr.mxu0 0.0
    %4120 = vmatpush1.msra.mxu0 0.0
    %4121 = vmatprep.subr.mxu0 0.0
    %4122 = vmatpush1.msra.mxu0 0.0
    %4123 = vmatprep.subr.mxu0 0.0
    %4124 = vmatpush1.msra.mxu0 0.0
    %4125 = vmatprep.subr.mxu0 0.0
    %4126 = vmatpush1.msra.mxu0 0.0
    %4127 = vmatprep.subr.mxu0 0.0
    %4128 = vmatpush1.msra.mxu0 0.0
    %4129 = vmatprep.subr.mxu0 0.0
    %4130 = vmatpush1.msra.mxu0 0.0
    %4131 = vmatprep.subr.mxu0 0.0
    %4132 = vmatpush1.msra.mxu0 0.0
    %4133 = vmatprep.subr.mxu0 0.0
    %4134 = vmatpush1.msra.mxu0 0.0
    %4135 = vmatprep.subr.mxu0 0.0
    %4136 = vmatpush1.msra.mxu0 0.0
    %4137 = vmatprep.subr.mxu0 0.0
    %4138 = vmatpush1.msra.mxu0 0.0
    %4139 = vmatprep.subr.mxu0 0.0
    %4140 = vmatpush1.msra.mxu0 0.0
    %4141 = vmatprep.subr.mxu0 0.0
    %4142 = vmatpush1.msra.mxu0 0.0
    %4143 = vmatprep.subr.mxu0 0.0
    %4144 = vmatpush1.msra.mxu0 0.0
    %4145 = vmatprep.subr.mxu0 0.0
    %4146 = vmatpush1.msra.mxu0 0.0
    %4147 = vmatprep.subr.mxu0 0.0
    %4148 = vmatpush1.msra.mxu0 0.0
    %4149 = vmatprep.subr.mxu0 0.0
    %4150 = vmatpush1.msra.mxu0 %v4114
    %4151 = vmatprep.subr.mxu0 0.0
    %4152 = vmatpush2.msra.mxu0 0.0
    %4153 = vmatprep.subr.mxu0 0.0
    %4154 = vmatpush2.msra.mxu0 0.0
    %4155 = vmatprep.subr.mxu0 0.0
    %4156 = vmatpush2.msra.mxu0 0.0
    %4157 = vmatprep.subr.mxu0 0.0
    %4158 = vmatpush2.msra.mxu0 0.0
    %4159 = vmatprep.subr.mxu0 0.0
    %4160 = vmatpush2.msra.mxu0 0.0
    %4161 = vmatprep.subr.mxu0 0.0
    %4162 = vmatpush2.msra.mxu0 0.0
    %4163 = vmatprep.subr.mxu0 0.0
    %4164 = vmatpush2.msra.mxu0 0.0
    %4165 = vmatprep.subr.mxu0 0.0
    %4166 = vmatpush2.msra.mxu0 0.0
    %4167 = vmatprep.subr.mxu0 0.0
    %4168 = vmatpush2.msra.mxu0 0.0
    %4169 = vmatprep.subr.mxu0 0.0
    %4170 = vmatpush2.msra.mxu0 0.0
    %4171 = vmatprep.subr.mxu0 0.0
    %4172 = vmatpush2.msra.mxu0 0.0
    %4173 = vmatprep.subr.mxu0 0.0
    %4174 = vmatpush2.msra.mxu0 0.0
    %4175 = vmatprep.subr.mxu0 0.0
    %4176 = vmatpush2.msra.mxu0 0.0
    %4177 = vmatprep.subr.mxu0 0.0
    %4178 = vmatpush2.msra.mxu0 0.0
    %4179 = vmatprep.subr.mxu0 0.0
    %4180 = vmatpush2.msra.mxu0 0.0
    %4181 = vmatprep.subr.mxu0 0.0
    %4182 = vmatpush2.msra.mxu0 0.0
    %4183 = vmatprep.mubr.f32.mxu0 0.0
    %4184 = vmatmul.mubr.f32.gmra.mxu0 %v4117
    %v4185 = vpop.f32.mrf.mxu0
    %v4186 = vadd.f32 0.0, %v4185
    %v4187 = vpop.f32.mrf.mxu0
    %4188 = vdwg.mxu0
    %4189 = vrot.lane.b32.xlu0 %v3928, 64
    %v4190 = vpop.permute.xlu0 %4189
    %v4193 = vsel %vm67, %v4110, 0
    %4195 = vmatprep.subr.mxu0 0.0
    %4196 = vmatpush1.msra.mxu0 0.0
    %4197 = vmatprep.subr.mxu0 0.0
    %4198 = vmatpush1.msra.mxu0 0.0
    %4199 = vmatprep.subr.mxu0 0.0
    %4200 = vmatpush1.msra.mxu0 0.0
    %4201 = vmatprep.subr.mxu0 0.0
    %4202 = vmatpush1.msra.mxu0 0.0
    %4203 = vmatprep.subr.mxu0 0.0
    %4204 = vmatpush1.msra.mxu0 0.0
    %4205 = vmatprep.subr.mxu0 0.0
    %4206 = vmatpush1.msra.mxu0 0.0
    %4207 = vmatprep.subr.mxu0 0.0
    %4208 = vmatpush1.msra.mxu0 0.0
    %4209 = vmatprep.subr.mxu0 0.0
    %4210 = vmatpush1.msra.mxu0 0.0
    %4211 = vmatprep.subr.mxu0 0.0
    %4212 = vmatpush1.msra.mxu0 0.0
    %4213 = vmatprep.subr.mxu0 0.0
    %4214 = vmatpush1.msra.mxu0 0.0
    %4215 = vmatprep.subr.mxu0 0.0
    %4216 = vmatpush1.msra.mxu0 0.0
    %4217 = vmatprep.subr.mxu0 0.0
    %4218 = vmatpush1.msra.mxu0 0.0
    %4219 = vmatprep.subr.mxu0 0.0
    %4220 = vmatpush1.msra.mxu0 0.0
    %4221 = vmatprep.subr.mxu0 0.0
    %4222 = vmatpush1.msra.mxu0 0.0
    %4223 = vmatprep.subr.mxu0 0.0
    %4224 = vmatpush1.msra.mxu0 0.0
    %4225 = vmatprep.subr.mxu0 0.0
    %4226 = vmatpush1.msra.mxu0 %v4190
    %4227 = vmatprep.subr.mxu0 0.0
    %4228 = vmatpush2.msra.mxu0 0.0
    %4229 = vmatprep.subr.mxu0 0.0
    %4230 = vmatpush2.msra.mxu0 0.0
    %4231 = vmatprep.subr.mxu0 0.0
    %4232 = vmatpush2.msra.mxu0 0.0
    %4233 = vmatprep.subr.mxu0 0.0
    %4234 = vmatpush2.msra.mxu0 0.0
    %4235 = vmatprep.subr.mxu0 0.0
    %4236 = vmatpush2.msra.mxu0 0.0
    %4237 = vmatprep.subr.mxu0 0.0
    %4238 = vmatpush2.msra.mxu0 0.0
    %4239 = vmatprep.subr.mxu0 0.0
    %4240 = vmatpush2.msra.mxu0 0.0
    %4241 = vmatprep.subr.mxu0 0.0
    %4242 = vmatpush2.msra.mxu0 0.0
    %4243 = vmatprep.subr.mxu0 0.0
    %4244 = vmatpush2.msra.mxu0 0.0
    %4245 = vmatprep.subr.mxu0 0.0
    %4246 = vmatpush2.msra.mxu0 0.0
    %4247 = vmatprep.subr.mxu0 0.0
    %4248 = vmatpush2.msra.mxu0 0.0
    %4249 = vmatprep.subr.mxu0 0.0
    %4250 = vmatpush2.msra.mxu0 0.0
    %4251 = vmatprep.subr.mxu0 0.0
    %4252 = vmatpush2.msra.mxu0 0.0
    %4253 = vmatprep.subr.mxu0 0.0
    %4254 = vmatpush2.msra.mxu0 0.0
    %4255 = vmatprep.subr.mxu0 0.0
    %4256 = vmatpush2.msra.mxu0 0.0
    %4257 = vmatprep.subr.mxu0 0.0
    %4258 = vmatpush2.msra.mxu0 0.0
    %4259 = vmatprep.mubr.f32.mxu0 0.0
    %4260 = vmatmul.mubr.f32.gmra.mxu0 %v4193
    %v4261 = vpop.f32.mrf.mxu0
    %v4262 = vadd.f32 0.0, %v4261
    %v4263 = vpop.f32.mrf.mxu0
    %4264 = vdwg.mxu0
    %4265 = vrot.lane.b32.xlu0 %v3931, 120
    %v4266 = vpop.permute.xlu0 %4265
    %4267 = vrot.lane.b32.xlu0 %v3923, 88
    %v4268 = vpop.permute.xlu0 %4267
    %v4269 = vsel %vm67, %v4266, 0
    %v4271 = vsel %vm67, %v4268, 0
    %4273 = vmatprep.subr.mxu0 0.0
    %4274 = vmatpush1.xpose.msra.mxu0 0.0
    %4275 = vmatprep.subr.mxu0 0.0
    %4276 = vmatpush1.xpose.msra.mxu0 0.0
    %4277 = vmatprep.subr.mxu0 0.0
    %4278 = vmatpush1.xpose.msra.mxu0 0.0
    %4279 = vmatprep.subr.mxu0 0.0
    %4280 = vmatpush1.xpose.msra.mxu0 0.0
    %4281 = vmatprep.subr.mxu0 0.0
    %4282 = vmatpush1.xpose.msra.mxu0 0.0
    %4283 = vmatprep.subr.mxu0 0.0
    %4284 = vmatpush1.xpose.msra.mxu0 0.0
    %4285 = vmatprep.subr.mxu0 0.0
    %4286 = vmatpush1.xpose.msra.mxu0 0.0
    %4287 = vmatprep.subr.mxu0 0.0
    %4288 = vmatpush1.xpose.msra.mxu0 0.0
    %4289 = vmatprep.subr.mxu0 0.0
    %4290 = vmatpush1.xpose.msra.mxu0 0.0
    %4291 = vmatprep.subr.mxu0 0.0
    %4292 = vmatpush1.xpose.msra.mxu0 0.0
    %4293 = vmatprep.subr.mxu0 0.0
    %4294 = vmatpush1.xpose.msra.mxu0 0.0
    %4295 = vmatprep.subr.mxu0 0.0
    %4296 = vmatpush1.xpose.msra.mxu0 0.0
    %4297 = vmatprep.subr.mxu0 0.0
    %4298 = vmatpush1.xpose.msra.mxu0 0.0
    %4299 = vmatprep.subr.mxu0 0.0
    %4300 = vmatpush1.xpose.msra.mxu0 0.0
    %4301 = vmatprep.subr.mxu0 0.0
    %4302 = vmatpush1.xpose.msra.mxu0 0.0
    %4303 = vmatprep.subr.mxu0 0.0
    %4304 = vmatpush1.xpose.msra.mxu0 %v4271
    %4305 = vmatprep.subr.mxu0 0.0
    %4306 = vmatpush2.xpose.msra.mxu0 0.0
    %4307 = vmatprep.subr.mxu0 0.0
    %4308 = vmatpush2.xpose.msra.mxu0 0.0
    %4309 = vmatprep.subr.mxu0 0.0
    %4310 = vmatpush2.xpose.msra.mxu0 0.0
    %4311 = vmatprep.subr.mxu0 0.0
    %4312 = vmatpush2.xpose.msra.mxu0 0.0
    %4313 = vmatprep.subr.mxu0 0.0
    %4314 = vmatpush2.xpose.msra.mxu0 0.0
    %4315 = vmatprep.subr.mxu0 0.0
    %4316 = vmatpush2.xpose.msra.mxu0 0.0
    %4317 = vmatprep.subr.mxu0 0.0
    %4318 = vmatpush2.xpose.msra.mxu0 0.0
    %4319 = vmatprep.subr.mxu0 0.0
    %4320 = vmatpush2.xpose.msra.mxu0 0.0
    %4321 = vmatprep.subr.mxu0 0.0
    %4322 = vmatpush2.xpose.msra.mxu0 0.0
    %4323 = vmatprep.subr.mxu0 0.0
    %4324 = vmatpush2.xpose.msra.mxu0 0.0
    %4325 = vmatprep.subr.mxu0 0.0
    %4326 = vmatpush2.xpose.msra.mxu0 0.0
    %4327 = vmatprep.subr.mxu0 0.0
    %4328 = vmatpush2.xpose.msra.mxu0 0.0
    %4329 = vmatprep.subr.mxu0 0.0
    %4330 = vmatpush2.xpose.msra.mxu0 0.0
    %4331 = vmatprep.subr.mxu0 0.0
    %4332 = vmatpush2.xpose.msra.mxu0 0.0
    %4333 = vmatprep.subr.mxu0 0.0
    %4334 = vmatpush2.xpose.msra.mxu0 0.0
    %4335 = vmatprep.subr.mxu0 0.0
    %4336 = vmatpush2.xpose.msra.mxu0 0.0
    %4337 = vmatprep.mubr.f32.mxu0 0.0
    %4338 = vmatmul.mubr.f32.gmra.mxu0 %v4269
    %v4339 = vpop.f32.mrf.mxu0
    %v4340 = vadd.f32 0.0, %v4339
    %v4341 = vpop.f32.mrf.mxu0
    %4342 = vdwg.mxu0
    %4343 = vrot.lane.b32.xlu0 %v3932, 120
    %v4344 = vpop.permute.xlu0 %4343
    %4345 = vrot.lane.b32.xlu0 %v3928, 88
    %v4346 = vpop.permute.xlu0 %4345
    %v4347 = vsel %vm67, %v4344, 0
    %v4349 = vsel %vm67, %v4346, 0
    %4351 = vmatprep.subr.mxu0 0.0
    %4352 = vmatpush1.xpose.msra.mxu0 0.0
    %4353 = vmatprep.subr.mxu0 0.0
    %4354 = vmatpush1.xpose.msra.mxu0 0.0
    %4355 = vmatprep.subr.mxu0 0.0
    %4356 = vmatpush1.xpose.msra.mxu0 0.0
    %4357 = vmatprep.subr.mxu0 0.0
    %4358 = vmatpush1.xpose.msra.mxu0 0.0
    %4359 = vmatprep.subr.mxu0 0.0
    %4360 = vmatpush1.xpose.msra.mxu0 0.0
    %4361 = vmatprep.subr.mxu0 0.0
    %4362 = vmatpush1.xpose.msra.mxu0 0.0
    %4363 = vmatprep.subr.mxu0 0.0
    %4364 = vmatpush1.xpose.msra.mxu0 0.0
    %4365 = vmatprep.subr.mxu0 0.0
    %4366 = vmatpush1.xpose.msra.mxu0 0.0
    %4367 = vmatprep.subr.mxu0 0.0
    %4368 = vmatpush1.xpose.msra.mxu0 0.0
    %4369 = vmatprep.subr.mxu0 0.0
    %4370 = vmatpush1.xpose.msra.mxu0 0.0
    %4371 = vmatprep.subr.mxu0 0.0
    %4372 = vmatpush1.xpose.msra.mxu0 0.0
    %4373 = vmatprep.subr.mxu0 0.0
    %4374 = vmatpush1.xpose.msra.mxu0 0.0
    %4375 = vmatprep.subr.mxu0 0.0
    %4376 = vmatpush1.xpose.msra.mxu0 0.0
    %4377 = vmatprep.subr.mxu0 0.0
    %4378 = vmatpush1.xpose.msra.mxu0 0.0
    %4379 = vmatprep.subr.mxu0 0.0
    %4380 = vmatpush1.xpose.msra.mxu0 0.0
    %4381 = vmatprep.subr.mxu0 0.0
    %4382 = vmatpush1.xpose.msra.mxu0 %v4349
    %4383 = vmatprep.subr.mxu0 0.0
    %4384 = vmatpush2.xpose.msra.mxu0 0.0
    %4385 = vmatprep.subr.mxu0 0.0
    %4386 = vmatpush2.xpose.msra.mxu0 0.0
    %4387 = vmatprep.subr.mxu0 0.0
    %4388 = vmatpush2.xpose.msra.mxu0 0.0
    %4389 = vmatprep.subr.mxu0 0.0
    %4390 = vmatpush2.xpose.msra.mxu0 0.0
    %4391 = vmatprep.subr.mxu0 0.0
    %4392 = vmatpush2.xpose.msra.mxu0 0.0
    %4393 = vmatprep.subr.mxu0 0.0
    %4394 = vmatpush2.xpose.msra.mxu0 0.0
    %4395 = vmatprep.subr.mxu0 0.0
    %4396 = vmatpush2.xpose.msra.mxu0 0.0
    %4397 = vmatprep.subr.mxu0 0.0
    %4398 = vmatpush2.xpose.msra.mxu0 0.0
    %4399 = vmatprep.subr.mxu0 0.0
    %4400 = vmatpush2.xpose.msra.mxu0 0.0
    %4401 = vmatprep.subr.mxu0 0.0
    %4402 = vmatpush2.xpose.msra.mxu0 0.0
    %4403 = vmatprep.subr.mxu0 0.0
    %4404 = vmatpush2.xpose.msra.mxu0 0.0
    %4405 = vmatprep.subr.mxu0 0.0
    %4406 = vmatpush2.xpose.msra.mxu0 0.0
    %4407 = vmatprep.subr.mxu0 0.0
    %4408 = vmatpush2.xpose.msra.mxu0 0.0
    %4409 = vmatprep.subr.mxu0 0.0
    %4410 = vmatpush2.xpose.msra.mxu0 0.0
    %4411 = vmatprep.subr.mxu0 0.0
    %4412 = vmatpush2.xpose.msra.mxu0 0.0
    %4413 = vmatprep.subr.mxu0 0.0
    %4414 = vmatpush2.xpose.msra.mxu0 0.0
    %4415 = vmatprep.mubr.f32.mxu0 0.0
    %4416 = vmatmul.mubr.f32.gmra.mxu0 %v4347
    %v4417 = vpop.f32.mrf.mxu0
    %v4418 = vadd.f32 0.0, %v4417
    %v4419 = vpop.f32.mrf.mxu0
    %4420 = vdwg.mxu0
    %v4421 = vsel %vm67, %v4340, -inf
    %4422 = vmax.xlane.f32.xlu0 %v4421
    %v4423 = vpop.xlane.xlu0 %4422
    %v4424 = vsel %vm67, %v4418, -inf
    %4425 = vmax.xlane.f32.xlu0 %v4424
    %v4426 = vpop.xlane.xlu0 %4425
    %v4427 = vsub.f32 %v4340, %v4423
    %v4428 = vsub.f32 %v4418, %v4426
    %v4429 = vmul.f32 %v4427, 1.442695
    %v4430 = vpow.pop %v4429
    %v4431 = vmul.f32 %v4428, 1.442695
    %v4432 = vpow.pop %v4431
    %v4433 = vsel %vm67, %v4430, 0.0
    %4434 = vadd.xlane.f32.xlu0 %v4433
    %v4435 = vpop.xlane.xlu0 %4434
    %v4436 = vsel %vm67, %v4432, 0.0
    %4437 = vadd.xlane.f32.xlu0 %v4436
    %v4438 = vpop.xlane.xlu0 %4437
    %v4439 = vrcp.pop %v4435
    %v4440 = vrcp.pop %v4438
    %v4441 = vmul.f32 %v4430, %v4439
    %v4442 = vmul.f32 %v4432, %v4440
    %v4443 = vadd.f32 %v4111, %v4441
    %v4444 = vadd.f32 %v4112, %v4442
    %4445 = vrot.lane.b32.xlu0 %v3923, 56
    %v4446 = vpop.permute.xlu0 %4445
    %v4449 = vsel %vm67, %v4441, 0
    %4451 = vmatprep.subr.mxu0 0.0
    %4452 = vmatpush1.msra.mxu0 0.0
    %4453 = vmatprep.subr.mxu0 0.0
    %4454 = vmatpush1.msra.mxu0 0.0
    %4455 = vmatprep.subr.mxu0 0.0
    %4456 = vmatpush1.msra.mxu0 0.0
    %4457 = vmatprep.subr.mxu0 0.0
    %4458 = vmatpush1.msra.mxu0 0.0
    %4459 = vmatprep.subr.mxu0 0.0
    %4460 = vmatpush1.msra.mxu0 0.0
    %4461 = vmatprep.subr.mxu0 0.0
    %4462 = vmatpush1.msra.mxu0 0.0
    %4463 = vmatprep.subr.mxu0 0.0
    %4464 = vmatpush1.msra.mxu0 0.0
    %4465 = vmatprep.subr.mxu0 0.0
    %4466 = vmatpush1.msra.mxu0 0.0
    %4467 = vmatprep.subr.mxu0 0.0
    %4468 = vmatpush1.msra.mxu0 0.0
    %4469 = vmatprep.subr.mxu0 0.0
    %4470 = vmatpush1.msra.mxu0 0.0
    %4471 = vmatprep.subr.mxu0 0.0
    %4472 = vmatpush1.msra.mxu0 0.0
    %4473 = vmatprep.subr.mxu0 0.0
    %4474 = vmatpush1.msra.mxu0 0.0
    %4475 = vmatprep.subr.mxu0 0.0
    %4476 = vmatpush1.msra.mxu0 0.0
    %4477 = vmatprep.subr.mxu0 0.0
    %4478 = vmatpush1.msra.mxu0 0.0
    %4479 = vmatprep.subr.mxu0 0.0
    %4480 = vmatpush1.msra.mxu0 0.0
    %4481 = vmatprep.subr.mxu0 0.0
    %4482 = vmatpush1.msra.mxu0 %v4446
    %4483 = vmatprep.subr.mxu0 0.0
    %4484 = vmatpush2.msra.mxu0 0.0
    %4485 = vmatprep.subr.mxu0 0.0
    %4486 = vmatpush2.msra.mxu0 0.0
    %4487 = vmatprep.subr.mxu0 0.0
    %4488 = vmatpush2.msra.mxu0 0.0
    %4489 = vmatprep.subr.mxu0 0.0
    %4490 = vmatpush2.msra.mxu0 0.0
    %4491 = vmatprep.subr.mxu0 0.0
    %4492 = vmatpush2.msra.mxu0 0.0
    %4493 = vmatprep.subr.mxu0 0.0
    %4494 = vmatpush2.msra.mxu0 0.0
    %4495 = vmatprep.subr.mxu0 0.0
    %4496 = vmatpush2.msra.mxu0 0.0
    %4497 = vmatprep.subr.mxu0 0.0
    %4498 = vmatpush2.msra.mxu0 0.0
    %4499 = vmatprep.subr.mxu0 0.0
    %4500 = vmatpush2.msra.mxu0 0.0
    %4501 = vmatprep.subr.mxu0 0.0
    %4502 = vmatpush2.msra.mxu0 0.0
    %4503 = vmatprep.subr.mxu0 0.0
    %4504 = vmatpush2.msra.mxu0 0.0
    %4505 = vmatprep.subr.mxu0 0.0
    %4506 = vmatpush2.msra.mxu0 0.0
    %4507 = vmatprep.subr.mxu0 0.0
    %4508 = vmatpush2.msra.mxu0 0.0
    %4509 = vmatprep.subr.mxu0 0.0
    %4510 = vmatpush2.msra.mxu0 0.0
    %4511 = vmatprep.subr.mxu0 0.0
    %4512 = vmatpush2.msra.mxu0 0.0
    %4513 = vmatprep.subr.mxu0 0.0
    %4514 = vmatpush2.msra.mxu0 0.0
    %4515 = vmatprep.mubr.f32.mxu0 0.0
    %4516 = vmatmul.mubr.f32.gmra.mxu0 %v4449
    %v4517 = vpop.f32.mrf.mxu0
    %v4518 = vadd.f32 0.0, %v4517
    %v4519 = vpop.f32.mrf.mxu0
    %4520 = vdwg.mxu0
    %4521 = vrot.lane.b32.xlu0 %v3928, 56
    %v4522 = vpop.permute.xlu0 %4521
    %v4525 = vsel %vm67, %v4442, 0
    %4527 = vmatprep.subr.mxu0 0.0
    %4528 = vmatpush1.msra.mxu0 0.0
    %4529 = vmatprep.subr.mxu0 0.0
    %4530 = vmatpush1.msra.mxu0 0.0
    %4531 = vmatprep.subr.mxu0 0.0
    %4532 = vmatpush1.msra.mxu0 0.0
    %4533 = vmatprep.subr.mxu0 0.0
    %4534 = vmatpush1.msra.mxu0 0.0
    %4535 = vmatprep.subr.mxu0 0.0
    %4536 = vmatpush1.msra.mxu0 0.0
    %4537 = vmatprep.subr.mxu0 0.0
    %4538 = vmatpush1.msra.mxu0 0.0
    %4539 = vmatprep.subr.mxu0 0.0
    %4540 = vmatpush1.msra.mxu0 0.0
    %4541 = vmatprep.subr.mxu0 0.0
    %4542 = vmatpush1.msra.mxu0 0.0
    %4543 = vmatprep.subr.mxu0 0.0
    %4544 = vmatpush1.msra.mxu0 0.0
    %4545 = vmatprep.subr.mxu0 0.0
    %4546 = vmatpush1.msra.mxu0 0.0
    %4547 = vmatprep.subr.mxu0 0.0
    %4548 = vmatpush1.msra.mxu0 0.0
    %4549 = vmatprep.subr.mxu0 0.0
    %4550 = vmatpush1.msra.mxu0 0.0
    %4551 = vmatprep.subr.mxu0 0.0
    %4552 = vmatpush1.msra.mxu0 0.0
    %4553 = vmatprep.subr.mxu0 0.0
    %4554 = vmatpush1.msra.mxu0 0.0
    %4555 = vmatprep.subr.mxu0 0.0
    %4556 = vmatpush1.msra.mxu0 0.0
    %4557 = vmatprep.subr.mxu0 0.0
    %4558 = vmatpush1.msra.mxu0 %v4522
    %4559 = vmatprep.subr.mxu0 0.0
    %4560 = vmatpush2.msra.mxu0 0.0
    %4561 = vmatprep.subr.mxu0 0.0
    %4562 = vmatpush2.msra.mxu0 0.0
    %4563 = vmatprep.subr.mxu0 0.0
    %4564 = vmatpush2.msra.mxu0 0.0
    %4565 = vmatprep.subr.mxu0 0.0
    %4566 = vmatpush2.msra.mxu0 0.0
    %4567 = vmatprep.subr.mxu0 0.0
    %4568 = vmatpush2.msra.mxu0 0.0
    %4569 = vmatprep.subr.mxu0 0.0
    %4570 = vmatpush2.msra.mxu0 0.0
    %4571 = vmatprep.subr.mxu0 0.0
    %4572 = vmatpush2.msra.mxu0 0.0
    %4573 = vmatprep.subr.mxu0 0.0
    %4574 = vmatpush2.msra.mxu0 0.0
    %4575 = vmatprep.subr.mxu0 0.0
    %4576 = vmatpush2.msra.mxu0 0.0
    %4577 = vmatprep.subr.mxu0 0.0
    %4578 = vmatpush2.msra.mxu0 0.0
    %4579 = vmatprep.subr.mxu0 0.0
    %4580 = vmatpush2.msra.mxu0 0.0
    %4581 = vmatprep.subr.mxu0 0.0
    %4582 = vmatpush2.msra.mxu0 0.0
    %4583 = vmatprep.subr.mxu0 0.0
    %4584 = vmatpush2.msra.mxu0 0.0
    %4585 = vmatprep.subr.mxu0 0.0
    %4586 = vmatpush2.msra.mxu0 0.0
    %4587 = vmatprep.subr.mxu0 0.0
    %4588 = vmatpush2.msra.mxu0 0.0
    %4589 = vmatprep.subr.mxu0 0.0
    %4590 = vmatpush2.msra.mxu0 0.0
    %4591 = vmatprep.mubr.f32.mxu0 0.0
    %4592 = vmatmul.mubr.f32.gmra.mxu0 %v4525
    %v4593 = vpop.f32.mrf.mxu0
    %v4594 = vadd.f32 0.0, %v4593
    %v4595 = vpop.f32.mrf.mxu0
    %4596 = vdwg.mxu0
    %4597 = vrot.lane.b32.xlu0 %v3931, 112
    %v4598 = vpop.permute.xlu0 %4597
    %4599 = vrot.lane.b32.xlu0 %v3923, 80
    %v4600 = vpop.permute.xlu0 %4599
    %v4601 = vsel %vm67, %v4598, 0
    %v4603 = vsel %vm67, %v4600, 0
    %4605 = vmatprep.subr.mxu0 0.0
    %4606 = vmatpush1.xpose.msra.mxu0 0.0
    %4607 = vmatprep.subr.mxu0 0.0
    %4608 = vmatpush1.xpose.msra.mxu0 0.0
    %4609 = vmatprep.subr.mxu0 0.0
    %4610 = vmatpush1.xpose.msra.mxu0 0.0
    %4611 = vmatprep.subr.mxu0 0.0
    %4612 = vmatpush1.xpose.msra.mxu0 0.0
    %4613 = vmatprep.subr.mxu0 0.0
    %4614 = vmatpush1.xpose.msra.mxu0 0.0
    %4615 = vmatprep.subr.mxu0 0.0
    %4616 = vmatpush1.xpose.msra.mxu0 0.0
    %4617 = vmatprep.subr.mxu0 0.0
    %4618 = vmatpush1.xpose.msra.mxu0 0.0
    %4619 = vmatprep.subr.mxu0 0.0
    %4620 = vmatpush1.xpose.msra.mxu0 0.0
    %4621 = vmatprep.subr.mxu0 0.0
    %4622 = vmatpush1.xpose.msra.mxu0 0.0
    %4623 = vmatprep.subr.mxu0 0.0
    %4624 = vmatpush1.xpose.msra.mxu0 0.0
    %4625 = vmatprep.subr.mxu0 0.0
    %4626 = vmatpush1.xpose.msra.mxu0 0.0
    %4627 = vmatprep.subr.mxu0 0.0
    %4628 = vmatpush1.xpose.msra.mxu0 0.0
    %4629 = vmatprep.subr.mxu0 0.0
    %4630 = vmatpush1.xpose.msra.mxu0 0.0
    %4631 = vmatprep.subr.mxu0 0.0
    %4632 = vmatpush1.xpose.msra.mxu0 0.0
    %4633 = vmatprep.subr.mxu0 0.0
    %4634 = vmatpush1.xpose.msra.mxu0 0.0
    %4635 = vmatprep.subr.mxu0 0.0
    %4636 = vmatpush1.xpose.msra.mxu0 %v4603
    %4637 = vmatprep.subr.mxu0 0.0
    %4638 = vmatpush2.xpose.msra.mxu0 0.0
    %4639 = vmatprep.subr.mxu0 0.0
    %4640 = vmatpush2.xpose.msra.mxu0 0.0
    %4641 = vmatprep.subr.mxu0 0.0
    %4642 = vmatpush2.xpose.msra.mxu0 0.0
    %4643 = vmatprep.subr.mxu0 0.0
    %4644 = vmatpush2.xpose.msra.mxu0 0.0
    %4645 = vmatprep.subr.mxu0 0.0
    %4646 = vmatpush2.xpose.msra.mxu0 0.0
    %4647 = vmatprep.subr.mxu0 0.0
    %4648 = vmatpush2.xpose.msra.mxu0 0.0
    %4649 = vmatprep.subr.mxu0 0.0
    %4650 = vmatpush2.xpose.msra.mxu0 0.0
    %4651 = vmatprep.subr.mxu0 0.0
    %4652 = vmatpush2.xpose.msra.mxu0 0.0
    %4653 = vmatprep.subr.mxu0 0.0
    %4654 = vmatpush2.xpose.msra.mxu0 0.0
    %4655 = vmatprep.subr.mxu0 0.0
    %4656 = vmatpush2.xpose.msra.mxu0 0.0
    %4657 = vmatprep.subr.mxu0 0.0
    %4658 = vmatpush2.xpose.msra.mxu0 0.0
    %4659 = vmatprep.subr.mxu0 0.0
    %4660 = vmatpush2.xpose.msra.mxu0 0.0
    %4661 = vmatprep.subr.mxu0 0.0
    %4662 = vmatpush2.xpose.msra.mxu0 0.0
    %4663 = vmatprep.subr.mxu0 0.0
    %4664 = vmatpush2.xpose.msra.mxu0 0.0
    %4665 = vmatprep.subr.mxu0 0.0
    %4666 = vmatpush2.xpose.msra.mxu0 0.0
    %4667 = vmatprep.subr.mxu0 0.0
    %4668 = vmatpush2.xpose.msra.mxu0 0.0
    %4669 = vmatprep.mubr.f32.mxu0 0.0
    %4670 = vmatmul.mubr.f32.gmra.mxu0 %v4601
    %v4671 = vpop.f32.mrf.mxu0
    %v4672 = vadd.f32 0.0, %v4671
    %v4673 = vpop.f32.mrf.mxu0
    %4674 = vdwg.mxu0
    %4675 = vrot.lane.b32.xlu0 %v3932, 112
    %v4676 = vpop.permute.xlu0 %4675
    %4677 = vrot.lane.b32.xlu0 %v3928, 80
    %v4678 = vpop.permute.xlu0 %4677
    %v4679 = vsel %vm67, %v4676, 0
    %v4681 = vsel %vm67, %v4678, 0
    %4683 = vmatprep.subr.mxu0 0.0
    %4684 = vmatpush1.xpose.msra.mxu0 0.0
    %4685 = vmatprep.subr.mxu0 0.0
    %4686 = vmatpush1.xpose.msra.mxu0 0.0
    %4687 = vmatprep.subr.mxu0 0.0
    %4688 = vmatpush1.xpose.msra.mxu0 0.0
    %4689 = vmatprep.subr.mxu0 0.0
    %4690 = vmatpush1.xpose.msra.mxu0 0.0
    %4691 = vmatprep.subr.mxu0 0.0
    %4692 = vmatpush1.xpose.msra.mxu0 0.0
    %4693 = vmatprep.subr.mxu0 0.0
    %4694 = vmatpush1.xpose.msra.mxu0 0.0
    %4695 = vmatprep.subr.mxu0 0.0
    %4696 = vmatpush1.xpose.msra.mxu0 0.0
    %4697 = vmatprep.subr.mxu0 0.0
    %4698 = vmatpush1.xpose.msra.mxu0 0.0
    %4699 = vmatprep.subr.mxu0 0.0
    %4700 = vmatpush1.xpose.msra.mxu0 0.0
    %4701 = vmatprep.subr.mxu0 0.0
    %4702 = vmatpush1.xpose.msra.mxu0 0.0
    %4703 = vmatprep.subr.mxu0 0.0
    %4704 = vmatpush1.xpose.msra.mxu0 0.0
    %4705 = vmatprep.subr.mxu0 0.0
    %4706 = vmatpush1.xpose.msra.mxu0 0.0
    %4707 = vmatprep.subr.mxu0 0.0
    %4708 = vmatpush1.xpose.msra.mxu0 0.0
    %4709 = vmatprep.subr.mxu0 0.0
    %4710 = vmatpush1.xpose.msra.mxu0 0.0
    %4711 = vmatprep.subr.mxu0 0.0
    %4712 = vmatpush1.xpose.msra.mxu0 0.0
    %4713 = vmatprep.subr.mxu0 0.0
    %4714 = vmatpush1.xpose.msra.mxu0 %v4681
    %4715 = vmatprep.subr.mxu0 0.0
    %4716 = vmatpush2.xpose.msra.mxu0 0.0
    %4717 = vmatprep.subr.mxu0 0.0
    %4718 = vmatpush2.xpose.msra.mxu0 0.0
    %4719 = vmatprep.subr.mxu0 0.0
    %4720 = vmatpush2.xpose.msra.mxu0 0.0
    %4721 = vmatprep.subr.mxu0 0.0
    %4722 = vmatpush2.xpose.msra.mxu0 0.0
    %4723 = vmatprep.subr.mxu0 0.0
    %4724 = vmatpush2.xpose.msra.mxu0 0.0
    %4725 = vmatprep.subr.mxu0 0.0
    %4726 = vmatpush2.xpose.msra.mxu0 0.0
    %4727 = vmatprep.subr.mxu0 0.0
    %4728 = vmatpush2.xpose.msra.mxu0 0.0
    %4729 = vmatprep.subr.mxu0 0.0
    %4730 = vmatpush2.xpose.msra.mxu0 0.0
    %4731 = vmatprep.subr.mxu0 0.0
    %4732 = vmatpush2.xpose.msra.mxu0 0.0
    %4733 = vmatprep.subr.mxu0 0.0
    %4734 = vmatpush2.xpose.msra.mxu0 0.0
    %4735 = vmatprep.subr.mxu0 0.0
    %4736 = vmatpush2.xpose.msra.mxu0 0.0
    %4737 = vmatprep.subr.mxu0 0.0
    %4738 = vmatpush2.xpose.msra.mxu0 0.0
    %4739 = vmatprep.subr.mxu0 0.0
    %4740 = vmatpush2.xpose.msra.mxu0 0.0
    %4741 = vmatprep.subr.mxu0 0.0
    %4742 = vmatpush2.xpose.msra.mxu0 0.0
    %4743 = vmatprep.subr.mxu0 0.0
    %4744 = vmatpush2.xpose.msra.mxu0 0.0
    %4745 = vmatprep.subr.mxu0 0.0
    %4746 = vmatpush2.xpose.msra.mxu0 0.0
    %4747 = vmatprep.mubr.f32.mxu0 0.0
    %4748 = vmatmul.mubr.f32.gmra.mxu0 %v4679
    %v4749 = vpop.f32.mrf.mxu0
    %v4750 = vadd.f32 0.0, %v4749
    %v4751 = vpop.f32.mrf.mxu0
    %4752 = vdwg.mxu0
    %v4753 = vsel %vm67, %v4672, -inf
    %4754 = vmax.xlane.f32.xlu0 %v4753
    %v4755 = vpop.xlane.xlu0 %4754
    %v4756 = vsel %vm67, %v4750, -inf
    %4757 = vmax.xlane.f32.xlu0 %v4756
    %v4758 = vpop.xlane.xlu0 %4757
    %v4759 = vsub.f32 %v4672, %v4755
    %v4760 = vsub.f32 %v4750, %v4758
    %v4761 = vmul.f32 %v4759, 1.442695
    %v4762 = vpow.pop %v4761
    %v4763 = vmul.f32 %v4760, 1.442695
    %v4764 = vpow.pop %v4763
    %v4765 = vsel %vm67, %v4762, 0.0
    %4766 = vadd.xlane.f32.xlu0 %v4765
    %v4767 = vpop.xlane.xlu0 %4766
    %v4768 = vsel %vm67, %v4764, 0.0
    %4769 = vadd.xlane.f32.xlu0 %v4768
    %v4770 = vpop.xlane.xlu0 %4769
    %v4771 = vrcp.pop %v4767
    %v4772 = vrcp.pop %v4770
    %v4773 = vmul.f32 %v4762, %v4771
    %v4774 = vmul.f32 %v4764, %v4772
    %v4775 = vadd.f32 %v4443, %v4773
    %v4776 = vadd.f32 %v4444, %v4774
    %4777 = vrot.lane.b32.xlu0 %v3923, 48
    %v4778 = vpop.permute.xlu0 %4777
    %v4781 = vsel %vm67, %v4773, 0
    %4783 = vmatprep.subr.mxu0 0.0
    %4784 = vmatpush1.msra.mxu0 0.0
    %4785 = vmatprep.subr.mxu0 0.0
    %4786 = vmatpush1.msra.mxu0 0.0
    %4787 = vmatprep.subr.mxu0 0.0
    %4788 = vmatpush1.msra.mxu0 0.0
    %4789 = vmatprep.subr.mxu0 0.0
    %4790 = vmatpush1.msra.mxu0 0.0
    %4791 = vmatprep.subr.mxu0 0.0
    %4792 = vmatpush1.msra.mxu0 0.0
    %4793 = vmatprep.subr.mxu0 0.0
    %4794 = vmatpush1.msra.mxu0 0.0
    %4795 = vmatprep.subr.mxu0 0.0
    %4796 = vmatpush1.msra.mxu0 0.0
    %4797 = vmatprep.subr.mxu0 0.0
    %4798 = vmatpush1.msra.mxu0 0.0
    %4799 = vmatprep.subr.mxu0 0.0
    %4800 = vmatpush1.msra.mxu0 0.0
    %4801 = vmatprep.subr.mxu0 0.0
    %4802 = vmatpush1.msra.mxu0 0.0
    %4803 = vmatprep.subr.mxu0 0.0
    %4804 = vmatpush1.msra.mxu0 0.0
    %4805 = vmatprep.subr.mxu0 0.0
    %4806 = vmatpush1.msra.mxu0 0.0
    %4807 = vmatprep.subr.mxu0 0.0
    %4808 = vmatpush1.msra.mxu0 0.0
    %4809 = vmatprep.subr.mxu0 0.0
    %4810 = vmatpush1.msra.mxu0 0.0
    %4811 = vmatprep.subr.mxu0 0.0
    %4812 = vmatpush1.msra.mxu0 0.0
    %4813 = vmatprep.subr.mxu0 0.0
    %4814 = vmatpush1.msra.mxu0 %v4778
    %4815 = vmatprep.subr.mxu0 0.0
    %4816 = vmatpush2.msra.mxu0 0.0
    %4817 = vmatprep.subr.mxu0 0.0
    %4818 = vmatpush2.msra.mxu0 0.0
    %4819 = vmatprep.subr.mxu0 0.0
    %4820 = vmatpush2.msra.mxu0 0.0
    %4821 = vmatprep.subr.mxu0 0.0
    %4822 = vmatpush2.msra.mxu0 0.0
    %4823 = vmatprep.subr.mxu0 0.0
    %4824 = vmatpush2.msra.mxu0 0.0
    %4825 = vmatprep.subr.mxu0 0.0
    %4826 = vmatpush2.msra.mxu0 0.0
    %4827 = vmatprep.subr.mxu0 0.0
    %4828 = vmatpush2.msra.mxu0 0.0
    %4829 = vmatprep.subr.mxu0 0.0
    %4830 = vmatpush2.msra.mxu0 0.0
    %4831 = vmatprep.subr.mxu0 0.0
    %4832 = vmatpush2.msra.mxu0 0.0
    %4833 = vmatprep.subr.mxu0 0.0
    %4834 = vmatpush2.msra.mxu0 0.0
    %4835 = vmatprep.subr.mxu0 0.0
    %4836 = vmatpush2.msra.mxu0 0.0
    %4837 = vmatprep.subr.mxu0 0.0
    %4838 = vmatpush2.msra.mxu0 0.0
    %4839 = vmatprep.subr.mxu0 0.0
    %4840 = vmatpush2.msra.mxu0 0.0
    %4841 = vmatprep.subr.mxu0 0.0
    %4842 = vmatpush2.msra.mxu0 0.0
    %4843 = vmatprep.subr.mxu0 0.0
    %4844 = vmatpush2.msra.mxu0 0.0
    %4845 = vmatprep.subr.mxu0 0.0
    %4846 = vmatpush2.msra.mxu0 0.0
    %4847 = vmatprep.mubr.f32.mxu0 0.0
    %4848 = vmatmul.mubr.f32.gmra.mxu0 %v4781
    %v4849 = vpop.f32.mrf.mxu0
    %v4850 = vadd.f32 0.0, %v4849
    %v4851 = vpop.f32.mrf.mxu0
    %4852 = vdwg.mxu0
    %4853 = vrot.lane.b32.xlu0 %v3928, 48
    %v4854 = vpop.permute.xlu0 %4853
    %v4857 = vsel %vm67, %v4774, 0
    %4859 = vmatprep.subr.mxu0 0.0
    %4860 = vmatpush1.msra.mxu0 0.0
    %4861 = vmatprep.subr.mxu0 0.0
    %4862 = vmatpush1.msra.mxu0 0.0
    %4863 = vmatprep.subr.mxu0 0.0
    %4864 = vmatpush1.msra.mxu0 0.0
    %4865 = vmatprep.subr.mxu0 0.0
    %4866 = vmatpush1.msra.mxu0 0.0
    %4867 = vmatprep.subr.mxu0 0.0
    %4868 = vmatpush1.msra.mxu0 0.0
    %4869 = vmatprep.subr.mxu0 0.0
    %4870 = vmatpush1.msra.mxu0 0.0
    %4871 = vmatprep.subr.mxu0 0.0
    %4872 = vmatpush1.msra.mxu0 0.0
    %4873 = vmatprep.subr.mxu0 0.0
    %4874 = vmatpush1.msra.mxu0 0.0
    %4875 = vmatprep.subr.mxu0 0.0
    %4876 = vmatpush1.msra.mxu0 0.0
    %4877 = vmatprep.subr.mxu0 0.0
    %4878 = vmatpush1.msra.mxu0 0.0
    %4879 = vmatprep.subr.mxu0 0.0
    %4880 = vmatpush1.msra.mxu0 0.0
    %4881 = vmatprep.subr.mxu0 0.0
    %4882 = vmatpush1.msra.mxu0 0.0
    %4883 = vmatprep.subr.mxu0 0.0
    %4884 = vmatpush1.msra.mxu0 0.0
    %4885 = vmatprep.subr.mxu0 0.0
    %4886 = vmatpush1.msra.mxu0 0.0
    %4887 = vmatprep.subr.mxu0 0.0
    %4888 = vmatpush1.msra.mxu0 0.0
    %4889 = vmatprep.subr.mxu0 0.0
    %4890 = vmatpush1.msra.mxu0 %v4854
    %4891 = vmatprep.subr.mxu0 0.0
    %4892 = vmatpush2.msra.mxu0 0.0
    %4893 = vmatprep.subr.mxu0 0.0
    %4894 = vmatpush2.msra.mxu0 0.0
    %4895 = vmatprep.subr.mxu0 0.0
    %4896 = vmatpush2.msra.mxu0 0.0
    %4897 = vmatprep.subr.mxu0 0.0
    %4898 = vmatpush2.msra.mxu0 0.0
    %4899 = vmatprep.subr.mxu0 0.0
    %4900 = vmatpush2.msra.mxu0 0.0
    %4901 = vmatprep.subr.mxu0 0.0
    %4902 = vmatpush2.msra.mxu0 0.0
    %4903 = vmatprep.subr.mxu0 0.0
    %4904 = vmatpush2.msra.mxu0 0.0
    %4905 = vmatprep.subr.mxu0 0.0
    %4906 = vmatpush2.msra.mxu0 0.0
    %4907 = vmatprep.subr.mxu0 0.0
    %4908 = vmatpush2.msra.mxu0 0.0
    %4909 = vmatprep.subr.mxu0 0.0
    %4910 = vmatpush2.msra.mxu0 0.0
    %4911 = vmatprep.subr.mxu0 0.0
    %4912 = vmatpush2.msra.mxu0 0.0
    %4913 = vmatprep.subr.mxu0 0.0
    %4914 = vmatpush2.msra.mxu0 0.0
    %4915 = vmatprep.subr.mxu0 0.0
    %4916 = vmatpush2.msra.mxu0 0.0
    %4917 = vmatprep.subr.mxu0 0.0
    %4918 = vmatpush2.msra.mxu0 0.0
    %4919 = vmatprep.subr.mxu0 0.0
    %4920 = vmatpush2.msra.mxu0 0.0
    %4921 = vmatprep.subr.mxu0 0.0
    %4922 = vmatpush2.msra.mxu0 0.0
    %4923 = vmatprep.mubr.f32.mxu0 0.0
    %4924 = vmatmul.mubr.f32.gmra.mxu0 %v4857
    %v4925 = vpop.f32.mrf.mxu0
    %v4926 = vadd.f32 0.0, %v4925
    %v4927 = vpop.f32.mrf.mxu0
    %4928 = vdwg.mxu0
    %4929 = vrot.lane.b32.xlu0 %v3931, 104
    %v4930 = vpop.permute.xlu0 %4929
    %4931 = vrot.lane.b32.xlu0 %v3923, 72
    %v4932 = vpop.permute.xlu0 %4931
    %v4933 = vsel %vm67, %v4930, 0
    %v4935 = vsel %vm67, %v4932, 0
    %4937 = vmatprep.subr.mxu0 0.0
    %4938 = vmatpush1.xpose.msra.mxu0 0.0
    %4939 = vmatprep.subr.mxu0 0.0
    %4940 = vmatpush1.xpose.msra.mxu0 0.0
    %4941 = vmatprep.subr.mxu0 0.0
    %4942 = vmatpush1.xpose.msra.mxu0 0.0
    %4943 = vmatprep.subr.mxu0 0.0
    %4944 = vmatpush1.xpose.msra.mxu0 0.0
    %4945 = vmatprep.subr.mxu0 0.0
    %4946 = vmatpush1.xpose.msra.mxu0 0.0
    %4947 = vmatprep.subr.mxu0 0.0
    %4948 = vmatpush1.xpose.msra.mxu0 0.0
    %4949 = vmatprep.subr.mxu0 0.0
    %4950 = vmatpush1.xpose.msra.mxu0 0.0
    %4951 = vmatprep.subr.mxu0 0.0
    %4952 = vmatpush1.xpose.msra.mxu0 0.0
    %4953 = vmatprep.subr.mxu0 0.0
    %4954 = vmatpush1.xpose.msra.mxu0 0.0
    %4955 = vmatprep.subr.mxu0 0.0
    %4956 = vmatpush1.xpose.msra.mxu0 0.0
    %4957 = vmatprep.subr.mxu0 0.0
    %4958 = vmatpush1.xpose.msra.mxu0 0.0
    %4959 = vmatprep.subr.mxu0 0.0
    %4960 = vmatpush1.xpose.msra.mxu0 0.0
    %4961 = vmatprep.subr.mxu0 0.0
    %4962 = vmatpush1.xpose.msra.mxu0 0.0
    %4963 = vmatprep.subr.mxu0 0.0
    %4964 = vmatpush1.xpose.msra.mxu0 0.0
    %4965 = vmatprep.subr.mxu0 0.0
    %4966 = vmatpush1.xpose.msra.mxu0 0.0
    %4967 = vmatprep.subr.mxu0 0.0
    %4968 = vmatpush1.xpose.msra.mxu0 %v4935
    %4969 = vmatprep.subr.mxu0 0.0
    %4970 = vmatpush2.xpose.msra.mxu0 0.0
    %4971 = vmatprep.subr.mxu0 0.0
    %4972 = vmatpush2.xpose.msra.mxu0 0.0
    %4973 = vmatprep.subr.mxu0 0.0
    %4974 = vmatpush2.xpose.msra.mxu0 0.0
    %4975 = vmatprep.subr.mxu0 0.0
    %4976 = vmatpush2.xpose.msra.mxu0 0.0
    %4977 = vmatprep.subr.mxu0 0.0
    %4978 = vmatpush2.xpose.msra.mxu0 0.0
    %4979 = vmatprep.subr.mxu0 0.0
    %4980 = vmatpush2.xpose.msra.mxu0 0.0
    %4981 = vmatprep.subr.mxu0 0.0
    %4982 = vmatpush2.xpose.msra.mxu0 0.0
    %4983 = vmatprep.subr.mxu0 0.0
    %4984 = vmatpush2.xpose.msra.mxu0 0.0
    %4985 = vmatprep.subr.mxu0 0.0
    %4986 = vmatpush2.xpose.msra.mxu0 0.0
    %4987 = vmatprep.subr.mxu0 0.0
    %4988 = vmatpush2.xpose.msra.mxu0 0.0
    %4989 = vmatprep.subr.mxu0 0.0
    %4990 = vmatpush2.xpose.msra.mxu0 0.0
    %4991 = vmatprep.subr.mxu0 0.0
    %4992 = vmatpush2.xpose.msra.mxu0 0.0
    %4993 = vmatprep.subr.mxu0 0.0
    %4994 = vmatpush2.xpose.msra.mxu0 0.0
    %4995 = vmatprep.subr.mxu0 0.0
    %4996 = vmatpush2.xpose.msra.mxu0 0.0
    %4997 = vmatprep.subr.mxu0 0.0
    %4998 = vmatpush2.xpose.msra.mxu0 0.0
    %4999 = vmatprep.subr.mxu0 0.0
    %5000 = vmatpush2.xpose.msra.mxu0 0.0
    %5001 = vmatprep.mubr.f32.mxu0 0.0
    %5002 = vmatmul.mubr.f32.gmra.mxu0 %v4933
    %v5003 = vpop.f32.mrf.mxu0
    %v5004 = vadd.f32 0.0, %v5003
    %v5005 = vpop.f32.mrf.mxu0
    %5006 = vdwg.mxu0
    %5007 = vrot.lane.b32.xlu0 %v3932, 104
    %v5008 = vpop.permute.xlu0 %5007
    %5009 = vrot.lane.b32.xlu0 %v3928, 72
    %v5010 = vpop.permute.xlu0 %5009
    %v5011 = vsel %vm67, %v5008, 0
    %v5013 = vsel %vm67, %v5010, 0
    %5015 = vmatprep.subr.mxu0 0.0
    %5016 = vmatpush1.xpose.msra.mxu0 0.0
    %5017 = vmatprep.subr.mxu0 0.0
    %5018 = vmatpush1.xpose.msra.mxu0 0.0
    %5019 = vmatprep.subr.mxu0 0.0
    %5020 = vmatpush1.xpose.msra.mxu0 0.0
    %5021 = vmatprep.subr.mxu0 0.0
    %5022 = vmatpush1.xpose.msra.mxu0 0.0
    %5023 = vmatprep.subr.mxu0 0.0
    %5024 = vmatpush1.xpose.msra.mxu0 0.0
    %5025 = vmatprep.subr.mxu0 0.0
    %5026 = vmatpush1.xpose.msra.mxu0 0.0
    %5027 = vmatprep.subr.mxu0 0.0
    %5028 = vmatpush1.xpose.msra.mxu0 0.0
    %5029 = vmatprep.subr.mxu0 0.0
    %5030 = vmatpush1.xpose.msra.mxu0 0.0
    %5031 = vmatprep.subr.mxu0 0.0
    %5032 = vmatpush1.xpose.msra.mxu0 0.0
    %5033 = vmatprep.subr.mxu0 0.0
    %5034 = vmatpush1.xpose.msra.mxu0 0.0
    %5035 = vmatprep.subr.mxu0 0.0
    %5036 = vmatpush1.xpose.msra.mxu0 0.0
    %5037 = vmatprep.subr.mxu0 0.0
    %5038 = vmatpush1.xpose.msra.mxu0 0.0
    %5039 = vmatprep.subr.mxu0 0.0
    %5040 = vmatpush1.xpose.msra.mxu0 0.0
    %5041 = vmatprep.subr.mxu0 0.0
    %5042 = vmatpush1.xpose.msra.mxu0 0.0
    %5043 = vmatprep.subr.mxu0 0.0
    %5044 = vmatpush1.xpose.msra.mxu0 0.0
    %5045 = vmatprep.subr.mxu0 0.0
    %5046 = vmatpush1.xpose.msra.mxu0 %v5013
    %5047 = vmatprep.subr.mxu0 0.0
    %5048 = vmatpush2.xpose.msra.mxu0 0.0
    %5049 = vmatprep.subr.mxu0 0.0
    %5050 = vmatpush2.xpose.msra.mxu0 0.0
    %5051 = vmatprep.subr.mxu0 0.0
    %5052 = vmatpush2.xpose.msra.mxu0 0.0
    %5053 = vmatprep.subr.mxu0 0.0
    %5054 = vmatpush2.xpose.msra.mxu0 0.0
    %5055 = vmatprep.subr.mxu0 0.0
    %5056 = vmatpush2.xpose.msra.mxu0 0.0
    %5057 = vmatprep.subr.mxu0 0.0
    %5058 = vmatpush2.xpose.msra.mxu0 0.0
    %5059 = vmatprep.subr.mxu0 0.0
    %5060 = vmatpush2.xpose.msra.mxu0 0.0
    %5061 = vmatprep.subr.mxu0 0.0
    %5062 = vmatpush2.xpose.msra.mxu0 0.0
    %5063 = vmatprep.subr.mxu0 0.0
    %5064 = vmatpush2.xpose.msra.mxu0 0.0
    %5065 = vmatprep.subr.mxu0 0.0
    %5066 = vmatpush2.xpose.msra.mxu0 0.0
    %5067 = vmatprep.subr.mxu0 0.0
    %5068 = vmatpush2.xpose.msra.mxu0 0.0
    %5069 = vmatprep.subr.mxu0 0.0
    %5070 = vmatpush2.xpose.msra.mxu0 0.0
    %5071 = vmatprep.subr.mxu0 0.0
    %5072 = vmatpush2.xpose.msra.mxu0 0.0
    %5073 = vmatprep.subr.mxu0 0.0
    %5074 = vmatpush2.xpose.msra.mxu0 0.0
    %5075 = vmatprep.subr.mxu0 0.0
    %5076 = vmatpush2.xpose.msra.mxu0 0.0
    %5077 = vmatprep.subr.mxu0 0.0
    %5078 = vmatpush2.xpose.msra.mxu0 0.0
    %5079 = vmatprep.mubr.f32.mxu0 0.0
    %5080 = vmatmul.mubr.f32.gmra.mxu0 %v5011
    %v5081 = vpop.f32.mrf.mxu0
    %v5082 = vadd.f32 0.0, %v5081
    %v5083 = vpop.f32.mrf.mxu0
    %5084 = vdwg.mxu0
    %v5085 = vsel %vm67, %v5004, -inf
    %5086 = vmax.xlane.f32.xlu0 %v5085
    %v5087 = vpop.xlane.xlu0 %5086
    %v5088 = vsel %vm67, %v5082, -inf
    %5089 = vmax.xlane.f32.xlu0 %v5088
    %v5090 = vpop.xlane.xlu0 %5089
    %v5091 = vsub.f32 %v5004, %v5087
    %v5092 = vsub.f32 %v5082, %v5090
    %v5093 = vmul.f32 %v5091, 1.442695
    %v5094 = vpow.pop %v5093
    %v5095 = vmul.f32 %v5092, 1.442695
    %v5096 = vpow.pop %v5095
    %v5097 = vsel %vm67, %v5094, 0.0
    %5098 = vadd.xlane.f32.xlu0 %v5097
    %v5099 = vpop.xlane.xlu0 %5098
    %v5100 = vsel %vm67, %v5096, 0.0
    %5101 = vadd.xlane.f32.xlu0 %v5100
    %v5102 = vpop.xlane.xlu0 %5101
    %v5103 = vrcp.pop %v5099
    %v5104 = vrcp.pop %v5102
    %v5105 = vmul.f32 %v5094, %v5103
    %v5106 = vmul.f32 %v5096, %v5104
    %v5107 = vadd.f32 %v4775, %v5105
    %v5108 = vadd.f32 %v4776, %v5106
    %5109 = vrot.lane.b32.xlu0 %v3923, 40
    %v5110 = vpop.permute.xlu0 %5109
    %v5113 = vsel %vm67, %v5105, 0
    %5115 = vmatprep.subr.mxu0 0.0
    %5116 = vmatpush1.msra.mxu0 0.0
    %5117 = vmatprep.subr.mxu0 0.0
    %5118 = vmatpush1.msra.mxu0 0.0
    %5119 = vmatprep.subr.mxu0 0.0
    %5120 = vmatpush1.msra.mxu0 0.0
    %5121 = vmatprep.subr.mxu0 0.0
    %5122 = vmatpush1.msra.mxu0 0.0
    %5123 = vmatprep.subr.mxu0 0.0
    %5124 = vmatpush1.msra.mxu0 0.0
    %5125 = vmatprep.subr.mxu0 0.0
    %5126 = vmatpush1.msra.mxu0 0.0
    %5127 = vmatprep.subr.mxu0 0.0
    %5128 = vmatpush1.msra.mxu0 0.0
    %5129 = vmatprep.subr.mxu0 0.0
    %5130 = vmatpush1.msra.mxu0 0.0
    %5131 = vmatprep.subr.mxu0 0.0
    %5132 = vmatpush1.msra.mxu0 0.0
    %5133 = vmatprep.subr.mxu0 0.0
    %5134 = vmatpush1.msra.mxu0 0.0
    %5135 = vmatprep.subr.mxu0 0.0
    %5136 = vmatpush1.msra.mxu0 0.0
    %5137 = vmatprep.subr.mxu0 0.0
    %5138 = vmatpush1.msra.mxu0 0.0
    %5139 = vmatprep.subr.mxu0 0.0
    %5140 = vmatpush1.msra.mxu0 0.0
    %5141 = vmatprep.subr.mxu0 0.0
    %5142 = vmatpush1.msra.mxu0 0.0
    %5143 = vmatprep.subr.mxu0 0.0
    %5144 = vmatpush1.msra.mxu0 0.0
    %5145 = vmatprep.subr.mxu0 0.0
    %5146 = vmatpush1.msra.mxu0 %v5110
    %5147 = vmatprep.subr.mxu0 0.0
    %5148 = vmatpush2.msra.mxu0 0.0
    %5149 = vmatprep.subr.mxu0 0.0
    %5150 = vmatpush2.msra.mxu0 0.0
    %5151 = vmatprep.subr.mxu0 0.0
    %5152 = vmatpush2.msra.mxu0 0.0
    %5153 = vmatprep.subr.mxu0 0.0
    %5154 = vmatpush2.msra.mxu0 0.0
    %5155 = vmatprep.subr.mxu0 0.0
    %5156 = vmatpush2.msra.mxu0 0.0
    %5157 = vmatprep.subr.mxu0 0.0
    %5158 = vmatpush2.msra.mxu0 0.0
    %5159 = vmatprep.subr.mxu0 0.0
    %5160 = vmatpush2.msra.mxu0 0.0
    %5161 = vmatprep.subr.mxu0 0.0
    %5162 = vmatpush2.msra.mxu0 0.0
    %5163 = vmatprep.subr.mxu0 0.0
    %5164 = vmatpush2.msra.mxu0 0.0
    %5165 = vmatprep.subr.mxu0 0.0
    %5166 = vmatpush2.msra.mxu0 0.0
    %5167 = vmatprep.subr.mxu0 0.0
    %5168 = vmatpush2.msra.mxu0 0.0
    %5169 = vmatprep.subr.mxu0 0.0
    %5170 = vmatpush2.msra.mxu0 0.0
    %5171 = vmatprep.subr.mxu0 0.0
    %5172 = vmatpush2.msra.mxu0 0.0
    %5173 = vmatprep.subr.mxu0 0.0
    %5174 = vmatpush2.msra.mxu0 0.0
    %5175 = vmatprep.subr.mxu0 0.0
    %5176 = vmatpush2.msra.mxu0 0.0
    %5177 = vmatprep.subr.mxu0 0.0
    %5178 = vmatpush2.msra.mxu0 0.0
    %5179 = vmatprep.mubr.f32.mxu0 0.0
    %5180 = vmatmul.mubr.f32.gmra.mxu0 %v5113
    %v5181 = vpop.f32.mrf.mxu0
    %v5182 = vadd.f32 0.0, %v5181
    %v5183 = vpop.f32.mrf.mxu0
    %5184 = vdwg.mxu0
    %5185 = vrot.lane.b32.xlu0 %v3928, 40
    %v5186 = vpop.permute.xlu0 %5185
    %v5189 = vsel %vm67, %v5106, 0
    %5191 = vmatprep.subr.mxu0 0.0
    %5192 = vmatpush1.msra.mxu0 0.0
    %5193 = vmatprep.subr.mxu0 0.0
    %5194 = vmatpush1.msra.mxu0 0.0
    %5195 = vmatprep.subr.mxu0 0.0
    %5196 = vmatpush1.msra.mxu0 0.0
    %5197 = vmatprep.subr.mxu0 0.0
    %5198 = vmatpush1.msra.mxu0 0.0
    %5199 = vmatprep.subr.mxu0 0.0
    %5200 = vmatpush1.msra.mxu0 0.0
    %5201 = vmatprep.subr.mxu0 0.0
    %5202 = vmatpush1.msra.mxu0 0.0
    %5203 = vmatprep.subr.mxu0 0.0
    %5204 = vmatpush1.msra.mxu0 0.0
    %5205 = vmatprep.subr.mxu0 0.0
    %5206 = vmatpush1.msra.mxu0 0.0
    %5207 = vmatprep.subr.mxu0 0.0
    %5208 = vmatpush1.msra.mxu0 0.0
    %5209 = vmatprep.subr.mxu0 0.0
    %5210 = vmatpush1.msra.mxu0 0.0
    %5211 = vmatprep.subr.mxu0 0.0
    %5212 = vmatpush1.msra.mxu0 0.0
    %5213 = vmatprep.subr.mxu0 0.0
    %5214 = vmatpush1.msra.mxu0 0.0
    %5215 = vmatprep.subr.mxu0 0.0
    %5216 = vmatpush1.msra.mxu0 0.0
    %5217 = vmatprep.subr.mxu0 0.0
    %5218 = vmatpush1.msra.mxu0 0.0
    %5219 = vmatprep.subr.mxu0 0.0
    %5220 = vmatpush1.msra.mxu0 0.0
    %5221 = vmatprep.subr.mxu0 0.0
    %5222 = vmatpush1.msra.mxu0 %v5186
    %5223 = vmatprep.subr.mxu0 0.0
    %5224 = vmatpush2.msra.mxu0 0.0
    %5225 = vmatprep.subr.mxu0 0.0
    %5226 = vmatpush2.msra.mxu0 0.0
    %5227 = vmatprep.subr.mxu0 0.0
    %5228 = vmatpush2.msra.mxu0 0.0
    %5229 = vmatprep.subr.mxu0 0.0
    %5230 = vmatpush2.msra.mxu0 0.0
    %5231 = vmatprep.subr.mxu0 0.0
    %5232 = vmatpush2.msra.mxu0 0.0
    %5233 = vmatprep.subr.mxu0 0.0
    %5234 = vmatpush2.msra.mxu0 0.0
    %5235 = vmatprep.subr.mxu0 0.0
    %5236 = vmatpush2.msra.mxu0 0.0
    %5237 = vmatprep.subr.mxu0 0.0
    %5238 = vmatpush2.msra.mxu0 0.0
    %5239 = vmatprep.subr.mxu0 0.0
    %5240 = vmatpush2.msra.mxu0 0.0
    %5241 = vmatprep.subr.mxu0 0.0
    %5242 = vmatpush2.msra.mxu0 0.0
    %5243 = vmatprep.subr.mxu0 0.0
    %5244 = vmatpush2.msra.mxu0 0.0
    %5245 = vmatprep.subr.mxu0 0.0
    %5246 = vmatpush2.msra.mxu0 0.0
    %5247 = vmatprep.subr.mxu0 0.0
    %5248 = vmatpush2.msra.mxu0 0.0
    %5249 = vmatprep.subr.mxu0 0.0
    %5250 = vmatpush2.msra.mxu0 0.0
    %5251 = vmatprep.subr.mxu0 0.0
    %5252 = vmatpush2.msra.mxu0 0.0
    %5253 = vmatprep.subr.mxu0 0.0
    %5254 = vmatpush2.msra.mxu0 0.0
    %5255 = vmatprep.mubr.f32.mxu0 0.0
    %5256 = vmatmul.mubr.f32.gmra.mxu0 %v5189
    %v5257 = vpop.f32.mrf.mxu0
    %v5258 = vadd.f32 0.0, %v5257
    %v5259 = vpop.f32.mrf.mxu0
    %5260 = vdwg.mxu0
    %v5261 = vmul.f32 %v5107, 0.25
    %v5262 = vmul.f32 %v5108, 0.25
    %s5263 = scalar_lea.vmem %s17, 16
    %5264 = vst.msk [vmem:[%s5263] sm:$0xff] %vm67, %v5261
    %5265 = vst.msk [vmem:[%s5263 + $0x8] sm:$0xff] %vm67, %v5262
    %5268 = vrot.lane.b32.xlu0 %v4518, 8
    %v5269 = vpop.permute.xlu0 %5268
    %5270 = vrot.lane.b32.xlu0 %v4594, 8
    %v5271 = vpop.permute.xlu0 %5270
    %5276 = vrot.lane.b32.xlu0 %v4850, 16
    %v5277 = vpop.permute.xlu0 %5276
    %5278 = vrot.lane.b32.xlu0 %v4926, 16
    %v5279 = vpop.permute.xlu0 %5278
    %5284 = vrot.lane.b32.xlu0 %v5182, 24
    %v5285 = vpop.permute.xlu0 %5284
    %5286 = vrot.lane.b32.xlu0 %v5258, 24
    %v5287 = vpop.permute.xlu0 %5286
    %v5290 = vsel %vm67, %v4186, %v5269
    %v5291 = vsel %vm67, %v4262, %v5271
    %v5292 = vsel %vm1605, %v5290, %v5277
    %v5293 = vsel %vm1605, %v5291, %v5279
    %v5294 = vsel %vm1608, %v5292, %v5285
    %v5295 = vsel %vm1608, %v5293, %v5287
    %s5296 = scalar_lea.vmem %s6, 32
    %v5297 = vld [vmem:[%s5296] sm:$0xff]
    %v5298 = vld [vmem:[%s5296 + $0x8] sm:$0xff]
    %v5299 = vld [vmem:[%s5296 + $0x10] sm:$0xff]
    %v5300 = vld [vmem:[%s5296 + $0x18] sm:$0xff]
    %s5301 = scalar_lea.vmem %s7, 1
    %v5302 = vld [vmem:[%s5301] sm:$0x1]
    %v5304 = vlaneseq
    %v5305 = vshrl.u32 %v5304, 7
    %v5306 = vsub.s32 0, %v5305
    %v5307 = vrot.slane %v5302, %v5306
    %v5310 = vsel %vm163, %v5294, 0
    %v5313 = vsel %vm163, %v5295, 0
    %5315 = vmatprep.subr.mxu0 0.0
    %5316 = vmatpush1.msra.mxu0 0.0
    %5317 = vmatprep.subr.mxu0 0.0
    %5318 = vmatpush1.msra.mxu0 0.0
    %5319 = vmatprep.subr.mxu0 0.0
    %5320 = vmatpush1.msra.mxu0 0.0
    %5321 = vmatprep.subr.mxu0 0.0
    %5322 = vmatpush1.msra.mxu0 0.0
    %5323 = vmatprep.subr.mxu0 0.0
    %5324 = vmatpush1.msra.mxu0 0.0
    %5325 = vmatprep.subr.mxu0 0.0
    %5326 = vmatpush1.msra.mxu0 0.0
    %5327 = vmatprep.subr.mxu0 0.0
    %5328 = vmatpush1.msra.mxu0 0.0
    %5329 = vmatprep.subr.mxu0 0.0
    %5330 = vmatpush1.msra.mxu0 0.0
    %5331 = vmatprep.subr.mxu0 0.0
    %5332 = vmatpush1.msra.mxu0 0.0
    %5333 = vmatprep.subr.mxu0 0.0
    %5334 = vmatpush1.msra.mxu0 0.0
    %5335 = vmatprep.subr.mxu0 0.0
    %5336 = vmatpush1.msra.mxu0 0.0
    %5337 = vmatprep.subr.mxu0 0.0
    %5338 = vmatpush1.msra.mxu0 0.0
    %5339 = vmatprep.subr.mxu0 0.0
    %5340 = vmatpush1.msra.mxu0 %v5300
    %5341 = vmatprep.subr.mxu0 0.0
    %5342 = vmatpush1.msra.mxu0 %v5299
    %5343 = vmatprep.subr.mxu0 0.0
    %5344 = vmatpush1.msra.mxu0 %v5298
    %5345 = vmatprep.subr.mxu0 0.0
    %5346 = vmatpush1.msra.mxu0 %v5297
    %5347 = vmatprep.subr.mxu0 0.0
    %5348 = vmatpush2.msra.mxu0 0.0
    %5349 = vmatprep.subr.mxu0 0.0
    %5350 = vmatpush2.msra.mxu0 0.0
    %5351 = vmatprep.subr.mxu0 0.0
    %5352 = vmatpush2.msra.mxu0 0.0
    %5353 = vmatprep.subr.mxu0 0.0
    %5354 = vmatpush2.msra.mxu0 0.0
    %5355 = vmatprep.subr.mxu0 0.0
    %5356 = vmatpush2.msra.mxu0 0.0
    %5357 = vmatprep.subr.mxu0 0.0
    %5358 = vmatpush2.msra.mxu0 0.0
    %5359 = vmatprep.subr.mxu0 0.0
    %5360 = vmatpush2.msra.mxu0 0.0
    %5361 = vmatprep.subr.mxu0 0.0
    %5362 = vmatpush2.msra.mxu0 0.0
    %5363 = vmatprep.subr.mxu0 0.0
    %5364 = vmatpush2.msra.mxu0 0.0
    %5365 = vmatprep.subr.mxu0 0.0
    %5366 = vmatpush2.msra.mxu0 0.0
    %5367 = vmatprep.subr.mxu0 0.0
    %5368 = vmatpush2.msra.mxu0 0.0
    %5369 = vmatprep.subr.mxu0 0.0
    %5370 = vmatpush2.msra.mxu0 0.0
    %5371 = vmatprep.subr.mxu0 0.0
    %5372 = vmatpush2.msra.mxu0 0.0
    %5373 = vmatprep.subr.mxu0 0.0
    %5374 = vmatpush2.msra.mxu0 0.0
    %5375 = vmatprep.subr.mxu0 0.0
    %5376 = vmatpush2.msra.mxu0 0.0
    %5377 = vmatprep.subr.mxu0 0.0
    %5378 = vmatpush2.msra.mxu0 0.0
    %5379 = vmatprep.mubr.f32.mxu0 0.0
    %5380 = vmatmul.mubr.f32.gmra.mxu0 %v5310
    %v5381 = vpop.f32.mrf.mxu0
    %v5382 = vadd.f32 %v5307, %v5381
    %v5383 = vpop.f32.mrf.mxu0
    %5384 = vmatprep.mubr.f32.mxu0 0.0
    %5385 = vmatmul.mubr.f32.gmra.mxu0 %v5313
    %v5386 = vpop.f32.mrf.mxu0
    %v5387 = vadd.f32 %v5307, %v5386
    %v5388 = vpop.f32.mrf.mxu0
    %5389 = vdwg.mxu0
    %v5390 = vadd.f32 %v3835, %v5382
    %v5391 = vadd.f32 %v3836, %v5387
    %s5392 = scalar_lea.vmem %s8, 1
    %v5393 = vld [vmem:[%s5392] sm:$0x1]
    %s5394 = scalar_lea.vmem %s9, 1
    %v5395 = vld [vmem:[%s5394] sm:$0x1]
    %v5396 = vsel %vm163, %v5390, 0.0
    %5397 = vadd.xlane.f32.xlu0 %v5396
    %v5398 = vpop.xlane.xlu0 %5397
    %v5399 = vsel %vm163, %v5391, 0.0
    %5400 = vadd.xlane.f32.xlu0 %v5399
    %v5401 = vpop.xlane.xlu0 %5400
    %v5402 = vmul.f32 %v5398, %v1713
    %v5403 = vmul.f32 %v5401, %v1713
    %v5404 = vsub.f32 %v5390, %v5402
    %v5405 = vsub.f32 %v5391, %v5403
    %v5406 = vmul.f32 %v5404, %v5404
    %v5407 = vmul.f32 %v5405, %v5405
    %v5408 = vsel %vm163, %v5406, 0.0
    %5409 = vadd.xlane.f32.xlu0 %v5408
    %v5410 = vpop.xlane.xlu0 %5409
    %v5411 = vsel %vm163, %v5407, 0.0
    %5412 = vadd.xlane.f32.xlu0 %v5411
    %v5413 = vpop.xlane.xlu0 %5412
    %v5414 = vmul.f32 %v5410, %v1713
    %v5415 = vmul.f32 %v5413, %v1713
    %v5416 = vadd.f32 %v5414, 1e-05
    %v5417 = vadd.f32 %v5415, 1e-05
    %v5418 = vrsqrt.pop %v5416
    %v5419 = vrsqrt.pop %v5417
    %v5420 = vmul.f32 %v5404, %v5418
    %v5421 = vmul.f32 %v5405, %v5419
    %v5423 = vlaneseq
    %v5424 = vshrl.u32 %v5423, 7
    %v5425 = vsub.s32 0, %v5424
    %v5426 = vrot.slane %v5393, %v5425
    %v5428 = vmul.f32 %v5420, %v5426
    %v5429 = vmul.f32 %v5421, %v5426
    %v5431 = vlaneseq
    %v5432 = vshrl.u32 %v5431, 7
    %v5433 = vsub.s32 0, %v5432
    %v5434 = vrot.slane %v5395, %v5433
    %v5436 = vadd.f32 %v5428, %v5434
    %v5437 = vadd.f32 %v5429, %v5434
    %v5438 = vpack.c.bf16 %v5437, %v5436
    %s5439 = scalar_lea.vmem %s10, 256
    %v5440 = vld [vmem:[%s5439] sm:$0xff]
    %v5441 = vld [vmem:[%s5439 + $0x8] sm:$0xff]
    %v5442 = vld [vmem:[%s5439 + $0x40] sm:$0xff]
    %v5443 = vld [vmem:[%s5439 + $0x48] sm:$0xff]
    %v5444 = vld [vmem:[%s5439 + $0x80] sm:$0xff]
    %v5445 = vld [vmem:[%s5439 + $0x88] sm:$0xff]
    %v5446 = vld [vmem:[%s5439 + $0xc0] sm:$0xff]
    %v5447 = vld [vmem:[%s5439 + $0xc8] sm:$0xff]
    %s5448 = scalar_lea.vmem %s11, 16
    %v5449 = vld [vmem:[%s5448] sm:$0xf]
    %v5451 = vlaneseq
    %v5452 = vshrl.u32 %v5451, 7
    %v5453 = vsub.s32 0, %v5452
    %v5454 = vrot.slane %v5449, %v5453
    %v5455 = vlaneseq
    %v5456 = vshrl.u32 %v5455, 7
    %v5457 = vsub.s32 1, %v5456
    %v5458 = vrot.slane %v5449, %v5457
    %v5459 = vlaneseq
    %v5460 = vshrl.u32 %v5459, 7
    %v5461 = vsub.s32 2, %v5460
    %v5462 = vrot.slane %v5449, %v5461
    %v5463 = vlaneseq
    %v5464 = vshrl.u32 %v5463, 7
    %v5465 = vsub.s32 3, %v5464
    %v5466 = vrot.slane %v5449, %v5465
    %v5479 = vunpack.c.l.b16 %v5440
    %v5480 = vunpack.c.h.b16 %v5440
    %v5481 = vunpack.c.l.b16 %v5441
    %v5482 = vunpack.c.h.b16 %v5441
    %v5483 = vunpack.c.l.b16 %v5442
    %v5484 = vunpack.c.h.b16 %v5442
    %v5485 = vunpack.c.l.b16 %v5443
    %v5486 = vunpack.c.h.b16 %v5443
    %v5487 = vunpack.c.l.b16 %v5444
    %v5488 = vunpack.c.h.b16 %v5444
    %v5489 = vunpack.c.l.b16 %v5445
    %v5490 = vunpack.c.h.b16 %v5445
    %v5491 = vunpack.c.l.b16 %v5446
    %v5492 = vunpack.c.h.b16 %v5446
    %v5493 = vunpack.c.l.b16 %v5447
    %v5494 = vunpack.c.h.b16 %v5447
    %v5495 = vpack.c.b16 %v5483, %v5479
    %v5496 = vpack.c.b16 %v5484, %v5480
    %v5497 = vpack.c.b16 %v5485, %v5481
    %v5498 = vpack.c.b16 %v5486, %v5482
    %v5499 = vpack.c.b16 %v5491, %v5487
    %v5500 = vpack.c.b16 %v5492, %v5488
    %v5501 = vpack.c.b16 %v5493, %v5489
    %v5502 = vpack.c.b16 %v5494, %v5490
    %v5512 = vsel %vm163, %v5438, 0
    %5514 = vmatprep.subr.bf16.mxu0 0
    %5515 = vmatpush1.bf16.msra.mxu0 0
    %5516 = vmatprep.subr.bf16.mxu0 0
    %5517 = vmatpush1.bf16.msra.mxu0 0
    %5518 = vmatprep.subr.bf16.mxu0 0
    %5519 = vmatpush1.bf16.msra.mxu0 0
    %5520 = vmatprep.subr.bf16.mxu0 0
    %5521 = vmatpush1.bf16.msra.mxu0 0
    %5522 = vmatprep.subr.bf16.mxu0 0
    %5523 = vmatpush1.bf16.msra.mxu0 0
    %5524 = vmatprep.subr.bf16.mxu0 0
    %5525 = vmatpush1.bf16.msra.mxu0 0
    %5526 = vmatprep.subr.bf16.mxu0 %v5500
    %5527 = vmatpush1.bf16.msra.mxu0 %v5499
    %5528 = vmatprep.subr.bf16.mxu0 %v5496
    %5529 = vmatpush1.bf16.msra.mxu0 %v5495
    %5530 = vmatprep.subr.bf16.mxu0 0
    %5531 = vmatpush2.bf16.msra.mxu0 0
    %5532 = vmatprep.subr.bf16.mxu0 0
    %5533 = vmatpush2.bf16.msra.mxu0 0
    %5534 = vmatprep.subr.bf16.mxu0 0
    %5535 = vmatpush2.bf16.msra.mxu0 0
    %5536 = vmatprep.subr.bf16.mxu0 0
    %5537 = vmatpush2.bf16.msra.mxu0 0
    %5538 = vmatprep.subr.bf16.mxu0 0
    %5539 = vmatpush2.bf16.msra.mxu0 0
    %5540 = vmatprep.subr.bf16.mxu0 0
    %5541 = vmatpush2.bf16.msra.mxu0 0
    %5542 = vmatprep.subr.bf16.mxu0 0
    %5543 = vmatpush2.bf16.msra.mxu0 0
    %5544 = vmatprep.subr.bf16.mxu0 0
    %5545 = vmatpush2.bf16.msra.mxu0 0
    %5546 = vmatprep.mubr.bf16.mxu0 0
    %5547 = vmatmul.mubr.bf16.gmra.mxu0 %v5512
    %v5548 = vpop.f32.mrf.mxu0
    %v5549 = vadd.f32 %v5454, %v5548
    %v5550 = vpop.f32.mrf.mxu0
    %v5551 = vadd.f32 %v5458, %v5550
    %v5552 = vpop.f32.mrf.mxu0
    %v5553 = vadd.f32 %v5454, %v5552
    %v5554 = vpop.f32.mrf.mxu0
    %v5555 = vadd.f32 %v5458, %v5554
    %5556 = vdwg.mxu0
    %5557 = vmatprep.subr.bf16.mxu0 0
    %5558 = vmatpush1.bf16.msra.mxu0 0
    %5559 = vmatprep.subr.bf16.mxu0 0
    %5560 = vmatpush1.bf16.msra.mxu0 0
    %5561 = vmatprep.subr.bf16.mxu0 0
    %5562 = vmatpush1.bf16.msra.mxu0 0
    %5563 = vmatprep.subr.bf16.mxu0 0
    %5564 = vmatpush1.bf16.msra.mxu0 0
    %5565 = vmatprep.subr.bf16.mxu0 0
    %5566 = vmatpush1.bf16.msra.mxu0 0
    %5567 = vmatprep.subr.bf16.mxu0 0
    %5568 = vmatpush1.bf16.msra.mxu0 0
    %5569 = vmatprep.subr.bf16.mxu0 %v5502
    %5570 = vmatpush1.bf16.msra.mxu0 %v5501
    %5571 = vmatprep.subr.bf16.mxu0 %v5498
    %5572 = vmatpush1.bf16.msra.mxu0 %v5497
    %5573 = vmatprep.subr.bf16.mxu0 0
    %5574 = vmatpush2.bf16.msra.mxu0 0
    %5575 = vmatprep.subr.bf16.mxu0 0
    %5576 = vmatpush2.bf16.msra.mxu0 0
    %5577 = vmatprep.subr.bf16.mxu0 0
    %5578 = vmatpush2.bf16.msra.mxu0 0
    %5579 = vmatprep.subr.bf16.mxu0 0
    %5580 = vmatpush2.bf16.msra.mxu0 0
    %5581 = vmatprep.subr.bf16.mxu0 0
    %5582 = vmatpush2.bf16.msra.mxu0 0
    %5583 = vmatprep.subr.bf16.mxu0 0
    %5584 = vmatpush2.bf16.msra.mxu0 0
    %5585 = vmatprep.subr.bf16.mxu0 0
    %5586 = vmatpush2.bf16.msra.mxu0 0
    %5587 = vmatprep.subr.bf16.mxu0 0
    %5588 = vmatpush2.bf16.msra.mxu0 0
    %5589 = vmatprep.mubr.bf16.mxu0 0
    %5590 = vmatmul.mubr.bf16.gmra.mxu0 %v5512
    %v5591 = vpop.f32.mrf.mxu0
    %v5592 = vadd.f32 %v5462, %v5591
    %v5593 = vpop.f32.mrf.mxu0
    %v5594 = vadd.f32 %v5466, %v5593
    %v5595 = vpop.f32.mrf.mxu0
    %v5596 = vadd.f32 %v5462, %v5595
    %v5597 = vpop.f32.mrf.mxu0
    %v5598 = vadd.f32 %v5466, %v5597
    %5599 = vdwg.mxu0
    %v5600 = vmax.f32 %v5549, 0.0
    %v5601 = vmax.f32 %v5551, 0.0
    %v5602 = vmax.f32 %v5592, 0.0
    %v5603 = vmax.f32 %v5594, 0.0
    %v5604 = vmax.f32 %v5553, 0.0
    %v5605 = vmax.f32 %v5555, 0.0
    %v5606 = vmax.f32 %v5596, 0.0
    %v5607 = vmax.f32 %v5598, 0.0
    %v5608 = vpack.c.bf16 %v5604, %v5600
    %v5609 = vpack.c.bf16 %v5605, %v5601
    %v5610 = vpack.c.bf16 %v5606, %v5602
    %v5611 = vpack.c.bf16 %v5607, %v5603
    %s5612 = scalar_lea.vmem %s12, 1024
    %v5613 = vld [vmem:[%s5612] sm:$0xf]
    %v5614 = vld [vmem:[%s5612 + $0x4] sm:$0xf]
    %v5615 = vld [vmem:[%s5612 + $0x8] sm:$0xf]
    %v5616 = vld [vmem:[%s5612 + $0xc] sm:$0xf]
    %v5617 = vld [vmem:[%s5612 + $0x10] sm:$0xf]
    %v5618 = vld [vmem:[%s5612 + $0x14] sm:$0xf]
    %v5619 = vld [vmem:[%s5612 + $0x18] sm:$0xf]
    %v5620 = vld [vmem:[%s5612 + $0x1c] sm:$0xf]
    %v5621 = vld [vmem:[%s5612 + $0x20] sm:$0xf]
    %v5622 = vld [vmem:[%s5612 + $0x24] sm:$0xf]
    %v5623 = vld [vmem:[%s5612 + $0x28] sm:$0xf]
    %v5624 = vld [vmem:[%s5612 + $0x2c] sm:$0xf]
    %v5625 = vld [vmem:[%s5612 + $0x30] sm:$0xf]
    %v5626 = vld [vmem:[%s5612 + $0x34] sm:$0xf]
    %v5627 = vld [vmem:[%s5612 + $0x38] sm:$0xf]
    %v5628 = vld [vmem:[%s5612 + $0x3c] sm:$0xf]
    %v5629 = vld [vmem:[%s5612 + $0x40] sm:$0xf]
    %v5630 = vld [vmem:[%s5612 + $0x44] sm:$0xf]
    %v5631 = vld [vmem:[%s5612 + $0x48] sm:$0xf]
    %v5632 = vld [vmem:[%s5612 + $0x4c] sm:$0xf]
    %v5633 = vld [vmem:[%s5612 + $0x50] sm:$0xf]
    %v5634 = vld [vmem:[%s5612 + $0x54] sm:$0xf]
    %v5635 = vld [vmem:[%s5612 + $0x58] sm:$0xf]
    %v5636 = vld [vmem:[%s5612 + $0x5c] sm:$0xf]
    %v5637 = vld [vmem:[%s5612 + $0x60] sm:$0xf]
    %v5638 = vld [vmem:[%s5612 + $0x64] sm:$0xf]
    %v5639 = vld [vmem:[%s5612 + $0x68] sm:$0xf]
    %v5640 = vld [vmem:[%s5612 + $0x6c] sm:$0xf]
    %v5641 = vld [vmem:[%s5612 + $0x70] sm:$0xf]
    %v5642 = vld [vmem:[%s5612 + $0x74] sm:$0xf]
    %v5643 = vld [vmem:[%s5612 + $0x78] sm:$0xf]
    %v5644 = vld [vmem:[%s5612 + $0x7c] sm:$0xf]
    %v5645 = vld [vmem:[%s5612 + $0x80] sm:$0xf]
    %v5646 = vld [vmem:[%s5612 + $0x84] sm:$0xf]
    %v5647 = vld [vmem:[%s5612 + $0x88] sm:$0xf]
    %v5648 = vld [vmem:[%s5612 + $0x8c] sm:$0xf]
    %v5649 = vld [vmem:[%s5612 + $0x90] sm:$0xf]
    %v5650 = vld [vmem:[%s5612 + $0x94] sm:$0xf]
    %v5651 = vld [vmem:[%s5612 + $0x98] sm:$0xf]
    %v5652 = vld [vmem:[%s5612 + $0x9c] sm:$0xf]
    %v5653 = vld [vmem:[%s5612 + $0xa0] sm:$0xf]
    %v5654 = vld [vmem:[%s5612 + $0xa4] sm:$0xf]
    %v5655 = vld [vmem:[%s5612 + $0xa8] sm:$0xf]
    %v5656 = vld [vmem:[%s5612 + $0xac] sm:$0xf]
    %v5657 = vld [vmem:[%s5612 + $0xb0] sm:$0xf]
    %v5658 = vld [vmem:[%s5612 + $0xb4] sm:$0xf]
    %v5659 = vld [vmem:[%s5612 + $0xb8] sm:$0xf]
    %v5660 = vld [vmem:[%s5612 + $0xbc] sm:$0xf]
    %v5661 = vld [vmem:[%s5612 + $0xc0] sm:$0xf]
    %v5662 = vld [vmem:[%s5612 + $0xc4] sm:$0xf]
    %v5663 = vld [vmem:[%s5612 + $0xc8] sm:$0xf]
    %v5664 = vld [vmem:[%s5612 + $0xcc] sm:$0xf]
    %v5665 = vld [vmem:[%s5612 + $0xd0] sm:$0xf]
    %v5666 = vld [vmem:[%s5612 + $0xd4] sm:$0xf]
    %v5667 = vld [vmem:[%s5612 + $0xd8] sm:$0xf]
    %v5668 = vld [vmem:[%s5612 + $0xdc] sm:$0xf]
    %v5669 = vld [vmem:[%s5612 + $0xe0] sm:$0xf]
    %v5670 = vld [vmem:[%s5612 + $0xe4] sm:$0xf]
    %v5671 = vld [vmem:[%s5612 + $0xe8] sm:$0xf]
    %v5672 = vld [vmem:[%s5612 + $0xec] sm:$0xf]
    %v5673 = vld [vmem:[%s5612 + $0xf0] sm:$0xf]
    %v5674 = vld [vmem:[%s5612 + $0xf4] sm:$0xf]
    %v5675 = vld [vmem:[%s5612 + $0xf8] sm:$0xf]
    %v5676 = vld [vmem:[%s5612 + $0xfc] sm:$0xf]
    %v5677 = vld [vmem:[%s5439 + $0x10] sm:$0xff]
    %v5678 = vld [vmem:[%s5439 + $0x18] sm:$0xff]
    %v5679 = vld [vmem:[%s5439 + $0x50] sm:$0xff]
    %v5680 = vld [vmem:[%s5439 + $0x58] sm:$0xff]
    %v5681 = vld [vmem:[%s5439 + $0x90] sm:$0xff]
    %v5682 = vld [vmem:[%s5439 + $0x98] sm:$0xff]
    %v5683 = vld [vmem:[%s5439 + $0xd0] sm:$0xff]
    %v5684 = vld [vmem:[%s5439 + $0xd8] sm:$0xff]
    %v5685 = vld [vmem:[%s5448 + $0x4] sm:$0xf]
    %v5687 = vlaneseq
    %v5688 = vshrl.u32 %v5687, 7
    %v5689 = vsub.s32 0, %v5688
    %v5690 = vrot.slane %v5685, %v5689
    %v5691 = vlaneseq
    %v5692 = vshrl.u32 %v5691, 7
    %v5693 = vsub.s32 1, %v5692
    %v5694 = vrot.slane %v5685, %v5693
    %v5695 = vlaneseq
    %v5696 = vshrl.u32 %v5695, 7
    %v5697 = vsub.s32 2, %v5696
    %v5698 = vrot.slane %v5685, %v5697
    %v5699 = vlaneseq
    %v5700 = vshrl.u32 %v5699, 7
    %v5701 = vsub.s32 3, %v5700
    %v5702 = vrot.slane %v5685, %v5701
    %v5715 = vunpack.c.l.b16 %v5677
    %v5716 = vunpack.c.h.b16 %v5677
    %v5717 = vunpack.c.l.b16 %v5678
    %v5718 = vunpack.c.h.b16 %v5678
    %v5719 = vunpack.c.l.b16 %v5679
    %v5720 = vunpack.c.h.b16 %v5679
    %v5721 = vunpack.c.l.b16 %v5680
    %v5722 = vunpack.c.h.b16 %v5680
    %v5723 = vunpack.c.l.b16 %v5681
    %v5724 = vunpack.c.h.b16 %v5681
    %v5725 = vunpack.c.l.b16 %v5682
    %v5726 = vunpack.c.h.b16 %v5682
    %v5727 = vunpack.c.l.b16 %v5683
    %v5728 = vunpack.c.h.b16 %v5683
    %v5729 = vunpack.c.l.b16 %v5684
    %v5730 = vunpack.c.h.b16 %v5684
    %v5731 = vpack.c.b16 %v5719, %v5715
    %v5732 = vpack.c.b16 %v5720, %v5716
    %v5733 = vpack.c.b16 %v5721, %v5717
    %v5734 = vpack.c.b16 %v5722, %v5718
    %v5735 = vpack.c.b16 %v5727, %v5723
    %v5736 = vpack.c.b16 %v5728, %v5724
    %v5737 = vpack.c.b16 %v5729, %v5725
    %v5738 = vpack.c.b16 %v5730, %v5726
    %5747 = vmatprep.subr.bf16.mxu0 0
    %5748 = vmatpush1.bf16.msra.mxu0 0
    %5749 = vmatprep.subr.bf16.mxu0 0
    %5750 = vmatpush1.bf16.msra.mxu0 0
    %5751 = vmatprep.subr.bf16.mxu0 0
    %5752 = vmatpush1.bf16.msra.mxu0 0
    %5753 = vmatprep.subr.bf16.mxu0 0
    %5754 = vmatpush1.bf16.msra.mxu0 0
    %5755 = vmatprep.subr.bf16.mxu0 0
    %5756 = vmatpush1.bf16.msra.mxu0 0
    %5757 = vmatprep.subr.bf16.mxu0 0
    %5758 = vmatpush1.bf16.msra.mxu0 0
    %5759 = vmatprep.subr.bf16.mxu0 %v5736
    %5760 = vmatpush1.bf16.msra.mxu0 %v5735
    %5761 = vmatprep.subr.bf16.mxu0 %v5732
    %5762 = vmatpush1.bf16.msra.mxu0 %v5731
    %5763 = vmatprep.subr.bf16.mxu0 0
    %5764 = vmatpush2.bf16.msra.mxu0 0
    %5765 = vmatprep.subr.bf16.mxu0 0
    %5766 = vmatpush2.bf16.msra.mxu0 0
    %5767 = vmatprep.subr.bf16.mxu0 0
    %5768 = vmatpush2.bf16.msra.mxu0 0
    %5769 = vmatprep.subr.bf16.mxu0 0
    %5770 = vmatpush2.bf16.msra.mxu0 0
    %5771 = vmatprep.subr.bf16.mxu0 0
    %5772 = vmatpush2.bf16.msra.mxu0 0
    %5773 = vmatprep.subr.bf16.mxu0 0
    %5774 = vmatpush2.bf16.msra.mxu0 0
    %5775 = vmatprep.subr.bf16.mxu0 0
    %5776 = vmatpush2.bf16.msra.mxu0 0
    %5777 = vmatprep.subr.bf16.mxu0 0
    %5778 = vmatpush2.bf16.msra.mxu0 0
    %5779 = vmatprep.mubr.bf16.mxu0 0
    %5780 = vmatmul.mubr.bf16.gmra.mxu0 %v5512
    %v5781 = vpop.f32.mrf.mxu0
    %v5782 = vadd.f32 %v5690, %v5781
    %v5783 = vpop.f32.mrf.mxu0
    %v5784 = vadd.f32 %v5694, %v5783
    %v5785 = vpop.f32.mrf.mxu0
    %v5786 = vadd.f32 %v5690, %v5785
    %v5787 = vpop.f32.mrf.mxu0
    %v5788 = vadd.f32 %v5694, %v5787
    %5789 = vdwg.mxu0
    %5790 = vmatprep.subr.bf16.mxu0 0
    %5791 = vmatpush1.bf16.msra.mxu0 0
    %5792 = vmatprep.subr.bf16.mxu0 0
    %5793 = vmatpush1.bf16.msra.mxu0 0
    %5794 = vmatprep.subr.bf16.mxu0 0
    %5795 = vmatpush1.bf16.msra.mxu0 0
    %5796 = vmatprep.subr.bf16.mxu0 0
    %5797 = vmatpush1.bf16.msra.mxu0 0
    %5798 = vmatprep.subr.bf16.mxu0 0
    %5799 = vmatpush1.bf16.msra.mxu0 0
    %5800 = vmatprep.subr.bf16.mxu0 0
    %5801 = vmatpush1.bf16.msra.mxu0 0
    %5802 = vmatprep.subr.bf16.mxu0 %v5738
    %5803 = vmatpush1.bf16.msra.mxu0 %v5737
    %5804 = vmatprep.subr.bf16.mxu0 %v5734
    %5805 = vmatpush1.bf16.msra.mxu0 %v5733
    %5806 = vmatprep.subr.bf16.mxu0 0
    %5807 = vmatpush2.bf16.msra.mxu0 0
    %5808 = vmatprep.subr.bf16.mxu0 0
    %5809 = vmatpush2.bf16.msra.mxu0 0
    %5810 = vmatprep.subr.bf16.mxu0 0
    %5811 = vmatpush2.bf16.msra.mxu0 0
    %5812 = vmatprep.subr.bf16.mxu0 0
    %5813 = vmatpush2.bf16.msra.mxu0 0
    %5814 = vmatprep.subr.bf16.mxu0 0
    %5815 = vmatpush2.bf16.msra.mxu0 0
    %5816 = vmatprep.subr.bf16.mxu0 0
    %5817 = vmatpush2.bf16.msra.mxu0 0
    %5818 = vmatprep.subr.bf16.mxu0 0
    %5819 = vmatpush2.bf16.msra.mxu0 0
    %5820 = vmatprep.subr.bf16.mxu0 0
    %5821 = vmatpush2.bf16.msra.mxu0 0
    %5822 = vmatprep.mubr.bf16.mxu0 0
    %5823 = vmatmul.mubr.bf16.gmra.mxu0 %v5512
    %v5824 = vpop.f32.mrf.mxu0
    %v5825 = vadd.f32 %v5698, %v5824
    %v5826 = vpop.f32.mrf.mxu0
    %v5827 = vadd.f32 %v5702, %v5826
    %v5828 = vpop.f32.mrf.mxu0
    %v5829 = vadd.f32 %v5698, %v5828
    %v5830 = vpop.f32.mrf.mxu0
    %v5831 = vadd.f32 %v5702, %v5830
    %5832 = vdwg.mxu0
    %v5833 = vmax.f32 %v5782, 0.0
    %v5834 = vmax.f32 %v5784, 0.0
    %v5835 = vmax.f32 %v5825, 0.0
    %v5836 = vmax.f32 %v5827, 0.0
    %v5837 = vmax.f32 %v5786, 0.0
    %v5838 = vmax.f32 %v5788, 0.0
    %v5839 = vmax.f32 %v5829, 0.0
    %v5840 = vmax.f32 %v5831, 0.0
    %v5841 = vpack.c.bf16 %v5837, %v5833
    %v5842 = vpack.c.bf16 %v5838, %v5834
    %v5843 = vpack.c.bf16 %v5839, %v5835
    %v5844 = vpack.c.bf16 %v5840, %v5836
    %v5845 = vld [vmem:[%s5612 + $0x100] sm:$0xf]
    %v5846 = vld [vmem:[%s5612 + $0x104] sm:$0xf]
    %v5847 = vld [vmem:[%s5612 + $0x108] sm:$0xf]
    %v5848 = vld [vmem:[%s5612 + $0x10c] sm:$0xf]
    %v5849 = vld [vmem:[%s5612 + $0x110] sm:$0xf]
    %v5850 = vld [vmem:[%s5612 + $0x114] sm:$0xf]
    %v5851 = vld [vmem:[%s5612 + $0x118] sm:$0xf]
    %v5852 = vld [vmem:[%s5612 + $0x11c] sm:$0xf]
    %v5853 = vld [vmem:[%s5612 + $0x120] sm:$0xf]
    %v5854 = vld [vmem:[%s5612 + $0x124] sm:$0xf]
    %v5855 = vld [vmem:[%s5612 + $0x128] sm:$0xf]
    %v5856 = vld [vmem:[%s5612 + $0x12c] sm:$0xf]
    %v5857 = vld [vmem:[%s5612 + $0x130] sm:$0xf]
    %v5858 = vld [vmem:[%s5612 + $0x134] sm:$0xf]
    %v5859 = vld [vmem:[%s5612 + $0x138] sm:$0xf]
    %v5860 = vld [vmem:[%s5612 + $0x13c] sm:$0xf]
    %v5861 = vld [vmem:[%s5612 + $0x140] sm:$0xf]
    %v5862 = vld [vmem:[%s5612 + $0x144] sm:$0xf]
    %v5863 = vld [vmem:[%s5612 + $0x148] sm:$0xf]
    %v5864 = vld [vmem:[%s5612 + $0x14c] sm:$0xf]
    %v5865 = vld [vmem:[%s5612 + $0x150] sm:$0xf]
    %v5866 = vld [vmem:[%s5612 + $0x154] sm:$0xf]
    %v5867 = vld [vmem:[%s5612 + $0x158] sm:$0xf]
    %v5868 = vld [vmem:[%s5612 + $0x15c] sm:$0xf]
    %v5869 = vld [vmem:[%s5612 + $0x160] sm:$0xf]
    %v5870 = vld [vmem:[%s5612 + $0x164] sm:$0xf]
    %v5871 = vld [vmem:[%s5612 + $0x168] sm:$0xf]
    %v5872 = vld [vmem:[%s5612 + $0x16c] sm:$0xf]
    %v5873 = vld [vmem:[%s5612 + $0x170] sm:$0xf]
    %v5874 = vld [vmem:[%s5612 + $0x174] sm:$0xf]
    %v5875 = vld [vmem:[%s5612 + $0x178] sm:$0xf]
    %v5876 = vld [vmem:[%s5612 + $0x17c] sm:$0xf]
    %v5877 = vld [vmem:[%s5612 + $0x180] sm:$0xf]
    %v5878 = vld [vmem:[%s5612 + $0x184] sm:$0xf]
    %v5879 = vld [vmem:[%s5612 + $0x188] sm:$0xf]
    %v5880 = vld [vmem:[%s5612 + $0x18c] sm:$0xf]
    %v5881 = vld [vmem:[%s5612 + $0x190] sm:$0xf]
    %v5882 = vld [vmem:[%s5612 + $0x194] sm:$0xf]
    %v5883 = vld [vmem:[%s5612 + $0x198] sm:$0xf]
    %v5884 = vld [vmem:[%s5612 + $0x19c] sm:$0xf]
    %v5885 = vld [vmem:[%s5612 + $0x1a0] sm:$0xf]
    %v5886 = vld [vmem:[%s5612 + $0x1a4] sm:$0xf]
    %v5887 = vld [vmem:[%s5612 + $0x1a8] sm:$0xf]
    %v5888 = vld [vmem:[%s5612 + $0x1ac] sm:$0xf]
    %v5889 = vld [vmem:[%s5612 + $0x1b0] sm:$0xf]
    %v5890 = vld [vmem:[%s5612 + $0x1b4] sm:$0xf]
    %v5891 = vld [vmem:[%s5612 + $0x1b8] sm:$0xf]
    %v5892 = vld [vmem:[%s5612 + $0x1bc] sm:$0xf]
    %v5893 = vld [vmem:[%s5612 + $0x1c0] sm:$0xf]
    %v5894 = vld [vmem:[%s5612 + $0x1c4] sm:$0xf]
    %v5895 = vld [vmem:[%s5612 + $0x1c8] sm:$0xf]
    %v5896 = vld [vmem:[%s5612 + $0x1cc] sm:$0xf]
    %v5897 = vld [vmem:[%s5612 + $0x1d0] sm:$0xf]
    %v5898 = vld [vmem:[%s5612 + $0x1d4] sm:$0xf]
    %v5899 = vld [vmem:[%s5612 + $0x1d8] sm:$0xf]
    %v5900 = vld [vmem:[%s5612 + $0x1dc] sm:$0xf]
    %v5901 = vld [vmem:[%s5612 + $0x1e0] sm:$0xf]
    %v5902 = vld [vmem:[%s5612 + $0x1e4] sm:$0xf]
    %v5903 = vld [vmem:[%s5612 + $0x1e8] sm:$0xf]
    %v5904 = vld [vmem:[%s5612 + $0x1ec] sm:$0xf]
    %v5905 = vld [vmem:[%s5612 + $0x1f0] sm:$0xf]
    %v5906 = vld [vmem:[%s5612 + $0x1f4] sm:$0xf]
    %v5907 = vld [vmem:[%s5612 + $0x1f8] sm:$0xf]
    %v5908 = vld [vmem:[%s5612 + $0x1fc] sm:$0xf]
    %v5973 = vunpack.c.l.b16 %v5845
    %v5974 = vunpack.c.l.b16 %v5846
    %v5975 = vunpack.c.l.b16 %v5847
    %v5976 = vunpack.c.l.b16 %v5848
    %v5977 = vunpack.c.l.b16 %v5849
    %v5978 = vunpack.c.l.b16 %v5850
    %v5979 = vunpack.c.l.b16 %v5851
    %v5980 = vunpack.c.l.b16 %v5852
    %v5981 = vunpack.c.l.b16 %v5853
    %v5982 = vunpack.c.l.b16 %v5854
    %v5983 = vunpack.c.l.b16 %v5855
    %v5984 = vunpack.c.l.b16 %v5856
    %v5985 = vunpack.c.l.b16 %v5857
    %v5986 = vunpack.c.l.b16 %v5858
    %v5987 = vunpack.c.l.b16 %v5859
    %v5988 = vunpack.c.l.b16 %v5860
    %v5989 = vunpack.c.l.b16 %v5861
    %v5990 = vunpack.c.l.b16 %v5862
    %v5991 = vunpack.c.l.b16 %v5863
    %v5992 = vunpack.c.l.b16 %v5864
    %v5993 = vunpack.c.l.b16 %v5865
    %v5994 = vunpack.c.l.b16 %v5866
    %v5995 = vunpack.c.l.b16 %v5867
    %v5996 = vunpack.c.l.b16 %v5868
    %v5997 = vunpack.c.l.b16 %v5869
    %v5998 = vunpack.c.l.b16 %v5870
    %v5999 = vunpack.c.l.b16 %v5871
    %v6000 = vunpack.c.l.b16 %v5872
    %v6001 = vunpack.c.l.b16 %v5873
    %v6002 = vunpack.c.l.b16 %v5874
    %v6003 = vunpack.c.l.b16 %v5875
    %v6004 = vunpack.c.l.b16 %v5876
    %v6005 = vunpack.c.l.b16 %v5877
    %v6006 = vunpack.c.l.b16 %v5878
    %v6007 = vunpack.c.l.b16 %v5879
    %v6008 = vunpack.c.l.b16 %v5880
    %v6009 = vunpack.c.l.b16 %v5881
    %v6010 = vunpack.c.l.b16 %v5882
    %v6011 = vunpack.c.l.b16 %v5883
    %v6012 = vunpack.c.l.b16 %v5884
    %v6013 = vunpack.c.l.b16 %v5885
    %v6014 = vunpack.c.l.b16 %v5886
    %v6015 = vunpack.c.l.b16 %v5887
    %v6016 = vunpack.c.l.b16 %v5888
    %v6017 = vunpack.c.l.b16 %v5889
    %v6018 = vunpack.c.l.b16 %v5890
    %v6019 = vunpack.c.l.b16 %v5891
    %v6020 = vunpack.c.l.b16 %v5892
    %v6021 = vunpack.c.l.b16 %v5893
    %v6022 = vunpack.c.l.b16 %v5894
    %v6023 = vunpack.c.l.b16 %v5895
    %v6024 = vunpack.c.l.b16 %v5896
    %v6025 = vunpack.c.l.b16 %v5897
    %v6026 = vunpack.c.l.b16 %v5898
    %v6027 = vunpack.c.l.b16 %v5899
    %v6028 = vunpack.c.l.b16 %v5900
    %v6029 = vunpack.c.l.b16 %v5901
    %v6030 = vunpack.c.l.b16 %v5902
    %v6031 = vunpack.c.l.b16 %v5903
    %v6032 = vunpack.c.l.b16 %v5904
    %v6033 = vunpack.c.l.b16 %v5905
    %v6034 = vunpack.c.l.b16 %v5906
    %v6035 = vunpack.c.l.b16 %v5907
    %v6036 = vunpack.c.l.b16 %v5908
    %v6037 = vpack.c.b16 %v5974, %v5973
    %v6038 = vpack.c.b16 %v5976, %v5975
    %v6039 = vpack.c.b16 %v5978, %v5977
    %v6040 = vpack.c.b16 %v5980, %v5979
    %v6041 = vpack.c.b16 %v5982, %v5981
    %v6042 = vpack.c.b16 %v5984, %v5983
    %v6043 = vpack.c.b16 %v5986, %v5985
    %v6044 = vpack.c.b16 %v5988, %v5987
    %v6045 = vpack.c.b16 %v5990, %v5989
    %v6046 = vpack.c.b16 %v5992, %v5991
    %v6047 = vpack.c.b16 %v5994, %v5993
    %v6048 = vpack.c.b16 %v5996, %v5995
    %v6049 = vpack.c.b16 %v5998, %v5997
    %v6050 = vpack.c.b16 %v6000, %v5999
    %v6051 = vpack.c.b16 %v6002, %v6001
    %v6052 = vpack.c.b16 %v6004, %v6003
    %v6053 = vpack.c.b16 %v6006, %v6005
    %v6054 = vpack.c.b16 %v6008, %v6007
    %v6055 = vpack.c.b16 %v6010, %v6009
    %v6056 = vpack.c.b16 %v6012, %v6011
    %v6057 = vpack.c.b16 %v6014, %v6013
    %v6058 = vpack.c.b16 %v6016, %v6015
    %v6059 = vpack.c.b16 %v6018, %v6017
    %v6060 = vpack.c.b16 %v6020, %v6019
    %v6061 = vpack.c.b16 %v6022, %v6021
    %v6062 = vpack.c.b16 %v6024, %v6023
    %v6063 = vpack.c.b16 %v6026, %v6025
    %v6064 = vpack.c.b16 %v6028, %v6027
    %v6065 = vpack.c.b16 %v6030, %v6029
    %v6066 = vpack.c.b16 %v6032, %v6031
    %v6067 = vpack.c.b16 %v6034, %v6033
    %v6068 = vpack.c.b16 %v6036, %v6035
    %6101 = vmatprep.subr.bf16.mxu0 0
    %6102 = vmatpush1.bf16.msra.mxu0 %v6044
    %6103 = vmatprep.subr.bf16.mxu0 0
    %6104 = vmatpush1.bf16.msra.mxu0 %v6043
    %6105 = vmatprep.subr.bf16.mxu0 0
    %6106 = vmatpush1.bf16.msra.mxu0 %v6042
    %6107 = vmatprep.subr.bf16.mxu0 0
    %6108 = vmatpush1.bf16.msra.mxu0 %v6041
    %6109 = vmatprep.subr.bf16.mxu0 0
    %6110 = vmatpush1.bf16.msra.mxu0 %v6040
    %6111 = vmatprep.subr.bf16.mxu0 0
    %6112 = vmatpush1.bf16.msra.mxu0 %v6039
    %6113 = vmatprep.subr.bf16.mxu0 0
    %6114 = vmatpush1.bf16.msra.mxu0 %v6038
    %6115 = vmatprep.subr.bf16.mxu0 0
    %6116 = vmatpush1.bf16.msra.mxu0 %v6037
    %6117 = vmatprep.subr.bf16.mxu0 0
    %6118 = vmatpush2.bf16.msra.mxu0 %v6052
    %6119 = vmatprep.subr.bf16.mxu0 0
    %6120 = vmatpush2.bf16.msra.mxu0 %v6051
    %6121 = vmatprep.subr.bf16.mxu0 0
    %6122 = vmatpush2.bf16.msra.mxu0 %v6050
    %6123 = vmatprep.subr.bf16.mxu0 0
    %6124 = vmatpush2.bf16.msra.mxu0 %v6049
    %6125 = vmatprep.subr.bf16.mxu0 0
    %6126 = vmatpush2.bf16.msra.mxu0 %v6048
    %6127 = vmatprep.subr.bf16.mxu0 0
    %6128 = vmatpush2.bf16.msra.mxu0 %v6047
    %6129 = vmatprep.subr.bf16.mxu0 0
    %6130 = vmatpush2.bf16.msra.mxu0 %v6046
    %6131 = vmatprep.subr.bf16.mxu0 0
    %6132 = vmatpush2.bf16.msra.mxu0 %v6045
    %6133 = vmatprep.mubr.bf16.mxu0 %v5842
    %6134 = vmatmul.mubr.bf16.gmra.mxu0 %v5841
    %v6135 = vpop.f32.mrf.mxu0
    %v6136 = vadd.f32 0.0, %v6135
    %v6137 = vpop.f32.mrf.mxu0
    %v6138 = vpop.f32.mrf.mxu0
    %v6139 = vadd.f32 0.0, %v6138
    %v6140 = vpop.f32.mrf.mxu0
    %6141 = vdwg.mxu0
    %6142 = vmatprep.subr.bf16.mxu0 0
    %6143 = vmatpush1.bf16.msra.mxu0 %v6060
    %6144 = vmatprep.subr.bf16.mxu0 0
    %6145 = vmatpush1.bf16.msra.mxu0 %v6059
    %6146 = vmatprep.subr.bf16.mxu0 0
    %6147 = vmatpush1.bf16.msra.mxu0 %v6058
    %6148 = vmatprep.subr.bf16.mxu0 0
    %6149 = vmatpush1.bf16.msra.mxu0 %v6057
    %6150 = vmatprep.subr.bf16.mxu0 0
    %6151 = vmatpush1.bf16.msra.mxu0 %v6056
    %6152 = vmatprep.subr.bf16.mxu0 0
    %6153 = vmatpush1.bf16.msra.mxu0 %v6055
    %6154 = vmatprep.subr.bf16.mxu0 0
    %6155 = vmatpush1.bf16.msra.mxu0 %v6054
    %6156 = vmatprep.subr.bf16.mxu0 0
    %6157 = vmatpush1.bf16.msra.mxu0 %v6053
    %6158 = vmatprep.subr.bf16.mxu0 0
    %6159 = vmatpush2.bf16.msra.mxu0 %v6068
    %6160 = vmatprep.subr.bf16.mxu0 0
    %6161 = vmatpush2.bf16.msra.mxu0 %v6067
    %6162 = vmatprep.subr.bf16.mxu0 0
    %6163 = vmatpush2.bf16.msra.mxu0 %v6066
    %6164 = vmatprep.subr.bf16.mxu0 0
    %6165 = vmatpush2.bf16.msra.mxu0 %v6065
    %6166 = vmatprep.subr.bf16.mxu0 0
    %6167 = vmatpush2.bf16.msra.mxu0 %v6064
    %6168 = vmatprep.subr.bf16.mxu0 0
    %6169 = vmatpush2.bf16.msra.mxu0 %v6063
    %6170 = vmatprep.subr.bf16.mxu0 0
    %6171 = vmatpush2.bf16.msra.mxu0 %v6062
    %6172 = vmatprep.subr.bf16.mxu0 0
    %6173 = vmatpush2.bf16.msra.mxu0 %v6061
    %6174 = vmatprep.mubr.bf16.mxu0 %v5844
    %6175 = vmatmul.mubr.bf16.gmra.mxu0 %v5843
    %v6176 = vpop.f32.mrf.mxu0
    %v6177 = vadd.f32 %v6136, %v6176
    %v6178 = vpop.f32.mrf.mxu0
    %v6179 = vpop.f32.mrf.mxu0
    %v6180 = vadd.f32 %v6139, %v6179
    %v6181 = vpop.f32.mrf.mxu0
    %6182 = vdwg.mxu0
    %v6247 = vunpack.c.l.b16 %v5613
    %v6248 = vunpack.c.l.b16 %v5614
    %v6249 = vunpack.c.l.b16 %v5615
    %v6250 = vunpack.c.l.b16 %v5616
    %v6251 = vunpack.c.l.b16 %v5617
    %v6252 = vunpack.c.l.b16 %v5618
    %v6253 = vunpack.c.l.b16 %v5619
    %v6254 = vunpack.c.l.b16 %v5620
    %v6255 = vunpack.c.l.b16 %v5621
    %v6256 = vunpack.c.l.b16 %v5622
    %v6257 = vunpack.c.l.b16 %v5623
    %v6258 = vunpack.c.l.b16 %v5624
    %v6259 = vunpack.c.l.b16 %v5625
    %v6260 = vunpack.c.l.b16 %v5626
    %v6261 = vunpack.c.l.b16 %v5627
    %v6262 = vunpack.c.l.b16 %v5628
    %v6263 = vunpack.c.l.b16 %v5629
    %v6264 = vunpack.c.l.b16 %v5630
    %v6265 = vunpack.c.l.b16 %v5631
    %v6266 = vunpack.c.l.b16 %v5632
    %v6267 = vunpack.c.l.b16 %v5633
    %v6268 = vunpack.c.l.b16 %v5634
    %v6269 = vunpack.c.l.b16 %v5635
    %v6270 = vunpack.c.l.b16 %v5636
    %v6271 = vunpack.c.l.b16 %v5637
    %v6272 = vunpack.c.l.b16 %v5638
    %v6273 = vunpack.c.l.b16 %v5639
    %v6274 = vunpack.c.l.b16 %v5640
    %v6275 = vunpack.c.l.b16 %v5641
    %v6276 = vunpack.c.l.b16 %v5642
    %v6277 = vunpack.c.l.b16 %v5643
    %v6278 = vunpack.c.l.b16 %v5644
    %v6279 = vunpack.c.l.b16 %v5645
    %v6280 = vunpack.c.l.b16 %v5646
    %v6281 = vunpack.c.l.b16 %v5647
    %v6282 = vunpack.c.l.b16 %v5648
    %v6283 = vunpack.c.l.b16 %v5649
    %v6284 = vunpack.c.l.b16 %v5650
    %v6285 = vunpack.c.l.b16 %v5651
    %v6286 = vunpack.c.l.b16 %v5652
    %v6287 = vunpack.c.l.b16 %v5653
    %v6288 = vunpack.c.l.b16 %v5654
    %v6289 = vunpack.c.l.b16 %v5655
    %v6290 = vunpack.c.l.b16 %v5656
    %v6291 = vunpack.c.l.b16 %v5657
    %v6292 = vunpack.c.l.b16 %v5658
    %v6293 = vunpack.c.l.b16 %v5659
    %v6294 = vunpack.c.l.b16 %v5660
    %v6295 = vunpack.c.l.b16 %v5661
    %v6296 = vunpack.c.l.b16 %v5662
    %v6297 = vunpack.c.l.b16 %v5663
    %v6298 = vunpack.c.l.b16 %v5664
    %v6299 = vunpack.c.l.b16 %v5665
    %v6300 = vunpack.c.l.b16 %v5666
    %v6301 = vunpack.c.l.b16 %v5667
    %v6302 = vunpack.c.l.b16 %v5668
    %v6303 = vunpack.c.l.b16 %v5669
    %v6304 = vunpack.c.l.b16 %v5670
    %v6305 = vunpack.c.l.b16 %v5671
    %v6306 = vunpack.c.l.b16 %v5672
    %v6307 = vunpack.c.l.b16 %v5673
    %v6308 = vunpack.c.l.b16 %v5674
    %v6309 = vunpack.c.l.b16 %v5675
    %v6310 = vunpack.c.l.b16 %v5676
    %v6311 = vpack.c.b16 %v6248, %v6247
    %v6312 = vpack.c.b16 %v6250, %v6249
    %v6313 = vpack.c.b16 %v6252, %v6251
    %v6314 = vpack.c.b16 %v6254, %v6253
    %v6315 = vpack.c.b16 %v6256, %v6255
    %v6316 = vpack.c.b16 %v6258, %v6257
    %v6317 = vpack.c.b16 %v6260, %v6259
    %v6318 = vpack.c.b16 %v6262, %v6261
    %v6319 = vpack.c.b16 %v6264, %v6263
    %v6320 = vpack.c.b16 %v6266, %v6265
    %v6321 = vpack.c.b16 %v6268, %v6267
    %v6322 = vpack.c.b16 %v6270, %v6269
    %v6323 = vpack.c.b16 %v6272, %v6271
    %v6324 = vpack.c.b16 %v6274, %v6273
    %v6325 = vpack.c.b16 %v6276, %v6275
    %v6326 = vpack.c.b16 %v6278, %v6277
    %v6327 = vpack.c.b16 %v6280, %v6279
    %v6328 = vpack.c.b16 %v6282, %v6281
    %v6329 = vpack.c.b16 %v6284, %v6283
    %v6330 = vpack.c.b16 %v6286, %v6285
    %v6331 = vpack.c.b16 %v6288, %v6287
    %v6332 = vpack.c.b16 %v6290, %v6289
    %v6333 = vpack.c.b16 %v6292, %v6291
    %v6334 = vpack.c.b16 %v6294, %v6293
    %v6335 = vpack.c.b16 %v6296, %v6295
    %v6336 = vpack.c.b16 %v6298, %v6297
    %v6337 = vpack.c.b16 %v6300, %v6299
    %v6338 = vpack.c.b16 %v6302, %v6301
    %v6339 = vpack.c.b16 %v6304, %v6303
    %v6340 = vpack.c.b16 %v6306, %v6305
    %v6341 = vpack.c.b16 %v6308, %v6307
    %v6342 = vpack.c.b16 %v6310, %v6309
    %6375 = vmatprep.subr.bf16.mxu0 0
    %6376 = vmatpush1.bf16.msra.mxu0 %v6318
    %6377 = vmatprep.subr.bf16.mxu0 0
    %6378 = vmatpush1.bf16.msra.mxu0 %v6317
    %6379 = vmatprep.subr.bf16.mxu0 0
    %6380 = vmatpush1.bf16.msra.mxu0 %v6316
    %6381 = vmatprep.subr.bf16.mxu0 0
    %6382 = vmatpush1.bf16.msra.mxu0 %v6315
    %6383 = vmatprep.subr.bf16.mxu0 0
    %6384 = vmatpush1.bf16.msra.mxu0 %v6314
    %6385 = vmatprep.subr.bf16.mxu0 0
    %6386 = vmatpush1.bf16.msra.mxu0 %v6313
    %6387 = vmatprep.subr.bf16.mxu0 0
    %6388 = vmatpush1.bf16.msra.mxu0 %v6312
    %6389 = vmatprep.subr.bf16.mxu0 0
    %6390 = vmatpush1.bf16.msra.mxu0 %v6311
    %6391 = vmatprep.subr.bf16.mxu0 0
    %6392 = vmatpush2.bf16.msra.mxu0 %v6326
    %6393 = vmatprep.subr.bf16.mxu0 0
    %6394 = vmatpush2.bf16.msra.mxu0 %v6325
    %6395 = vmatprep.subr.bf16.mxu0 0
    %6396 = vmatpush2.bf16.msra.mxu0 %v6324
    %6397 = vmatprep.subr.bf16.mxu0 0
    %6398 = vmatpush2.bf16.msra.mxu0 %v6323
    %6399 = vmatprep.subr.bf16.mxu0 0
    %6400 = vmatpush2.bf16.msra.mxu0 %v6322
    %6401 = vmatprep.subr.bf16.mxu0 0
    %6402 = vmatpush2.bf16.msra.mxu0 %v6321
    %6403 = vmatprep.subr.bf16.mxu0 0
    %6404 = vmatpush2.bf16.msra.mxu0 %v6320
    %6405 = vmatprep.subr.bf16.mxu0 0
    %6406 = vmatpush2.bf16.msra.mxu0 %v6319
    %6407 = vmatprep.mubr.bf16.mxu0 %v5609
    %6408 = vmatmul.mubr.bf16.gmra.mxu0 %v5608
    %v6409 = vpop.f32.mrf.mxu0
    %v6410 = vadd.f32 %v6177, %v6409
    %v6411 = vpop.f32.mrf.mxu0
    %v6412 = vpop.f32.mrf.mxu0
    %v6413 = vadd.f32 %v6180, %v6412
    %v6414 = vpop.f32.mrf.mxu0
    %6415 = vdwg.mxu0
    %6416 = vmatprep.subr.bf16.mxu0 0
    %6417 = vmatpush1.bf16.msra.mxu0 %v6334
    %6418 = vmatprep.subr.bf16.mxu0 0
    %6419 = vmatpush1.bf16.msra.mxu0 %v6333
    %6420 = vmatprep.subr.bf16.mxu0 0
    %6421 = vmatpush1.bf16.msra.mxu0 %v6332
    %6422 = vmatprep.subr.bf16.mxu0 0
    %6423 = vmatpush1.bf16.msra.mxu0 %v6331
    %6424 = vmatprep.subr.bf16.mxu0 0
    %6425 = vmatpush1.bf16.msra.mxu0 %v6330
    %6426 = vmatprep.subr.bf16.mxu0 0
    %6427 = vmatpush1.bf16.msra.mxu0 %v6329
    %6428 = vmatprep.subr.bf16.mxu0 0
    %6429 = vmatpush1.bf16.msra.mxu0 %v6328
    %6430 = vmatprep.subr.bf16.mxu0 0
    %6431 = vmatpush1.bf16.msra.mxu0 %v6327
    %6432 = vmatprep.subr.bf16.mxu0 0
    %6433 = vmatpush2.bf16.msra.mxu0 %v6342
    %6434 = vmatprep.subr.bf16.mxu0 0
    %6435 = vmatpush2.bf16.msra.mxu0 %v6341
    %6436 = vmatprep.subr.bf16.mxu0 0
    %6437 = vmatpush2.bf16.msra.mxu0 %v6340
    %6438 = vmatprep.subr.bf16.mxu0 0
    %6439 = vmatpush2.bf16.msra.mxu0 %v6339
    %6440 = vmatprep.subr.bf16.mxu0 0
    %6441 = vmatpush2.bf16.msra.mxu0 %v6338
    %6442 = vmatprep.subr.bf16.mxu0 0
    %6443 = vmatpush2.bf16.msra.mxu0 %v6337
    %6444 = vmatprep.subr.bf16.mxu0 0
    %6445 = vmatpush2.bf16.msra.mxu0 %v6336
    %6446 = vmatprep.subr.bf16.mxu0 0
    %6447 = vmatpush2.bf16.msra.mxu0 %v6335
    %6448 = vmatprep.mubr.bf16.mxu0 %v5611
    %6449 = vmatmul.mubr.bf16.gmra.mxu0 %v5610
    %v6450 = vpop.f32.mrf.mxu0
    %v6451 = vadd.f32 %v6410, %v6450
    %v6452 = vpop.f32.mrf.mxu0
    %v6453 = vpop.f32.mrf.mxu0
    %v6454 = vadd.f32 %v6413, %v6453
    %v6455 = vpop.f32.mrf.mxu0
    %6456 = vdwg.mxu0
    %v6457 = vld [vmem:[%s5439 + $0x20] sm:$0xff]
    %v6458 = vld [vmem:[%s5439 + $0x28] sm:$0xff]
    %v6459 = vld [vmem:[%s5439 + $0x60] sm:$0xff]
    %v6460 = vld [vmem:[%s5439 + $0x68] sm:$0xff]
    %v6461 = vld [vmem:[%s5439 + $0xa0] sm:$0xff]
    %v6462 = vld [vmem:[%s5439 + $0xa8] sm:$0xff]
    %v6463 = vld [vmem:[%s5439 + $0xe0] sm:$0xff]
    %v6464 = vld [vmem:[%s5439 + $0xe8] sm:$0xff]
    %v6465 = vld [vmem:[%s5448 + $0x8] sm:$0xf]
    %v6467 = vlaneseq
    %v6468 = vshrl.u32 %v6467, 7
    %v6469 = vsub.s32 0, %v6468
    %v6470 = vrot.slane %v6465, %v6469
    %v6471 = vlaneseq
    %v6472 = vshrl.u32 %v6471, 7
    %v6473 = vsub.s32 1, %v6472
    %v6474 = vrot.slane %v6465, %v6473
    %v6475 = vlaneseq
    %v6476 = vshrl.u32 %v6475, 7
    %v6477 = vsub.s32 2, %v6476
    %v6478 = vrot.slane %v6465, %v6477
    %v6479 = vlaneseq
    %v6480 = vshrl.u32 %v6479, 7
    %v6481 = vsub.s32 3, %v6480
    %v6482 = vrot.slane %v6465, %v6481
    %v6495 = vunpack.c.l.b16 %v6457
    %v6496 = vunpack.c.h.b16 %v6457
    %v6497 = vunpack.c.l.b16 %v6458
    %v6498 = vunpack.c.h.b16 %v6458
    %v6499 = vunpack.c.l.b16 %v6459
    %v6500 = vunpack.c.h.b16 %v6459
    %v6501 = vunpack.c.l.b16 %v6460
    %v6502 = vunpack.c.h.b16 %v6460
    %v6503 = vunpack.c.l.b16 %v6461
    %v6504 = vunpack.c.h.b16 %v6461
    %v6505 = vunpack.c.l.b16 %v6462
    %v6506 = vunpack.c.h.b16 %v6462
    %v6507 = vunpack.c.l.b16 %v6463
    %v6508 = vunpack.c.h.b16 %v6463
    %v6509 = vunpack.c.l.b16 %v6464
    %v6510 = vunpack.c.h.b16 %v6464
    %v6511 = vpack.c.b16 %v6499, %v6495
    %v6512 = vpack.c.b16 %v6500, %v6496
    %v6513 = vpack.c.b16 %v6501, %v6497
    %v6514 = vpack.c.b16 %v6502, %v6498
    %v6515 = vpack.c.b16 %v6507, %v6503
    %v6516 = vpack.c.b16 %v6508, %v6504
    %v6517 = vpack.c.b16 %v6509, %v6505
    %v6518 = vpack.c.b16 %v6510, %v6506
    %6527 = vmatprep.subr.bf16.mxu0 0
    %6528 = vmatpush1.bf16.msra.mxu0 0
    %6529 = vmatprep.subr.bf16.mxu0 0
    %6530 = vmatpush1.bf16.msra.mxu0 0
    %6531 = vmatprep.subr.bf16.mxu0 0
    %6532 = vmatpush1.bf16.msra.mxu0 0
    %6533 = vmatprep.subr.bf16.mxu0 0
    %6534 = vmatpush1.bf16.msra.mxu0 0
    %6535 = vmatprep.subr.bf16.mxu0 0
    %6536 = vmatpush1.bf16.msra.mxu0 0
    %6537 = vmatprep.subr.bf16.mxu0 0
    %6538 = vmatpush1.bf16.msra.mxu0 0
    %6539 = vmatprep.subr.bf16.mxu0 %v6516
    %6540 = vmatpush1.bf16.msra.mxu0 %v6515
    %6541 = vmatprep.subr.bf16.mxu0 %v6512
    %6542 = vmatpush1.bf16.msra.mxu0 %v6511
    %6543 = vmatprep.subr.bf16.mxu0 0
    %6544 = vmatpush2.bf16.msra.mxu0 0
    %6545 = vmatprep.subr.bf16.mxu0 0
    %6546 = vmatpush2.bf16.msra.mxu0 0
    %6547 = vmatprep.subr.bf16.mxu0 0
    %6548 = vmatpush2.bf16.msra.mxu0 0
    %6549 = vmatprep.subr.bf16.mxu0 0
    %6550 = vmatpush2.bf16.msra.mxu0 0
    %6551 = vmatprep.subr.bf16.mxu0 0
    %6552 = vmatpush2.bf16.msra.mxu0 0
    %6553 = vmatprep.subr.bf16.mxu0 0
    %6554 = vmatpush2.bf16.msra.mxu0 0
    %6555 = vmatprep.subr.bf16.mxu0 0
    %6556 = vmatpush2.bf16.msra.mxu0 0
    %6557 = vmatprep.subr.bf16.mxu0 0
    %6558 = vmatpush2.bf16.msra.mxu0 0
    %6559 = vmatprep.mubr.bf16.mxu0 0
    %6560 = vmatmul.mubr.bf16.gmra.mxu0 %v5512
    %v6561 = vpop.f32.mrf.mxu0
    %v6562 = vadd.f32 %v6470, %v6561
    %v6563 = vpop.f32.mrf.mxu0
    %v6564 = vadd.f32 %v6474, %v6563
    %v6565 = vpop.f32.mrf.mxu0
    %v6566 = vadd.f32 %v6470, %v6565
    %v6567 = vpop.f32.mrf.mxu0
    %v6568 = vadd.f32 %v6474, %v6567
    %6569 = vdwg.mxu0
    %6570 = vmatprep.subr.bf16.mxu0 0
    %6571 = vmatpush1.bf16.msra.mxu0 0
    %6572 = vmatprep.subr.bf16.mxu0 0
    %6573 = vmatpush1.bf16.msra.mxu0 0
    %6574 = vmatprep.subr.bf16.mxu0 0
    %6575 = vmatpush1.bf16.msra.mxu0 0
    %6576 = vmatprep.subr.bf16.mxu0 0
    %6577 = vmatpush1.bf16.msra.mxu0 0
    %6578 = vmatprep.subr.bf16.mxu0 0
    %6579 = vmatpush1.bf16.msra.mxu0 0
    %6580 = vmatprep.subr.bf16.mxu0 0
    %6581 = vmatpush1.bf16.msra.mxu0 0
    %6582 = vmatprep.subr.bf16.mxu0 %v6518
    %6583 = vmatpush1.bf16.msra.mxu0 %v6517
    %6584 = vmatprep.subr.bf16.mxu0 %v6514
    %6585 = vmatpush1.bf16.msra.mxu0 %v6513
    %6586 = vmatprep.subr.bf16.mxu0 0
    %6587 = vmatpush2.bf16.msra.mxu0 0
    %6588 = vmatprep.subr.bf16.mxu0 0
    %6589 = vmatpush2.bf16.msra.mxu0 0
    %6590 = vmatprep.subr.bf16.mxu0 0
    %6591 = vmatpush2.bf16.msra.mxu0 0
    %6592 = vmatprep.subr.bf16.mxu0 0
    %6593 = vmatpush2.bf16.msra.mxu0 0
    %6594 = vmatprep.subr.bf16.mxu0 0
    %6595 = vmatpush2.bf16.msra.mxu0 0
    %6596 = vmatprep.subr.bf16.mxu0 0
    %6597 = vmatpush2.bf16.msra.mxu0 0
    %6598 = vmatprep.subr.bf16.mxu0 0
    %6599 = vmatpush2.bf16.msra.mxu0 0
    %6600 = vmatprep.subr.bf16.mxu0 0
    %6601 = vmatpush2.bf16.msra.mxu0 0
    %6602 = vmatprep.mubr.bf16.mxu0 0
    %6603 = vmatmul.mubr.bf16.gmra.mxu0 %v5512
    %v6604 = vpop.f32.mrf.mxu0
    %v6605 = vadd.f32 %v6478, %v6604
    %v6606 = vpop.f32.mrf.mxu0
    %v6607 = vadd.f32 %v6482, %v6606
    %v6608 = vpop.f32.mrf.mxu0
    %v6609 = vadd.f32 %v6478, %v6608
    %v6610 = vpop.f32.mrf.mxu0
    %v6611 = vadd.f32 %v6482, %v6610
    %6612 = vdwg.mxu0
    %v6613 = vmax.f32 %v6562, 0.0
    %v6614 = vmax.f32 %v6564, 0.0
    %v6615 = vmax.f32 %v6605, 0.0
    %v6616 = vmax.f32 %v6607, 0.0
    %v6617 = vmax.f32 %v6566, 0.0
    %v6618 = vmax.f32 %v6568, 0.0
    %v6619 = vmax.f32 %v6609, 0.0
    %v6620 = vmax.f32 %v6611, 0.0
    %v6621 = vpack.c.bf16 %v6617, %v6613
    %v6622 = vpack.c.bf16 %v6618, %v6614
    %v6623 = vpack.c.bf16 %v6619, %v6615
    %v6624 = vpack.c.bf16 %v6620, %v6616
    %v6625 = vld [vmem:[%s5612 + $0x200] sm:$0xf]
    %v6626 = vld [vmem:[%s5612 + $0x204] sm:$0xf]
    %v6627 = vld [vmem:[%s5612 + $0x208] sm:$0xf]
    %v6628 = vld [vmem:[%s5612 + $0x20c] sm:$0xf]
    %v6629 = vld [vmem:[%s5612 + $0x210] sm:$0xf]
    %v6630 = vld [vmem:[%s5612 + $0x214] sm:$0xf]
    %v6631 = vld [vmem:[%s5612 + $0x218] sm:$0xf]
    %v6632 = vld [vmem:[%s5612 + $0x21c] sm:$0xf]
    %v6633 = vld [vmem:[%s5612 + $0x220] sm:$0xf]
    %v6634 = vld [vmem:[%s5612 + $0x224] sm:$0xf]
    %v6635 = vld [vmem:[%s5612 + $0x228] sm:$0xf]
    %v6636 = vld [vmem:[%s5612 + $0x22c] sm:$0xf]
    %v6637 = vld [vmem:[%s5612 + $0x230] sm:$0xf]
    %v6638 = vld [vmem:[%s5612 + $0x234] sm:$0xf]
    %v6639 = vld [vmem:[%s5612 + $0x238] sm:$0xf]
    %v6640 = vld [vmem:[%s5612 + $0x23c] sm:$0xf]
    %v6641 = vld [vmem:[%s5612 + $0x240] sm:$0xf]
    %v6642 = vld [vmem:[%s5612 + $0x244] sm:$0xf]
    %v6643 = vld [vmem:[%s5612 + $0x248] sm:$0xf]
    %v6644 = vld [vmem:[%s5612 + $0x24c] sm:$0xf]
    %v6645 = vld [vmem:[%s5612 + $0x250] sm:$0xf]
    %v6646 = vld [vmem:[%s5612 + $0x254] sm:$0xf]
    %v6647 = vld [vmem:[%s5612 + $0x258] sm:$0xf]
    %v6648 = vld [vmem:[%s5612 + $0x25c] sm:$0xf]
    %v6649 = vld [vmem:[%s5612 + $0x260] sm:$0xf]
    %v6650 = vld [vmem:[%s5612 + $0x264] sm:$0xf]
    %v6651 = vld [vmem:[%s5612 + $0x268] sm:$0xf]
    %v6652 = vld [vmem:[%s5612 + $0x26c] sm:$0xf]
    %v6653 = vld [vmem:[%s5612 + $0x270] sm:$0xf]
    %v6654 = vld [vmem:[%s5612 + $0x274] sm:$0xf]
    %v6655 = vld [vmem:[%s5612 + $0x278] sm:$0xf]
    %v6656 = vld [vmem:[%s5612 + $0x27c] sm:$0xf]
    %v6657 = vld [vmem:[%s5612 + $0x280] sm:$0xf]
    %v6658 = vld [vmem:[%s5612 + $0x284] sm:$0xf]
    %v6659 = vld [vmem:[%s5612 + $0x288] sm:$0xf]
    %v6660 = vld [vmem:[%s5612 + $0x28c] sm:$0xf]
    %v6661 = vld [vmem:[%s5612 + $0x290] sm:$0xf]
    %v6662 = vld [vmem:[%s5612 + $0x294] sm:$0xf]
    %v6663 = vld [vmem:[%s5612 + $0x298] sm:$0xf]
    %v6664 = vld [vmem:[%s5612 + $0x29c] sm:$0xf]
    %v6665 = vld [vmem:[%s5612 + $0x2a0] sm:$0xf]
    %v6666 = vld [vmem:[%s5612 + $0x2a4] sm:$0xf]
    %v6667 = vld [vmem:[%s5612 + $0x2a8] sm:$0xf]
    %v6668 = vld [vmem:[%s5612 + $0x2ac] sm:$0xf]
    %v6669 = vld [vmem:[%s5612 + $0x2b0] sm:$0xf]
    %v6670 = vld [vmem:[%s5612 + $0x2b4] sm:$0xf]
    %v6671 = vld [vmem:[%s5612 + $0x2b8] sm:$0xf]
    %v6672 = vld [vmem:[%s5612 + $0x2bc] sm:$0xf]
    %v6673 = vld [vmem:[%s5612 + $0x2c0] sm:$0xf]
    %v6674 = vld [vmem:[%s5612 + $0x2c4] sm:$0xf]
    %v6675 = vld [vmem:[%s5612 + $0x2c8] sm:$0xf]
    %v6676 = vld [vmem:[%s5612 + $0x2cc] sm:$0xf]
    %v6677 = vld [vmem:[%s5612 + $0x2d0] sm:$0xf]
    %v6678 = vld [vmem:[%s5612 + $0x2d4] sm:$0xf]
    %v6679 = vld [vmem:[%s5612 + $0x2d8] sm:$0xf]
    %v6680 = vld [vmem:[%s5612 + $0x2dc] sm:$0xf]
    %v6681 = vld [vmem:[%s5612 + $0x2e0] sm:$0xf]
    %v6682 = vld [vmem:[%s5612 + $0x2e4] sm:$0xf]
    %v6683 = vld [vmem:[%s5612 + $0x2e8] sm:$0xf]
    %v6684 = vld [vmem:[%s5612 + $0x2ec] sm:$0xf]
    %v6685 = vld [vmem:[%s5612 + $0x2f0] sm:$0xf]
    %v6686 = vld [vmem:[%s5612 + $0x2f4] sm:$0xf]
    %v6687 = vld [vmem:[%s5612 + $0x2f8] sm:$0xf]
    %v6688 = vld [vmem:[%s5612 + $0x2fc] sm:$0xf]
    %v6753 = vunpack.c.l.b16 %v6625
    %v6754 = vunpack.c.l.b16 %v6626
    %v6755 = vunpack.c.l.b16 %v6627
    %v6756 = vunpack.c.l.b16 %v6628
    %v6757 = vunpack.c.l.b16 %v6629
    %v6758 = vunpack.c.l.b16 %v6630
    %v6759 = vunpack.c.l.b16 %v6631
    %v6760 = vunpack.c.l.b16 %v6632
    %v6761 = vunpack.c.l.b16 %v6633
    %v6762 = vunpack.c.l.b16 %v6634
    %v6763 = vunpack.c.l.b16 %v6635
    %v6764 = vunpack.c.l.b16 %v6636
    %v6765 = vunpack.c.l.b16 %v6637
    %v6766 = vunpack.c.l.b16 %v6638
    %v6767 = vunpack.c.l.b16 %v6639
    %v6768 = vunpack.c.l.b16 %v6640
    %v6769 = vunpack.c.l.b16 %v6641
    %v6770 = vunpack.c.l.b16 %v6642
    %v6771 = vunpack.c.l.b16 %v6643
    %v6772 = vunpack.c.l.b16 %v6644
    %v6773 = vunpack.c.l.b16 %v6645
    %v6774 = vunpack.c.l.b16 %v6646
    %v6775 = vunpack.c.l.b16 %v6647
    %v6776 = vunpack.c.l.b16 %v6648
    %v6777 = vunpack.c.l.b16 %v6649
    %v6778 = vunpack.c.l.b16 %v6650
    %v6779 = vunpack.c.l.b16 %v6651
    %v6780 = vunpack.c.l.b16 %v6652
    %v6781 = vunpack.c.l.b16 %v6653
    %v6782 = vunpack.c.l.b16 %v6654
    %v6783 = vunpack.c.l.b16 %v6655
    %v6784 = vunpack.c.l.b16 %v6656
    %v6785 = vunpack.c.l.b16 %v6657
    %v6786 = vunpack.c.l.b16 %v6658
    %v6787 = vunpack.c.l.b16 %v6659
    %v6788 = vunpack.c.l.b16 %v6660
    %v6789 = vunpack.c.l.b16 %v6661
    %v6790 = vunpack.c.l.b16 %v6662
    %v6791 = vunpack.c.l.b16 %v6663
    %v6792 = vunpack.c.l.b16 %v6664
    %v6793 = vunpack.c.l.b16 %v6665
    %v6794 = vunpack.c.l.b16 %v6666
    %v6795 = vunpack.c.l.b16 %v6667
    %v6796 = vunpack.c.l.b16 %v6668
    %v6797 = vunpack.c.l.b16 %v6669
    %v6798 = vunpack.c.l.b16 %v6670
    %v6799 = vunpack.c.l.b16 %v6671
    %v6800 = vunpack.c.l.b16 %v6672
    %v6801 = vunpack.c.l.b16 %v6673
    %v6802 = vunpack.c.l.b16 %v6674
    %v6803 = vunpack.c.l.b16 %v6675
    %v6804 = vunpack.c.l.b16 %v6676
    %v6805 = vunpack.c.l.b16 %v6677
    %v6806 = vunpack.c.l.b16 %v6678
    %v6807 = vunpack.c.l.b16 %v6679
    %v6808 = vunpack.c.l.b16 %v6680
    %v6809 = vunpack.c.l.b16 %v6681
    %v6810 = vunpack.c.l.b16 %v6682
    %v6811 = vunpack.c.l.b16 %v6683
    %v6812 = vunpack.c.l.b16 %v6684
    %v6813 = vunpack.c.l.b16 %v6685
    %v6814 = vunpack.c.l.b16 %v6686
    %v6815 = vunpack.c.l.b16 %v6687
    %v6816 = vunpack.c.l.b16 %v6688
    %v6817 = vpack.c.b16 %v6754, %v6753
    %v6818 = vpack.c.b16 %v6756, %v6755
    %v6819 = vpack.c.b16 %v6758, %v6757
    %v6820 = vpack.c.b16 %v6760, %v6759
    %v6821 = vpack.c.b16 %v6762, %v6761
    %v6822 = vpack.c.b16 %v6764, %v6763
    %v6823 = vpack.c.b16 %v6766, %v6765
    %v6824 = vpack.c.b16 %v6768, %v6767
    %v6825 = vpack.c.b16 %v6770, %v6769
    %v6826 = vpack.c.b16 %v6772, %v6771
    %v6827 = vpack.c.b16 %v6774, %v6773
    %v6828 = vpack.c.b16 %v6776, %v6775
    %v6829 = vpack.c.b16 %v6778, %v6777
    %v6830 = vpack.c.b16 %v6780, %v6779
    %v6831 = vpack.c.b16 %v6782, %v6781
    %v6832 = vpack.c.b16 %v6784, %v6783
    %v6833 = vpack.c.b16 %v6786, %v6785
    %v6834 = vpack.c.b16 %v6788, %v6787
    %v6835 = vpack.c.b16 %v6790, %v6789
    %v6836 = vpack.c.b16 %v6792, %v6791
    %v6837 = vpack.c.b16 %v6794, %v6793
    %v6838 = vpack.c.b16 %v6796, %v6795
    %v6839 = vpack.c.b16 %v6798, %v6797
    %v6840 = vpack.c.b16 %v6800, %v6799
    %v6841 = vpack.c.b16 %v6802, %v6801
    %v6842 = vpack.c.b16 %v6804, %v6803
    %v6843 = vpack.c.b16 %v6806, %v6805
    %v6844 = vpack.c.b16 %v6808, %v6807
    %v6845 = vpack.c.b16 %v6810, %v6809
    %v6846 = vpack.c.b16 %v6812, %v6811
    %v6847 = vpack.c.b16 %v6814, %v6813
    %v6848 = vpack.c.b16 %v6816, %v6815
    %6881 = vmatprep.subr.bf16.mxu0 0
    %6882 = vmatpush1.bf16.msra.mxu0 %v6824
    %6883 = vmatprep.subr.bf16.mxu0 0
    %6884 = vmatpush1.bf16.msra.mxu0 %v6823
    %6885 = vmatprep.subr.bf16.mxu0 0
    %6886 = vmatpush1.bf16.msra.mxu0 %v6822
    %6887 = vmatprep.subr.bf16.mxu0 0
    %6888 = vmatpush1.bf16.msra.mxu0 %v6821
    %6889 = vmatprep.subr.bf16.mxu0 0
    %6890 = vmatpush1.bf16.msra.mxu0 %v6820
    %6891 = vmatprep.subr.bf16.mxu0 0
    %6892 = vmatpush1.bf16.msra.mxu0 %v6819
    %6893 = vmatprep.subr.bf16.mxu0 0
    %6894 = vmatpush1.bf16.msra.mxu0 %v6818
    %6895 = vmatprep.subr.bf16.mxu0 0
    %6896 = vmatpush1.bf16.msra.mxu0 %v6817
    %6897 = vmatprep.subr.bf16.mxu0 0
    %6898 = vmatpush2.bf16.msra.mxu0 %v6832
    %6899 = vmatprep.subr.bf16.mxu0 0
    %6900 = vmatpush2.bf16.msra.mxu0 %v6831
    %6901 = vmatprep.subr.bf16.mxu0 0
    %6902 = vmatpush2.bf16.msra.mxu0 %v6830
    %6903 = vmatprep.subr.bf16.mxu0 0
    %6904 = vmatpush2.bf16.msra.mxu0 %v6829
    %6905 = vmatprep.subr.bf16.mxu0 0
    %6906 = vmatpush2.bf16.msra.mxu0 %v6828
    %6907 = vmatprep.subr.bf16.mxu0 0
    %6908 = vmatpush2.bf16.msra.mxu0 %v6827
    %6909 = vmatprep.subr.bf16.mxu0 0
    %6910 = vmatpush2.bf16.msra.mxu0 %v6826
    %6911 = vmatprep.subr.bf16.mxu0 0
    %6912 = vmatpush2.bf16.msra.mxu0 %v6825
    %6913 = vmatprep.mubr.bf16.mxu0 %v6622
    %6914 = vmatmul.mubr.bf16.gmra.mxu0 %v6621
    %v6915 = vpop.f32.mrf.mxu0
    %v6916 = vadd.f32 0.0, %v6915
    %v6917 = vpop.f32.mrf.mxu0
    %v6918 = vpop.f32.mrf.mxu0
    %v6919 = vadd.f32 0.0, %v6918
    %v6920 = vpop.f32.mrf.mxu0
    %6921 = vdwg.mxu0
    %6922 = vmatprep.subr.bf16.mxu0 0
    %6923 = vmatpush1.bf16.msra.mxu0 %v6840
    %6924 = vmatprep.subr.bf16.mxu0 0
    %6925 = vmatpush1.bf16.msra.mxu0 %v6839
    %6926 = vmatprep.subr.bf16.mxu0 0
    %6927 = vmatpush1.bf16.msra.mxu0 %v6838
    %6928 = vmatprep.subr.bf16.mxu0 0
    %6929 = vmatpush1.bf16.msra.mxu0 %v6837
    %6930 = vmatprep.subr.bf16.mxu0 0
    %6931 = vmatpush1.bf16.msra.mxu0 %v6836
    %6932 = vmatprep.subr.bf16.mxu0 0
    %6933 = vmatpush1.bf16.msra.mxu0 %v6835
    %6934 = vmatprep.subr.bf16.mxu0 0
    %6935 = vmatpush1.bf16.msra.mxu0 %v6834
    %6936 = vmatprep.subr.bf16.mxu0 0
    %6937 = vmatpush1.bf16.msra.mxu0 %v6833
    %6938 = vmatprep.subr.bf16.mxu0 0
    %6939 = vmatpush2.bf16.msra.mxu0 %v6848
    %6940 = vmatprep.subr.bf16.mxu0 0
    %6941 = vmatpush2.bf16.msra.mxu0 %v6847
    %6942 = vmatprep.subr.bf16.mxu0 0
    %6943 = vmatpush2.bf16.msra.mxu0 %v6846
    %6944 = vmatprep.subr.bf16.mxu0 0
    %6945 = vmatpush2.bf16.msra.mxu0 %v6845
    %6946 = vmatprep.subr.bf16.mxu0 0
    %6947 = vmatpush2.bf16.msra.mxu0 %v6844
    %6948 = vmatprep.subr.bf16.mxu0 0
    %6949 = vmatpush2.bf16.msra.mxu0 %v6843
    %6950 = vmatprep.subr.bf16.mxu0 0
    %6951 = vmatpush2.bf16.msra.mxu0 %v6842
    %6952 = vmatprep.subr.bf16.mxu0 0
    %6953 = vmatpush2.bf16.msra.mxu0 %v6841
    %6954 = vmatprep.mubr.bf16.mxu0 %v6624
    %6955 = vmatmul.mubr.bf16.gmra.mxu0 %v6623
    %v6956 = vpop.f32.mrf.mxu0
    %v6957 = vadd.f32 %v6916, %v6956
    %v6958 = vpop.f32.mrf.mxu0
    %v6959 = vpop.f32.mrf.mxu0
    %v6960 = vadd.f32 %v6919, %v6959
    %v6961 = vpop.f32.mrf.mxu0
    %6962 = vdwg.mxu0
    %v6963 = vadd.f32 %v6451, %v6957
    %v6964 = vadd.f32 %v6454, %v6960
    %v6965 = vld [vmem:[%s5439 + $0x30] sm:$0xff]
    %v6966 = vld [vmem:[%s5439 + $0x38] sm:$0xff]
    %v6967 = vld [vmem:[%s5439 + $0x70] sm:$0xff]
    %v6968 = vld [vmem:[%s5439 + $0x78] sm:$0xff]
    %v6969 = vld [vmem:[%s5439 + $0xb0] sm:$0xff]
    %v6970 = vld [vmem:[%s5439 + $0xb8] sm:$0xff]
    %v6971 = vld [vmem:[%s5439 + $0xf0] sm:$0xff]
    %v6972 = vld [vmem:[%s5439 + $0xf8] sm:$0xff]
    %v6973 = vld [vmem:[%s5448 + $0xc] sm:$0xf]
    %v6975 = vlaneseq
    %v6976 = vshrl.u32 %v6975, 7
    %v6977 = vsub.s32 0, %v6976
    %v6978 = vrot.slane %v6973, %v6977
    %v6979 = vlaneseq
    %v6980 = vshrl.u32 %v6979, 7
    %v6981 = vsub.s32 1, %v6980
    %v6982 = vrot.slane %v6973, %v6981
    %v6983 = vlaneseq
    %v6984 = vshrl.u32 %v6983, 7
    %v6985 = vsub.s32 2, %v6984
    %v6986 = vrot.slane %v6973, %v6985
    %v6987 = vlaneseq
    %v6988 = vshrl.u32 %v6987, 7
    %v6989 = vsub.s32 3, %v6988
    %v6990 = vrot.slane %v6973, %v6989
    %v7003 = vunpack.c.l.b16 %v6965
    %v7004 = vunpack.c.h.b16 %v6965
    %v7005 = vunpack.c.l.b16 %v6966
    %v7006 = vunpack.c.h.b16 %v6966
    %v7007 = vunpack.c.l.b16 %v6967
    %v7008 = vunpack.c.h.b16 %v6967
    %v7009 = vunpack.c.l.b16 %v6968
    %v7010 = vunpack.c.h.b16 %v6968
    %v7011 = vunpack.c.l.b16 %v6969
    %v7012 = vunpack.c.h.b16 %v6969
    %v7013 = vunpack.c.l.b16 %v6970
    %v7014 = vunpack.c.h.b16 %v6970
    %v7015 = vunpack.c.l.b16 %v6971
    %v7016 = vunpack.c.h.b16 %v6971
    %v7017 = vunpack.c.l.b16 %v6972
    %v7018 = vunpack.c.h.b16 %v6972
    %v7019 = vpack.c.b16 %v7007, %v7003
    %v7020 = vpack.c.b16 %v7008, %v7004
    %v7021 = vpack.c.b16 %v7009, %v7005
    %v7022 = vpack.c.b16 %v7010, %v7006
    %v7023 = vpack.c.b16 %v7015, %v7011
    %v7024 = vpack.c.b16 %v7016, %v7012
    %v7025 = vpack.c.b16 %v7017, %v7013
    %v7026 = vpack.c.b16 %v7018, %v7014
    %7035 = vmatprep.subr.bf16.mxu0 0
    %7036 = vmatpush1.bf16.msra.mxu0 0
    %7037 = vmatprep.subr.bf16.mxu0 0
    %7038 = vmatpush1.bf16.msra.mxu0 0
    %7039 = vmatprep.subr.bf16.mxu0 0
    %7040 = vmatpush1.bf16.msra.mxu0 0
    %7041 = vmatprep.subr.bf16.mxu0 0
    %7042 = vmatpush1.bf16.msra.mxu0 0
    %7043 = vmatprep.subr.bf16.mxu0 0
    %7044 = vmatpush1.bf16.msra.mxu0 0
    %7045 = vmatprep.subr.bf16.mxu0 0
    %7046 = vmatpush1.bf16.msra.mxu0 0
    %7047 = vmatprep.subr.bf16.mxu0 %v7024
    %7048 = vmatpush1.bf16.msra.mxu0 %v7023
    %7049 = vmatprep.subr.bf16.mxu0 %v7020
    %7050 = vmatpush1.bf16.msra.mxu0 %v7019
    %7051 = vmatprep.subr.bf16.mxu0 0
    %7052 = vmatpush2.bf16.msra.mxu0 0
    %7053 = vmatprep.subr.bf16.mxu0 0
    %7054 = vmatpush2.bf16.msra.mxu0 0
    %7055 = vmatprep.subr.bf16.mxu0 0
    %7056 = vmatpush2.bf16.msra.mxu0 0
    %7057 = vmatprep.subr.bf16.mxu0 0
    %7058 = vmatpush2.bf16.msra.mxu0 0
    %7059 = vmatprep.subr.bf16.mxu0 0
    %7060 = vmatpush2.bf16.msra.mxu0 0
    %7061 = vmatprep.subr.bf16.mxu0 0
    %7062 = vmatpush2.bf16.msra.mxu0 0
    %7063 = vmatprep.subr.bf16.mxu0 0
    %7064 = vmatpush2.bf16.msra.mxu0 0
    %7065 = vmatprep.subr.bf16.mxu0 0
    %7066 = vmatpush2.bf16.msra.mxu0 0
    %7067 = vmatprep.mubr.bf16.mxu0 0
    %7068 = vmatmul.mubr.bf16.gmra.mxu0 %v5512
    %v7069 = vpop.f32.mrf.mxu0
    %v7070 = vadd.f32 %v6978, %v7069
    %v7071 = vpop.f32.mrf.mxu0
    %v7072 = vadd.f32 %v6982, %v7071
    %v7073 = vpop.f32.mrf.mxu0
    %v7074 = vadd.f32 %v6978, %v7073
    %v7075 = vpop.f32.mrf.mxu0
    %v7076 = vadd.f32 %v6982, %v7075
    %7077 = vdwg.mxu0
    %7078 = vmatprep.subr.bf16.mxu0 0
    %7079 = vmatpush1.bf16.msra.mxu0 0
    %7080 = vmatprep.subr.bf16.mxu0 0
    %7081 = vmatpush1.bf16.msra.mxu0 0
    %7082 = vmatprep.subr.bf16.mxu0 0
    %7083 = vmatpush1.bf16.msra.mxu0 0
    %7084 = vmatprep.subr.bf16.mxu0 0
    %7085 = vmatpush1.bf16.msra.mxu0 0
    %7086 = vmatprep.subr.bf16.mxu0 0
    %7087 = vmatpush1.bf16.msra.mxu0 0
    %7088 = vmatprep.subr.bf16.mxu0 0
    %7089 = vmatpush1.bf16.msra.mxu0 0
    %7090 = vmatprep.subr.bf16.mxu0 %v7026
    %7091 = vmatpush1.bf16.msra.mxu0 %v7025
    %7092 = vmatprep.subr.bf16.mxu0 %v7022
    %7093 = vmatpush1.bf16.msra.mxu0 %v7021
    %7094 = vmatprep.subr.bf16.mxu0 0
    %7095 = vmatpush2.bf16.msra.mxu0 0
    %7096 = vmatprep.subr.bf16.mxu0 0
    %7097 = vmatpush2.bf16.msra.mxu0 0
    %7098 = vmatprep.subr.bf16.mxu0 0
    %7099 = vmatpush2.bf16.msra.mxu0 0
    %7100 = vmatprep.subr.bf16.mxu0 0
    %7101 = vmatpush2.bf16.msra.mxu0 0
    %7102 = vmatprep.subr.bf16.mxu0 0
    %7103 = vmatpush2.bf16.msra.mxu0 0
    %7104 = vmatprep.subr.bf16.mxu0 0
    %7105 = vmatpush2.bf16.msra.mxu0 0
    %7106 = vmatprep.subr.bf16.mxu0 0
    %7107 = vmatpush2.bf16.msra.mxu0 0
    %7108 = vmatprep.subr.bf16.mxu0 0
    %7109 = vmatpush2.bf16.msra.mxu0 0
    %7110 = vmatprep.mubr.bf16.mxu0 0
    %7111 = vmatmul.mubr.bf16.gmra.mxu0 %v5512
    %v7112 = vpop.f32.mrf.mxu0
    %v7113 = vadd.f32 %v6986, %v7112
    %v7114 = vpop.f32.mrf.mxu0
    %v7115 = vadd.f32 %v6990, %v7114
    %v7116 = vpop.f32.mrf.mxu0
    %v7117 = vadd.f32 %v6986, %v7116
    %v7118 = vpop.f32.mrf.mxu0
    %v7119 = vadd.f32 %v6990, %v7118
    %7120 = vdwg.mxu0
    %v7121 = vmax.f32 %v7070, 0.0
    %v7122 = vmax.f32 %v7072, 0.0
    %v7123 = vmax.f32 %v7113, 0.0
    %v7124 = vmax.f32 %v7115, 0.0
    %v7125 = vmax.f32 %v7074, 0.0
    %v7126 = vmax.f32 %v7076, 0.0
    %v7127 = vmax.f32 %v7117, 0.0
    %v7128 = vmax.f32 %v7119, 0.0
    %v7129 = vpack.c.bf16 %v7125, %v7121
    %v7130 = vpack.c.bf16 %v7126, %v7122
    %v7131 = vpack.c.bf16 %v7127, %v7123
    %v7132 = vpack.c.bf16 %v7128, %v7124
    %v7133 = vld [vmem:[%s5612 + $0x300] sm:$0xf]
    %v7134 = vld [vmem:[%s5612 + $0x304] sm:$0xf]
    %v7135 = vld [vmem:[%s5612 + $0x308] sm:$0xf]
    %v7136 = vld [vmem:[%s5612 + $0x30c] sm:$0xf]
    %v7137 = vld [vmem:[%s5612 + $0x310] sm:$0xf]
    %v7138 = vld [vmem:[%s5612 + $0x314] sm:$0xf]
    %v7139 = vld [vmem:[%s5612 + $0x318] sm:$0xf]
    %v7140 = vld [vmem:[%s5612 + $0x31c] sm:$0xf]
    %v7141 = vld [vmem:[%s5612 + $0x320] sm:$0xf]
    %v7142 = vld [vmem:[%s5612 + $0x324] sm:$0xf]
    %v7143 = vld [vmem:[%s5612 + $0x328] sm:$0xf]
    %v7144 = vld [vmem:[%s5612 + $0x32c] sm:$0xf]
    %v7145 = vld [vmem:[%s5612 + $0x330] sm:$0xf]
    %v7146 = vld [vmem:[%s5612 + $0x334] sm:$0xf]
    %v7147 = vld [vmem:[%s5612 + $0x338] sm:$0xf]
    %v7148 = vld [vmem:[%s5612 + $0x33c] sm:$0xf]
    %v7149 = vld [vmem:[%s5612 + $0x340] sm:$0xf]
    %v7150 = vld [vmem:[%s5612 + $0x344] sm:$0xf]
    %v7151 = vld [vmem:[%s5612 + $0x348] sm:$0xf]
    %v7152 = vld [vmem:[%s5612 + $0x34c] sm:$0xf]
    %v7153 = vld [vmem:[%s5612 + $0x350] sm:$0xf]
    %v7154 = vld [vmem:[%s5612 + $0x354] sm:$0xf]
    %v7155 = vld [vmem:[%s5612 + $0x358] sm:$0xf]
    %v7156 = vld [vmem:[%s5612 + $0x35c] sm:$0xf]
    %v7157 = vld [vmem:[%s5612 + $0x360] sm:$0xf]
    %v7158 = vld [vmem:[%s5612 + $0x364] sm:$0xf]
    %v7159 = vld [vmem:[%s5612 + $0x368] sm:$0xf]
    %v7160 = vld [vmem:[%s5612 + $0x36c] sm:$0xf]
    %v7161 = vld [vmem:[%s5612 + $0x370] sm:$0xf]
    %v7162 = vld [vmem:[%s5612 + $0x374] sm:$0xf]
    %v7163 = vld [vmem:[%s5612 + $0x378] sm:$0xf]
    %v7164 = vld [vmem:[%s5612 + $0x37c] sm:$0xf]
    %v7165 = vld [vmem:[%s5612 + $0x380] sm:$0xf]
    %v7166 = vld [vmem:[%s5612 + $0x384] sm:$0xf]
    %v7167 = vld [vmem:[%s5612 + $0x388] sm:$0xf]
    %v7168 = vld [vmem:[%s5612 + $0x38c] sm:$0xf]
    %v7169 = vld [vmem:[%s5612 + $0x390] sm:$0xf]
    %v7170 = vld [vmem:[%s5612 + $0x394] sm:$0xf]
    %v7171 = vld [vmem:[%s5612 + $0x398] sm:$0xf]
    %v7172 = vld [vmem:[%s5612 + $0x39c] sm:$0xf]
    %v7173 = vld [vmem:[%s5612 + $0x3a0] sm:$0xf]
    %v7174 = vld [vmem:[%s5612 + $0x3a4] sm:$0xf]
    %v7175 = vld [vmem:[%s5612 + $0x3a8] sm:$0xf]
    %v7176 = vld [vmem:[%s5612 + $0x3ac] sm:$0xf]
    %v7177 = vld [vmem:[%s5612 + $0x3b0] sm:$0xf]
    %v7178 = vld [vmem:[%s5612 + $0x3b4] sm:$0xf]
    %v7179 = vld [vmem:[%s5612 + $0x3b8] sm:$0xf]
    %v7180 = vld [vmem:[%s5612 + $0x3bc] sm:$0xf]
    %v7181 = vld [vmem:[%s5612 + $0x3c0] sm:$0xf]
    %v7182 = vld [vmem:[%s5612 + $0x3c4] sm:$0xf]
    %v7183 = vld [vmem:[%s5612 + $0x3c8] sm:$0xf]
    %v7184 = vld [vmem:[%s5612 + $0x3cc] sm:$0xf]
    %v7185 = vld [vmem:[%s5612 + $0x3d0] sm:$0xf]
    %v7186 = vld [vmem:[%s5612 + $0x3d4] sm:$0xf]
    %v7187 = vld [vmem:[%s5612 + $0x3d8] sm:$0xf]
    %v7188 = vld [vmem:[%s5612 + $0x3dc] sm:$0xf]
    %v7189 = vld [vmem:[%s5612 + $0x3e0] sm:$0xf]
    %v7190 = vld [vmem:[%s5612 + $0x3e4] sm:$0xf]
    %v7191 = vld [vmem:[%s5612 + $0x3e8] sm:$0xf]
    %v7192 = vld [vmem:[%s5612 + $0x3ec] sm:$0xf]
    %v7193 = vld [vmem:[%s5612 + $0x3f0] sm:$0xf]
    %v7194 = vld [vmem:[%s5612 + $0x3f4] sm:$0xf]
    %v7195 = vld [vmem:[%s5612 + $0x3f8] sm:$0xf]
    %v7196 = vld [vmem:[%s5612 + $0x3fc] sm:$0xf]
    %v7261 = vunpack.c.l.b16 %v7133
    %v7262 = vunpack.c.l.b16 %v7134
    %v7263 = vunpack.c.l.b16 %v7135
    %v7264 = vunpack.c.l.b16 %v7136
    %v7265 = vunpack.c.l.b16 %v7137
    %v7266 = vunpack.c.l.b16 %v7138
    %v7267 = vunpack.c.l.b16 %v7139
    %v7268 = vunpack.c.l.b16 %v7140
    %v7269 = vunpack.c.l.b16 %v7141
    %v7270 = vunpack.c.l.b16 %v7142
    %v7271 = vunpack.c.l.b16 %v7143
    %v7272 = vunpack.c.l.b16 %v7144
    %v7273 = vunpack.c.l.b16 %v7145
    %v7274 = vunpack.c.l.b16 %v7146
    %v7275 = vunpack.c.l.b16 %v7147
    %v7276 = vunpack.c.l.b16 %v7148
    %v7277 = vunpack.c.l.b16 %v7149
    %v7278 = vunpack.c.l.b16 %v7150
    %v7279 = vunpack.c.l.b16 %v7151
    %v7280 = vunpack.c.l.b16 %v7152
    %v7281 = vunpack.c.l.b16 %v7153
    %v7282 = vunpack.c.l.b16 %v7154
    %v7283 = vunpack.c.l.b16 %v7155
    %v7284 = vunpack.c.l.b16 %v7156
    %v7285 = vunpack.c.l.b16 %v7157
    %v7286 = vunpack.c.l.b16 %v7158
    %v7287 = vunpack.c.l.b16 %v7159
    %v7288 = vunpack.c.l.b16 %v7160
    %v7289 = vunpack.c.l.b16 %v7161
    %v7290 = vunpack.c.l.b16 %v7162
    %v7291 = vunpack.c.l.b16 %v7163
    %v7292 = vunpack.c.l.b16 %v7164
    %v7293 = vunpack.c.l.b16 %v7165
    %v7294 = vunpack.c.l.b16 %v7166
    %v7295 = vunpack.c.l.b16 %v7167
    %v7296 = vunpack.c.l.b16 %v7168
    %v7297 = vunpack.c.l.b16 %v7169
    %v7298 = vunpack.c.l.b16 %v7170
    %v7299 = vunpack.c.l.b16 %v7171
    %v7300 = vunpack.c.l.b16 %v7172
    %v7301 = vunpack.c.l.b16 %v7173
    %v7302 = vunpack.c.l.b16 %v7174
    %v7303 = vunpack.c.l.b16 %v7175
    %v7304 = vunpack.c.l.b16 %v7176
    %v7305 = vunpack.c.l.b16 %v7177
    %v7306 = vunpack.c.l.b16 %v7178
    %v7307 = vunpack.c.l.b16 %v7179
    %v7308 = vunpack.c.l.b16 %v7180
    %v7309 = vunpack.c.l.b16 %v7181
    %v7310 = vunpack.c.l.b16 %v7182
    %v7311 = vunpack.c.l.b16 %v7183
    %v7312 = vunpack.c.l.b16 %v7184
    %v7313 = vunpack.c.l.b16 %v7185
    %v7314 = vunpack.c.l.b16 %v7186
    %v7315 = vunpack.c.l.b16 %v7187
    %v7316 = vunpack.c.l.b16 %v7188
    %v7317 = vunpack.c.l.b16 %v7189
    %v7318 = vunpack.c.l.b16 %v7190
    %v7319 = vunpack.c.l.b16 %v7191
    %v7320 = vunpack.c.l.b16 %v7192
    %v7321 = vunpack.c.l.b16 %v7193
    %v7322 = vunpack.c.l.b16 %v7194
    %v7323 = vunpack.c.l.b16 %v7195
    %v7324 = vunpack.c.l.b16 %v7196
    %v7325 = vpack.c.b16 %v7262, %v7261
    %v7326 = vpack.c.b16 %v7264, %v7263
    %v7327 = vpack.c.b16 %v7266, %v7265
    %v7328 = vpack.c.b16 %v7268, %v7267
    %v7329 = vpack.c.b16 %v7270, %v7269
    %v7330 = vpack.c.b16 %v7272, %v7271
    %v7331 = vpack.c.b16 %v7274, %v7273
    %v7332 = vpack.c.b16 %v7276, %v7275
    %v7333 = vpack.c.b16 %v7278, %v7277
    %v7334 = vpack.c.b16 %v7280, %v7279
    %v7335 = vpack.c.b16 %v7282, %v7281
    %v7336 = vpack.c.b16 %v7284, %v7283
    %v7337 = vpack.c.b16 %v7286, %v7285
    %v7338 = vpack.c.b16 %v7288, %v7287
    %v7339 = vpack.c.b16 %v7290, %v7289
    %v7340 = vpack.c.b16 %v7292, %v7291
    %v7341 = vpack.c.b16 %v7294, %v7293
    %v7342 = vpack.c.b16 %v7296, %v7295
    %v7343 = vpack.c.b16 %v7298, %v7297
    %v7344 = vpack.c.b16 %v7300, %v7299
    %v7345 = vpack.c.b16 %v7302, %v7301
    %v7346 = vpack.c.b16 %v7304, %v7303
    %v7347 = vpack.c.b16 %v7306, %v7305
    %v7348 = vpack.c.b16 %v7308, %v7307
    %v7349 = vpack.c.b16 %v7310, %v7309
    %v7350 = vpack.c.b16 %v7312, %v7311
    %v7351 = vpack.c.b16 %v7314, %v7313
    %v7352 = vpack.c.b16 %v7316, %v7315
    %v7353 = vpack.c.b16 %v7318, %v7317
    %v7354 = vpack.c.b16 %v7320, %v7319
    %v7355 = vpack.c.b16 %v7322, %v7321
    %v7356 = vpack.c.b16 %v7324, %v7323
    %7389 = vmatprep.subr.bf16.mxu0 0
    %7390 = vmatpush1.bf16.msra.mxu0 %v7332
    %7391 = vmatprep.subr.bf16.mxu0 0
    %7392 = vmatpush1.bf16.msra.mxu0 %v7331
    %7393 = vmatprep.subr.bf16.mxu0 0
    %7394 = vmatpush1.bf16.msra.mxu0 %v7330
    %7395 = vmatprep.subr.bf16.mxu0 0
    %7396 = vmatpush1.bf16.msra.mxu0 %v7329
    %7397 = vmatprep.subr.bf16.mxu0 0
    %7398 = vmatpush1.bf16.msra.mxu0 %v7328
    %7399 = vmatprep.subr.bf16.mxu0 0
    %7400 = vmatpush1.bf16.msra.mxu0 %v7327
    %7401 = vmatprep.subr.bf16.mxu0 0
    %7402 = vmatpush1.bf16.msra.mxu0 %v7326
    %7403 = vmatprep.subr.bf16.mxu0 0
    %7404 = vmatpush1.bf16.msra.mxu0 %v7325
    %7405 = vmatprep.subr.bf16.mxu0 0
    %7406 = vmatpush2.bf16.msra.mxu0 %v7340
    %7407 = vmatprep.subr.bf16.mxu0 0
    %7408 = vmatpush2.bf16.msra.mxu0 %v7339
    %7409 = vmatprep.subr.bf16.mxu0 0
    %7410 = vmatpush2.bf16.msra.mxu0 %v7338
    %7411 = vmatprep.subr.bf16.mxu0 0
    %7412 = vmatpush2.bf16.msra.mxu0 %v7337
    %7413 = vmatprep.subr.bf16.mxu0 0
    %7414 = vmatpush2.bf16.msra.mxu0 %v7336
    %7415 = vmatprep.subr.bf16.mxu0 0
    %7416 = vmatpush2.bf16.msra.mxu0 %v7335
    %7417 = vmatprep.subr.bf16.mxu0 0
    %7418 = vmatpush2.bf16.msra.mxu0 %v7334
    %7419 = vmatprep.subr.bf16.mxu0 0
    %7420 = vmatpush2.bf16.msra.mxu0 %v7333
    %7421 = vmatprep.mubr.bf16.mxu0 %v7130
    %7422 = vmatmul.mubr.bf16.gmra.mxu0 %v7129
    %v7423 = vpop.f32.mrf.mxu0
    %v7424 = vadd.f32 0.0, %v7423
    %v7425 = vpop.f32.mrf.mxu0
    %v7426 = vpop.f32.mrf.mxu0
    %v7427 = vadd.f32 0.0, %v7426
    %v7428 = vpop.f32.mrf.mxu0
    %7429 = vdwg.mxu0
    %7430 = vmatprep.subr.bf16.mxu0 0
    %7431 = vmatpush1.bf16.msra.mxu0 %v7348
    %7432 = vmatprep.subr.bf16.mxu0 0
    %7433 = vmatpush1.bf16.msra.mxu0 %v7347
    %7434 = vmatprep.subr.bf16.mxu0 0
    %7435 = vmatpush1.bf16.msra.mxu0 %v7346
    %7436 = vmatprep.subr.bf16.mxu0 0
    %7437 = vmatpush1.bf16.msra.mxu0 %v7345
    %7438 = vmatprep.subr.bf16.mxu0 0
    %7439 = vmatpush1.bf16.msra.mxu0 %v7344
    %7440 = vmatprep.subr.bf16.mxu0 0
    %7441 = vmatpush1.bf16.msra.mxu0 %v7343
    %7442 = vmatprep.subr.bf16.mxu0 0
    %7443 = vmatpush1.bf16.msra.mxu0 %v7342
    %7444 = vmatprep.subr.bf16.mxu0 0
    %7445 = vmatpush1.bf16.msra.mxu0 %v7341
    %7446 = vmatprep.subr.bf16.mxu0 0
    %7447 = vmatpush2.bf16.msra.mxu0 %v7356
    %7448 = vmatprep.subr.bf16.mxu0 0
    %7449 = vmatpush2.bf16.msra.mxu0 %v7355
    %7450 = vmatprep.subr.bf16.mxu0 0
    %7451 = vmatpush2.bf16.msra.mxu0 %v7354
    %7452 = vmatprep.subr.bf16.mxu0 0
    %7453 = vmatpush2.bf16.msra.mxu0 %v7353
    %7454 = vmatprep.subr.bf16.mxu0 0
    %7455 = vmatpush2.bf16.msra.mxu0 %v7352
    %7456 = vmatprep.subr.bf16.mxu0 0
    %7457 = vmatpush2.bf16.msra.mxu0 %v7351
    %7458 = vmatprep.subr.bf16.mxu0 0
    %7459 = vmatpush2.bf16.msra.mxu0 %v7350
    %7460 = vmatprep.subr.bf16.mxu0 0
    %7461 = vmatpush2.bf16.msra.mxu0 %v7349
    %7462 = vmatprep.mubr.bf16.mxu0 %v7132
    %7463 = vmatmul.mubr.bf16.gmra.mxu0 %v7131
    %v7464 = vpop.f32.mrf.mxu0
    %v7465 = vadd.f32 %v7424, %v7464
    %v7466 = vpop.f32.mrf.mxu0
    %v7467 = vpop.f32.mrf.mxu0
    %v7468 = vadd.f32 %v7427, %v7467
    %v7469 = vpop.f32.mrf.mxu0
    %7470 = vdwg.mxu0
    %v7471 = vadd.f32 %v6963, %v7465
    %v7472 = vadd.f32 %v6964, %v7468
    %s7473 = scalar_lea.vmem %s13, 1
    %v7474 = vld [vmem:[%s7473] sm:$0x1]
    %v7476 = vlaneseq
    %v7477 = vshrl.u32 %v7476, 7
    %v7478 = vsub.s32 0, %v7477
    %v7479 = vrot.slane %v7474, %v7478
    %v7481 = vadd.f32 %v7471, %v7479
    %v7482 = vadd.f32 %v7472, %v7479
    %v7483 = vadd.f32 %v5436, %v7481
    %v7484 = vadd.f32 %v5437, %v7482
    %s7485 = scalar_lea.vmem %s14, 1
    %v7486 = vld [vmem:[%s7485] sm:$0x1]
    %s7487 = scalar_lea.vmem %s15, 1
    %v7488 = vld [vmem:[%s7487] sm:$0x1]
    %v7489 = vsel %vm163, %v7483, 0.0
    %7490 = vadd.xlane.f32.xlu0 %v7489
    %v7491 = vpop.xlane.xlu0 %7490
    %v7492 = vsel %vm163, %v7484, 0.0
    %7493 = vadd.xlane.f32.xlu0 %v7492
    %v7494 = vpop.xlane.xlu0 %7493
    %v7495 = vmul.f32 %v7491, %v1713
    %v7496 = vmul.f32 %v7494, %v1713
    %v7497 = vsub.f32 %v7483, %v7495
    %v7498 = vsub.f32 %v7484, %v7496
    %v7499 = vmul.f32 %v7497, %v7497
    %v7500 = vmul.f32 %v7498, %v7498
    %v7501 = vsel %vm163, %v7499, 0.0
    %7502 = vadd.xlane.f32.xlu0 %v7501
    %v7503 = vpop.xlane.xlu0 %7502
    %v7504 = vsel %vm163, %v7500, 0.0
    %7505 = vadd.xlane.f32.xlu0 %v7504
    %v7506 = vpop.xlane.xlu0 %7505
    %v7507 = vmul.f32 %v7503, %v1713
    %v7508 = vmul.f32 %v7506, %v1713
    %v7509 = vadd.f32 %v7507, 1e-05
    %v7510 = vadd.f32 %v7508, 1e-05
    %v7511 = vrsqrt.pop %v7509
    %v7512 = vrsqrt.pop %v7510
    %v7513 = vmul.f32 %v7497, %v7511
    %v7514 = vmul.f32 %v7498, %v7512
    %v7516 = vlaneseq
    %v7517 = vshrl.u32 %v7516, 7
    %v7518 = vsub.s32 0, %v7517
    %v7519 = vrot.slane %v7486, %v7518
    %v7521 = vmul.f32 %v7513, %v7519
    %v7522 = vmul.f32 %v7514, %v7519
    %v7524 = vlaneseq
    %v7525 = vshrl.u32 %v7524, 7
    %v7526 = vsub.s32 0, %v7525
    %v7527 = vrot.slane %v7488, %v7526
    %v7529 = vadd.f32 %v7521, %v7527
    %v7530 = vadd.f32 %v7522, %v7527
    %v7531 = vsel %vm163, %v7529, 0.0
    %v7532 = vrot.slane %v7531, 4
    %v7533 = vadd.f32 %v7531, %v7532
    %v7534 = vrot.slane %v7533, 2
    %v7535 = vadd.f32 %v7533, %v7534
    %v7536 = vrot.slane %v7535, 1
    %v7537 = vadd.f32 %v7535, %v7536
    %v7538 = vsel %vm163, %v7530, 0.0
    %v7539 = vrot.slane %v7538, 4
    %v7540 = vadd.f32 %v7538, %v7539
    %v7541 = vrot.slane %v7540, 2
    %v7542 = vadd.f32 %v7540, %v7541
    %v7543 = vrot.slane %v7542, 1
    %v7544 = vadd.f32 %v7542, %v7543
    %v7545 = vrcp.pop 8.0
    %v7546 = vmul.f32 %v7537, %v7545
    %v7547 = vmul.f32 %v7544, %v7545
    %vm7550 = vcmask 1041409
    %v7551 = vsel %vm7550, %v7547, %v7546
    %vm7553 = vcmask 254976
    %7554 = vst.msk [vmem:[#allocation2] sm:$0x3] %vm7553, %v7551
    // Predicated region
    $region66: #{transformer_branch_forward.1} parent=1 // pred_check
      _
    $region67: #{transformer_branch_forward.1} parent=1 // pred_check_branch
      %7556 = sbr.rel (0) target = $region69
    $region68: #{transformer_branch_forward.1} parent=1 // pred_region
      %s7558 = ssub.s32 32, 32
      %7559 = vsyncadd [#allocation3], %s7558
      %s7561 = sshll.u32 [#allocation2], 4
      %s7562 = int_to_ptr.vmem [resolvable:$true] %s7561
      %7564 = dma.vmem_to_hbm [thread:$0]  %s7562, 32, %s16, [#allocation3]
    $region69: #{transformer_branch_forward.1} parent=1 // pred_fallthru
      _
    // Predicated region
    $region70: #{transformer_branch_forward.1} parent=1 // pred_check
      _
    $region71: #{transformer_branch_forward.1} parent=1 // pred_check_branch
      %7566 = sbr.rel (0) target = $region73
    $region72: #{transformer_branch_forward.1} parent=1 // pred_region
      _
    $region73: #{transformer_branch_forward.1} parent=1 // pred_fallthru
      _
    // Predicated region
    $region74: #{transformer_branch_forward.1} parent=1 // pred_check
      _
    $region75: #{transformer_branch_forward.1} parent=1 // pred_check_branch
      %7568 = sbr.rel (0) target = $region77
    $region76: #{transformer_branch_forward.1} parent=1 // pred_region
      %7569 = dma.done [#allocation3], 32
    $region77: #{transformer_branch_forward.1} parent=1 // pred_fallthru
      _
    // Predicated region
    $region78: #{transformer_branch_forward.1} parent=1 // pred_check
      _
    $region79: #{transformer_branch_forward.1} parent=1 // pred_check_branch
      %7571 = sbr.rel (0) target = $region81
    $region80: #{transformer_branch_forward.1} parent=1 // pred_region
      _
    $region81: #{transformer_branch_forward.1} parent=1 // pred_fallthru
      _
    %7572 = vsyncpa [#allocation3], 1

</llo_original>
